<compile_context>
chip_gen: v7x
topology: tpu7x:2x2x1
jax: 0.10.0
libtpu: 0.0.40
codegen_flags: <defaults>
</compile_context>

<pallas_src>
import functools

import jax
import jax.numpy as jnp
from jax.experimental import pallas as pl
from jax.experimental.pallas import tpu as pltpu


SHORT_K = 20
MIDDLE_K = 80
LONG_K = 160
HOP = SHORT_K // 2           # 10 — stride shared by all three branches
N_SUB = LONG_K // HOP        # 16 — hop-chunks per (longest) conv window
HALO_CHUNKS = 128            # lane-aligned halo block width (>= N_SUB)


def _fused_encoder_kernel(xc_ref, halo_ref, w_ref, b_ref,
                          o_short_ref, o_middle_ref, o_long_ref):
    """One (batch, time-tile) cell of the fused 3-branch conv + ReLU.

    xc_ref   : (HOP, T_tile)        hop-chunks of this tile, time on lanes (bf16)
    halo_ref : (HOP, HALO_CHUNKS)   chunks right after this tile (halo, bf16)
    w_ref    : (3C, LONG_K)         fused conv weights, channel-major (bf16)
    b_ref    : (3C, 1)              fused bias (f32)
    o_*_ref  : (C, T_tile)          per-branch outputs, channel-major (f32)
    """
    c = o_short_ref.shape[0]
    t_tile = o_short_ref.shape[1]

    # Time-on-lanes chunk strip covering this tile plus its right halo.
    xc_all = jnp.concatenate([xc_ref[...], halo_ref[...]], axis=-1)

    # Transposed im2col, built ONCE for all three branches:
    #   frames_t[j*HOP + h, tau] = x[(tile_start + tau + j) * HOP + h]
    # Full-lane-width rows stacked at sublane offsets -> no operand transpose
    # for the matmul, no output transpose afterwards.
    frames_t = jnp.concatenate(
        [xc_all[:, j:j + t_tile] for j in range(N_SUB)], axis=0)  # (160, T_tile)

    # Single fused MXU matmul, channel-major result, bf16 ops / f32 accumulate.
    y = jnp.dot(w_ref[...], frames_t,
                preferred_element_type=jnp.float32)               # (3C, T_tile)
    y = jnp.maximum(y + b_ref[...], 0.0)

    # Plain sublane-aligned row slices -> direct (B, C, T) stores, no .T.
    o_short_ref[...] = y[0 * c:1 * c, :].astype(o_short_ref.dtype)
    o_middle_ref[...] = y[1 * c:2 * c, :].astype(o_middle_ref.dtype)
    o_long_ref[...] = y[2 * c:3 * c, :].astype(o_long_ref.dtype)


def _pick_t_tile(t_out):
    # Lane-dense output blocks (multiples of 128).  1024 amortizes the
    # ~0.35 us per-grid-step overhead against the output writeback on
    # v6e/v7x while keeping per-step VMEM ~10 MiB (fits every generation).
    for cand in (1024, 512, 256):
        if t_out >= cand:
            return cand
    return 128


def _vmem_limit_bytes(t_tile):
    # v5e's scoped default is only 16 MiB, so always set this explicitly.
    # 48 MiB leaves headroom under v7x's 64 MiB physical VMEM.
    return (48 if t_tile >= 1024 else 32) * 1024 * 1024


def _fused_encoder(x2d, w_cat, b_cat, t_out, compute_dtype):
    """x2d: (B, L) f32, w_cat: (3C, 160) bf16, b_cat: (3C, 1) f32."""
    B, L = x2d.shape
    c_out = w_cat.shape[0] // 3

    t_tile = _pick_t_tile(t_out)
    n_t = pl.cdiv(t_out, t_tile)
    halo_mul = t_tile // HALO_CHUNKS     # t_tile is a multiple of 128

    # Zero-pad the signal ONCE (covers the ConstantPad1d of the middle/long
    # branches, the last frame's window and the last tile's halo block), cast
    # to bf16, and lay it out as hop-chunks with time on the lane axis.
    n_chunks = n_t * t_tile + HALO_CHUNKS
    l_needed = n_chunks * HOP
    x_use = x2d[:, :min(L, l_needed)].astype(compute_dtype)
    pad = l_needed - x_use.shape[1]
    if pad > 0:
        x_use = jnp.pad(x_use, ((0, 0), (0, pad)))
    x_chunks = jnp.transpose(x_use.reshape(B, n_chunks, HOP), (0, 2, 1))

    # Output time dim is exactly t_out; the ragged final block is masked on
    # store by Pallas (no wrapper-side slice copy).
    out_sds = jax.ShapeDtypeStruct((B, c_out, t_out), jnp.float32)
    return pl.pallas_call(
        _fused_encoder_kernel,
        out_shape=(out_sds, out_sds, out_sds),
        grid=(B, n_t),
        in_specs=[
            # hop-chunks of this time-tile (time on the lane axis)
            pl.BlockSpec((None, HOP, t_tile), lambda b, t: (b, 0, t)),
            # lane-aligned halo: the 128 chunks right after this tile
            pl.BlockSpec((None, HOP, HALO_CHUNKS),
                         lambda b, t: (b, 0, (t + 1) * halo_mul)),
            # grid-invariant fused weight / bias (block index never changes,
            # so Pallas DMAs them only once)
            pl.BlockSpec((3 * c_out, LONG_K), lambda b, t: (0, 0)),
            pl.BlockSpec((3 * c_out, 1), lambda b, t: (0, 0)),
        ],
        out_specs=(
            pl.BlockSpec((None, c_out, t_tile), lambda b, t: (b, 0, t)),
            pl.BlockSpec((None, c_out, t_tile), lambda b, t: (b, 0, t)),
            pl.BlockSpec((None, c_out, t_tile), lambda b, t: (b, 0, t)),
        ),
        compiler_params=pltpu.CompilerParams(
            dimension_semantics=("parallel", "parallel"),
            vmem_limit_bytes=_vmem_limit_bytes(t_tile),
        ),
    )(x_chunks, x_chunks, w_cat, b_cat)


def init_encoder_params(key, encoder_out_channels=256):
    """Synthetic parameters. torch Conv1d weight is (C, 1, K); we store it
    transposed as (K, C)."""
    params = {}
    for name, k in (("short", SHORT_K), ("middle", MIDDLE_K), ("long", LONG_K)):
        key, kw, kb = jax.random.split(key, 3)
        w = jax.random.normal(kw, (k, encoder_out_channels), jnp.float32) * 0.05
        b = jax.random.normal(kb, (encoder_out_channels,), jnp.float32) * 0.05
        params[name] = (w, b)
    return params


@functools.partial(jax.jit, static_argnames=("compute_dtype",))
def encoder_forward(x, params, compute_dtype=jnp.bfloat16):
    """x: (B, 1, L) f32 -> (x_short, x_middle, x_long), each (B, C, T) f32."""
    B, cin, L = x.shape
    assert cin == 1
    x2d = x[:, 0, :]
    t_out = (L - SHORT_K) // HOP + 1

    # Fuse the three branches into one channel-major matmul weight: zero-pad
    # short/middle taps to 160 (reproduces the right ConstantPad1d exactly),
    # transpose to (C, 160) and concat along output channels -> (3C, 160).
    ws, bs = [], []
    for name, k in (("short", SHORT_K), ("middle", MIDDLE_K), ("long", LONG_K)):
        w, b = params[name]                                       # (k, C), (C,)
        ws.append(jnp.pad(w, ((0, LONG_K - k), (0, 0))).T)        # (C, 160)
        bs.append(b)
    w_cat = jnp.concatenate(ws, axis=0).astype(compute_dtype)     # (3C, 160)
    b_cat = jnp.concatenate(bs).reshape(-1, 1).astype(jnp.float32)  # (3C, 1)

    return _fused_encoder(x2d, w_cat, b_cat, t_out, compute_dtype)


def _reference_branch(x2d, w, bias, t_out, compute_dtype):
    """Pure-JAX reference for ConstantPad1d + Conv1d(stride=HOP) + ReLU, with
    operands quantized to `compute_dtype` to match the kernel precision."""
    K, _ = w.shape
    xq = x2d.astype(compute_dtype).astype(jnp.float32)
    wq = w.astype(compute_dtype).astype(jnp.float32)
    xp = jnp.pad(xq, ((0, 0), (0, K - SHORT_K)))
    idx = jnp.arange(t_out)[:, None] * HOP + jnp.arange(K)[None, :]
    frames = xp[:, idx]                                           # (B, T, K)
    y = jnp.einsum("btk,kc->btc", frames, wq,
                   precision=jax.lax.Precision.HIGHEST) + bias
    return jnp.transpose(jnp.maximum(y, 0.0), (0, 2, 1))


if __name__ == "__main__":
    key = jax.random.PRNGKey(0)
    k_params, k_x = jax.random.split(key)

    # Small demo: B=2, C=128, L=12510 samples -> T = 1250 frames.
    # Exercises the multi-time-tile grid (t_tile=1024, n_t=2), the halo path
    # and the masked ragged final time block (1250 % 1024 != 0); B*n_t = 4 is
    # even so both v7x TensorCores stay busy.
    B, L, C = 2, 12510, 128
    params = init_encoder_params(k_params, encoder_out_channels=C)
    x = jax.random.normal(k_x, (B, 1, L), jnp.float32)

    outs = jax.block_until_ready(encoder_forward(x, params))

    T = (L - SHORT_K) // HOP + 1
    for name, got in zip(("short", "middle", "long"), outs):
        w, b = params[name]
        ref = _reference_branch(x[:, 0, :], w, b, T, jnp.bfloat16)
        assert got.shape == (B, C, T), (name, got.shape)
        max_err = float(jnp.max(jnp.abs(got - ref)))
        assert jnp.allclose(got, ref, rtol=1e-3, atol=1e-3), (name, max_err)

    print("KERNEL_OK")
</pallas_src>

<mosaic_0001>
module attributes {stable_mosaic.version = 11 : i64} {
  func.func @_fused_encoder_kernel(%arg0: i32, %arg1: i32, %arg2: memref<1x10x1024xbf16, #tpu.memory_space<vmem>>, %arg3: memref<1x10x128xbf16, #tpu.memory_space<vmem>>, %arg4: memref<384x160xbf16, #tpu.memory_space<vmem>>, %arg5: memref<384x1xf32, #tpu.memory_space<vmem>>, %arg6: memref<1x128x1024xf32, #tpu.memory_space<vmem>>, %arg7: memref<1x128x1024xf32, #tpu.memory_space<vmem>>, %arg8: memref<1x128x1024xf32, #tpu.memory_space<vmem>>) attributes {dimension_semantics = [#tpu.dimension_semantics<parallel>, #tpu.dimension_semantics<parallel>], iteration_bounds = array<i64: 2, 2>, scalar_prefetch = 0 : i64, scratch_operands = 0 : i64, tpu.core_type = #tpu.core_type<tc>, window_params = [{transform_indices = @transform_0, window_bounds = array<i64: 1, 10, 1024>}, {transform_indices = @transform_1, window_bounds = array<i64: 1, 10, 128>}, {pipeline_mode = #tpu.pipeline_mode<synchronous>, transform_indices = @transform_2, window_bounds = array<i64: 384, 160>}, {pipeline_mode = #tpu.pipeline_mode<synchronous>, transform_indices = @transform_3, window_bounds = array<i64: 384, 1>}, {transform_indices = @transform_4, window_bounds = array<i64: 1, 128, 1024>}, {transform_indices = @transform_5, window_bounds = array<i64: 1, 128, 1024>}, {transform_indices = @transform_6, window_bounds = array<i64: 1, 128, 1024>}]} {
    %c0 = arith.constant 0 : index
    %c0_0 = arith.constant 0 : index
    %c0_1 = arith.constant 0 : index
    %0 = vector.load %arg2[%c0, %c0_0, %c0_1] : memref<1x10x1024xbf16, #tpu.memory_space<vmem>>, vector<1x10x1024xbf16>
    %1 = vector.shape_cast %0 : vector<1x10x1024xbf16> to vector<10x1024xbf16>
    %c0_2 = arith.constant 0 : index
    %c0_3 = arith.constant 0 : index
    %c0_4 = arith.constant 0 : index
    %2 = vector.load %arg3[%c0_2, %c0_3, %c0_4] : memref<1x10x128xbf16, #tpu.memory_space<vmem>>, vector<1x10x128xbf16>
    %3 = vector.shape_cast %2 : vector<1x10x128xbf16> to vector<10x128xbf16>
    %4 = tpu.concatenate %1, %3 in 1 : vector<10x1024xbf16>, vector<10x128xbf16> -> vector<10x1152xbf16>
    %5 = vector.extract_strided_slice %4 {offsets = [0, 0], sizes = [10, 1024], strides = [1, 1]} : vector<10x1152xbf16> to vector<10x1024xbf16>
    %6 = vector.extract_strided_slice %4 {offsets = [0, 1], sizes = [10, 1024], strides = [1, 1]} : vector<10x1152xbf16> to vector<10x1024xbf16>
    %7 = vector.extract_strided_slice %4 {offsets = [0, 2], sizes = [10, 1024], strides = [1, 1]} : vector<10x1152xbf16> to vector<10x1024xbf16>
    %8 = vector.extract_strided_slice %4 {offsets = [0, 3], sizes = [10, 1024], strides = [1, 1]} : vector<10x1152xbf16> to vector<10x1024xbf16>
    %9 = vector.extract_strided_slice %4 {offsets = [0, 4], sizes = [10, 1024], strides = [1, 1]} : vector<10x1152xbf16> to vector<10x1024xbf16>
    %10 = vector.extract_strided_slice %4 {offsets = [0, 5], sizes = [10, 1024], strides = [1, 1]} : vector<10x1152xbf16> to vector<10x1024xbf16>
    %11 = vector.extract_strided_slice %4 {offsets = [0, 6], sizes = [10, 1024], strides = [1, 1]} : vector<10x1152xbf16> to vector<10x1024xbf16>
    %12 = vector.extract_strided_slice %4 {offsets = [0, 7], sizes = [10, 1024], strides = [1, 1]} : vector<10x1152xbf16> to vector<10x1024xbf16>
    %13 = vector.extract_strided_slice %4 {offsets = [0, 8], sizes = [10, 1024], strides = [1, 1]} : vector<10x1152xbf16> to vector<10x1024xbf16>
    %14 = vector.extract_strided_slice %4 {offsets = [0, 9], sizes = [10, 1024], strides = [1, 1]} : vector<10x1152xbf16> to vector<10x1024xbf16>
    %15 = vector.extract_strided_slice %4 {offsets = [0, 10], sizes = [10, 1024], strides = [1, 1]} : vector<10x1152xbf16> to vector<10x1024xbf16>
    %16 = vector.extract_strided_slice %4 {offsets = [0, 11], sizes = [10, 1024], strides = [1, 1]} : vector<10x1152xbf16> to vector<10x1024xbf16>
    %17 = vector.extract_strided_slice %4 {offsets = [0, 12], sizes = [10, 1024], strides = [1, 1]} : vector<10x1152xbf16> to vector<10x1024xbf16>
    %18 = vector.extract_strided_slice %4 {offsets = [0, 13], sizes = [10, 1024], strides = [1, 1]} : vector<10x1152xbf16> to vector<10x1024xbf16>
    %19 = vector.extract_strided_slice %4 {offsets = [0, 14], sizes = [10, 1024], strides = [1, 1]} : vector<10x1152xbf16> to vector<10x1024xbf16>
    %20 = vector.extract_strided_slice %4 {offsets = [0, 15], sizes = [10, 1024], strides = [1, 1]} : vector<10x1152xbf16> to vector<10x1024xbf16>
    %21 = tpu.concatenate %5, %6, %7, %8, %9, %10, %11, %12, %13, %14, %15, %16, %17, %18, %19, %20 in 0 : vector<10x1024xbf16>, vector<10x1024xbf16>, vector<10x1024xbf16>, vector<10x1024xbf16>, vector<10x1024xbf16>, vector<10x1024xbf16>, vector<10x1024xbf16>, vector<10x1024xbf16>, vector<10x1024xbf16>, vector<10x1024xbf16>, vector<10x1024xbf16>, vector<10x1024xbf16>, vector<10x1024xbf16>, vector<10x1024xbf16>, vector<10x1024xbf16>, vector<10x1024xbf16> -> vector<160x1024xbf16>
    %c0_5 = arith.constant 0 : index
    %c0_6 = arith.constant 0 : index
    %22 = vector.load %arg4[%c0_5, %c0_6] : memref<384x160xbf16, #tpu.memory_space<vmem>>, vector<384x160xbf16>
    %cst = arith.constant dense<0.000000e+00> : vector<384x1024xf32>
    %23 = tpu.matmul %22, %21, %cst {dimension_numbers = #tpu.dot_dimension_numbers<[1], [0], [0], [1], [0, 0, 1, 1], [], []>} : vector<384x160xbf16>, vector<160x1024xbf16>, vector<384x1024xf32> -> vector<384x1024xf32>
    %c0_7 = arith.constant 0 : index
    %c0_8 = arith.constant 0 : index
    %24 = vector.load %arg5[%c0_7, %c0_8] : memref<384x1xf32, #tpu.memory_space<vmem>>, vector<384x1xf32>
    %25 = vector.broadcast %24 : vector<384x1xf32> to vector<384x1024xf32>
    %26 = arith.addf %23, %25 : vector<384x1024xf32>
    %cst_9 = arith.constant 0.000000e+00 : f32
    %27 = vector.broadcast %cst_9 : f32 to vector<384x1024xf32>
    %28 = arith.maximumf %26, %27 : vector<384x1024xf32>
    %29 = vector.extract_strided_slice %28 {offsets = [0, 0], sizes = [128, 1024], strides = [1, 1]} : vector<384x1024xf32> to vector<128x1024xf32>
    %c0_10 = arith.constant 0 : index
    %c0_11 = arith.constant 0 : index
    %c0_12 = arith.constant 0 : index
    %30 = vector.load %arg6[%c0_10, %c0_11, %c0_12] : memref<1x128x1024xf32, #tpu.memory_space<vmem>>, vector<1x128x1024xf32>
    %31 = vector.shape_cast %30 : vector<1x128x1024xf32> to vector<128x1024xf32>
    %32 = vector.shape_cast %29 : vector<128x1024xf32> to vector<1x128x1024xf32>
    tpu.vector_store %arg6[%c0_10, %c0_11, %c0_12], %32 {strides = array<i32>} : memref<1x128x1024xf32, #tpu.memory_space<vmem>>, vector<1x128x1024xf32>,
    %33 = vector.extract_strided_slice %28 {offsets = [128, 0], sizes = [128, 1024], strides = [1, 1]} : vector<384x1024xf32> to vector<128x1024xf32>
    %c0_13 = arith.constant 0 : index
    %c0_14 = arith.constant 0 : index
    %c0_15 = arith.constant 0 : index
    %34 = vector.load %arg7[%c0_13, %c0_14, %c0_15] : memref<1x128x1024xf32, #tpu.memory_space<vmem>>, vector<1x128x1024xf32>
    %35 = vector.shape_cast %34 : vector<1x128x1024xf32> to vector<128x1024xf32>
    %36 = vector.shape_cast %33 : vector<128x1024xf32> to vector<1x128x1024xf32>
    tpu.vector_store %arg7[%c0_13, %c0_14, %c0_15], %36 {strides = array<i32>} : memref<1x128x1024xf32, #tpu.memory_space<vmem>>, vector<1x128x1024xf32>,
    %37 = vector.extract_strided_slice %28 {offsets = [256, 0], sizes = [128, 1024], strides = [1, 1]} : vector<384x1024xf32> to vector<128x1024xf32>
    %c0_16 = arith.constant 0 : index
    %c0_17 = arith.constant 0 : index
    %c0_18 = arith.constant 0 : index
    %38 = vector.load %arg8[%c0_16, %c0_17, %c0_18] : memref<1x128x1024xf32, #tpu.memory_space<vmem>>, vector<1x128x1024xf32>
    %39 = vector.shape_cast %38 : vector<1x128x1024xf32> to vector<128x1024xf32>
    %40 = vector.shape_cast %37 : vector<128x1024xf32> to vector<1x128x1024xf32>
    tpu.vector_store %arg8[%c0_16, %c0_17, %c0_18], %40 {strides = array<i32>} : memref<1x128x1024xf32, #tpu.memory_space<vmem>>, vector<1x128x1024xf32>,
    return
  }
  func.func @transform_0(%arg0: i32, %arg1: i32) -> (i32, i32, i32) {
    %c0_i32 = arith.constant 0 : i32
    %c0_i32_0 = arith.constant 0 : i32
    return %arg0, %c0_i32, %arg1 : i32, i32, i32
  }
  func.func @transform_1(%arg0: i32, %arg1: i32) -> (i32, i32, i32) {
    %c1_i32 = arith.constant 1 : i32
    %0 = arith.addi %arg1, %c1_i32 : i32
    %c8_i32 = arith.constant 8 : i32
    %1 = arith.muli %0, %c8_i32 : i32
    %c0_i32 = arith.constant 0 : i32
    %c0_i32_0 = arith.constant 0 : i32
    return %arg0, %c0_i32, %1 : i32, i32, i32
  }
  func.func @transform_2(%arg0: i32, %arg1: i32) -> (i32, i32) {
    %c0_i32 = arith.constant 0 : i32
    %c0_i32_0 = arith.constant 0 : i32
    %c0_i32_1 = arith.constant 0 : i32
    return %c0_i32, %c0_i32_0 : i32, i32
  }
  func.func @transform_3(%arg0: i32, %arg1: i32) -> (i32, i32) {
    %c0_i32 = arith.constant 0 : i32
    %c0_i32_0 = arith.constant 0 : i32
    %c0_i32_1 = arith.constant 0 : i32
    return %c0_i32, %c0_i32_0 : i32, i32
  }
  func.func @transform_4(%arg0: i32, %arg1: i32) -> (i32, i32, i32) {
    %c0_i32 = arith.constant 0 : i32
    %c0_i32_0 = arith.constant 0 : i32
    return %arg0, %c0_i32, %arg1 : i32, i32, i32
  }
  func.func @transform_5(%arg0: i32, %arg1: i32) -> (i32, i32, i32) {
    %c0_i32 = arith.constant 0 : i32
    %c0_i32_0 = arith.constant 0 : i32
    return %arg0, %c0_i32, %arg1 : i32, i32, i32
  }
  func.func @transform_6(%arg0: i32, %arg1: i32) -> (i32, i32, i32) {
    %c0_i32 = arith.constant 0 : i32
    %c0_i32_0 = arith.constant 0 : i32
    return %arg0, %c0_i32, %arg1 : i32, i32, i32
  }
}

</mosaic_0001>

<llo_original>
// kernel: encoder_forward.1
$region0: #{encoder_forward.1}
  #allocation0 [shape = 'u32[]', space=smem, size = 0x4, offset = 0x4, fixed_abs, tag = 'smem constant byte address 0x4 - core index']
  #allocation1 [shape = 'u32[144,128]{1,0:T(1,128)}', space=vmem, size = 0x12000, scoped, tag = 'internal scratch']
  %s0 = inlined_call_operand.vmem [shape: bf16[2,10,2176], index: 0, kind: input, shape index: {}, may-alias: {0,1}]
  %s1 = inlined_call_operand.vmem [shape: bf16[2,10,2176], index: 1, kind: input, shape index: {}, may-alias: {0,1}]
  %s2 = inlined_call_operand.vmem [shape: bf16[384,160], index: 2, kind: input, shape index: {}]
  %s3 = inlined_call_operand.vmem [shape: f32[384,1], index: 3, kind: input, shape index: {}]
  %s4 = inlined_call_operand.vmem [shape: f32[2,128,1250], index: 4, kind: output, shape index: {0}]
  %s5 = inlined_call_operand.vmem [shape: f32[2,128,1250], index: 5, kind: output, shape index: {1}]
  %s6 = inlined_call_operand.vmem [shape: f32[2,128,1250], index: 6, kind: output, shape index: {2}]
  %7 = xla_tuple %s4, %s5, %s6
  %s8 = sld [smem:[#allocation0]]
  $region358: #{encoder_forward.1} parent=0
    _
  %s10 = ssub.s32 1, %s8
  %s11 = scalar_select 0, %s10, %s8
  $region1: #{encoder_forward.1} parent=0
    #allocation2 [shape = 'u8[65536]{0}', space=vmem, size = 0x10000, scoped, tag = 'input window, operand 0']
    #allocation3 [shape = 'u8[8192]{0}', space=vmem, size = 0x2000, scoped, tag = 'input window, operand 1']
    #allocation4 [shape = 'u8[1048576]{0}', space=vmem, size = 0x100000, scoped, tag = 'output window, operand 0']
    #allocation5 [shape = 'u8[1048576]{0}', space=vmem, size = 0x100000, scoped, tag = 'output window, operand 1']
    #allocation6 [shape = 'u8[1048576]{0}', space=vmem, size = 0x100000, scoped, tag = 'output window, operand 2']
    loop: start=0, step=1, limit=6
    $region2: #{encoder_forward.1} parent=1 // loop_pre_header
      _
    $region3: #{encoder_forward.1} parent=1 // loop_header
      %s13 = sphi 0, %s17
      %p14 = scmp.ge.s32.totalorder %s13, 6
      %s20 = sphi 0, %s32
      %s21 = sphi 0, %s28
      %s22 = sphi 0, %s20
      %s23 = sphi 0, %s21
      %s24 = sphi 0, %s22
      %s25 = sphi 0, %s23
      %s37 = sphi 0, %s39
      %s40 = sphi 0, %s37
      %s41 = sphi 0, %s40
      %s57 = sphi 0, %s41
      %s69 = sphi 0, %s71
      %s72 = sphi 0, %s69
      %s73 = sphi 0, %s72
      %s89 = sphi 0, %s73
      %s93 = sphi 0, %s93
      %s95 = sphi 0, %s93
      %s96 = sphi 0, %s95
      %s110 = sphi 0, %s96
      %s114 = sphi 0, %s114
      %s116 = sphi 0, %s114
      %s117 = sphi 0, %s116
      %s131 = sphi 0, %s117
      %s139 = sphi 0, %s141
      %s142 = sphi 0, %s139
      %s143 = sphi 0, %s142
      %s159 = sphi 0, %s143
      %s167 = sphi 0, %s169
      %s170 = sphi 0, %s167
      %s171 = sphi 0, %s170
      %s187 = sphi 0, %s171
      %s195 = sphi 0, %s197
      %s198 = sphi 0, %s195
      %s199 = sphi 0, %s198
      %s215 = sphi 0, %s199
    $region4: #{encoder_forward.1} parent=1 // loop_header_branch
      %16 = sbr.rel (%p14) target = $region8
    $region5: #{encoder_forward.1} parent=1 // loop_body
      %s18 = ssub.s32 %s13, 1
      %s19 = ssub.s32 %s13, 2
      %s26 = sadd.s32 1, %s21
      %p27 = scmp.ge.s32.totalorder %s26, 2
      %s28 = scalar_select %p27, 0, %s26
      %s29 = sadd.s32 1, %s20
      %s30 = scalar_select %p27, %s29, %s20
      %p31 = scmp.ge.s32.totalorder %s30, 2
      %s32 = scalar_select %p31, 0, %s30
      %s33 = ssub.s32 %s20, %s32
      %s34 = ssub.s32 %s21, %s28
      %s35 = sor.u32 %s33, %s34
      %p36 = scmp.eq.s32.totalorder %s35, 0
      %s38 = sadd.s32 %s37, 1
      %s39 = scalar_select %p36, %s37, %s38
      %p42 = pneg %p36
      %p43 = scmp.eq.s32.totalorder %s13, 3
      %p44 = por %p42, %p43
      %p45 = scmp.ne.s32.totalorder %s37, %s40
      %p46 = scmp.eq.s32.totalorder %s13, 0
      %p47 = por %p45, %p46
      %p48 = scmp.ne.s32.totalorder %s37, %s40
      %p49 = scmp.eq.s32.totalorder %s18, 3
      %p50 = por %p48, %p49
      %p51 = scmp.ne.s32.totalorder %s40, %s41
      %p52 = scmp.eq.s32.totalorder %s18, 0
      %p53 = por %p51, %p52
      %p54 = scmp.ne.s32.totalorder %s40, %s41
      %p55 = scmp.eq.s32.totalorder %s19, 3
      %p56 = por %p54, %p55
      %p58 = scmp.ne.s32.totalorder %s41, %s57
      %p59 = scmp.eq.s32.totalorder %s19, 0
      %p60 = por %p58, %p59
      %s61 = sadd.s32 %s21, 1
      %s62 = smul.u32 %s61, 8
      %s63 = sadd.s32 %s28, 1
      %s64 = smul.u32 %s63, 8
      %s65 = ssub.s32 %s20, %s32
      %s66 = ssub.s32 %s62, %s64
      %s67 = sor.u32 %s65, %s66
      %p68 = scmp.eq.s32.totalorder %s67, 0
      %s70 = sadd.s32 %s69, 1
      %s71 = scalar_select %p68, %s69, %s70
      %p74 = pneg %p68
      %p75 = scmp.eq.s32.totalorder %s13, 3
      %p76 = por %p74, %p75
      %p77 = scmp.ne.s32.totalorder %s69, %s72
      %p78 = scmp.eq.s32.totalorder %s13, 0
      %p79 = por %p77, %p78
      %p80 = scmp.ne.s32.totalorder %s69, %s72
      %p81 = scmp.eq.s32.totalorder %s18, 3
      %p82 = por %p80, %p81
      %p83 = scmp.ne.s32.totalorder %s72, %s73
      %p84 = scmp.eq.s32.totalorder %s18, 0
      %p85 = por %p83, %p84
      %p86 = scmp.ne.s32.totalorder %s72, %s73
      %p87 = scmp.eq.s32.totalorder %s19, 3
      %p88 = por %p86, %p87
      %p90 = scmp.ne.s32.totalorder %s73, %s89
      %p91 = scmp.eq.s32.totalorder %s19, 0
      %p92 = por %p90, %p91
      %s94 = sadd.s32 %s93, 1
      %p97 = scmp.eq.s32.totalorder %s13, 3
      %p98 = scmp.ne.s32.totalorder %s93, %s95
      %p99 = scmp.eq.s32.totalorder %s13, 0
      %p100 = por %p98, %p99
      %p101 = scmp.ne.s32.totalorder %s93, %s95
      %p102 = scmp.eq.s32.totalorder %s18, 3
      %p103 = por %p101, %p102
      %p104 = scmp.ne.s32.totalorder %s95, %s96
      %p105 = scmp.eq.s32.totalorder %s18, 0
      %p106 = por %p104, %p105
      %p107 = scmp.ne.s32.totalorder %s95, %s96
      %p108 = scmp.eq.s32.totalorder %s19, 3
      %p109 = por %p107, %p108
      %p111 = scmp.ne.s32.totalorder %s96, %s110
      %p112 = scmp.eq.s32.totalorder %s19, 0
      %p113 = por %p111, %p112
      %s115 = sadd.s32 %s114, 1
      %p118 = scmp.eq.s32.totalorder %s13, 3
      %p119 = scmp.ne.s32.totalorder %s114, %s116
      %p120 = scmp.eq.s32.totalorder %s13, 0
      %p121 = por %p119, %p120
      %p122 = scmp.ne.s32.totalorder %s114, %s116
      %p123 = scmp.eq.s32.totalorder %s18, 3
      %p124 = por %p122, %p123
      %p125 = scmp.ne.s32.totalorder %s116, %s117
      %p126 = scmp.eq.s32.totalorder %s18, 0
      %p127 = por %p125, %p126
      %p128 = scmp.ne.s32.totalorder %s116, %s117
      %p129 = scmp.eq.s32.totalorder %s19, 3
      %p130 = por %p128, %p129
      %p132 = scmp.ne.s32.totalorder %s117, %s131
      %p133 = scmp.eq.s32.totalorder %s19, 0
      %p134 = por %p132, %p133
      %s135 = ssub.s32 %s20, %s32
      %s136 = ssub.s32 %s21, %s28
      %s137 = sor.u32 %s135, %s136
      %p138 = scmp.eq.s32.totalorder %s137, 0
      %s140 = sadd.s32 %s139, 1
      %s141 = scalar_select %p138, %s139, %s140
      %p144 = pneg %p138
      %p145 = scmp.eq.s32.totalorder %s13, 3
      %p146 = por %p144, %p145
      %p147 = scmp.ne.s32.totalorder %s139, %s142
      %p148 = scmp.eq.s32.totalorder %s13, 0
      %p149 = por %p147, %p148
      %p150 = scmp.ne.s32.totalorder %s139, %s142
      %p151 = scmp.eq.s32.totalorder %s18, 3
      %p152 = por %p150, %p151
      %p153 = scmp.ne.s32.totalorder %s142, %s143
      %p154 = scmp.eq.s32.totalorder %s18, 0
      %p155 = por %p153, %p154
      %p156 = scmp.ne.s32.totalorder %s142, %s143
      %p157 = scmp.eq.s32.totalorder %s19, 3
      %p158 = por %p156, %p157
      %p160 = scmp.ne.s32.totalorder %s143, %s159
      %p161 = scmp.eq.s32.totalorder %s19, 0
      %p162 = por %p160, %p161
      %s163 = ssub.s32 %s20, %s32
      %s164 = ssub.s32 %s21, %s28
      %s165 = sor.u32 %s163, %s164
      %p166 = scmp.eq.s32.totalorder %s165, 0
      %s168 = sadd.s32 %s167, 1
      %s169 = scalar_select %p166, %s167, %s168
      %p172 = pneg %p166
      %p173 = scmp.eq.s32.totalorder %s13, 3
      %p174 = por %p172, %p173
      %p175 = scmp.ne.s32.totalorder %s167, %s170
      %p176 = scmp.eq.s32.totalorder %s13, 0
      %p177 = por %p175, %p176
      %p178 = scmp.ne.s32.totalorder %s167, %s170
      %p179 = scmp.eq.s32.totalorder %s18, 3
      %p180 = por %p178, %p179
      %p181 = scmp.ne.s32.totalorder %s170, %s171
      %p182 = scmp.eq.s32.totalorder %s18, 0
      %p183 = por %p181, %p182
      %p184 = scmp.ne.s32.totalorder %s170, %s171
      %p185 = scmp.eq.s32.totalorder %s19, 3
      %p186 = por %p184, %p185
      %p188 = scmp.ne.s32.totalorder %s171, %s187
      %p189 = scmp.eq.s32.totalorder %s19, 0
      %p190 = por %p188, %p189
      %s191 = ssub.s32 %s20, %s32
      %s192 = ssub.s32 %s21, %s28
      %s193 = sor.u32 %s191, %s192
      %p194 = scmp.eq.s32.totalorder %s193, 0
      %s196 = sadd.s32 %s195, 1
      %s197 = scalar_select %p194, %s195, %s196
      %p200 = pneg %p194
      %p201 = scmp.eq.s32.totalorder %s13, 3
      %p202 = por %p200, %p201
      %p203 = scmp.ne.s32.totalorder %s195, %s198
      %p204 = scmp.eq.s32.totalorder %s13, 0
      %p205 = por %p203, %p204
      %p206 = scmp.ne.s32.totalorder %s195, %s198
      %p207 = scmp.eq.s32.totalorder %s18, 3
      %p208 = por %p206, %p207
      %p209 = scmp.ne.s32.totalorder %s198, %s199
      %p210 = scmp.eq.s32.totalorder %s18, 0
      %p211 = por %p209, %p210
      %p212 = scmp.ne.s32.totalorder %s198, %s199
      %p213 = scmp.eq.s32.totalorder %s19, 3
      %p214 = por %p212, %p213
      %p216 = scmp.ne.s32.totalorder %s199, %s215
      %p217 = scmp.eq.s32.totalorder %s19, 0
      %p218 = por %p216, %p217
      %p219 = scmp.le.s32.totalorder 1, %s13
      %p220 = scmp.lt.s32.totalorder %s13, 5
      %p221 = pnand %p219, %p220
      %p222 = pneg %p221
      // Predicated region
      $region9: #{encoder_forward.1} parent=5 // pred_check
        _
      $region10: #{encoder_forward.1} parent=5 // pred_check_branch
        %224 = sbr.rel (%p221) target = $region12
      $region11: #{encoder_forward.1} parent=5 // pred_region
        %s225 = ssub.s32 %s13, 1
        // Predicated region
        $region13: #{encoder_forward.1} parent=11 // pred_check
          %p226 = pneg %p106
        $region14: #{encoder_forward.1} parent=11 // pred_check_branch
          %228 = sbr.rel (%p226) target = $region16
        $region15: #{encoder_forward.1} parent=11 // pred_region
          _
        $region16: #{encoder_forward.1} parent=11 // pred_fallthru
          _
        // Predicated region
        $region17: #{encoder_forward.1} parent=11 // pred_check
          %p229 = pneg %p127
        $region18: #{encoder_forward.1} parent=11 // pred_check_branch
          %231 = sbr.rel (%p229) target = $region20
        $region19: #{encoder_forward.1} parent=11 // pred_region
          _
        $region20: #{encoder_forward.1} parent=11 // pred_fallthru
          _
      $region12: #{encoder_forward.1} parent=5 // pred_fallthru
        _
      %p232 = scmp.lt.s32.totalorder %s13, 4
      // Predicated region
      $region21: #{encoder_forward.1} parent=5 // pred_check
        %p233 = pneg %p232
      $region22: #{encoder_forward.1} parent=5 // pred_check_branch
        %235 = sbr.rel (%p233) target = $region24
      $region23: #{encoder_forward.1} parent=5 // pred_region
        // Predicated region
        $region25: #{encoder_forward.1} parent=23 // pred_check
          %p236 = pneg %p47
        $region26: #{encoder_forward.1} parent=23 // pred_check_branch
          %238 = sbr.rel (%p236) target = $region28
        $region27: #{encoder_forward.1} parent=23 // pred_region
          %s239 = sand.u32 %s37, 1
          %s240 = sand.u32 %s37, 1
          %s241 = smul.addr %s240, 64
          %s242 = scalar_lea.vmem [#allocation2], %s241
          %s243 = smul.u32 8, %s21
          %s244 = ssub.s32 17, %s243
          %p245 = scmp.lt.s32.totalorder %s244, 8
          %s246 = scalar_select %p245, %s244, 8
          %s247 = smul.u32 128, %s246
          %p248 = scmp.ne.s32.totalorder 0, %s247
          %s249 = smul.addr %s20, 34
          %s250 = sadd.s32 %s243, %s249
          %s251 = smul.addr %s250, 4
          %s252 = scalar_lea.vmem %s0, %s251
          %s253 = smul.u32 %s246, 4
          // Predicated region
          $region29: #{encoder_forward.1} parent=27 // pred_check
            %p254 = pneg %p248
          $region30: #{encoder_forward.1} parent=27 // pred_check_branch
            %256 = sbr.rel (%p254) target = $region32
          $region31: #{encoder_forward.1} parent=27 // pred_region
            %p257 = scmp.lt.u32.totalorder %s253, 8
            %p258 = pneg %p257
            // Predicated region
            $region33: #{encoder_forward.1} parent=31 // pred_check
              _
            $region34: #{encoder_forward.1} parent=31 // pred_check_branch
              %260 = sbr.rel (%p257) target = $region36
            $region35: #{encoder_forward.1} parent=31 // pred_region
              %s277 = sand.u32 %s253, 7
              %p278 = scmp.eq.s32.totalorder %s277, 0
              // Predicated region
              $region48: #{encoder_forward.1} parent=35 // pred_check
                %p279 = pneg %p278
              $region49: #{encoder_forward.1} parent=35 // pred_check_branch
                %281 = sbr.rel (%p279) target = $region51
              $region50: #{encoder_forward.1} parent=35 // pred_region
                %s282 = sshrl.u32 %s253, 3
                %s283 = sshrl.u32 %s282, 5
                // While loop
                $region52: #{encoder_forward.1} parent=50 // loop_pre_header
                  _
                $region53: #{encoder_forward.1} parent=50 // loop_header
                  %s287 = sphi 0, %s289
                  %p288 = scmp.ge.s32.totalorder %s287, %s283
                  %s292 = sphi 0, %s425
                  %s293 = sphi %s252, %s428
                  %s294 = sphi %s242, %s429
                $region54: #{encoder_forward.1} parent=50 // loop_header_branch
                  %291 = sbr.rel (%p288) target = $region58
                $region55: #{encoder_forward.1} parent=50 // loop_body
                  %v295 = vld [vmem:[%s293] sm:$0xff]
                  %296 = vst [vmem:[%s294] sm:$0xff] %v295
                  %v297 = vld [vmem:[%s293 + $0x8] sm:$0xff]
                  %298 = vst [vmem:[%s294 + $0x8] sm:$0xff] %v297
                  %v299 = vld [vmem:[%s293 + $0x10] sm:$0xff]
                  %300 = vst [vmem:[%s294 + $0x10] sm:$0xff] %v299
                  %v301 = vld [vmem:[%s293 + $0x18] sm:$0xff]
                  %302 = vst [vmem:[%s294 + $0x18] sm:$0xff] %v301
                  %v303 = vld [vmem:[%s293 + $0x20] sm:$0xff]
                  %304 = vst [vmem:[%s294 + $0x20] sm:$0xff] %v303
                  %v305 = vld [vmem:[%s293 + $0x28] sm:$0xff]
                  %306 = vst [vmem:[%s294 + $0x28] sm:$0xff] %v305
                  %v307 = vld [vmem:[%s293 + $0x30] sm:$0xff]
                  %308 = vst [vmem:[%s294 + $0x30] sm:$0xff] %v307
                  %v309 = vld [vmem:[%s293 + $0x38] sm:$0xff]
                  %310 = vst [vmem:[%s294 + $0x38] sm:$0xff] %v309
                  %v311 = vld [vmem:[%s293 + $0x40] sm:$0xff]
                  %312 = vst [vmem:[%s294 + $0x40] sm:$0xff] %v311
                  %v313 = vld [vmem:[%s293 + $0x48] sm:$0xff]
                  %314 = vst [vmem:[%s294 + $0x48] sm:$0xff] %v313
                  %v315 = vld [vmem:[%s293 + $0x50] sm:$0xff]
                  %316 = vst [vmem:[%s294 + $0x50] sm:$0xff] %v315
                  %v317 = vld [vmem:[%s293 + $0x58] sm:$0xff]
                  %318 = vst [vmem:[%s294 + $0x58] sm:$0xff] %v317
                  %v319 = vld [vmem:[%s293 + $0x60] sm:$0xff]
                  %320 = vst [vmem:[%s294 + $0x60] sm:$0xff] %v319
                  %v321 = vld [vmem:[%s293 + $0x68] sm:$0xff]
                  %322 = vst [vmem:[%s294 + $0x68] sm:$0xff] %v321
                  %v323 = vld [vmem:[%s293 + $0x70] sm:$0xff]
                  %324 = vst [vmem:[%s294 + $0x70] sm:$0xff] %v323
                  %v325 = vld [vmem:[%s293 + $0x78] sm:$0xff]
                  %326 = vst [vmem:[%s294 + $0x78] sm:$0xff] %v325
                  %v327 = vld [vmem:[%s293 + $0x80] sm:$0xff]
                  %328 = vst [vmem:[%s294 + $0x80] sm:$0xff] %v327
                  %v329 = vld [vmem:[%s293 + $0x88] sm:$0xff]
                  %330 = vst [vmem:[%s294 + $0x88] sm:$0xff] %v329
                  %v331 = vld [vmem:[%s293 + $0x90] sm:$0xff]
                  %332 = vst [vmem:[%s294 + $0x90] sm:$0xff] %v331
                  %v333 = vld [vmem:[%s293 + $0x98] sm:$0xff]
                  %334 = vst [vmem:[%s294 + $0x98] sm:$0xff] %v333
                  %v335 = vld [vmem:[%s293 + $0xa0] sm:$0xff]
                  %336 = vst [vmem:[%s294 + $0xa0] sm:$0xff] %v335
                  %v337 = vld [vmem:[%s293 + $0xa8] sm:$0xff]
                  %338 = vst [vmem:[%s294 + $0xa8] sm:$0xff] %v337
                  %v339 = vld [vmem:[%s293 + $0xb0] sm:$0xff]
                  %340 = vst [vmem:[%s294 + $0xb0] sm:$0xff] %v339
                  %v341 = vld [vmem:[%s293 + $0xb8] sm:$0xff]
                  %342 = vst [vmem:[%s294 + $0xb8] sm:$0xff] %v341
                  %v343 = vld [vmem:[%s293 + $0xc0] sm:$0xff]
                  %344 = vst [vmem:[%s294 + $0xc0] sm:$0xff] %v343
                  %v345 = vld [vmem:[%s293 + $0xc8] sm:$0xff]
                  %346 = vst [vmem:[%s294 + $0xc8] sm:$0xff] %v345
                  %v347 = vld [vmem:[%s293 + $0xd0] sm:$0xff]
                  %348 = vst [vmem:[%s294 + $0xd0] sm:$0xff] %v347
                  %v349 = vld [vmem:[%s293 + $0xd8] sm:$0xff]
                  %350 = vst [vmem:[%s294 + $0xd8] sm:$0xff] %v349
                  %v351 = vld [vmem:[%s293 + $0xe0] sm:$0xff]
                  %352 = vst [vmem:[%s294 + $0xe0] sm:$0xff] %v351
                  %v353 = vld [vmem:[%s293 + $0xe8] sm:$0xff]
                  %354 = vst [vmem:[%s294 + $0xe8] sm:$0xff] %v353
                  %v355 = vld [vmem:[%s293 + $0xf0] sm:$0xff]
                  %356 = vst [vmem:[%s294 + $0xf0] sm:$0xff] %v355
                  %v357 = vld [vmem:[%s293 + $0xf8] sm:$0xff]
                  %358 = vst [vmem:[%s294 + $0xf8] sm:$0xff] %v357
                  %v359 = vld [vmem:[%s293 + $0x44] sm:$0xff]
                  %360 = vst [vmem:[%s294 + $0x20] sm:$0xff] %v359
                  %v361 = vld [vmem:[%s293 + $0x4c] sm:$0xff]
                  %362 = vst [vmem:[%s294 + $0x28] sm:$0xff] %v361
                  %v363 = vld [vmem:[%s293 + $0x54] sm:$0xff]
                  %364 = vst [vmem:[%s294 + $0x30] sm:$0xff] %v363
                  %v365 = vld [vmem:[%s293 + $0x5c] sm:$0xff]
                  %366 = vst [vmem:[%s294 + $0x38] sm:$0xff] %v365
                  %v367 = vld [vmem:[%s293 + $0x64] sm:$0xff]
                  %368 = vst [vmem:[%s294 + $0x40] sm:$0xff] %v367
                  %v369 = vld [vmem:[%s293 + $0x6c] sm:$0xff]
                  %370 = vst [vmem:[%s294 + $0x48] sm:$0xff] %v369
                  %v371 = vld [vmem:[%s293 + $0x74] sm:$0xff]
                  %372 = vst [vmem:[%s294 + $0x50] sm:$0xff] %v371
                  %v373 = vld [vmem:[%s293 + $0x7c] sm:$0xff]
                  %374 = vst [vmem:[%s294 + $0x58] sm:$0xff] %v373
                  %v375 = vld [vmem:[%s293 + $0x84] sm:$0xff]
                  %376 = vst [vmem:[%s294 + $0x60] sm:$0xff] %v375
                  %v377 = vld [vmem:[%s293 + $0x8c] sm:$0xff]
                  %378 = vst [vmem:[%s294 + $0x68] sm:$0xff] %v377
                  %v379 = vld [vmem:[%s293 + $0x94] sm:$0xff]
                  %380 = vst [vmem:[%s294 + $0x70] sm:$0xff] %v379
                  %v381 = vld [vmem:[%s293 + $0x9c] sm:$0xff]
                  %382 = vst [vmem:[%s294 + $0x78] sm:$0xff] %v381
                  %v383 = vld [vmem:[%s293 + $0xa4] sm:$0xff]
                  %384 = vst [vmem:[%s294 + $0x80] sm:$0xff] %v383
                  %v385 = vld [vmem:[%s293 + $0xac] sm:$0xff]
                  %386 = vst [vmem:[%s294 + $0x88] sm:$0xff] %v385
                  %v387 = vld [vmem:[%s293 + $0xb4] sm:$0xff]
                  %388 = vst [vmem:[%s294 + $0x90] sm:$0xff] %v387
                  %v389 = vld [vmem:[%s293 + $0xbc] sm:$0xff]
                  %390 = vst [vmem:[%s294 + $0x98] sm:$0xff] %v389
                  %v391 = vld [vmem:[%s293 + $0xc4] sm:$0xff]
                  %392 = vst [vmem:[%s294 + $0xa0] sm:$0xff] %v391
                  %v393 = vld [vmem:[%s293 + $0xcc] sm:$0xff]
                  %394 = vst [vmem:[%s294 + $0xa8] sm:$0xff] %v393
                  %v395 = vld [vmem:[%s293 + $0xd4] sm:$0xff]
                  %396 = vst [vmem:[%s294 + $0xb0] sm:$0xff] %v395
                  %v397 = vld [vmem:[%s293 + $0xdc] sm:$0xff]
                  %398 = vst [vmem:[%s294 + $0xb8] sm:$0xff] %v397
                  %v399 = vld [vmem:[%s293 + $0xe4] sm:$0xff]
                  %400 = vst [vmem:[%s294 + $0xc0] sm:$0xff] %v399
                  %v401 = vld [vmem:[%s293 + $0xec] sm:$0xff]
                  %402 = vst [vmem:[%s294 + $0xc8] sm:$0xff] %v401
                  %v403 = vld [vmem:[%s293 + $0xf4] sm:$0xff]
                  %404 = vst [vmem:[%s294 + $0xd0] sm:$0xff] %v403
                  %v405 = vld [vmem:[%s293 + $0xfc] sm:$0xff]
                  %406 = vst [vmem:[%s294 + $0xd8] sm:$0xff] %v405
                  %v407 = vld [vmem:[%s293 + $0x104] sm:$0xff]
                  %408 = vst [vmem:[%s294 + $0xe0] sm:$0xff] %v407
                  %v409 = vld [vmem:[%s293 + $0x10c] sm:$0xff]
                  %410 = vst [vmem:[%s294 + $0xe8] sm:$0xff] %v409
                  %v411 = vld [vmem:[%s293 + $0x114] sm:$0xff]
                  %412 = vst [vmem:[%s294 + $0xf0] sm:$0xff] %v411
                  %v413 = vld [vmem:[%s293 + $0x11c] sm:$0xff]
                  %414 = vst [vmem:[%s294 + $0xf8] sm:$0xff] %v413
                  %v415 = vld [vmem:[%s293 + $0x124] sm:$0xff]
                  %416 = vst [vmem:[%s294 + $0x100] sm:$0xff] %v415
                  %v417 = vld [vmem:[%s293 + $0x12c] sm:$0xff]
                  %418 = vst [vmem:[%s294 + $0x108] sm:$0xff] %v417
                  %v419 = vld [vmem:[%s293 + $0x134] sm:$0xff]
                  %420 = vst [vmem:[%s294 + $0x110] sm:$0xff] %v419
                  %v421 = vld [vmem:[%s293 + $0x13c] sm:$0xff]
                  %422 = vst [vmem:[%s294 + $0x118] sm:$0xff] %v421
                  %s423 = sadd.s32 1, %s292
                  %p424 = scmp.ge.s32.totalorder %s423, %s283
                  %s425 = scalar_select %p424, 0, %s423
                  %s426 = smul.u32 %s425, 256
                  %s427 = smul.u32 %s425, 256
                  %s428 = scalar_lea.vmem %s252, %s426
                  %s429 = scalar_lea.vmem %s242, %s427 [#allocation2]
                $region56: #{encoder_forward.1} parent=50 // loop_footer
                  %s289 = sadd.s32 %s287, 1
                $region57: #{encoder_forward.1} parent=50 // loop_footer_branch
                  %286 = sbr.rel target = $region53
                $region58: #{encoder_forward.1} parent=50 // loop_exit
                  _
                %s430 = sshrl.u32 %s282, 5
                %s431 = sand.u32 %s282, 31
                %s432 = smul.u32 %s430, 32
                %s433 = smul.u32 128, %s432
                %s434 = sshra.s32 %s433, 4
                %s435 = scalar_lea.vmem %s252, %s434
                %s436 = smul.u32 128, %s432
                %s437 = sshra.s32 %s436, 4
                %s438 = scalar_lea.vmem %s242, %s437 [#allocation2]
                // While loop
                $region59: #{encoder_forward.1} parent=50 // loop_pre_header
                  _
                $region60: #{encoder_forward.1} parent=50 // loop_header
                  %s442 = sphi 0, %s444
                  %p443 = scmp.ge.s32.totalorder %s442, %s431
                  %s447 = sphi 0, %s456
                  %s448 = sphi %s435, %s459
                  %s449 = sphi %s438, %s460
                $region61: #{encoder_forward.1} parent=50 // loop_header_branch
                  %446 = sbr.rel (%p443) target = $region65
                $region62: #{encoder_forward.1} parent=50 // loop_body
                  %v450 = vld [vmem:[%s448] sm:$0xff]
                  %451 = vst [vmem:[%s449] sm:$0xff] %v450
                  %v452 = vld [vmem:[%s448 + $0x44] sm:$0xff]
                  %453 = vst [vmem:[%s449 + $0x20] sm:$0xff] %v452
                  %s454 = sadd.s32 1, %s447
                  %p455 = scmp.ge.s32.totalorder %s454, %s431
                  %s456 = scalar_select %p455, 0, %s454
                  %s457 = smul.u32 %s456, 8
                  %s458 = smul.u32 %s456, 8
                  %s459 = scalar_lea.vmem %s435, %s457
                  %s460 = scalar_lea.vmem %s438, %s458 [#allocation2]
                $region63: #{encoder_forward.1} parent=50 // loop_footer
                  %s444 = sadd.s32 %s442, 1
                $region64: #{encoder_forward.1} parent=50 // loop_footer_branch
                  %441 = sbr.rel target = $region60
                $region65: #{encoder_forward.1} parent=50 // loop_exit
                  _
              $region51: #{encoder_forward.1} parent=35 // pred_fallthru
                _
              %p461 = pneg %p278
              // Predicated region
              $region66: #{encoder_forward.1} parent=35 // pred_check
                _
              $region67: #{encoder_forward.1} parent=35 // pred_check_branch
                %463 = sbr.rel (%p278) target = $region69
              $region68: #{encoder_forward.1} parent=35 // pred_region
                %s464 = sand.u32 %s253, 7
                %s465 = ssub.s32 %s253, %s464
                %s466 = scalar_lea.vmem %s252, %s465
                %s467 = ssub.s32 %s253, %s464
                %s468 = scalar_lea.vmem %s242, %s467 [#allocation2]
                %s469 = sshrl.u32 %s253, 3
                %s470 = sshrl.u32 %s469, 5
                // While loop
                $region70: #{encoder_forward.1} parent=68 // loop_pre_header
                  _
                $region71: #{encoder_forward.1} parent=68 // loop_header
                  %s474 = sphi 0, %s476
                  %p475 = scmp.ge.s32.totalorder %s474, %s470
                  %s479 = sphi 0, %s612
                  %s480 = sphi %s252, %s615
                  %s481 = sphi %s242, %s616
                $region72: #{encoder_forward.1} parent=68 // loop_header_branch
                  %478 = sbr.rel (%p475) target = $region76
                $region73: #{encoder_forward.1} parent=68 // loop_body
                  %v482 = vld [vmem:[%s480] sm:$0xff]
                  %483 = vst [vmem:[%s481] sm:$0xff] %v482
                  %v484 = vld [vmem:[%s480 + $0x8] sm:$0xff]
                  %485 = vst [vmem:[%s481 + $0x8] sm:$0xff] %v484
                  %v486 = vld [vmem:[%s480 + $0x10] sm:$0xff]
                  %487 = vst [vmem:[%s481 + $0x10] sm:$0xff] %v486
                  %v488 = vld [vmem:[%s480 + $0x18] sm:$0xff]
                  %489 = vst [vmem:[%s481 + $0x18] sm:$0xff] %v488
                  %v490 = vld [vmem:[%s480 + $0x20] sm:$0xff]
                  %491 = vst [vmem:[%s481 + $0x20] sm:$0xff] %v490
                  %v492 = vld [vmem:[%s480 + $0x28] sm:$0xff]
                  %493 = vst [vmem:[%s481 + $0x28] sm:$0xff] %v492
                  %v494 = vld [vmem:[%s480 + $0x30] sm:$0xff]
                  %495 = vst [vmem:[%s481 + $0x30] sm:$0xff] %v494
                  %v496 = vld [vmem:[%s480 + $0x38] sm:$0xff]
                  %497 = vst [vmem:[%s481 + $0x38] sm:$0xff] %v496
                  %v498 = vld [vmem:[%s480 + $0x40] sm:$0xff]
                  %499 = vst [vmem:[%s481 + $0x40] sm:$0xff] %v498
                  %v500 = vld [vmem:[%s480 + $0x48] sm:$0xff]
                  %501 = vst [vmem:[%s481 + $0x48] sm:$0xff] %v500
                  %v502 = vld [vmem:[%s480 + $0x50] sm:$0xff]
                  %503 = vst [vmem:[%s481 + $0x50] sm:$0xff] %v502
                  %v504 = vld [vmem:[%s480 + $0x58] sm:$0xff]
                  %505 = vst [vmem:[%s481 + $0x58] sm:$0xff] %v504
                  %v506 = vld [vmem:[%s480 + $0x60] sm:$0xff]
                  %507 = vst [vmem:[%s481 + $0x60] sm:$0xff] %v506
                  %v508 = vld [vmem:[%s480 + $0x68] sm:$0xff]
                  %509 = vst [vmem:[%s481 + $0x68] sm:$0xff] %v508
                  %v510 = vld [vmem:[%s480 + $0x70] sm:$0xff]
                  %511 = vst [vmem:[%s481 + $0x70] sm:$0xff] %v510
                  %v512 = vld [vmem:[%s480 + $0x78] sm:$0xff]
                  %513 = vst [vmem:[%s481 + $0x78] sm:$0xff] %v512
                  %v514 = vld [vmem:[%s480 + $0x80] sm:$0xff]
                  %515 = vst [vmem:[%s481 + $0x80] sm:$0xff] %v514
                  %v516 = vld [vmem:[%s480 + $0x88] sm:$0xff]
                  %517 = vst [vmem:[%s481 + $0x88] sm:$0xff] %v516
                  %v518 = vld [vmem:[%s480 + $0x90] sm:$0xff]
                  %519 = vst [vmem:[%s481 + $0x90] sm:$0xff] %v518
                  %v520 = vld [vmem:[%s480 + $0x98] sm:$0xff]
                  %521 = vst [vmem:[%s481 + $0x98] sm:$0xff] %v520
                  %v522 = vld [vmem:[%s480 + $0xa0] sm:$0xff]
                  %523 = vst [vmem:[%s481 + $0xa0] sm:$0xff] %v522
                  %v524 = vld [vmem:[%s480 + $0xa8] sm:$0xff]
                  %525 = vst [vmem:[%s481 + $0xa8] sm:$0xff] %v524
                  %v526 = vld [vmem:[%s480 + $0xb0] sm:$0xff]
                  %527 = vst [vmem:[%s481 + $0xb0] sm:$0xff] %v526
                  %v528 = vld [vmem:[%s480 + $0xb8] sm:$0xff]
                  %529 = vst [vmem:[%s481 + $0xb8] sm:$0xff] %v528
                  %v530 = vld [vmem:[%s480 + $0xc0] sm:$0xff]
                  %531 = vst [vmem:[%s481 + $0xc0] sm:$0xff] %v530
                  %v532 = vld [vmem:[%s480 + $0xc8] sm:$0xff]
                  %533 = vst [vmem:[%s481 + $0xc8] sm:$0xff] %v532
                  %v534 = vld [vmem:[%s480 + $0xd0] sm:$0xff]
                  %535 = vst [vmem:[%s481 + $0xd0] sm:$0xff] %v534
                  %v536 = vld [vmem:[%s480 + $0xd8] sm:$0xff]
                  %537 = vst [vmem:[%s481 + $0xd8] sm:$0xff] %v536
                  %v538 = vld [vmem:[%s480 + $0xe0] sm:$0xff]
                  %539 = vst [vmem:[%s481 + $0xe0] sm:$0xff] %v538
                  %v540 = vld [vmem:[%s480 + $0xe8] sm:$0xff]
                  %541 = vst [vmem:[%s481 + $0xe8] sm:$0xff] %v540
                  %v542 = vld [vmem:[%s480 + $0xf0] sm:$0xff]
                  %543 = vst [vmem:[%s481 + $0xf0] sm:$0xff] %v542
                  %v544 = vld [vmem:[%s480 + $0xf8] sm:$0xff]
                  %545 = vst [vmem:[%s481 + $0xf8] sm:$0xff] %v544
                  %v546 = vld [vmem:[%s480 + $0x44] sm:$0xff]
                  %547 = vst [vmem:[%s481 + $0x20] sm:$0xff] %v546
                  %v548 = vld [vmem:[%s480 + $0x4c] sm:$0xff]
                  %549 = vst [vmem:[%s481 + $0x28] sm:$0xff] %v548
                  %v550 = vld [vmem:[%s480 + $0x54] sm:$0xff]
                  %551 = vst [vmem:[%s481 + $0x30] sm:$0xff] %v550
                  %v552 = vld [vmem:[%s480 + $0x5c] sm:$0xff]
                  %553 = vst [vmem:[%s481 + $0x38] sm:$0xff] %v552
                  %v554 = vld [vmem:[%s480 + $0x64] sm:$0xff]
                  %555 = vst [vmem:[%s481 + $0x40] sm:$0xff] %v554
                  %v556 = vld [vmem:[%s480 + $0x6c] sm:$0xff]
                  %557 = vst [vmem:[%s481 + $0x48] sm:$0xff] %v556
                  %v558 = vld [vmem:[%s480 + $0x74] sm:$0xff]
                  %559 = vst [vmem:[%s481 + $0x50] sm:$0xff] %v558
                  %v560 = vld [vmem:[%s480 + $0x7c] sm:$0xff]
                  %561 = vst [vmem:[%s481 + $0x58] sm:$0xff] %v560
                  %v562 = vld [vmem:[%s480 + $0x84] sm:$0xff]
                  %563 = vst [vmem:[%s481 + $0x60] sm:$0xff] %v562
                  %v564 = vld [vmem:[%s480 + $0x8c] sm:$0xff]
                  %565 = vst [vmem:[%s481 + $0x68] sm:$0xff] %v564
                  %v566 = vld [vmem:[%s480 + $0x94] sm:$0xff]
                  %567 = vst [vmem:[%s481 + $0x70] sm:$0xff] %v566
                  %v568 = vld [vmem:[%s480 + $0x9c] sm:$0xff]
                  %569 = vst [vmem:[%s481 + $0x78] sm:$0xff] %v568
                  %v570 = vld [vmem:[%s480 + $0xa4] sm:$0xff]
                  %571 = vst [vmem:[%s481 + $0x80] sm:$0xff] %v570
                  %v572 = vld [vmem:[%s480 + $0xac] sm:$0xff]
                  %573 = vst [vmem:[%s481 + $0x88] sm:$0xff] %v572
                  %v574 = vld [vmem:[%s480 + $0xb4] sm:$0xff]
                  %575 = vst [vmem:[%s481 + $0x90] sm:$0xff] %v574
                  %v576 = vld [vmem:[%s480 + $0xbc] sm:$0xff]
                  %577 = vst [vmem:[%s481 + $0x98] sm:$0xff] %v576
                  %v578 = vld [vmem:[%s480 + $0xc4] sm:$0xff]
                  %579 = vst [vmem:[%s481 + $0xa0] sm:$0xff] %v578
                  %v580 = vld [vmem:[%s480 + $0xcc] sm:$0xff]
                  %581 = vst [vmem:[%s481 + $0xa8] sm:$0xff] %v580
                  %v582 = vld [vmem:[%s480 + $0xd4] sm:$0xff]
                  %583 = vst [vmem:[%s481 + $0xb0] sm:$0xff] %v582
                  %v584 = vld [vmem:[%s480 + $0xdc] sm:$0xff]
                  %585 = vst [vmem:[%s481 + $0xb8] sm:$0xff] %v584
                  %v586 = vld [vmem:[%s480 + $0xe4] sm:$0xff]
                  %587 = vst [vmem:[%s481 + $0xc0] sm:$0xff] %v586
                  %v588 = vld [vmem:[%s480 + $0xec] sm:$0xff]
                  %589 = vst [vmem:[%s481 + $0xc8] sm:$0xff] %v588
                  %v590 = vld [vmem:[%s480 + $0xf4] sm:$0xff]
                  %591 = vst [vmem:[%s481 + $0xd0] sm:$0xff] %v590
                  %v592 = vld [vmem:[%s480 + $0xfc] sm:$0xff]
                  %593 = vst [vmem:[%s481 + $0xd8] sm:$0xff] %v592
                  %v594 = vld [vmem:[%s480 + $0x104] sm:$0xff]
                  %595 = vst [vmem:[%s481 + $0xe0] sm:$0xff] %v594
                  %v596 = vld [vmem:[%s480 + $0x10c] sm:$0xff]
                  %597 = vst [vmem:[%s481 + $0xe8] sm:$0xff] %v596
                  %v598 = vld [vmem:[%s480 + $0x114] sm:$0xff]
                  %599 = vst [vmem:[%s481 + $0xf0] sm:$0xff] %v598
                  %v600 = vld [vmem:[%s480 + $0x11c] sm:$0xff]
                  %601 = vst [vmem:[%s481 + $0xf8] sm:$0xff] %v600
                  %v602 = vld [vmem:[%s480 + $0x124] sm:$0xff]
                  %603 = vst [vmem:[%s481 + $0x100] sm:$0xff] %v602
                  %v604 = vld [vmem:[%s480 + $0x12c] sm:$0xff]
                  %605 = vst [vmem:[%s481 + $0x108] sm:$0xff] %v604
                  %v606 = vld [vmem:[%s480 + $0x134] sm:$0xff]
                  %607 = vst [vmem:[%s481 + $0x110] sm:$0xff] %v606
                  %v608 = vld [vmem:[%s480 + $0x13c] sm:$0xff]
                  %609 = vst [vmem:[%s481 + $0x118] sm:$0xff] %v608
                  %s610 = sadd.s32 1, %s479
                  %p611 = scmp.ge.s32.totalorder %s610, %s470
                  %s612 = scalar_select %p611, 0, %s610
                  %s613 = smul.u32 %s612, 256
                  %s614 = smul.u32 %s612, 256
                  %s615 = scalar_lea.vmem %s252, %s613
                  %s616 = scalar_lea.vmem %s242, %s614 [#allocation2]
                $region74: #{encoder_forward.1} parent=68 // loop_footer
                  %s476 = sadd.s32 %s474, 1
                $region75: #{encoder_forward.1} parent=68 // loop_footer_branch
                  %473 = sbr.rel target = $region71
                $region76: #{encoder_forward.1} parent=68 // loop_exit
                  _
                %s617 = sshrl.u32 %s469, 5
                %s618 = sand.u32 %s469, 31
                %s619 = smul.u32 %s617, 32
                %s620 = smul.u32 128, %s619
                %s621 = sshra.s32 %s620, 4
                %s622 = scalar_lea.vmem %s252, %s621
                %s623 = smul.u32 128, %s619
                %s624 = sshra.s32 %s623, 4
                %s625 = scalar_lea.vmem %s242, %s624 [#allocation2]
                // While loop
                $region77: #{encoder_forward.1} parent=68 // loop_pre_header
                  _
                $region78: #{encoder_forward.1} parent=68 // loop_header
                  %s629 = sphi 0, %s631
                  %p630 = scmp.ge.s32.totalorder %s629, %s618
                  %s634 = sphi 0, %s643
                  %s635 = sphi %s622, %s646
                  %s636 = sphi %s625, %s647
                $region79: #{encoder_forward.1} parent=68 // loop_header_branch
                  %633 = sbr.rel (%p630) target = $region83
                $region80: #{encoder_forward.1} parent=68 // loop_body
                  %v637 = vld [vmem:[%s635] sm:$0xff]
                  %638 = vst [vmem:[%s636] sm:$0xff] %v637
                  %v639 = vld [vmem:[%s635 + $0x44] sm:$0xff]
                  %640 = vst [vmem:[%s636 + $0x20] sm:$0xff] %v639
                  %s641 = sadd.s32 1, %s634
                  %p642 = scmp.ge.s32.totalorder %s641, %s618
                  %s643 = scalar_select %p642, 0, %s641
                  %s644 = smul.u32 %s643, 8
                  %s645 = smul.u32 %s643, 8
                  %s646 = scalar_lea.vmem %s622, %s644
                  %s647 = scalar_lea.vmem %s625, %s645 [#allocation2]
                $region81: #{encoder_forward.1} parent=68 // loop_footer
                  %s631 = sadd.s32 %s629, 1
                $region82: #{encoder_forward.1} parent=68 // loop_footer_branch
                  %628 = sbr.rel target = $region78
                $region83: #{encoder_forward.1} parent=68 // loop_exit
                  _
                %s648 = sshllo.u32 0, %s464
                loop: start=0, step=1, limit=1
                $region84: #{encoder_forward.1} parent=68 // loop_pre_header
                  _
                $region85: #{encoder_forward.1} parent=68 // loop_header
                  %s650 = sphi 0, %s654
                  %p651 = scmp.ge.s32.totalorder %s650, 1
                  %s655 = sphi %s466, %s466
                  %s656 = sphi %s468, %s468
                $region86: #{encoder_forward.1} parent=68 // loop_header_branch
                  %653 = sbr.rel (%p651) target = $region90
                $region87: #{encoder_forward.1} parent=68 // loop_body
                  %v657 = vld [vmem:[%s655] sm:%s648]
                  %658 = vst [vmem:[%s656] sm:%s648] %v657
                  %v659 = vld [vmem:[%s655 + $0x44] sm:%s648]
                  %660 = vst [vmem:[%s656 + $0x20] sm:%s648] %v659
                $region88: #{encoder_forward.1} parent=68 // loop_footer
                  %s654 = sadd.s32 1, %s650
                $region89: #{encoder_forward.1} parent=68 // loop_footer_branch
                  %649 = sbr.rel target = $region85
                $region90: #{encoder_forward.1} parent=68 // loop_exit
                  _
              $region69: #{encoder_forward.1} parent=35 // pred_fallthru
                _
            $region36: #{encoder_forward.1} parent=31 // pred_fallthru
              _
            // Predicated region
            $region37: #{encoder_forward.1} parent=31 // pred_check
              %p261 = pneg %p257
            $region38: #{encoder_forward.1} parent=31 // pred_check_branch
              %263 = sbr.rel (%p261) target = $region40
            $region39: #{encoder_forward.1} parent=31 // pred_region
              %s264 = sshllo.u32 0, %s253
              loop: start=0, step=1, limit=1
              $region41: #{encoder_forward.1} parent=39 // loop_pre_header
                _
              $region42: #{encoder_forward.1} parent=39 // loop_header
                %s266 = sphi 0, %s270
                %p267 = scmp.ge.s32.totalorder %s266, 1
                %s271 = sphi %s252, %s252
                %s272 = sphi %s242, %s242
              $region43: #{encoder_forward.1} parent=39 // loop_header_branch
                %269 = sbr.rel (%p267) target = $region47
              $region44: #{encoder_forward.1} parent=39 // loop_body
                %v273 = vld [vmem:[%s271] sm:%s264]
                %274 = vst [vmem:[%s272] sm:%s264] %v273
                %v275 = vld [vmem:[%s271 + $0x44] sm:%s264]
                %276 = vst [vmem:[%s272 + $0x20] sm:%s264] %v275
              $region45: #{encoder_forward.1} parent=39 // loop_footer
                %s270 = sadd.s32 1, %s266
              $region46: #{encoder_forward.1} parent=39 // loop_footer_branch
                %265 = sbr.rel target = $region42
              $region47: #{encoder_forward.1} parent=39 // loop_exit
                _
            $region40: #{encoder_forward.1} parent=31 // pred_fallthru
              _
          $region32: #{encoder_forward.1} parent=27 // pred_fallthru
            _
          %661 = vnop
        $region28: #{encoder_forward.1} parent=23 // pred_fallthru
          _
        // Predicated region
        $region91: #{encoder_forward.1} parent=23 // pred_check
          %p662 = pneg %p79
        $region92: #{encoder_forward.1} parent=23 // pred_check_branch
          %664 = sbr.rel (%p662) target = $region94
        $region93: #{encoder_forward.1} parent=23 // pred_region
          %s665 = sand.u32 %s69, 1
          %s666 = sand.u32 %s69, 1
          %s667 = smul.addr %s666, 8
          %s668 = scalar_lea.vmem [#allocation3], %s667
          %s669 = sadd.s32 %s21, 1
          %s670 = smul.u32 %s669, 8
          %s671 = smul.addr %s20, 34
          %s672 = sadd.s32 %s670, %s671
          %s673 = smul.addr %s672, 4
          %s674 = scalar_lea.vmem %s1, %s673
          // Predicated region
          $region95: #{encoder_forward.1} parent=93 // pred_check
            _
          $region96: #{encoder_forward.1} parent=93 // pred_check_branch
            %676 = sbr.rel (0) target = $region98
          $region97: #{encoder_forward.1} parent=93 // pred_region
            // Predicated region
            $region99: #{encoder_forward.1} parent=97 // pred_check
              _
            $region100: #{encoder_forward.1} parent=97 // pred_check_branch
              %678 = sbr.rel target = $region102
            $region101: #{encoder_forward.1} parent=97 // pred_region
              // Predicated region
              $region114: #{encoder_forward.1} parent=101 // pred_check
                _
              $region115: #{encoder_forward.1} parent=101 // pred_check_branch
                %695 = sbr.rel (0) target = $region117
              $region116: #{encoder_forward.1} parent=101 // pred_region
                loop: start=0, step=1, limit=1
                $region118: #{encoder_forward.1} parent=116 // loop_pre_header
                  _
                $region119: #{encoder_forward.1} parent=116 // loop_header
                  %s697 = sphi 0, %s701
                  %p698 = scmp.ge.s32.totalorder %s697, 1
                  %s702 = sphi %s674, %s674
                  %s703 = sphi %s668, %s668
                $region120: #{encoder_forward.1} parent=116 // loop_header_branch
                  %700 = sbr.rel (%p698) target = $region124
                $region121: #{encoder_forward.1} parent=116 // loop_body
                  _
                $region122: #{encoder_forward.1} parent=116 // loop_footer
                  %s701 = sadd.s32 1, %s697
                $region123: #{encoder_forward.1} parent=116 // loop_footer_branch
                  %696 = sbr.rel target = $region119
                $region124: #{encoder_forward.1} parent=116 // loop_exit
                  _
                loop: start=0, step=1, limit=1
                $region125: #{encoder_forward.1} parent=116 // loop_pre_header
                  _
                $region126: #{encoder_forward.1} parent=116 // loop_header
                  %s706 = sphi 0, %s710
                  %p707 = scmp.ge.s32.totalorder %s706, 1
                  %s711 = sphi %s674, %s674
                  %s712 = sphi %s668, %s668
                $region127: #{encoder_forward.1} parent=116 // loop_header_branch
                  %709 = sbr.rel (%p707) target = $region131
                $region128: #{encoder_forward.1} parent=116 // loop_body
                  %v713 = vld [vmem:[%s711] sm:$0xf]
                  %714 = vst [vmem:[%s712] sm:$0xf] %v713
                  %v715 = vld [vmem:[%s711 + $0x44] sm:$0xf]
                  %716 = vst [vmem:[%s712 + $0x4] sm:$0xf] %v715
                $region129: #{encoder_forward.1} parent=116 // loop_footer
                  %s710 = sadd.s32 1, %s706
                $region130: #{encoder_forward.1} parent=116 // loop_footer_branch
                  %705 = sbr.rel target = $region126
                $region131: #{encoder_forward.1} parent=116 // loop_exit
                  _
              $region117: #{encoder_forward.1} parent=101 // pred_fallthru
                _
            $region102: #{encoder_forward.1} parent=97 // pred_fallthru
              _
            // Predicated region
            $region103: #{encoder_forward.1} parent=97 // pred_check
              _
            $region104: #{encoder_forward.1} parent=97 // pred_check_branch
              %680 = sbr.rel (0) target = $region106
            $region105: #{encoder_forward.1} parent=97 // pred_region
              loop: start=0, step=1, limit=1
              $region107: #{encoder_forward.1} parent=105 // loop_pre_header
                _
              $region108: #{encoder_forward.1} parent=105 // loop_header
                %s683 = sphi 0, %s687
                %p684 = scmp.ge.s32.totalorder %s683, 1
                %s688 = sphi %s674, %s674
                %s689 = sphi %s668, %s668
              $region109: #{encoder_forward.1} parent=105 // loop_header_branch
                %686 = sbr.rel (%p684) target = $region113
              $region110: #{encoder_forward.1} parent=105 // loop_body
                %v690 = vld [vmem:[%s688] sm:$0xf]
                %691 = vst [vmem:[%s689] sm:$0xf] %v690
                %v692 = vld [vmem:[%s688 + $0x44] sm:$0xf]
                %693 = vst [vmem:[%s689 + $0x4] sm:$0xf] %v692
              $region111: #{encoder_forward.1} parent=105 // loop_footer
                %s687 = sadd.s32 1, %s683
              $region112: #{encoder_forward.1} parent=105 // loop_footer_branch
                %682 = sbr.rel target = $region108
              $region113: #{encoder_forward.1} parent=105 // loop_exit
                _
            $region106: #{encoder_forward.1} parent=97 // pred_fallthru
              _
          $region98: #{encoder_forward.1} parent=93 // pred_fallthru
            _
          %717 = vnop
        $region94: #{encoder_forward.1} parent=23 // pred_fallthru
          _
      $region24: #{encoder_forward.1} parent=5 // pred_fallthru
        _
      %p718 = scmp.le.s32.totalorder 1, %s13
      %p719 = scmp.lt.s32.totalorder %s13, 5
      %p720 = pnand %p718, %p719
      %p721 = pneg %p720
      // Predicated region
      $region132: #{encoder_forward.1} parent=5 // pred_check
        _
      $region133: #{encoder_forward.1} parent=5 // pred_check_branch
        %723 = sbr.rel (%p720) target = $region135
      $region134: #{encoder_forward.1} parent=5 // pred_region
        %s724 = ssub.s32 %s13, 1
        %s725 = sand.u32 %s40, 1
        %s726 = sand.u32 %s40, 1
        %s727 = smul.addr %s726, 64
        %s728 = scalar_lea.vmem [#allocation2], %s727
        // Predicated region
        $region136: #{encoder_forward.1} parent=134 // pred_check
          %p729 = pneg %p53
        $region137: #{encoder_forward.1} parent=134 // pred_check_branch
          %731 = sbr.rel (%p729) target = $region139
        $region138: #{encoder_forward.1} parent=134 // pred_region
          _
        $region139: #{encoder_forward.1} parent=134 // pred_fallthru
          _
        %s732 = sand.u32 %s72, 1
        %s733 = sand.u32 %s72, 1
        %s734 = smul.addr %s733, 8
        %s735 = scalar_lea.vmem [#allocation3], %s734
        // Predicated region
        $region140: #{encoder_forward.1} parent=134 // pred_check
          %p736 = pneg %p85
        $region141: #{encoder_forward.1} parent=134 // pred_check_branch
          %738 = sbr.rel (%p736) target = $region143
        $region142: #{encoder_forward.1} parent=134 // pred_region
          _
        $region143: #{encoder_forward.1} parent=134 // pred_fallthru
          _
        %s739 = sand.u32 %s40, 1
        %s740 = sand.u32 %s40, 1
        %s741 = smul.addr %s740, 64
        %s742 = scalar_lea.vmem [#allocation2], %s741
        %p743 = pneg %p53
        %p744 = pneg %p50
        %s745 = sand.u32 %s72, 1
        %s746 = sand.u32 %s72, 1
        %s747 = smul.addr %s746, 8
        %s748 = scalar_lea.vmem [#allocation3], %s747
        %p749 = pneg %p85
        %p750 = pneg %p82
        %p751 = pneg %p106
        %p752 = pneg %p103
        %p753 = pneg %p127
        %p754 = pneg %p124
        %p755 = pneg %p155
        %p756 = pneg %p152
        %s757 = sand.u32 %s142, 1
        %s758 = sand.u32 %s142, 1
        %s759 = smul.addr %s758, 1024
        %s760 = scalar_lea.vmem [#allocation4], %s759
        %p761 = pneg %p183
        %p762 = pneg %p180
        %s763 = sand.u32 %s170, 1
        %s764 = sand.u32 %s170, 1
        %s765 = smul.addr %s764, 1024
        %s766 = scalar_lea.vmem [#allocation5], %s765
        %p767 = pneg %p211
        %p768 = pneg %p208
        %s769 = sand.u32 %s198, 1
        %s770 = sand.u32 %s198, 1
        %s771 = smul.addr %s770, 1024
        %s772 = scalar_lea.vmem [#allocation6], %s771
        %s773 = smul.u32 8, %s23
        %s774 = ssub.s32 17, %s773
        %p775 = scmp.lt.s32.totalorder %s774, 8
        %s776 = scalar_select %p775, %s774, 8
        %s777 = smul.u32 128, %s776
        %s778 = sadd.s32 %s23, 1
        %s779 = smul.u32 %s778, 8
        %s780 = smul.u32 8, %s23
        %s781 = ssub.s32 10, %s780
        %p782 = scmp.lt.s32.totalorder %s781, 8
        %s783 = scalar_select %p782, %s781, 8
        %s784 = smul.u32 2048, %s783
        %s785 = smul.u32 8, %s23
        %s786 = ssub.s32 10, %s785
        %p787 = scmp.lt.s32.totalorder %s786, 8
        %s788 = scalar_select %p787, %s786, 8
        %s789 = smul.u32 2048, %s788
        %s790 = smul.u32 8, %s23
        %s791 = ssub.s32 10, %s790
        %p792 = scmp.lt.s32.totalorder %s791, 8
        %s793 = scalar_select %p792, %s791, 8
        %s794 = smul.u32 2048, %s793
        %v796 = vld [vmem:[%s728] sm:$0xff]
        %v797 = vld [vmem:[%s728 + $0x8] sm:$0xff]
        %v798 = vld [vmem:[%s728 + $0x10] sm:$0xff]
        %v799 = vld [vmem:[%s728 + $0x18] sm:$0xff]
        %v800 = vld [vmem:[%s728 + $0x20] sm:$0x11]
        %v801 = vld [vmem:[%s728 + $0x28] sm:$0x11]
        %v802 = vld [vmem:[%s728 + $0x30] sm:$0x11]
        %v803 = vld [vmem:[%s728 + $0x38] sm:$0x11]
        %v804 = vld [vmem:[%s735] sm:$0xf]
        %v805 = vld [vmem:[%s735 + $0x4] sm:$0x1]
        %v814 = vunpack.c.l.b16 %v796
        %v815 = vunpack.c.h.b16 %v796
        %v816 = vunpack.c.l.b16 %v797
        %v817 = vunpack.c.h.b16 %v797
        %v818 = vunpack.c.l.b16 %v798
        %v819 = vunpack.c.h.b16 %v798
        %v820 = vunpack.c.l.b16 %v799
        %v821 = vunpack.c.h.b16 %v799
        %v822 = vunpack.c.l.b16 %v800
        %v823 = vunpack.c.h.b16 %v800
        %v824 = vunpack.c.l.b16 %v801
        %v825 = vunpack.c.h.b16 %v801
        %v826 = vunpack.c.l.b16 %v802
        %v827 = vunpack.c.h.b16 %v802
        %v828 = vunpack.c.l.b16 %v803
        %v829 = vunpack.c.h.b16 %v803
        %v830 = vpack.c.b16 %v822, %v814
        %v831 = vpack.c.b16 %v823, %v815
        %v832 = vpack.c.b16 %v824, %v816
        %v833 = vpack.c.b16 %v825, %v817
        %v834 = vpack.c.b16 %v826, %v818
        %v835 = vpack.c.b16 %v827, %v819
        %v836 = vpack.c.b16 %v828, %v820
        %v837 = vpack.c.b16 %v829, %v821
        %v840 = vunpack.c.l.b16 %v804
        %v841 = vunpack.c.l.b16 %v805
        %v842 = vpack.c.b16 %v841, %v840
        %v843 = vrot.slane %v830, 3
        %v844 = vrot.slane %v831, 3
        %v845 = vrot.slane %v832, 3
        %v846 = vrot.slane %v833, 3
        %v847 = vrot.slane %v834, 3
        %v848 = vrot.slane %v835, 3
        %v849 = vrot.slane %v836, 3
        %v850 = vrot.slane %v837, 3
        %v851 = vrot.slane %v842, 3
        %852 = vrot.lane.b32.xlu0 %v843, 127
        %v853 = vpop.permute.xlu0 %852
        %854 = vrot.lane.b32.xlu0 %v844, 127
        %v855 = vpop.permute.xlu0 %854
        %856 = vrot.lane.b32.xlu0 %v845, 127
        %v857 = vpop.permute.xlu0 %856
        %858 = vrot.lane.b32.xlu0 %v846, 127
        %v859 = vpop.permute.xlu0 %858
        %860 = vrot.lane.b32.xlu0 %v847, 127
        %v861 = vpop.permute.xlu0 %860
        %862 = vrot.lane.b32.xlu0 %v848, 127
        %v863 = vpop.permute.xlu0 %862
        %864 = vrot.lane.b32.xlu0 %v849, 127
        %v865 = vpop.permute.xlu0 %864
        %866 = vrot.lane.b32.xlu0 %v850, 127
        %v867 = vpop.permute.xlu0 %866
        %868 = vrot.lane.b32.xlu0 %v851, 127
        %v869 = vpop.permute.xlu0 %868
        %vm870 = vcmask 1039360
        %v871 = vsel %vm870, %v853, %v855
        %v872 = vsel %vm870, %v855, %v857
        %v873 = vsel %vm870, %v857, %v859
        %v874 = vsel %vm870, %v859, %v861
        %v875 = vsel %vm870, %v861, %v863
        %v876 = vsel %vm870, %v863, %v865
        %v877 = vsel %vm870, %v865, %v867
        %v878 = vsel %vm870, %v867, %v869
        %v879 = vrot.slane %v830, 6
        %v880 = vrot.slane %v831, 6
        %v881 = vrot.slane %v832, 6
        %v882 = vrot.slane %v833, 6
        %v883 = vrot.slane %v834, 6
        %v884 = vrot.slane %v835, 6
        %v885 = vrot.slane %v836, 6
        %v886 = vrot.slane %v837, 6
        %v887 = vrot.slane %v842, 6
        %888 = vrot.lane.b32.xlu0 %v879, 126
        %v889 = vpop.permute.xlu0 %888
        %890 = vrot.lane.b32.xlu0 %v880, 126
        %v891 = vpop.permute.xlu0 %890
        %892 = vrot.lane.b32.xlu0 %v881, 126
        %v893 = vpop.permute.xlu0 %892
        %894 = vrot.lane.b32.xlu0 %v882, 126
        %v895 = vpop.permute.xlu0 %894
        %896 = vrot.lane.b32.xlu0 %v883, 126
        %v897 = vpop.permute.xlu0 %896
        %898 = vrot.lane.b32.xlu0 %v884, 126
        %v899 = vpop.permute.xlu0 %898
        %900 = vrot.lane.b32.xlu0 %v885, 126
        %v901 = vpop.permute.xlu0 %900
        %902 = vrot.lane.b32.xlu0 %v886, 126
        %v903 = vpop.permute.xlu0 %902
        %904 = vrot.lane.b32.xlu0 %v887, 126
        %v905 = vpop.permute.xlu0 %904
        %vm906 = vcmask 1031168
        %v907 = vsel %vm906, %v889, %v891
        %v908 = vsel %vm906, %v891, %v893
        %v909 = vsel %vm906, %v893, %v895
        %v910 = vsel %vm906, %v895, %v897
        %v911 = vsel %vm906, %v897, %v899
        %v912 = vsel %vm906, %v899, %v901
        %v913 = vsel %vm906, %v901, %v903
        %v914 = vsel %vm906, %v903, %v905
        %v915 = vrot.slane %v830, 1
        %v916 = vrot.slane %v831, 1
        %v917 = vrot.slane %v832, 1
        %v918 = vrot.slane %v833, 1
        %v919 = vrot.slane %v834, 1
        %v920 = vrot.slane %v835, 1
        %v921 = vrot.slane %v836, 1
        %v922 = vrot.slane %v837, 1
        %v923 = vrot.slane %v842, 1
        %924 = vrot.lane.b32.xlu0 %v915, 125
        %v925 = vpop.permute.xlu0 %924
        %926 = vrot.lane.b32.xlu0 %v916, 125
        %v927 = vpop.permute.xlu0 %926
        %928 = vrot.lane.b32.xlu0 %v917, 125
        %v929 = vpop.permute.xlu0 %928
        %930 = vrot.lane.b32.xlu0 %v918, 125
        %v931 = vpop.permute.xlu0 %930
        %932 = vrot.lane.b32.xlu0 %v919, 125
        %v933 = vpop.permute.xlu0 %932
        %934 = vrot.lane.b32.xlu0 %v920, 125
        %v935 = vpop.permute.xlu0 %934
        %936 = vrot.lane.b32.xlu0 %v921, 125
        %v937 = vpop.permute.xlu0 %936
        %938 = vrot.lane.b32.xlu0 %v922, 125
        %v939 = vpop.permute.xlu0 %938
        %940 = vrot.lane.b32.xlu0 %v923, 125
        %v941 = vpop.permute.xlu0 %940
        %vm942 = vcmask 1022976
        %v943 = vsel %vm942, %v925, %v927
        %v944 = vsel %vm942, %v927, %v929
        %v945 = vsel %vm942, %v929, %v931
        %v946 = vsel %vm942, %v931, %v933
        %v947 = vsel %vm942, %v933, %v935
        %v948 = vsel %vm942, %v935, %v937
        %v949 = vsel %vm942, %v937, %v939
        %v950 = vsel %vm942, %v939, %v941
        %v951 = vrot.slane %v830, 4
        %v952 = vrot.slane %v831, 4
        %v953 = vrot.slane %v832, 4
        %v954 = vrot.slane %v833, 4
        %v955 = vrot.slane %v834, 4
        %v956 = vrot.slane %v835, 4
        %v957 = vrot.slane %v836, 4
        %v958 = vrot.slane %v837, 4
        %v959 = vrot.slane %v842, 4
        %960 = vrot.lane.b32.xlu0 %v951, 124
        %v961 = vpop.permute.xlu0 %960
        %962 = vrot.lane.b32.xlu0 %v952, 124
        %v963 = vpop.permute.xlu0 %962
        %964 = vrot.lane.b32.xlu0 %v953, 124
        %v965 = vpop.permute.xlu0 %964
        %966 = vrot.lane.b32.xlu0 %v954, 124
        %v967 = vpop.permute.xlu0 %966
        %968 = vrot.lane.b32.xlu0 %v955, 124
        %v969 = vpop.permute.xlu0 %968
        %970 = vrot.lane.b32.xlu0 %v956, 124
        %v971 = vpop.permute.xlu0 %970
        %972 = vrot.lane.b32.xlu0 %v957, 124
        %v973 = vpop.permute.xlu0 %972
        %974 = vrot.lane.b32.xlu0 %v958, 124
        %v975 = vpop.permute.xlu0 %974
        %976 = vrot.lane.b32.xlu0 %v959, 124
        %v977 = vpop.permute.xlu0 %976
        %vm978 = vcmask 1014784
        %v979 = vsel %vm978, %v961, %v963
        %v980 = vsel %vm978, %v963, %v965
        %v981 = vsel %vm978, %v965, %v967
        %v982 = vsel %vm978, %v967, %v969
        %v983 = vsel %vm978, %v969, %v971
        %v984 = vsel %vm978, %v971, %v973
        %v985 = vsel %vm978, %v973, %v975
        %v986 = vsel %vm978, %v975, %v977
        %v987 = vrot.slane %v830, 7
        %v988 = vrot.slane %v831, 7
        %v989 = vrot.slane %v832, 7
        %v990 = vrot.slane %v833, 7
        %v991 = vrot.slane %v834, 7
        %v992 = vrot.slane %v835, 7
        %v993 = vrot.slane %v836, 7
        %v994 = vrot.slane %v837, 7
        %v995 = vrot.slane %v842, 7
        %996 = vrot.lane.b32.xlu0 %v987, 123
        %v997 = vpop.permute.xlu0 %996
        %998 = vrot.lane.b32.xlu0 %v988, 123
        %v999 = vpop.permute.xlu0 %998
        %1000 = vrot.lane.b32.xlu0 %v989, 123
        %v1001 = vpop.permute.xlu0 %1000
        %1002 = vrot.lane.b32.xlu0 %v990, 123
        %v1003 = vpop.permute.xlu0 %1002
        %1004 = vrot.lane.b32.xlu0 %v991, 123
        %v1005 = vpop.permute.xlu0 %1004
        %1006 = vrot.lane.b32.xlu0 %v992, 123
        %v1007 = vpop.permute.xlu0 %1006
        %1008 = vrot.lane.b32.xlu0 %v993, 123
        %v1009 = vpop.permute.xlu0 %1008
        %1010 = vrot.lane.b32.xlu0 %v994, 123
        %v1011 = vpop.permute.xlu0 %1010
        %1012 = vrot.lane.b32.xlu0 %v995, 123
        %v1013 = vpop.permute.xlu0 %1012
        %vm1014 = vcmask 1006592
        %v1015 = vsel %vm1014, %v997, %v999
        %v1016 = vsel %vm1014, %v999, %v1001
        %v1017 = vsel %vm1014, %v1001, %v1003
        %v1018 = vsel %vm1014, %v1003, %v1005
        %v1019 = vsel %vm1014, %v1005, %v1007
        %v1020 = vsel %vm1014, %v1007, %v1009
        %v1021 = vsel %vm1014, %v1009, %v1011
        %v1022 = vsel %vm1014, %v1011, %v1013
        %v1023 = vrot.slane %v830, 2
        %v1024 = vrot.slane %v831, 2
        %v1025 = vrot.slane %v832, 2
        %v1026 = vrot.slane %v833, 2
        %v1027 = vrot.slane %v834, 2
        %v1028 = vrot.slane %v835, 2
        %v1029 = vrot.slane %v836, 2
        %v1030 = vrot.slane %v837, 2
        %v1031 = vrot.slane %v842, 2
        %1032 = vrot.lane.b32.xlu0 %v1023, 122
        %v1033 = vpop.permute.xlu0 %1032
        %1034 = vrot.lane.b32.xlu0 %v1024, 122
        %v1035 = vpop.permute.xlu0 %1034
        %1036 = vrot.lane.b32.xlu0 %v1025, 122
        %v1037 = vpop.permute.xlu0 %1036
        %1038 = vrot.lane.b32.xlu0 %v1026, 122
        %v1039 = vpop.permute.xlu0 %1038
        %1040 = vrot.lane.b32.xlu0 %v1027, 122
        %v1041 = vpop.permute.xlu0 %1040
        %1042 = vrot.lane.b32.xlu0 %v1028, 122
        %v1043 = vpop.permute.xlu0 %1042
        %1044 = vrot.lane.b32.xlu0 %v1029, 122
        %v1045 = vpop.permute.xlu0 %1044
        %1046 = vrot.lane.b32.xlu0 %v1030, 122
        %v1047 = vpop.permute.xlu0 %1046
        %1048 = vrot.lane.b32.xlu0 %v1031, 122
        %v1049 = vpop.permute.xlu0 %1048
        %vm1050 = vcmask 998400
        %v1051 = vsel %vm1050, %v1033, %v1035
        %v1052 = vsel %vm1050, %v1035, %v1037
        %v1053 = vsel %vm1050, %v1037, %v1039
        %v1054 = vsel %vm1050, %v1039, %v1041
        %v1055 = vsel %vm1050, %v1041, %v1043
        %v1056 = vsel %vm1050, %v1043, %v1045
        %v1057 = vsel %vm1050, %v1045, %v1047
        %v1058 = vsel %vm1050, %v1047, %v1049
        %v1059 = vrot.slane %v830, 5
        %v1060 = vrot.slane %v831, 5
        %v1061 = vrot.slane %v832, 5
        %v1062 = vrot.slane %v833, 5
        %v1063 = vrot.slane %v834, 5
        %v1064 = vrot.slane %v835, 5
        %v1065 = vrot.slane %v836, 5
        %v1066 = vrot.slane %v837, 5
        %v1067 = vrot.slane %v842, 5
        %1068 = vrot.lane.b32.xlu0 %v1059, 121
        %v1069 = vpop.permute.xlu0 %1068
        %1070 = vrot.lane.b32.xlu0 %v1060, 121
        %v1071 = vpop.permute.xlu0 %1070
        %1072 = vrot.lane.b32.xlu0 %v1061, 121
        %v1073 = vpop.permute.xlu0 %1072
        %1074 = vrot.lane.b32.xlu0 %v1062, 121
        %v1075 = vpop.permute.xlu0 %1074
        %1076 = vrot.lane.b32.xlu0 %v1063, 121
        %v1077 = vpop.permute.xlu0 %1076
        %1078 = vrot.lane.b32.xlu0 %v1064, 121
        %v1079 = vpop.permute.xlu0 %1078
        %1080 = vrot.lane.b32.xlu0 %v1065, 121
        %v1081 = vpop.permute.xlu0 %1080
        %1082 = vrot.lane.b32.xlu0 %v1066, 121
        %v1083 = vpop.permute.xlu0 %1082
        %1084 = vrot.lane.b32.xlu0 %v1067, 121
        %v1085 = vpop.permute.xlu0 %1084
        %vm1086 = vcmask 990208
        %v1087 = vsel %vm1086, %v1069, %v1071
        %v1088 = vsel %vm1086, %v1071, %v1073
        %v1089 = vsel %vm1086, %v1073, %v1075
        %v1090 = vsel %vm1086, %v1075, %v1077
        %v1091 = vsel %vm1086, %v1077, %v1079
        %v1092 = vsel %vm1086, %v1079, %v1081
        %v1093 = vsel %vm1086, %v1081, %v1083
        %v1094 = vsel %vm1086, %v1083, %v1085
        %1095 = vrot.lane.b32.xlu0 %v830, 120
        %v1096 = vpop.permute.xlu0 %1095
        %1097 = vrot.lane.b32.xlu0 %v831, 120
        %v1098 = vpop.permute.xlu0 %1097
        %1099 = vrot.lane.b32.xlu0 %v832, 120
        %v1100 = vpop.permute.xlu0 %1099
        %1101 = vrot.lane.b32.xlu0 %v833, 120
        %v1102 = vpop.permute.xlu0 %1101
        %1103 = vrot.lane.b32.xlu0 %v834, 120
        %v1104 = vpop.permute.xlu0 %1103
        %1105 = vrot.lane.b32.xlu0 %v835, 120
        %v1106 = vpop.permute.xlu0 %1105
        %1107 = vrot.lane.b32.xlu0 %v836, 120
        %v1108 = vpop.permute.xlu0 %1107
        %1109 = vrot.lane.b32.xlu0 %v837, 120
        %v1110 = vpop.permute.xlu0 %1109
        %1111 = vrot.lane.b32.xlu0 %v842, 120
        %v1112 = vpop.permute.xlu0 %1111
        %vm1113 = vcmask 982016
        %v1114 = vsel %vm1113, %v1096, %v1098
        %v1115 = vsel %vm1113, %v1098, %v1100
        %v1116 = vsel %vm1113, %v1100, %v1102
        %v1117 = vsel %vm1113, %v1102, %v1104
        %v1118 = vsel %vm1113, %v1104, %v1106
        %v1119 = vsel %vm1113, %v1106, %v1108
        %v1120 = vsel %vm1113, %v1108, %v1110
        %v1121 = vsel %vm1113, %v1110, %v1112
        %1122 = vrot.lane.b32.xlu0 %v843, 119
        %v1123 = vpop.permute.xlu0 %1122
        %1124 = vrot.lane.b32.xlu0 %v844, 119
        %v1125 = vpop.permute.xlu0 %1124
        %1126 = vrot.lane.b32.xlu0 %v845, 119
        %v1127 = vpop.permute.xlu0 %1126
        %1128 = vrot.lane.b32.xlu0 %v846, 119
        %v1129 = vpop.permute.xlu0 %1128
        %1130 = vrot.lane.b32.xlu0 %v847, 119
        %v1131 = vpop.permute.xlu0 %1130
        %1132 = vrot.lane.b32.xlu0 %v848, 119
        %v1133 = vpop.permute.xlu0 %1132
        %1134 = vrot.lane.b32.xlu0 %v849, 119
        %v1135 = vpop.permute.xlu0 %1134
        %1136 = vrot.lane.b32.xlu0 %v850, 119
        %v1137 = vpop.permute.xlu0 %1136
        %1138 = vrot.lane.b32.xlu0 %v851, 119
        %v1139 = vpop.permute.xlu0 %1138
        %vm1140 = vcmask 973824
        %v1141 = vsel %vm1140, %v1123, %v1125
        %v1142 = vsel %vm1140, %v1125, %v1127
        %v1143 = vsel %vm1140, %v1127, %v1129
        %v1144 = vsel %vm1140, %v1129, %v1131
        %v1145 = vsel %vm1140, %v1131, %v1133
        %v1146 = vsel %vm1140, %v1133, %v1135
        %v1147 = vsel %vm1140, %v1135, %v1137
        %v1148 = vsel %vm1140, %v1137, %v1139
        %1149 = vrot.lane.b32.xlu0 %v879, 118
        %v1150 = vpop.permute.xlu0 %1149
        %1151 = vrot.lane.b32.xlu0 %v880, 118
        %v1152 = vpop.permute.xlu0 %1151
        %1153 = vrot.lane.b32.xlu0 %v881, 118
        %v1154 = vpop.permute.xlu0 %1153
        %1155 = vrot.lane.b32.xlu0 %v882, 118
        %v1156 = vpop.permute.xlu0 %1155
        %1157 = vrot.lane.b32.xlu0 %v883, 118
        %v1158 = vpop.permute.xlu0 %1157
        %1159 = vrot.lane.b32.xlu0 %v884, 118
        %v1160 = vpop.permute.xlu0 %1159
        %1161 = vrot.lane.b32.xlu0 %v885, 118
        %v1162 = vpop.permute.xlu0 %1161
        %1163 = vrot.lane.b32.xlu0 %v886, 118
        %v1164 = vpop.permute.xlu0 %1163
        %1165 = vrot.lane.b32.xlu0 %v887, 118
        %v1166 = vpop.permute.xlu0 %1165
        %vm1167 = vcmask 965632
        %v1168 = vsel %vm1167, %v1150, %v1152
        %v1169 = vsel %vm1167, %v1152, %v1154
        %v1170 = vsel %vm1167, %v1154, %v1156
        %v1171 = vsel %vm1167, %v1156, %v1158
        %v1172 = vsel %vm1167, %v1158, %v1160
        %v1173 = vsel %vm1167, %v1160, %v1162
        %v1174 = vsel %vm1167, %v1162, %v1164
        %v1175 = vsel %vm1167, %v1164, %v1166
        %1176 = vrot.lane.b32.xlu0 %v915, 117
        %v1177 = vpop.permute.xlu0 %1176
        %1178 = vrot.lane.b32.xlu0 %v916, 117
        %v1179 = vpop.permute.xlu0 %1178
        %1180 = vrot.lane.b32.xlu0 %v917, 117
        %v1181 = vpop.permute.xlu0 %1180
        %1182 = vrot.lane.b32.xlu0 %v918, 117
        %v1183 = vpop.permute.xlu0 %1182
        %1184 = vrot.lane.b32.xlu0 %v919, 117
        %v1185 = vpop.permute.xlu0 %1184
        %1186 = vrot.lane.b32.xlu0 %v920, 117
        %v1187 = vpop.permute.xlu0 %1186
        %1188 = vrot.lane.b32.xlu0 %v921, 117
        %v1189 = vpop.permute.xlu0 %1188
        %1190 = vrot.lane.b32.xlu0 %v922, 117
        %v1191 = vpop.permute.xlu0 %1190
        %1192 = vrot.lane.b32.xlu0 %v923, 117
        %v1193 = vpop.permute.xlu0 %1192
        %vm1194 = vcmask 957440
        %v1195 = vsel %vm1194, %v1177, %v1179
        %v1196 = vsel %vm1194, %v1179, %v1181
        %v1197 = vsel %vm1194, %v1181, %v1183
        %v1198 = vsel %vm1194, %v1183, %v1185
        %v1199 = vsel %vm1194, %v1185, %v1187
        %v1200 = vsel %vm1194, %v1187, %v1189
        %v1201 = vsel %vm1194, %v1189, %v1191
        %v1202 = vsel %vm1194, %v1191, %v1193
        %1203 = vrot.lane.b32.xlu0 %v951, 116
        %v1204 = vpop.permute.xlu0 %1203
        %1205 = vrot.lane.b32.xlu0 %v952, 116
        %v1206 = vpop.permute.xlu0 %1205
        %1207 = vrot.lane.b32.xlu0 %v953, 116
        %v1208 = vpop.permute.xlu0 %1207
        %1209 = vrot.lane.b32.xlu0 %v954, 116
        %v1210 = vpop.permute.xlu0 %1209
        %1211 = vrot.lane.b32.xlu0 %v955, 116
        %v1212 = vpop.permute.xlu0 %1211
        %1213 = vrot.lane.b32.xlu0 %v956, 116
        %v1214 = vpop.permute.xlu0 %1213
        %1215 = vrot.lane.b32.xlu0 %v957, 116
        %v1216 = vpop.permute.xlu0 %1215
        %1217 = vrot.lane.b32.xlu0 %v958, 116
        %v1218 = vpop.permute.xlu0 %1217
        %1219 = vrot.lane.b32.xlu0 %v959, 116
        %v1220 = vpop.permute.xlu0 %1219
        %vm1221 = vcmask 949248
        %v1222 = vsel %vm1221, %v1204, %v1206
        %v1223 = vsel %vm1221, %v1206, %v1208
        %v1224 = vsel %vm1221, %v1208, %v1210
        %v1225 = vsel %vm1221, %v1210, %v1212
        %v1226 = vsel %vm1221, %v1212, %v1214
        %v1227 = vsel %vm1221, %v1214, %v1216
        %v1228 = vsel %vm1221, %v1216, %v1218
        %v1229 = vsel %vm1221, %v1218, %v1220
        %1230 = vrot.lane.b32.xlu0 %v987, 115
        %v1231 = vpop.permute.xlu0 %1230
        %1232 = vrot.lane.b32.xlu0 %v988, 115
        %v1233 = vpop.permute.xlu0 %1232
        %1234 = vrot.lane.b32.xlu0 %v989, 115
        %v1235 = vpop.permute.xlu0 %1234
        %1236 = vrot.lane.b32.xlu0 %v990, 115
        %v1237 = vpop.permute.xlu0 %1236
        %1238 = vrot.lane.b32.xlu0 %v991, 115
        %v1239 = vpop.permute.xlu0 %1238
        %1240 = vrot.lane.b32.xlu0 %v992, 115
        %v1241 = vpop.permute.xlu0 %1240
        %1242 = vrot.lane.b32.xlu0 %v993, 115
        %v1243 = vpop.permute.xlu0 %1242
        %1244 = vrot.lane.b32.xlu0 %v994, 115
        %v1245 = vpop.permute.xlu0 %1244
        %1246 = vrot.lane.b32.xlu0 %v995, 115
        %v1247 = vpop.permute.xlu0 %1246
        %vm1248 = vcmask 941056
        %v1249 = vsel %vm1248, %v1231, %v1233
        %v1250 = vsel %vm1248, %v1233, %v1235
        %v1251 = vsel %vm1248, %v1235, %v1237
        %v1252 = vsel %vm1248, %v1237, %v1239
        %v1253 = vsel %vm1248, %v1239, %v1241
        %v1254 = vsel %vm1248, %v1241, %v1243
        %v1255 = vsel %vm1248, %v1243, %v1245
        %v1256 = vsel %vm1248, %v1245, %v1247
        %1257 = vrot.lane.b32.xlu0 %v1023, 114
        %v1258 = vpop.permute.xlu0 %1257
        %1259 = vrot.lane.b32.xlu0 %v1024, 114
        %v1260 = vpop.permute.xlu0 %1259
        %1261 = vrot.lane.b32.xlu0 %v1025, 114
        %v1262 = vpop.permute.xlu0 %1261
        %1263 = vrot.lane.b32.xlu0 %v1026, 114
        %v1264 = vpop.permute.xlu0 %1263
        %1265 = vrot.lane.b32.xlu0 %v1027, 114
        %v1266 = vpop.permute.xlu0 %1265
        %1267 = vrot.lane.b32.xlu0 %v1028, 114
        %v1268 = vpop.permute.xlu0 %1267
        %1269 = vrot.lane.b32.xlu0 %v1029, 114
        %v1270 = vpop.permute.xlu0 %1269
        %1271 = vrot.lane.b32.xlu0 %v1030, 114
        %v1272 = vpop.permute.xlu0 %1271
        %1273 = vrot.lane.b32.xlu0 %v1031, 114
        %v1274 = vpop.permute.xlu0 %1273
        %vm1275 = vcmask 932864
        %v1276 = vsel %vm1275, %v1258, %v1260
        %v1277 = vsel %vm1275, %v1260, %v1262
        %v1278 = vsel %vm1275, %v1262, %v1264
        %v1279 = vsel %vm1275, %v1264, %v1266
        %v1280 = vsel %vm1275, %v1266, %v1268
        %v1281 = vsel %vm1275, %v1268, %v1270
        %v1282 = vsel %vm1275, %v1270, %v1272
        %v1283 = vsel %vm1275, %v1272, %v1274
        %1284 = vrot.lane.b32.xlu0 %v1059, 113
        %v1285 = vpop.permute.xlu0 %1284
        %1286 = vrot.lane.b32.xlu0 %v1060, 113
        %v1287 = vpop.permute.xlu0 %1286
        %1288 = vrot.lane.b32.xlu0 %v1061, 113
        %v1289 = vpop.permute.xlu0 %1288
        %1290 = vrot.lane.b32.xlu0 %v1062, 113
        %v1291 = vpop.permute.xlu0 %1290
        %1292 = vrot.lane.b32.xlu0 %v1063, 113
        %v1293 = vpop.permute.xlu0 %1292
        %1294 = vrot.lane.b32.xlu0 %v1064, 113
        %v1295 = vpop.permute.xlu0 %1294
        %1296 = vrot.lane.b32.xlu0 %v1065, 113
        %v1297 = vpop.permute.xlu0 %1296
        %1298 = vrot.lane.b32.xlu0 %v1066, 113
        %v1299 = vpop.permute.xlu0 %1298
        %1300 = vrot.lane.b32.xlu0 %v1067, 113
        %v1301 = vpop.permute.xlu0 %1300
        %vm1302 = vcmask 924672
        %v1303 = vsel %vm1302, %v1285, %v1287
        %v1304 = vsel %vm1302, %v1287, %v1289
        %v1305 = vsel %vm1302, %v1289, %v1291
        %v1306 = vsel %vm1302, %v1291, %v1293
        %v1307 = vsel %vm1302, %v1293, %v1295
        %v1308 = vsel %vm1302, %v1295, %v1297
        %v1309 = vsel %vm1302, %v1297, %v1299
        %v1310 = vsel %vm1302, %v1299, %v1301
        %vm1311 = vcmask 1044480
        %v1314 = vsel %vm1311, %v830, %v871
        %v1318 = vsel %vm1311, %v831, %v872
        %v1322 = vsel %vm1311, %v832, %v873
        %v1326 = vsel %vm1311, %v833, %v874
        %v1330 = vsel %vm1311, %v834, %v875
        %v1334 = vsel %vm1311, %v835, %v876
        %v1338 = vsel %vm1311, %v836, %v877
        %v1342 = vsel %vm1311, %v837, %v878
        %vm1344 = vcmask 1041408
        %v1346 = vsel %vm1344, %v871, %v907
        %v1348 = vsel %vm1344, %v872, %v908
        %v1350 = vsel %vm1344, %v873, %v909
        %v1352 = vsel %vm1344, %v874, %v910
        %v1354 = vsel %vm1344, %v875, %v911
        %v1356 = vsel %vm1344, %v876, %v912
        %v1358 = vsel %vm1344, %v877, %v913
        %v1360 = vsel %vm1344, %v878, %v914
        %vm1361 = vcmask 1046528
        %v1363 = vsel %vm1361, %v1346, %v943
        %v1366 = vsel %vm1361, %v1348, %v944
        %v1369 = vsel %vm1361, %v1350, %v945
        %v1372 = vsel %vm1361, %v1352, %v946
        %v1375 = vsel %vm1361, %v1354, %v947
        %v1378 = vsel %vm1361, %v1356, %v948
        %v1381 = vsel %vm1361, %v1358, %v949
        %v1384 = vsel %vm1361, %v1360, %v950
        %vm1386 = vcmask 1043456
        %v1388 = vsel %vm1386, %v943, %v979
        %v1391 = vsel %vm1386, %v944, %v980
        %v1394 = vsel %vm1386, %v945, %v981
        %v1397 = vsel %vm1386, %v946, %v982
        %v1400 = vsel %vm1386, %v947, %v983
        %v1403 = vsel %vm1386, %v948, %v984
        %v1406 = vsel %vm1386, %v949, %v985
        %v1409 = vsel %vm1386, %v950, %v986
        %vm1411 = vcmask 1040384
        %v1413 = vsel %vm1411, %v979, %v1015
        %v1415 = vsel %vm1411, %v980, %v1016
        %v1417 = vsel %vm1411, %v981, %v1017
        %v1419 = vsel %vm1411, %v982, %v1018
        %v1421 = vsel %vm1411, %v983, %v1019
        %v1423 = vsel %vm1411, %v984, %v1020
        %v1425 = vsel %vm1411, %v985, %v1021
        %v1427 = vsel %vm1411, %v986, %v1022
        %vm1428 = vcmask 1045504
        %v1430 = vsel %vm1428, %v1413, %v1051
        %v1433 = vsel %vm1428, %v1415, %v1052
        %v1436 = vsel %vm1428, %v1417, %v1053
        %v1439 = vsel %vm1428, %v1419, %v1054
        %v1442 = vsel %vm1428, %v1421, %v1055
        %v1445 = vsel %vm1428, %v1423, %v1056
        %v1448 = vsel %vm1428, %v1425, %v1057
        %v1451 = vsel %vm1428, %v1427, %v1058
        %vm1453 = vcmask 1042432
        %v1455 = vsel %vm1453, %v1051, %v1087
        %v1458 = vsel %vm1453, %v1052, %v1088
        %v1461 = vsel %vm1453, %v1053, %v1089
        %v1464 = vsel %vm1453, %v1054, %v1090
        %v1467 = vsel %vm1453, %v1055, %v1091
        %v1470 = vsel %vm1453, %v1056, %v1092
        %v1473 = vsel %vm1453, %v1057, %v1093
        %v1476 = vsel %vm1453, %v1058, %v1094
        %v1480 = vsel %vm1311, %v1114, %v1141
        %v1484 = vsel %vm1311, %v1115, %v1142
        %v1488 = vsel %vm1311, %v1116, %v1143
        %v1492 = vsel %vm1311, %v1117, %v1144
        %v1496 = vsel %vm1311, %v1118, %v1145
        %v1500 = vsel %vm1311, %v1119, %v1146
        %v1504 = vsel %vm1311, %v1120, %v1147
        %v1508 = vsel %vm1311, %v1121, %v1148
        %v1511 = vsel %vm1344, %v1141, %v1168
        %v1513 = vsel %vm1344, %v1142, %v1169
        %v1515 = vsel %vm1344, %v1143, %v1170
        %v1517 = vsel %vm1344, %v1144, %v1171
        %v1519 = vsel %vm1344, %v1145, %v1172
        %v1521 = vsel %vm1344, %v1146, %v1173
        %v1523 = vsel %vm1344, %v1147, %v1174
        %v1525 = vsel %vm1344, %v1148, %v1175
        %v1527 = vsel %vm1361, %v1511, %v1195
        %v1530 = vsel %vm1361, %v1513, %v1196
        %v1533 = vsel %vm1361, %v1515, %v1197
        %v1536 = vsel %vm1361, %v1517, %v1198
        %v1539 = vsel %vm1361, %v1519, %v1199
        %v1542 = vsel %vm1361, %v1521, %v1200
        %v1545 = vsel %vm1361, %v1523, %v1201
        %v1548 = vsel %vm1361, %v1525, %v1202
        %v1551 = vsel %vm1386, %v1195, %v1222
        %v1554 = vsel %vm1386, %v1196, %v1223
        %v1557 = vsel %vm1386, %v1197, %v1224
        %v1560 = vsel %vm1386, %v1198, %v1225
        %v1563 = vsel %vm1386, %v1199, %v1226
        %v1566 = vsel %vm1386, %v1200, %v1227
        %v1569 = vsel %vm1386, %v1201, %v1228
        %v1572 = vsel %vm1386, %v1202, %v1229
        %v1575 = vsel %vm1411, %v1222, %v1249
        %v1577 = vsel %vm1411, %v1223, %v1250
        %v1579 = vsel %vm1411, %v1224, %v1251
        %v1581 = vsel %vm1411, %v1225, %v1252
        %v1583 = vsel %vm1411, %v1226, %v1253
        %v1585 = vsel %vm1411, %v1227, %v1254
        %v1587 = vsel %vm1411, %v1228, %v1255
        %v1589 = vsel %vm1411, %v1229, %v1256
        %v1591 = vsel %vm1428, %v1575, %v1276
        %v1594 = vsel %vm1428, %v1577, %v1277
        %v1597 = vsel %vm1428, %v1579, %v1278
        %v1600 = vsel %vm1428, %v1581, %v1279
        %v1603 = vsel %vm1428, %v1583, %v1280
        %v1606 = vsel %vm1428, %v1585, %v1281
        %v1609 = vsel %vm1428, %v1587, %v1282
        %v1612 = vsel %vm1428, %v1589, %v1283
        %v1615 = vsel %vm1453, %v1276, %v1303
        %v1618 = vsel %vm1453, %v1277, %v1304
        %v1621 = vsel %vm1453, %v1278, %v1305
        %v1624 = vsel %vm1453, %v1279, %v1306
        %v1627 = vsel %vm1453, %v1280, %v1307
        %v1630 = vsel %vm1453, %v1281, %v1308
        %v1633 = vsel %vm1453, %v1282, %v1309
        %v1636 = vsel %vm1453, %v1283, %v1310
        %v1638 = vld [vmem:[%s2] sm:$0xff]
        %v1639 = vld [vmem:[%s2 + $0x8] sm:$0xff]
        %v1640 = vld [vmem:[%s2 + $0x10] sm:$0xff]
        %v1641 = vld [vmem:[%s2 + $0x18] sm:$0xff]
        %v1642 = vld [vmem:[%s2 + $0x20] sm:$0xff]
        %v1643 = vld [vmem:[%s2 + $0x28] sm:$0xff]
        %v1644 = vld [vmem:[%s2 + $0x30] sm:$0xff]
        %v1645 = vld [vmem:[%s2 + $0x38] sm:$0xff]
        %v1646 = vld [vmem:[%s2 + $0x40] sm:$0xff]
        %v1647 = vld [vmem:[%s2 + $0x48] sm:$0xff]
        %v1648 = vld [vmem:[%s2 + $0x50] sm:$0xff]
        %v1649 = vld [vmem:[%s2 + $0x58] sm:$0xff]
        %v1650 = vld [vmem:[%s2 + $0x60] sm:$0xff]
        %v1651 = vld [vmem:[%s2 + $0x68] sm:$0xff]
        %v1652 = vld [vmem:[%s2 + $0x70] sm:$0xff]
        %v1653 = vld [vmem:[%s2 + $0x78] sm:$0xff]
        %v1654 = vld [vmem:[%s2 + $0x80] sm:$0xff]
        %v1655 = vld [vmem:[%s2 + $0x88] sm:$0xff]
        %v1656 = vld [vmem:[%s2 + $0x90] sm:$0xff]
        %v1657 = vld [vmem:[%s2 + $0x98] sm:$0xff]
        %v1658 = vld [vmem:[%s2 + $0xa0] sm:$0xff]
        %v1659 = vld [vmem:[%s2 + $0xa8] sm:$0xff]
        %v1660 = vld [vmem:[%s2 + $0xb0] sm:$0xff]
        %v1661 = vld [vmem:[%s2 + $0xb8] sm:$0xff]
        %v1662 = vld [vmem:[%s2 + $0xc0] sm:$0xff]
        %v1663 = vld [vmem:[%s2 + $0xc8] sm:$0xff]
        %v1664 = vld [vmem:[%s2 + $0xd0] sm:$0xff]
        %v1665 = vld [vmem:[%s2 + $0xd8] sm:$0xff]
        %v1666 = vld [vmem:[%s2 + $0xe0] sm:$0xff]
        %v1667 = vld [vmem:[%s2 + $0xe8] sm:$0xff]
        %v1668 = vld [vmem:[%s2 + $0xf0] sm:$0xff]
        %v1669 = vld [vmem:[%s2 + $0xf8] sm:$0xff]
        %v1670 = vld [vmem:[%s2 + $0x100] sm:$0xff]
        %v1671 = vld [vmem:[%s2 + $0x108] sm:$0xff]
        %v1672 = vld [vmem:[%s2 + $0x110] sm:$0xff]
        %v1673 = vld [vmem:[%s2 + $0x118] sm:$0xff]
        %v1674 = vld [vmem:[%s2 + $0x120] sm:$0xff]
        %v1675 = vld [vmem:[%s2 + $0x128] sm:$0xff]
        %v1676 = vld [vmem:[%s2 + $0x130] sm:$0xff]
        %v1677 = vld [vmem:[%s2 + $0x138] sm:$0xff]
        %v1678 = vld [vmem:[%s2 + $0x140] sm:$0xff]
        %v1679 = vld [vmem:[%s2 + $0x148] sm:$0xff]
        %v1680 = vld [vmem:[%s2 + $0x150] sm:$0xff]
        %v1681 = vld [vmem:[%s2 + $0x158] sm:$0xff]
        %v1682 = vld [vmem:[%s2 + $0x160] sm:$0xff]
        %v1683 = vld [vmem:[%s2 + $0x168] sm:$0xff]
        %v1684 = vld [vmem:[%s2 + $0x170] sm:$0xff]
        %v1685 = vld [vmem:[%s2 + $0x178] sm:$0xff]
        %v1686 = vld [vmem:[%s3] sm:$0xff]
        %v1687 = vld [vmem:[%s3 + $0x8] sm:$0xff]
        %v1688 = vld [vmem:[%s3 + $0x10] sm:$0xff]
        %v1689 = vld [vmem:[%s3 + $0x18] sm:$0xff]
        %v1690 = vld [vmem:[%s3 + $0x20] sm:$0xff]
        %v1691 = vld [vmem:[%s3 + $0x28] sm:$0xff]
        %v1692 = vld [vmem:[%s3 + $0x30] sm:$0xff]
        %v1693 = vld [vmem:[%s3 + $0x38] sm:$0xff]
        %v1694 = vld [vmem:[%s3 + $0x40] sm:$0xff]
        %v1695 = vld [vmem:[%s3 + $0x48] sm:$0xff]
        %v1696 = vld [vmem:[%s3 + $0x50] sm:$0xff]
        %v1697 = vld [vmem:[%s3 + $0x58] sm:$0xff]
        %v1698 = vld [vmem:[%s3 + $0x60] sm:$0xff]
        %v1699 = vld [vmem:[%s3 + $0x68] sm:$0xff]
        %v1700 = vld [vmem:[%s3 + $0x70] sm:$0xff]
        %v1701 = vld [vmem:[%s3 + $0x78] sm:$0xff]
        %v1702 = vld [vmem:[%s3 + $0x80] sm:$0xff]
        %v1703 = vld [vmem:[%s3 + $0x88] sm:$0xff]
        %v1704 = vld [vmem:[%s3 + $0x90] sm:$0xff]
        %v1705 = vld [vmem:[%s3 + $0x98] sm:$0xff]
        %v1706 = vld [vmem:[%s3 + $0xa0] sm:$0xff]
        %v1707 = vld [vmem:[%s3 + $0xa8] sm:$0xff]
        %v1708 = vld [vmem:[%s3 + $0xb0] sm:$0xff]
        %v1709 = vld [vmem:[%s3 + $0xb8] sm:$0xff]
        %v1710 = vld [vmem:[%s3 + $0xc0] sm:$0xff]
        %v1711 = vld [vmem:[%s3 + $0xc8] sm:$0xff]
        %v1712 = vld [vmem:[%s3 + $0xd0] sm:$0xff]
        %v1713 = vld [vmem:[%s3 + $0xd8] sm:$0xff]
        %v1714 = vld [vmem:[%s3 + $0xe0] sm:$0xff]
        %v1715 = vld [vmem:[%s3 + $0xe8] sm:$0xff]
        %v1716 = vld [vmem:[%s3 + $0xf0] sm:$0xff]
        %v1717 = vld [vmem:[%s3 + $0xf8] sm:$0xff]
        %v1718 = vld [vmem:[%s3 + $0x100] sm:$0xff]
        %v1719 = vld [vmem:[%s3 + $0x108] sm:$0xff]
        %v1720 = vld [vmem:[%s3 + $0x110] sm:$0xff]
        %v1721 = vld [vmem:[%s3 + $0x118] sm:$0xff]
        %v1722 = vld [vmem:[%s3 + $0x120] sm:$0xff]
        %v1723 = vld [vmem:[%s3 + $0x128] sm:$0xff]
        %v1724 = vld [vmem:[%s3 + $0x130] sm:$0xff]
        %v1725 = vld [vmem:[%s3 + $0x138] sm:$0xff]
        %v1726 = vld [vmem:[%s3 + $0x140] sm:$0xff]
        %v1727 = vld [vmem:[%s3 + $0x148] sm:$0xff]
        %v1728 = vld [vmem:[%s3 + $0x150] sm:$0xff]
        %v1729 = vld [vmem:[%s3 + $0x158] sm:$0xff]
        %v1730 = vld [vmem:[%s3 + $0x160] sm:$0xff]
        %v1731 = vld [vmem:[%s3 + $0x168] sm:$0xff]
        %v1732 = vld [vmem:[%s3 + $0x170] sm:$0xff]
        %v1733 = vld [vmem:[%s3 + $0x178] sm:$0xff]
        %1735 = vset.pattern.permute.xlu0 0
        %1736 = vperm.xlu0 %1735, %v1686
        %v1737 = vpop.permute.xlu0 %1736
        %1740 = vset.pattern.permute.xlu0 0
        %1741 = vperm.xlu0 %1740, %v1687
        %v1742 = vpop.permute.xlu0 %1741
        %1745 = vset.pattern.permute.xlu0 0
        %1746 = vperm.xlu0 %1745, %v1688
        %v1747 = vpop.permute.xlu0 %1746
        %1750 = vset.pattern.permute.xlu0 0
        %1751 = vperm.xlu0 %1750, %v1689
        %v1752 = vpop.permute.xlu0 %1751
        %1755 = vset.pattern.permute.xlu0 0
        %1756 = vperm.xlu0 %1755, %v1690
        %v1757 = vpop.permute.xlu0 %1756
        %1760 = vset.pattern.permute.xlu0 0
        %1761 = vperm.xlu0 %1760, %v1691
        %v1762 = vpop.permute.xlu0 %1761
        %1765 = vset.pattern.permute.xlu0 0
        %1766 = vperm.xlu0 %1765, %v1692
        %v1767 = vpop.permute.xlu0 %1766
        %1770 = vset.pattern.permute.xlu0 0
        %1771 = vperm.xlu0 %1770, %v1693
        %v1772 = vpop.permute.xlu0 %1771
        %1775 = vset.pattern.permute.xlu0 0
        %1776 = vperm.xlu0 %1775, %v1694
        %v1777 = vpop.permute.xlu0 %1776
        %1780 = vset.pattern.permute.xlu0 0
        %1781 = vperm.xlu0 %1780, %v1695
        %v1782 = vpop.permute.xlu0 %1781
        %1785 = vset.pattern.permute.xlu0 0
        %1786 = vperm.xlu0 %1785, %v1696
        %v1787 = vpop.permute.xlu0 %1786
        %1790 = vset.pattern.permute.xlu0 0
        %1791 = vperm.xlu0 %1790, %v1697
        %v1792 = vpop.permute.xlu0 %1791
        %1795 = vset.pattern.permute.xlu0 0
        %1796 = vperm.xlu0 %1795, %v1698
        %v1797 = vpop.permute.xlu0 %1796
        %1800 = vset.pattern.permute.xlu0 0
        %1801 = vperm.xlu0 %1800, %v1699
        %v1802 = vpop.permute.xlu0 %1801
        %1805 = vset.pattern.permute.xlu0 0
        %1806 = vperm.xlu0 %1805, %v1700
        %v1807 = vpop.permute.xlu0 %1806
        %1810 = vset.pattern.permute.xlu0 0
        %1811 = vperm.xlu0 %1810, %v1701
        %v1812 = vpop.permute.xlu0 %1811
        %1815 = vset.pattern.permute.xlu0 0
        %1816 = vperm.xlu0 %1815, %v1702
        %v1817 = vpop.permute.xlu0 %1816
        %1820 = vset.pattern.permute.xlu0 0
        %1821 = vperm.xlu0 %1820, %v1703
        %v1822 = vpop.permute.xlu0 %1821
        %1825 = vset.pattern.permute.xlu0 0
        %1826 = vperm.xlu0 %1825, %v1704
        %v1827 = vpop.permute.xlu0 %1826
        %1830 = vset.pattern.permute.xlu0 0
        %1831 = vperm.xlu0 %1830, %v1705
        %v1832 = vpop.permute.xlu0 %1831
        %1835 = vset.pattern.permute.xlu0 0
        %1836 = vperm.xlu0 %1835, %v1706
        %v1837 = vpop.permute.xlu0 %1836
        %1840 = vset.pattern.permute.xlu0 0
        %1841 = vperm.xlu0 %1840, %v1707
        %v1842 = vpop.permute.xlu0 %1841
        %1845 = vset.pattern.permute.xlu0 0
        %1846 = vperm.xlu0 %1845, %v1708
        %v1847 = vpop.permute.xlu0 %1846
        %1850 = vset.pattern.permute.xlu0 0
        %1851 = vperm.xlu0 %1850, %v1709
        %v1852 = vpop.permute.xlu0 %1851
        %1855 = vset.pattern.permute.xlu0 0
        %1856 = vperm.xlu0 %1855, %v1710
        %v1857 = vpop.permute.xlu0 %1856
        %1860 = vset.pattern.permute.xlu0 0
        %1861 = vperm.xlu0 %1860, %v1711
        %v1862 = vpop.permute.xlu0 %1861
        %1865 = vset.pattern.permute.xlu0 0
        %1866 = vperm.xlu0 %1865, %v1712
        %v1867 = vpop.permute.xlu0 %1866
        %1870 = vset.pattern.permute.xlu0 0
        %1871 = vperm.xlu0 %1870, %v1713
        %v1872 = vpop.permute.xlu0 %1871
        %1875 = vset.pattern.permute.xlu0 0
        %1876 = vperm.xlu0 %1875, %v1714
        %v1877 = vpop.permute.xlu0 %1876
        %1880 = vset.pattern.permute.xlu0 0
        %1881 = vperm.xlu0 %1880, %v1715
        %v1882 = vpop.permute.xlu0 %1881
        %1885 = vset.pattern.permute.xlu0 0
        %1886 = vperm.xlu0 %1885, %v1716
        %v1887 = vpop.permute.xlu0 %1886
        %1890 = vset.pattern.permute.xlu0 0
        %1891 = vperm.xlu0 %1890, %v1717
        %v1892 = vpop.permute.xlu0 %1891
        %1895 = vset.pattern.permute.xlu0 0
        %1896 = vperm.xlu0 %1895, %v1718
        %v1897 = vpop.permute.xlu0 %1896
        %1900 = vset.pattern.permute.xlu0 0
        %1901 = vperm.xlu0 %1900, %v1719
        %v1902 = vpop.permute.xlu0 %1901
        %1905 = vset.pattern.permute.xlu0 0
        %1906 = vperm.xlu0 %1905, %v1720
        %v1907 = vpop.permute.xlu0 %1906
        %1910 = vset.pattern.permute.xlu0 0
        %1911 = vperm.xlu0 %1910, %v1721
        %v1912 = vpop.permute.xlu0 %1911
        %1915 = vset.pattern.permute.xlu0 0
        %1916 = vperm.xlu0 %1915, %v1722
        %v1917 = vpop.permute.xlu0 %1916
        %1920 = vset.pattern.permute.xlu0 0
        %1921 = vperm.xlu0 %1920, %v1723
        %v1922 = vpop.permute.xlu0 %1921
        %1925 = vset.pattern.permute.xlu0 0
        %1926 = vperm.xlu0 %1925, %v1724
        %v1927 = vpop.permute.xlu0 %1926
        %1930 = vset.pattern.permute.xlu0 0
        %1931 = vperm.xlu0 %1930, %v1725
        %v1932 = vpop.permute.xlu0 %1931
        %1935 = vset.pattern.permute.xlu0 0
        %1936 = vperm.xlu0 %1935, %v1726
        %v1937 = vpop.permute.xlu0 %1936
        %1940 = vset.pattern.permute.xlu0 0
        %1941 = vperm.xlu0 %1940, %v1727
        %v1942 = vpop.permute.xlu0 %1941
        %1945 = vset.pattern.permute.xlu0 0
        %1946 = vperm.xlu0 %1945, %v1728
        %v1947 = vpop.permute.xlu0 %1946
        %1950 = vset.pattern.permute.xlu0 0
        %1951 = vperm.xlu0 %1950, %v1729
        %v1952 = vpop.permute.xlu0 %1951
        %1955 = vset.pattern.permute.xlu0 0
        %1956 = vperm.xlu0 %1955, %v1730
        %v1957 = vpop.permute.xlu0 %1956
        %1960 = vset.pattern.permute.xlu0 0
        %1961 = vperm.xlu0 %1960, %v1731
        %v1962 = vpop.permute.xlu0 %1961
        %1965 = vset.pattern.permute.xlu0 0
        %1966 = vperm.xlu0 %1965, %v1732
        %v1967 = vpop.permute.xlu0 %1966
        %1970 = vset.pattern.permute.xlu0 0
        %1971 = vperm.xlu0 %1970, %v1733
        %v1972 = vpop.permute.xlu0 %1971
        %v2022 = vunpack.c.l.b16 %v1638
        %v2023 = vunpack.c.h.b16 %v1638
        %v2024 = vunpack.c.l.b16 %v1639
        %v2025 = vunpack.c.h.b16 %v1639
        %v2026 = vunpack.c.l.b16 %v1640
        %v2027 = vunpack.c.h.b16 %v1640
        %v2028 = vunpack.c.l.b16 %v1641
        %v2029 = vunpack.c.h.b16 %v1641
        %v2030 = vunpack.c.l.b16 %v1642
        %v2031 = vunpack.c.h.b16 %v1642
        %v2032 = vunpack.c.l.b16 %v1643
        %v2033 = vunpack.c.h.b16 %v1643
        %v2034 = vunpack.c.l.b16 %v1644
        %v2035 = vunpack.c.h.b16 %v1644
        %v2036 = vunpack.c.l.b16 %v1645
        %v2037 = vunpack.c.h.b16 %v1645
        %v2038 = vunpack.c.l.b16 %v1646
        %v2039 = vunpack.c.h.b16 %v1646
        %v2040 = vunpack.c.l.b16 %v1647
        %v2041 = vunpack.c.h.b16 %v1647
        %v2042 = vunpack.c.l.b16 %v1648
        %v2043 = vunpack.c.h.b16 %v1648
        %v2044 = vunpack.c.l.b16 %v1649
        %v2045 = vunpack.c.h.b16 %v1649
        %v2046 = vunpack.c.l.b16 %v1650
        %v2047 = vunpack.c.h.b16 %v1650
        %v2048 = vunpack.c.l.b16 %v1651
        %v2049 = vunpack.c.h.b16 %v1651
        %v2050 = vunpack.c.l.b16 %v1652
        %v2051 = vunpack.c.h.b16 %v1652
        %v2052 = vunpack.c.l.b16 %v1653
        %v2053 = vunpack.c.h.b16 %v1653
        %v2054 = vunpack.c.l.b16 %v1654
        %v2055 = vunpack.c.h.b16 %v1654
        %v2056 = vunpack.c.l.b16 %v1655
        %v2057 = vunpack.c.h.b16 %v1655
        %v2058 = vunpack.c.l.b16 %v1656
        %v2059 = vunpack.c.h.b16 %v1656
        %v2060 = vunpack.c.l.b16 %v1657
        %v2061 = vunpack.c.h.b16 %v1657
        %v2062 = vunpack.c.l.b16 %v1658
        %v2063 = vunpack.c.h.b16 %v1658
        %v2064 = vunpack.c.l.b16 %v1659
        %v2065 = vunpack.c.h.b16 %v1659
        %v2066 = vunpack.c.l.b16 %v1660
        %v2067 = vunpack.c.h.b16 %v1660
        %v2068 = vunpack.c.l.b16 %v1661
        %v2069 = vunpack.c.h.b16 %v1661
        %v2070 = vunpack.c.l.b16 %v1662
        %v2071 = vunpack.c.h.b16 %v1662
        %v2072 = vunpack.c.l.b16 %v1663
        %v2073 = vunpack.c.h.b16 %v1663
        %v2074 = vunpack.c.l.b16 %v1664
        %v2075 = vunpack.c.h.b16 %v1664
        %v2076 = vunpack.c.l.b16 %v1665
        %v2077 = vunpack.c.h.b16 %v1665
        %v2078 = vunpack.c.l.b16 %v1666
        %v2079 = vunpack.c.h.b16 %v1666
        %v2080 = vunpack.c.l.b16 %v1667
        %v2081 = vunpack.c.h.b16 %v1667
        %v2082 = vunpack.c.l.b16 %v1668
        %v2083 = vunpack.c.h.b16 %v1668
        %v2084 = vunpack.c.l.b16 %v1669
        %v2085 = vunpack.c.h.b16 %v1669
        %v2086 = vunpack.c.l.b16 %v1670
        %v2087 = vunpack.c.h.b16 %v1670
        %v2088 = vunpack.c.l.b16 %v1671
        %v2089 = vunpack.c.h.b16 %v1671
        %v2090 = vunpack.c.l.b16 %v1672
        %v2091 = vunpack.c.h.b16 %v1672
        %v2092 = vunpack.c.l.b16 %v1673
        %v2093 = vunpack.c.h.b16 %v1673
        %v2094 = vunpack.c.l.b16 %v1674
        %v2095 = vunpack.c.h.b16 %v1674
        %v2096 = vunpack.c.l.b16 %v1675
        %v2097 = vunpack.c.h.b16 %v1675
        %v2098 = vunpack.c.l.b16 %v1676
        %v2099 = vunpack.c.h.b16 %v1676
        %v2100 = vunpack.c.l.b16 %v1677
        %v2101 = vunpack.c.h.b16 %v1677
        %v2102 = vunpack.c.l.b16 %v1678
        %v2103 = vunpack.c.h.b16 %v1678
        %v2104 = vunpack.c.l.b16 %v1679
        %v2105 = vunpack.c.h.b16 %v1679
        %v2106 = vunpack.c.l.b16 %v1680
        %v2107 = vunpack.c.h.b16 %v1680
        %v2108 = vunpack.c.l.b16 %v1681
        %v2109 = vunpack.c.h.b16 %v1681
        %v2110 = vunpack.c.l.b16 %v1682
        %v2111 = vunpack.c.h.b16 %v1682
        %v2112 = vunpack.c.l.b16 %v1683
        %v2113 = vunpack.c.h.b16 %v1683
        %v2114 = vunpack.c.l.b16 %v1684
        %v2115 = vunpack.c.h.b16 %v1684
        %v2116 = vunpack.c.l.b16 %v1685
        %v2117 = vunpack.c.h.b16 %v1685
        %v2118 = vpack.c.b16 %v2024, %v2022
        %v2119 = vpack.c.b16 %v2025, %v2023
        %v2120 = vpack.c.b16 %v2028, %v2026
        %v2121 = vpack.c.b16 %v2029, %v2027
        %v2122 = vpack.c.b16 %v2032, %v2030
        %v2123 = vpack.c.b16 %v2033, %v2031
        %v2124 = vpack.c.b16 %v2036, %v2034
        %v2125 = vpack.c.b16 %v2037, %v2035
        %v2126 = vpack.c.b16 %v2040, %v2038
        %v2127 = vpack.c.b16 %v2041, %v2039
        %v2128 = vpack.c.b16 %v2044, %v2042
        %v2129 = vpack.c.b16 %v2045, %v2043
        %v2130 = vpack.c.b16 %v2048, %v2046
        %v2131 = vpack.c.b16 %v2049, %v2047
        %v2132 = vpack.c.b16 %v2052, %v2050
        %v2133 = vpack.c.b16 %v2053, %v2051
        %v2134 = vpack.c.b16 %v2056, %v2054
        %v2135 = vpack.c.b16 %v2057, %v2055
        %v2136 = vpack.c.b16 %v2060, %v2058
        %v2137 = vpack.c.b16 %v2061, %v2059
        %v2138 = vpack.c.b16 %v2064, %v2062
        %v2139 = vpack.c.b16 %v2065, %v2063
        %v2140 = vpack.c.b16 %v2068, %v2066
        %v2141 = vpack.c.b16 %v2069, %v2067
        %v2142 = vpack.c.b16 %v2072, %v2070
        %v2143 = vpack.c.b16 %v2073, %v2071
        %v2144 = vpack.c.b16 %v2076, %v2074
        %v2145 = vpack.c.b16 %v2077, %v2075
        %v2146 = vpack.c.b16 %v2080, %v2078
        %v2147 = vpack.c.b16 %v2081, %v2079
        %v2148 = vpack.c.b16 %v2084, %v2082
        %v2149 = vpack.c.b16 %v2085, %v2083
        %v2150 = vpack.c.b16 %v2088, %v2086
        %v2151 = vpack.c.b16 %v2089, %v2087
        %v2152 = vpack.c.b16 %v2092, %v2090
        %v2153 = vpack.c.b16 %v2093, %v2091
        %v2154 = vpack.c.b16 %v2096, %v2094
        %v2155 = vpack.c.b16 %v2097, %v2095
        %v2156 = vpack.c.b16 %v2100, %v2098
        %v2157 = vpack.c.b16 %v2101, %v2099
        %v2158 = vpack.c.b16 %v2104, %v2102
        %v2159 = vpack.c.b16 %v2105, %v2103
        %v2160 = vpack.c.b16 %v2108, %v2106
        %v2161 = vpack.c.b16 %v2109, %v2107
        %v2162 = vpack.c.b16 %v2112, %v2110
        %v2163 = vpack.c.b16 %v2113, %v2111
        %v2164 = vpack.c.b16 %v2116, %v2114
        %v2165 = vpack.c.b16 %v2117, %v2115
        %vm2190 = vcmask 261120
        %v2192 = vsel %vm2190, %v2119, 0
        %v2195 = vsel %vm2190, %v2121, 0
        %v2198 = vsel %vm2190, %v2123, 0
        %v2201 = vsel %vm2190, %v2125, 0
        %v2204 = vsel %vm2190, %v2127, 0
        %v2207 = vsel %vm2190, %v2129, 0
        %v2210 = vsel %vm2190, %v2131, 0
        %v2213 = vsel %vm2190, %v2133, 0
        %v2216 = vsel %vm2190, %v2135, 0
        %v2219 = vsel %vm2190, %v2137, 0
        %v2222 = vsel %vm2190, %v2139, 0
        %v2225 = vsel %vm2190, %v2141, 0
        %v2228 = vsel %vm2190, %v2143, 0
        %v2231 = vsel %vm2190, %v2145, 0
        %v2234 = vsel %vm2190, %v2147, 0
        %v2237 = vsel %vm2190, %v2149, 0
        %v2240 = vsel %vm2190, %v2151, 0
        %v2243 = vsel %vm2190, %v2153, 0
        %v2246 = vsel %vm2190, %v2155, 0
        %v2249 = vsel %vm2190, %v2157, 0
        %v2252 = vsel %vm2190, %v2159, 0
        %v2255 = vsel %vm2190, %v2161, 0
        %v2258 = vsel %vm2190, %v2163, 0
        %v2261 = vsel %vm2190, %v2165, 0
        %2263 = vmatprep.subr.bf16.mxu0 %v1318
        %2264 = vmatpush1.bf16.msra.mxu0 %v1314
        %2265 = vmatprep.subr.bf16.mxu0 %v1366
        %2266 = vmatpush1.bf16.msra.mxu0 %v1363
        %2267 = vmatprep.subr.bf16.mxu0 %v1391
        %2268 = vmatpush1.bf16.msra.mxu0 %v1388
        %2269 = vmatprep.subr.bf16.mxu0 %v1433
        %2270 = vmatpush1.bf16.msra.mxu0 %v1430
        %2271 = vmatprep.subr.bf16.mxu0 %v1458
        %2272 = vmatpush1.bf16.msra.mxu0 %v1455
        %2273 = vmatprep.subr.bf16.mxu0 %v1484
        %2274 = vmatpush1.bf16.msra.mxu0 %v1480
        %2275 = vmatprep.subr.bf16.mxu0 %v1530
        %2276 = vmatpush1.bf16.msra.mxu0 %v1527
        %2277 = vmatprep.subr.bf16.mxu0 %v1554
        %2278 = vmatpush1.bf16.msra.mxu0 %v1551
        %2279 = vmatprep.subr.bf16.mxu0 %v1594
        %2280 = vmatpush1.bf16.msra.mxu0 %v1591
        %2281 = vmatprep.subr.bf16.mxu0 %v1618
        %2282 = vmatpush1.bf16.msra.mxu0 %v1615
        %2283 = vmatprep.subr.bf16.mxu0 0
        %2284 = vmatpush1.bf16.msra.mxu0 0
        %2285 = vmatprep.subr.bf16.mxu0 0
        %2286 = vmatpush1.bf16.msra.mxu0 0
        %2287 = vmatprep.subr.bf16.mxu0 0
        %2288 = vmatpush1.bf16.msra.mxu0 0
        %2289 = vmatprep.subr.bf16.mxu0 0
        %2290 = vmatpush1.bf16.msra.mxu0 0
        %2291 = vmatprep.subr.bf16.mxu0 0
        %2292 = vmatpush1.bf16.msra.mxu0 0
        %2293 = vmatprep.subr.bf16.mxu0 0
        %2294 = vmatpush1.bf16.msra.mxu0 0
        %2295 = vmatprep.mubr.bf16.mxu0 %v2192
        %2296 = vmatmul.mubr.bf16.gmra.mrb[0].mxu0 %v2118
        %v2297 = vpop.f32.mrb[0].mxu0
        %v2298 = vadd.f32 %v1737, %v2297
        %v2299 = vpop.f32.mrb[0].mxu0
        %v2300 = vadd.f32 %v1737, %v2299
        %v2301 = vpop.f32.mrb[0].mxu0
        %v2302 = vadd.f32 %v1742, %v2301
        %v2303 = vpop.f32.mrb[0].mxu0
        %v2304 = vadd.f32 %v1742, %v2303
        %2305 = vmatprep.mubr.bf16.mxu0 %v2195
        %2306 = vmatmul.mubr.bf16.gmra.mrb[0].mxu0 %v2120
        %v2307 = vpop.f32.mrb[0].mxu0
        %v2308 = vadd.f32 %v1747, %v2307
        %v2309 = vpop.f32.mrb[0].mxu0
        %v2310 = vadd.f32 %v1747, %v2309
        %v2311 = vpop.f32.mrb[0].mxu0
        %v2312 = vadd.f32 %v1752, %v2311
        %v2313 = vpop.f32.mrb[0].mxu0
        %v2314 = vadd.f32 %v1752, %v2313
        %2315 = vmatprep.mubr.bf16.mxu0 %v2198
        %2316 = vmatmul.mubr.bf16.gmra.mrb[0].mxu0 %v2122
        %v2317 = vpop.f32.mrb[0].mxu0
        %v2318 = vadd.f32 %v1757, %v2317
        %v2319 = vpop.f32.mrb[0].mxu0
        %v2320 = vadd.f32 %v1757, %v2319
        %v2321 = vpop.f32.mrb[0].mxu0
        %v2322 = vadd.f32 %v1762, %v2321
        %v2323 = vpop.f32.mrb[0].mxu0
        %v2324 = vadd.f32 %v1762, %v2323
        %2325 = vmatprep.mubr.bf16.mxu0 %v2201
        %2326 = vmatmul.mubr.bf16.gmra.mrb[0].mxu0 %v2124
        %v2327 = vpop.f32.mrb[0].mxu0
        %v2328 = vadd.f32 %v1767, %v2327
        %v2329 = vpop.f32.mrb[0].mxu0
        %v2330 = vadd.f32 %v1767, %v2329
        %v2331 = vpop.f32.mrb[0].mxu0
        %v2332 = vadd.f32 %v1772, %v2331
        %v2333 = vpop.f32.mrb[0].mxu0
        %v2334 = vadd.f32 %v1772, %v2333
        %2335 = vmatprep.mubr.bf16.mxu0 %v2204
        %2336 = vmatmul.mubr.bf16.gmra.mrb[0].mxu0 %v2126
        %v2337 = vpop.f32.mrb[0].mxu0
        %v2338 = vadd.f32 %v1777, %v2337
        %v2339 = vpop.f32.mrb[0].mxu0
        %v2340 = vadd.f32 %v1777, %v2339
        %v2341 = vpop.f32.mrb[0].mxu0
        %v2342 = vadd.f32 %v1782, %v2341
        %v2343 = vpop.f32.mrb[0].mxu0
        %v2344 = vadd.f32 %v1782, %v2343
        %2345 = vmatprep.mubr.bf16.mxu0 %v2207
        %2346 = vmatmul.mubr.bf16.gmra.mrb[0].mxu0 %v2128
        %v2347 = vpop.f32.mrb[0].mxu0
        %v2348 = vadd.f32 %v1787, %v2347
        %v2349 = vpop.f32.mrb[0].mxu0
        %v2350 = vadd.f32 %v1787, %v2349
        %v2351 = vpop.f32.mrb[0].mxu0
        %v2352 = vadd.f32 %v1792, %v2351
        %v2353 = vpop.f32.mrb[0].mxu0
        %v2354 = vadd.f32 %v1792, %v2353
        %2355 = vmatprep.mubr.bf16.mxu0 %v2210
        %2356 = vmatmul.mubr.bf16.gmra.mrb[0].mxu0 %v2130
        %v2357 = vpop.f32.mrb[0].mxu0
        %v2358 = vadd.f32 %v1797, %v2357
        %v2359 = vpop.f32.mrb[0].mxu0
        %v2360 = vadd.f32 %v1797, %v2359
        %v2361 = vpop.f32.mrb[0].mxu0
        %v2362 = vadd.f32 %v1802, %v2361
        %v2363 = vpop.f32.mrb[0].mxu0
        %v2364 = vadd.f32 %v1802, %v2363
        %2365 = vmatprep.mubr.bf16.mxu0 %v2213
        %2366 = vmatmul.mubr.bf16.gmra.mrb[0].mxu0 %v2132
        %v2367 = vpop.f32.mrb[0].mxu0
        %v2368 = vadd.f32 %v1807, %v2367
        %v2369 = vpop.f32.mrb[0].mxu0
        %v2370 = vadd.f32 %v1807, %v2369
        %v2371 = vpop.f32.mrb[0].mxu0
        %v2372 = vadd.f32 %v1812, %v2371
        %v2373 = vpop.f32.mrb[0].mxu0
        %v2374 = vadd.f32 %v1812, %v2373
        %2375 = vmatprep.mubr.bf16.mxu0 %v2216
        %2376 = vmatmul.mubr.bf16.gmra.mrb[0].mxu0 %v2134
        %v2377 = vpop.f32.mrb[0].mxu0
        %v2378 = vadd.f32 %v1817, %v2377
        %v2379 = vpop.f32.mrb[0].mxu0
        %v2380 = vadd.f32 %v1817, %v2379
        %v2381 = vpop.f32.mrb[0].mxu0
        %v2382 = vadd.f32 %v1822, %v2381
        %v2383 = vpop.f32.mrb[0].mxu0
        %v2384 = vadd.f32 %v1822, %v2383
        %2385 = vmatprep.mubr.bf16.mxu0 %v2219
        %2386 = vmatmul.mubr.bf16.gmra.mrb[0].mxu0 %v2136
        %v2387 = vpop.f32.mrb[0].mxu0
        %v2388 = vadd.f32 %v1827, %v2387
        %v2389 = vpop.f32.mrb[0].mxu0
        %v2390 = vadd.f32 %v1827, %v2389
        %v2391 = vpop.f32.mrb[0].mxu0
        %v2392 = vadd.f32 %v1832, %v2391
        %v2393 = vpop.f32.mrb[0].mxu0
        %v2394 = vadd.f32 %v1832, %v2393
        %2395 = vmatprep.mubr.bf16.mxu0 %v2222
        %2396 = vmatmul.mubr.bf16.gmra.mrb[0].mxu0 %v2138
        %v2397 = vpop.f32.mrb[0].mxu0
        %v2398 = vadd.f32 %v1837, %v2397
        %v2399 = vpop.f32.mrb[0].mxu0
        %v2400 = vadd.f32 %v1837, %v2399
        %v2401 = vpop.f32.mrb[0].mxu0
        %v2402 = vadd.f32 %v1842, %v2401
        %v2403 = vpop.f32.mrb[0].mxu0
        %v2404 = vadd.f32 %v1842, %v2403
        %2405 = vmatprep.mubr.bf16.mxu0 %v2225
        %2406 = vmatmul.mubr.bf16.gmra.mrb[0].mxu0 %v2140
        %v2407 = vpop.f32.mrb[0].mxu0
        %v2408 = vadd.f32 %v1847, %v2407
        %v2409 = vpop.f32.mrb[0].mxu0
        %v2410 = vadd.f32 %v1847, %v2409
        %v2411 = vpop.f32.mrb[0].mxu0
        %v2412 = vadd.f32 %v1852, %v2411
        %v2413 = vpop.f32.mrb[0].mxu0
        %v2414 = vadd.f32 %v1852, %v2413
        %2415 = vmatprep.mubr.bf16.mxu0 %v2228
        %2416 = vmatmul.mubr.bf16.gmra.mrb[0].mxu0 %v2142
        %v2417 = vpop.f32.mrb[0].mxu0
        %v2418 = vadd.f32 %v1857, %v2417
        %v2419 = vpop.f32.mrb[0].mxu0
        %v2420 = vadd.f32 %v1857, %v2419
        %v2421 = vpop.f32.mrb[0].mxu0
        %v2422 = vadd.f32 %v1862, %v2421
        %v2423 = vpop.f32.mrb[0].mxu0
        %v2424 = vadd.f32 %v1862, %v2423
        %2425 = vmatprep.mubr.bf16.mxu0 %v2231
        %2426 = vmatmul.mubr.bf16.gmra.mrb[0].mxu0 %v2144
        %v2427 = vpop.f32.mrb[0].mxu0
        %v2428 = vadd.f32 %v1867, %v2427
        %v2429 = vpop.f32.mrb[0].mxu0
        %v2430 = vadd.f32 %v1867, %v2429
        %v2431 = vpop.f32.mrb[0].mxu0
        %v2432 = vadd.f32 %v1872, %v2431
        %v2433 = vpop.f32.mrb[0].mxu0
        %v2434 = vadd.f32 %v1872, %v2433
        %2435 = vmatprep.mubr.bf16.mxu0 %v2234
        %2436 = vmatmul.mubr.bf16.gmra.mrb[0].mxu0 %v2146
        %v2437 = vpop.f32.mrb[0].mxu0
        %v2438 = vadd.f32 %v1877, %v2437
        %v2439 = vpop.f32.mrb[0].mxu0
        %v2440 = vadd.f32 %v1877, %v2439
        %v2441 = vpop.f32.mrb[0].mxu0
        %v2442 = vadd.f32 %v1882, %v2441
        %v2443 = vpop.f32.mrb[0].mxu0
        %v2444 = vadd.f32 %v1882, %v2443
        %2445 = vmatprep.mubr.bf16.mxu0 %v2237
        %2446 = vmatmul.mubr.bf16.gmra.mrb[0].mxu0 %v2148
        %v2447 = vpop.f32.mrb[0].mxu0
        %v2448 = vadd.f32 %v1887, %v2447
        %v2449 = vpop.f32.mrb[0].mxu0
        %v2450 = vadd.f32 %v1887, %v2449
        %v2451 = vpop.f32.mrb[0].mxu0
        %v2452 = vadd.f32 %v1892, %v2451
        %v2453 = vpop.f32.mrb[0].mxu0
        %v2454 = vadd.f32 %v1892, %v2453
        %2455 = vmatprep.mubr.bf16.mxu0 %v2240
        %2456 = vmatmul.mubr.bf16.gmra.mrb[0].mxu0 %v2150
        %v2457 = vpop.f32.mrb[0].mxu0
        %v2458 = vadd.f32 %v1897, %v2457
        %v2459 = vpop.f32.mrb[0].mxu0
        %v2460 = vadd.f32 %v1897, %v2459
        %v2461 = vpop.f32.mrb[0].mxu0
        %v2462 = vadd.f32 %v1902, %v2461
        %v2463 = vpop.f32.mrb[0].mxu0
        %v2464 = vadd.f32 %v1902, %v2463
        %2465 = vmatprep.mubr.bf16.mxu0 %v2243
        %2466 = vmatmul.mubr.bf16.gmra.mrb[0].mxu0 %v2152
        %v2467 = vpop.f32.mrb[0].mxu0
        %v2468 = vadd.f32 %v1907, %v2467
        %v2469 = vpop.f32.mrb[0].mxu0
        %v2470 = vadd.f32 %v1907, %v2469
        %v2471 = vpop.f32.mrb[0].mxu0
        %v2472 = vadd.f32 %v1912, %v2471
        %v2473 = vpop.f32.mrb[0].mxu0
        %v2474 = vadd.f32 %v1912, %v2473
        %2475 = vmatprep.mubr.bf16.mxu0 %v2246
        %2476 = vmatmul.mubr.bf16.gmra.mrb[0].mxu0 %v2154
        %v2477 = vpop.f32.mrb[0].mxu0
        %v2478 = vadd.f32 %v1917, %v2477
        %v2479 = vpop.f32.mrb[0].mxu0
        %v2480 = vadd.f32 %v1917, %v2479
        %v2481 = vpop.f32.mrb[0].mxu0
        %v2482 = vadd.f32 %v1922, %v2481
        %v2483 = vpop.f32.mrb[0].mxu0
        %v2484 = vadd.f32 %v1922, %v2483
        %2485 = vmatprep.mubr.bf16.mxu0 %v2249
        %2486 = vmatmul.mubr.bf16.gmra.mrb[0].mxu0 %v2156
        %v2487 = vpop.f32.mrb[0].mxu0
        %v2488 = vadd.f32 %v1927, %v2487
        %v2489 = vpop.f32.mrb[0].mxu0
        %v2490 = vadd.f32 %v1927, %v2489
        %v2491 = vpop.f32.mrb[0].mxu0
        %v2492 = vadd.f32 %v1932, %v2491
        %v2493 = vpop.f32.mrb[0].mxu0
        %v2494 = vadd.f32 %v1932, %v2493
        %2495 = vmatprep.mubr.bf16.mxu0 %v2252
        %2496 = vmatmul.mubr.bf16.gmra.mrb[0].mxu0 %v2158
        %v2497 = vpop.f32.mrb[0].mxu0
        %v2498 = vadd.f32 %v1937, %v2497
        %v2499 = vpop.f32.mrb[0].mxu0
        %v2500 = vadd.f32 %v1937, %v2499
        %v2501 = vpop.f32.mrb[0].mxu0
        %v2502 = vadd.f32 %v1942, %v2501
        %v2503 = vpop.f32.mrb[0].mxu0
        %v2504 = vadd.f32 %v1942, %v2503
        %2505 = vmatprep.mubr.bf16.mxu0 %v2255
        %2506 = vmatmul.mubr.bf16.gmra.mrb[0].mxu0 %v2160
        %v2507 = vpop.f32.mrb[0].mxu0
        %v2508 = vadd.f32 %v1947, %v2507
        %v2509 = vpop.f32.mrb[0].mxu0
        %v2510 = vadd.f32 %v1947, %v2509
        %v2511 = vpop.f32.mrb[0].mxu0
        %v2512 = vadd.f32 %v1952, %v2511
        %v2513 = vpop.f32.mrb[0].mxu0
        %v2514 = vadd.f32 %v1952, %v2513
        %2515 = vmatprep.mubr.bf16.mxu0 %v2258
        %2516 = vmatmul.mubr.bf16.gmra.mrb[0].mxu0 %v2162
        %v2517 = vpop.f32.mrb[0].mxu0
        %v2518 = vadd.f32 %v1957, %v2517
        %v2519 = vpop.f32.mrb[0].mxu0
        %v2520 = vadd.f32 %v1957, %v2519
        %v2521 = vpop.f32.mrb[0].mxu0
        %v2522 = vadd.f32 %v1962, %v2521
        %v2523 = vpop.f32.mrb[0].mxu0
        %v2524 = vadd.f32 %v1962, %v2523
        %2525 = vmatprep.mubr.bf16.mxu0 %v2261
        %2526 = vmatmul.mubr.bf16.gmra.mrb[0].mxu0 %v2164
        %v2527 = vpop.f32.mrb[0].mxu0
        %v2528 = vadd.f32 %v1967, %v2527
        %v2529 = vpop.f32.mrb[0].mxu0
        %v2530 = vadd.f32 %v1967, %v2529
        %v2531 = vpop.f32.mrb[0].mxu0
        %v2532 = vadd.f32 %v1972, %v2531
        %v2533 = vpop.f32.mrb[0].mxu0
        %v2534 = vadd.f32 %v1972, %v2533
        %2535 = vdwg.mxu0
        %2536 = vmatprep.subr.bf16.mxu0 %v1326
        %2537 = vmatpush1.bf16.msra.mxu0 %v1322
        %2538 = vmatprep.subr.bf16.mxu0 %v1372
        %2539 = vmatpush1.bf16.msra.mxu0 %v1369
        %2540 = vmatprep.subr.bf16.mxu0 %v1397
        %2541 = vmatpush1.bf16.msra.mxu0 %v1394
        %2542 = vmatprep.subr.bf16.mxu0 %v1439
        %2543 = vmatpush1.bf16.msra.mxu0 %v1436
        %2544 = vmatprep.subr.bf16.mxu0 %v1464
        %2545 = vmatpush1.bf16.msra.mxu0 %v1461
        %2546 = vmatprep.subr.bf16.mxu0 %v1492
        %2547 = vmatpush1.bf16.msra.mxu0 %v1488
        %2548 = vmatprep.subr.bf16.mxu0 %v1536
        %2549 = vmatpush1.bf16.msra.mxu0 %v1533
        %2550 = vmatprep.subr.bf16.mxu0 %v1560
        %2551 = vmatpush1.bf16.msra.mxu0 %v1557
        %2552 = vmatprep.subr.bf16.mxu0 %v1600
        %2553 = vmatpush1.bf16.msra.mxu0 %v1597
        %2554 = vmatprep.subr.bf16.mxu0 %v1624
        %2555 = vmatpush1.bf16.msra.mxu0 %v1621
        %2556 = vmatprep.subr.bf16.mxu0 0
        %2557 = vmatpush1.bf16.msra.mxu0 0
        %2558 = vmatprep.subr.bf16.mxu0 0
        %2559 = vmatpush1.bf16.msra.mxu0 0
        %2560 = vmatprep.subr.bf16.mxu0 0
        %2561 = vmatpush1.bf16.msra.mxu0 0
        %2562 = vmatprep.subr.bf16.mxu0 0
        %2563 = vmatpush1.bf16.msra.mxu0 0
        %2564 = vmatprep.subr.bf16.mxu0 0
        %2565 = vmatpush1.bf16.msra.mxu0 0
        %2566 = vmatprep.subr.bf16.mxu0 0
        %2567 = vmatpush1.bf16.msra.mxu0 0
        %2568 = vmatprep.mubr.bf16.mxu0 %v2192
        %2569 = vmatmul.mubr.bf16.gmra.mrb[0].mxu0 %v2118
        %v2570 = vpop.f32.mrb[0].mxu0
        %v2571 = vadd.f32 %v1737, %v2570
        %v2572 = vpop.f32.mrb[0].mxu0
        %v2573 = vadd.f32 %v1737, %v2572
        %v2574 = vpop.f32.mrb[0].mxu0
        %v2575 = vadd.f32 %v1742, %v2574
        %v2576 = vpop.f32.mrb[0].mxu0
        %v2577 = vadd.f32 %v1742, %v2576
        %2578 = vmatprep.mubr.bf16.mxu0 %v2195
        %2579 = vmatmul.mubr.bf16.gmra.mrb[0].mxu0 %v2120
        %v2580 = vpop.f32.mrb[0].mxu0
        %v2581 = vadd.f32 %v1747, %v2580
        %v2582 = vpop.f32.mrb[0].mxu0
        %v2583 = vadd.f32 %v1747, %v2582
        %v2584 = vpop.f32.mrb[0].mxu0
        %v2585 = vadd.f32 %v1752, %v2584
        %v2586 = vpop.f32.mrb[0].mxu0
        %v2587 = vadd.f32 %v1752, %v2586
        %2588 = vmatprep.mubr.bf16.mxu0 %v2198
        %2589 = vmatmul.mubr.bf16.gmra.mrb[0].mxu0 %v2122
        %v2590 = vpop.f32.mrb[0].mxu0
        %v2591 = vadd.f32 %v1757, %v2590
        %v2592 = vpop.f32.mrb[0].mxu0
        %v2593 = vadd.f32 %v1757, %v2592
        %v2594 = vpop.f32.mrb[0].mxu0
        %v2595 = vadd.f32 %v1762, %v2594
        %v2596 = vpop.f32.mrb[0].mxu0
        %v2597 = vadd.f32 %v1762, %v2596
        %2598 = vmatprep.mubr.bf16.mxu0 %v2201
        %2599 = vmatmul.mubr.bf16.gmra.mrb[0].mxu0 %v2124
        %v2600 = vpop.f32.mrb[0].mxu0
        %v2601 = vadd.f32 %v1767, %v2600
        %v2602 = vpop.f32.mrb[0].mxu0
        %v2603 = vadd.f32 %v1767, %v2602
        %v2604 = vpop.f32.mrb[0].mxu0
        %v2605 = vadd.f32 %v1772, %v2604
        %v2606 = vpop.f32.mrb[0].mxu0
        %v2607 = vadd.f32 %v1772, %v2606
        %2608 = vmatprep.mubr.bf16.mxu0 %v2204
        %2609 = vmatmul.mubr.bf16.gmra.mrb[0].mxu0 %v2126
        %v2610 = vpop.f32.mrb[0].mxu0
        %v2611 = vadd.f32 %v1777, %v2610
        %v2612 = vpop.f32.mrb[0].mxu0
        %v2613 = vadd.f32 %v1777, %v2612
        %v2614 = vpop.f32.mrb[0].mxu0
        %v2615 = vadd.f32 %v1782, %v2614
        %v2616 = vpop.f32.mrb[0].mxu0
        %v2617 = vadd.f32 %v1782, %v2616
        %2618 = vmatprep.mubr.bf16.mxu0 %v2207
        %2619 = vmatmul.mubr.bf16.gmra.mrb[0].mxu0 %v2128
        %v2620 = vpop.f32.mrb[0].mxu0
        %v2621 = vadd.f32 %v1787, %v2620
        %v2622 = vpop.f32.mrb[0].mxu0
        %v2623 = vadd.f32 %v1787, %v2622
        %v2624 = vpop.f32.mrb[0].mxu0
        %v2625 = vadd.f32 %v1792, %v2624
        %v2626 = vpop.f32.mrb[0].mxu0
        %v2627 = vadd.f32 %v1792, %v2626
        %2628 = vmatprep.mubr.bf16.mxu0 %v2210
        %2629 = vmatmul.mubr.bf16.gmra.mrb[0].mxu0 %v2130
        %v2630 = vpop.f32.mrb[0].mxu0
        %v2631 = vadd.f32 %v1797, %v2630
        %v2632 = vpop.f32.mrb[0].mxu0
        %v2633 = vadd.f32 %v1797, %v2632
        %v2634 = vpop.f32.mrb[0].mxu0
        %v2635 = vadd.f32 %v1802, %v2634
        %v2636 = vpop.f32.mrb[0].mxu0
        %v2637 = vadd.f32 %v1802, %v2636
        %2638 = vmatprep.mubr.bf16.mxu0 %v2213
        %2639 = vmatmul.mubr.bf16.gmra.mrb[0].mxu0 %v2132
        %v2640 = vpop.f32.mrb[0].mxu0
        %v2641 = vadd.f32 %v1807, %v2640
        %v2642 = vpop.f32.mrb[0].mxu0
        %v2643 = vadd.f32 %v1807, %v2642
        %v2644 = vpop.f32.mrb[0].mxu0
        %v2645 = vadd.f32 %v1812, %v2644
        %v2646 = vpop.f32.mrb[0].mxu0
        %v2647 = vadd.f32 %v1812, %v2646
        %2648 = vmatprep.mubr.bf16.mxu0 %v2216
        %2649 = vmatmul.mubr.bf16.gmra.mrb[0].mxu0 %v2134
        %v2650 = vpop.f32.mrb[0].mxu0
        %v2651 = vadd.f32 %v1817, %v2650
        %v2652 = vpop.f32.mrb[0].mxu0
        %v2653 = vadd.f32 %v1817, %v2652
        %v2654 = vpop.f32.mrb[0].mxu0
        %v2655 = vadd.f32 %v1822, %v2654
        %v2656 = vpop.f32.mrb[0].mxu0
        %v2657 = vadd.f32 %v1822, %v2656
        %2658 = vmatprep.mubr.bf16.mxu0 %v2219
        %2659 = vmatmul.mubr.bf16.gmra.mrb[0].mxu0 %v2136
        %v2660 = vpop.f32.mrb[0].mxu0
        %v2661 = vadd.f32 %v1827, %v2660
        %v2662 = vpop.f32.mrb[0].mxu0
        %v2663 = vadd.f32 %v1827, %v2662
        %v2664 = vpop.f32.mrb[0].mxu0
        %v2665 = vadd.f32 %v1832, %v2664
        %v2666 = vpop.f32.mrb[0].mxu0
        %v2667 = vadd.f32 %v1832, %v2666
        %2668 = vmatprep.mubr.bf16.mxu0 %v2222
        %2669 = vmatmul.mubr.bf16.gmra.mrb[0].mxu0 %v2138
        %v2670 = vpop.f32.mrb[0].mxu0
        %v2671 = vadd.f32 %v1837, %v2670
        %v2672 = vpop.f32.mrb[0].mxu0
        %v2673 = vadd.f32 %v1837, %v2672
        %v2674 = vpop.f32.mrb[0].mxu0
        %v2675 = vadd.f32 %v1842, %v2674
        %v2676 = vpop.f32.mrb[0].mxu0
        %v2677 = vadd.f32 %v1842, %v2676
        %2678 = vmatprep.mubr.bf16.mxu0 %v2225
        %2679 = vmatmul.mubr.bf16.gmra.mrb[0].mxu0 %v2140
        %v2680 = vpop.f32.mrb[0].mxu0
        %v2681 = vadd.f32 %v1847, %v2680
        %v2682 = vpop.f32.mrb[0].mxu0
        %v2683 = vadd.f32 %v1847, %v2682
        %v2684 = vpop.f32.mrb[0].mxu0
        %v2685 = vadd.f32 %v1852, %v2684
        %v2686 = vpop.f32.mrb[0].mxu0
        %v2687 = vadd.f32 %v1852, %v2686
        %2688 = vmatprep.mubr.bf16.mxu0 %v2228
        %2689 = vmatmul.mubr.bf16.gmra.mrb[0].mxu0 %v2142
        %v2690 = vpop.f32.mrb[0].mxu0
        %v2691 = vadd.f32 %v1857, %v2690
        %v2692 = vpop.f32.mrb[0].mxu0
        %v2693 = vadd.f32 %v1857, %v2692
        %v2694 = vpop.f32.mrb[0].mxu0
        %v2695 = vadd.f32 %v1862, %v2694
        %v2696 = vpop.f32.mrb[0].mxu0
        %v2697 = vadd.f32 %v1862, %v2696
        %2698 = vmatprep.mubr.bf16.mxu0 %v2231
        %2699 = vmatmul.mubr.bf16.gmra.mrb[0].mxu0 %v2144
        %v2700 = vpop.f32.mrb[0].mxu0
        %v2701 = vadd.f32 %v1867, %v2700
        %v2702 = vpop.f32.mrb[0].mxu0
        %v2703 = vadd.f32 %v1867, %v2702
        %v2704 = vpop.f32.mrb[0].mxu0
        %v2705 = vadd.f32 %v1872, %v2704
        %v2706 = vpop.f32.mrb[0].mxu0
        %v2707 = vadd.f32 %v1872, %v2706
        %2708 = vmatprep.mubr.bf16.mxu0 %v2234
        %2709 = vmatmul.mubr.bf16.gmra.mrb[0].mxu0 %v2146
        %v2710 = vpop.f32.mrb[0].mxu0
        %v2711 = vadd.f32 %v1877, %v2710
        %v2712 = vpop.f32.mrb[0].mxu0
        %v2713 = vadd.f32 %v1877, %v2712
        %v2714 = vpop.f32.mrb[0].mxu0
        %v2715 = vadd.f32 %v1882, %v2714
        %v2716 = vpop.f32.mrb[0].mxu0
        %v2717 = vadd.f32 %v1882, %v2716
        %2718 = vmatprep.mubr.bf16.mxu0 %v2237
        %2719 = vmatmul.mubr.bf16.gmra.mrb[0].mxu0 %v2148
        %v2720 = vpop.f32.mrb[0].mxu0
        %v2721 = vadd.f32 %v1887, %v2720
        %v2722 = vpop.f32.mrb[0].mxu0
        %v2723 = vadd.f32 %v1887, %v2722
        %v2724 = vpop.f32.mrb[0].mxu0
        %v2725 = vadd.f32 %v1892, %v2724
        %v2726 = vpop.f32.mrb[0].mxu0
        %v2727 = vadd.f32 %v1892, %v2726
        %2728 = vmatprep.mubr.bf16.mxu0 %v2240
        %2729 = vmatmul.mubr.bf16.gmra.mrb[0].mxu0 %v2150
        %v2730 = vpop.f32.mrb[0].mxu0
        %v2731 = vadd.f32 %v1897, %v2730
        %v2732 = vpop.f32.mrb[0].mxu0
        %v2733 = vadd.f32 %v1897, %v2732
        %v2734 = vpop.f32.mrb[0].mxu0
        %v2735 = vadd.f32 %v1902, %v2734
        %v2736 = vpop.f32.mrb[0].mxu0
        %v2737 = vadd.f32 %v1902, %v2736
        %2738 = vmatprep.mubr.bf16.mxu0 %v2243
        %2739 = vmatmul.mubr.bf16.gmra.mrb[0].mxu0 %v2152
        %v2740 = vpop.f32.mrb[0].mxu0
        %v2741 = vadd.f32 %v1907, %v2740
        %v2742 = vpop.f32.mrb[0].mxu0
        %v2743 = vadd.f32 %v1907, %v2742
        %v2744 = vpop.f32.mrb[0].mxu0
        %v2745 = vadd.f32 %v1912, %v2744
        %v2746 = vpop.f32.mrb[0].mxu0
        %v2747 = vadd.f32 %v1912, %v2746
        %2748 = vmatprep.mubr.bf16.mxu0 %v2246
        %2749 = vmatmul.mubr.bf16.gmra.mrb[0].mxu0 %v2154
        %v2750 = vpop.f32.mrb[0].mxu0
        %v2751 = vadd.f32 %v1917, %v2750
        %v2752 = vpop.f32.mrb[0].mxu0
        %v2753 = vadd.f32 %v1917, %v2752
        %v2754 = vpop.f32.mrb[0].mxu0
        %v2755 = vadd.f32 %v1922, %v2754
        %v2756 = vpop.f32.mrb[0].mxu0
        %v2757 = vadd.f32 %v1922, %v2756
        %2758 = vmatprep.mubr.bf16.mxu0 %v2249
        %2759 = vmatmul.mubr.bf16.gmra.mrb[0].mxu0 %v2156
        %v2760 = vpop.f32.mrb[0].mxu0
        %v2761 = vadd.f32 %v1927, %v2760
        %v2762 = vpop.f32.mrb[0].mxu0
        %v2763 = vadd.f32 %v1927, %v2762
        %v2764 = vpop.f32.mrb[0].mxu0
        %v2765 = vadd.f32 %v1932, %v2764
        %v2766 = vpop.f32.mrb[0].mxu0
        %v2767 = vadd.f32 %v1932, %v2766
        %2768 = vmatprep.mubr.bf16.mxu0 %v2252
        %2769 = vmatmul.mubr.bf16.gmra.mrb[0].mxu0 %v2158
        %v2770 = vpop.f32.mrb[0].mxu0
        %v2771 = vadd.f32 %v1937, %v2770
        %v2772 = vpop.f32.mrb[0].mxu0
        %v2773 = vadd.f32 %v1937, %v2772
        %v2774 = vpop.f32.mrb[0].mxu0
        %v2775 = vadd.f32 %v1942, %v2774
        %v2776 = vpop.f32.mrb[0].mxu0
        %v2777 = vadd.f32 %v1942, %v2776
        %2778 = vmatprep.mubr.bf16.mxu0 %v2255
        %2779 = vmatmul.mubr.bf16.gmra.mrb[0].mxu0 %v2160
        %v2780 = vpop.f32.mrb[0].mxu0
        %v2781 = vadd.f32 %v1947, %v2780
        %v2782 = vpop.f32.mrb[0].mxu0
        %v2783 = vadd.f32 %v1947, %v2782
        %v2784 = vpop.f32.mrb[0].mxu0
        %v2785 = vadd.f32 %v1952, %v2784
        %v2786 = vpop.f32.mrb[0].mxu0
        %v2787 = vadd.f32 %v1952, %v2786
        %2788 = vmatprep.mubr.bf16.mxu0 %v2258
        %2789 = vmatmul.mubr.bf16.gmra.mrb[0].mxu0 %v2162
        %v2790 = vpop.f32.mrb[0].mxu0
        %v2791 = vadd.f32 %v1957, %v2790
        %v2792 = vpop.f32.mrb[0].mxu0
        %v2793 = vadd.f32 %v1957, %v2792
        %v2794 = vpop.f32.mrb[0].mxu0
        %v2795 = vadd.f32 %v1962, %v2794
        %v2796 = vpop.f32.mrb[0].mxu0
        %v2797 = vadd.f32 %v1962, %v2796
        %2798 = vmatprep.mubr.bf16.mxu0 %v2261
        %2799 = vmatmul.mubr.bf16.gmra.mrb[0].mxu0 %v2164
        %v2800 = vpop.f32.mrb[0].mxu0
        %v2801 = vadd.f32 %v1967, %v2800
        %v2802 = vpop.f32.mrb[0].mxu0
        %v2803 = vadd.f32 %v1967, %v2802
        %v2804 = vpop.f32.mrb[0].mxu0
        %v2805 = vadd.f32 %v1972, %v2804
        %v2806 = vpop.f32.mrb[0].mxu0
        %v2807 = vadd.f32 %v1972, %v2806
        %2808 = vdwg.mxu0
        %2809 = vmatprep.subr.bf16.mxu0 %v1334
        %2810 = vmatpush1.bf16.msra.mxu0 %v1330
        %2811 = vmatprep.subr.bf16.mxu0 %v1378
        %2812 = vmatpush1.bf16.msra.mxu0 %v1375
        %2813 = vmatprep.subr.bf16.mxu0 %v1403
        %2814 = vmatpush1.bf16.msra.mxu0 %v1400
        %2815 = vmatprep.subr.bf16.mxu0 %v1445
        %2816 = vmatpush1.bf16.msra.mxu0 %v1442
        %2817 = vmatprep.subr.bf16.mxu0 %v1470
        %2818 = vmatpush1.bf16.msra.mxu0 %v1467
        %2819 = vmatprep.subr.bf16.mxu0 %v1500
        %2820 = vmatpush1.bf16.msra.mxu0 %v1496
        %2821 = vmatprep.subr.bf16.mxu0 %v1542
        %2822 = vmatpush1.bf16.msra.mxu0 %v1539
        %2823 = vmatprep.subr.bf16.mxu0 %v1566
        %2824 = vmatpush1.bf16.msra.mxu0 %v1563
        %2825 = vmatprep.subr.bf16.mxu0 %v1606
        %2826 = vmatpush1.bf16.msra.mxu0 %v1603
        %2827 = vmatprep.subr.bf16.mxu0 %v1630
        %2828 = vmatpush1.bf16.msra.mxu0 %v1627
        %2829 = vmatprep.subr.bf16.mxu0 0
        %2830 = vmatpush1.bf16.msra.mxu0 0
        %2831 = vmatprep.subr.bf16.mxu0 0
        %2832 = vmatpush1.bf16.msra.mxu0 0
        %2833 = vmatprep.subr.bf16.mxu0 0
        %2834 = vmatpush1.bf16.msra.mxu0 0
        %2835 = vmatprep.subr.bf16.mxu0 0
        %2836 = vmatpush1.bf16.msra.mxu0 0
        %2837 = vmatprep.subr.bf16.mxu0 0
        %2838 = vmatpush1.bf16.msra.mxu0 0
        %2839 = vmatprep.subr.bf16.mxu0 0
        %2840 = vmatpush1.bf16.msra.mxu0 0
        %2841 = vmatprep.mubr.bf16.mxu0 %v2192
        %2842 = vmatmul.mubr.bf16.gmra.mrb[0].mxu0 %v2118
        %v2843 = vpop.f32.mrb[0].mxu0
        %v2844 = vadd.f32 %v1737, %v2843
        %v2845 = vpop.f32.mrb[0].mxu0
        %v2846 = vadd.f32 %v1737, %v2845
        %v2847 = vpop.f32.mrb[0].mxu0
        %v2848 = vadd.f32 %v1742, %v2847
        %v2849 = vpop.f32.mrb[0].mxu0
        %v2850 = vadd.f32 %v1742, %v2849
        %2851 = vmatprep.mubr.bf16.mxu0 %v2195
        %2852 = vmatmul.mubr.bf16.gmra.mrb[0].mxu0 %v2120
        %v2853 = vpop.f32.mrb[0].mxu0
        %v2854 = vadd.f32 %v1747, %v2853
        %v2855 = vpop.f32.mrb[0].mxu0
        %v2856 = vadd.f32 %v1747, %v2855
        %v2857 = vpop.f32.mrb[0].mxu0
        %v2858 = vadd.f32 %v1752, %v2857
        %v2859 = vpop.f32.mrb[0].mxu0
        %v2860 = vadd.f32 %v1752, %v2859
        %2861 = vmatprep.mubr.bf16.mxu0 %v2198
        %2862 = vmatmul.mubr.bf16.gmra.mrb[0].mxu0 %v2122
        %v2863 = vpop.f32.mrb[0].mxu0
        %v2864 = vadd.f32 %v1757, %v2863
        %v2865 = vpop.f32.mrb[0].mxu0
        %v2866 = vadd.f32 %v1757, %v2865
        %v2867 = vpop.f32.mrb[0].mxu0
        %v2868 = vadd.f32 %v1762, %v2867
        %v2869 = vpop.f32.mrb[0].mxu0
        %v2870 = vadd.f32 %v1762, %v2869
        %2871 = vmatprep.mubr.bf16.mxu0 %v2201
        %2872 = vmatmul.mubr.bf16.gmra.mrb[0].mxu0 %v2124
        %v2873 = vpop.f32.mrb[0].mxu0
        %v2874 = vadd.f32 %v1767, %v2873
        %v2875 = vpop.f32.mrb[0].mxu0
        %v2876 = vadd.f32 %v1767, %v2875
        %v2877 = vpop.f32.mrb[0].mxu0
        %v2878 = vadd.f32 %v1772, %v2877
        %v2879 = vpop.f32.mrb[0].mxu0
        %v2880 = vadd.f32 %v1772, %v2879
        %2881 = vmatprep.mubr.bf16.mxu0 %v2204
        %2882 = vmatmul.mubr.bf16.gmra.mrb[0].mxu0 %v2126
        %v2883 = vpop.f32.mrb[0].mxu0
        %v2884 = vadd.f32 %v1777, %v2883
        %v2885 = vpop.f32.mrb[0].mxu0
        %v2886 = vadd.f32 %v1777, %v2885
        %v2887 = vpop.f32.mrb[0].mxu0
        %v2888 = vadd.f32 %v1782, %v2887
        %v2889 = vpop.f32.mrb[0].mxu0
        %v2890 = vadd.f32 %v1782, %v2889
        %2891 = vmatprep.mubr.bf16.mxu0 %v2207
        %2892 = vmatmul.mubr.bf16.gmra.mrb[0].mxu0 %v2128
        %v2893 = vpop.f32.mrb[0].mxu0
        %v2894 = vadd.f32 %v1787, %v2893
        %v2895 = vpop.f32.mrb[0].mxu0
        %v2896 = vadd.f32 %v1787, %v2895
        %v2897 = vpop.f32.mrb[0].mxu0
        %v2898 = vadd.f32 %v1792, %v2897
        %v2899 = vpop.f32.mrb[0].mxu0
        %v2900 = vadd.f32 %v1792, %v2899
        %2901 = vmatprep.mubr.bf16.mxu0 %v2210
        %2902 = vmatmul.mubr.bf16.gmra.mrb[0].mxu0 %v2130
        %v2903 = vpop.f32.mrb[0].mxu0
        %v2904 = vadd.f32 %v1797, %v2903
        %v2905 = vpop.f32.mrb[0].mxu0
        %v2906 = vadd.f32 %v1797, %v2905
        %v2907 = vpop.f32.mrb[0].mxu0
        %v2908 = vadd.f32 %v1802, %v2907
        %v2909 = vpop.f32.mrb[0].mxu0
        %v2910 = vadd.f32 %v1802, %v2909
        %2911 = vmatprep.mubr.bf16.mxu0 %v2213
        %2912 = vmatmul.mubr.bf16.gmra.mrb[0].mxu0 %v2132
        %v2913 = vpop.f32.mrb[0].mxu0
        %v2914 = vadd.f32 %v1807, %v2913
        %v2915 = vpop.f32.mrb[0].mxu0
        %v2916 = vadd.f32 %v1807, %v2915
        %v2917 = vpop.f32.mrb[0].mxu0
        %v2918 = vadd.f32 %v1812, %v2917
        %v2919 = vpop.f32.mrb[0].mxu0
        %v2920 = vadd.f32 %v1812, %v2919
        %2921 = vmatprep.mubr.bf16.mxu0 %v2216
        %2922 = vmatmul.mubr.bf16.gmra.mrb[0].mxu0 %v2134
        %v2923 = vpop.f32.mrb[0].mxu0
        %v2924 = vadd.f32 %v1817, %v2923
        %v2925 = vpop.f32.mrb[0].mxu0
        %v2926 = vadd.f32 %v1817, %v2925
        %v2927 = vpop.f32.mrb[0].mxu0
        %v2928 = vadd.f32 %v1822, %v2927
        %v2929 = vpop.f32.mrb[0].mxu0
        %v2930 = vadd.f32 %v1822, %v2929
        %2931 = vmatprep.mubr.bf16.mxu0 %v2219
        %2932 = vmatmul.mubr.bf16.gmra.mrb[0].mxu0 %v2136
        %v2933 = vpop.f32.mrb[0].mxu0
        %v2934 = vadd.f32 %v1827, %v2933
        %v2935 = vpop.f32.mrb[0].mxu0
        %v2936 = vadd.f32 %v1827, %v2935
        %v2937 = vpop.f32.mrb[0].mxu0
        %v2938 = vadd.f32 %v1832, %v2937
        %v2939 = vpop.f32.mrb[0].mxu0
        %v2940 = vadd.f32 %v1832, %v2939
        %2941 = vmatprep.mubr.bf16.mxu0 %v2222
        %2942 = vmatmul.mubr.bf16.gmra.mrb[0].mxu0 %v2138
        %v2943 = vpop.f32.mrb[0].mxu0
        %v2944 = vadd.f32 %v1837, %v2943
        %v2945 = vpop.f32.mrb[0].mxu0
        %v2946 = vadd.f32 %v1837, %v2945
        %v2947 = vpop.f32.mrb[0].mxu0
        %v2948 = vadd.f32 %v1842, %v2947
        %v2949 = vpop.f32.mrb[0].mxu0
        %v2950 = vadd.f32 %v1842, %v2949
        %2951 = vmatprep.mubr.bf16.mxu0 %v2225
        %2952 = vmatmul.mubr.bf16.gmra.mrb[0].mxu0 %v2140
        %v2953 = vpop.f32.mrb[0].mxu0
        %v2954 = vadd.f32 %v1847, %v2953
        %v2955 = vpop.f32.mrb[0].mxu0
        %v2956 = vadd.f32 %v1847, %v2955
        %v2957 = vpop.f32.mrb[0].mxu0
        %v2958 = vadd.f32 %v1852, %v2957
        %v2959 = vpop.f32.mrb[0].mxu0
        %v2960 = vadd.f32 %v1852, %v2959
        %2961 = vmatprep.mubr.bf16.mxu0 %v2228
        %2962 = vmatmul.mubr.bf16.gmra.mrb[0].mxu0 %v2142
        %v2963 = vpop.f32.mrb[0].mxu0
        %v2964 = vadd.f32 %v1857, %v2963
        %v2965 = vpop.f32.mrb[0].mxu0
        %v2966 = vadd.f32 %v1857, %v2965
        %v2967 = vpop.f32.mrb[0].mxu0
        %v2968 = vadd.f32 %v1862, %v2967
        %v2969 = vpop.f32.mrb[0].mxu0
        %v2970 = vadd.f32 %v1862, %v2969
        %2971 = vmatprep.mubr.bf16.mxu0 %v2231
        %2972 = vmatmul.mubr.bf16.gmra.mrb[0].mxu0 %v2144
        %v2973 = vpop.f32.mrb[0].mxu0
        %v2974 = vadd.f32 %v1867, %v2973
        %v2975 = vpop.f32.mrb[0].mxu0
        %v2976 = vadd.f32 %v1867, %v2975
        %v2977 = vpop.f32.mrb[0].mxu0
        %v2978 = vadd.f32 %v1872, %v2977
        %v2979 = vpop.f32.mrb[0].mxu0
        %v2980 = vadd.f32 %v1872, %v2979
        %2981 = vmatprep.mubr.bf16.mxu0 %v2234
        %2982 = vmatmul.mubr.bf16.gmra.mrb[0].mxu0 %v2146
        %v2983 = vpop.f32.mrb[0].mxu0
        %v2984 = vadd.f32 %v1877, %v2983
        %v2985 = vpop.f32.mrb[0].mxu0
        %v2986 = vadd.f32 %v1877, %v2985
        %v2987 = vpop.f32.mrb[0].mxu0
        %v2988 = vadd.f32 %v1882, %v2987
        %v2989 = vpop.f32.mrb[0].mxu0
        %v2990 = vadd.f32 %v1882, %v2989
        %2991 = vmatprep.mubr.bf16.mxu0 %v2237
        %2992 = vmatmul.mubr.bf16.gmra.mrb[0].mxu0 %v2148
        %v2993 = vpop.f32.mrb[0].mxu0
        %v2994 = vadd.f32 %v1887, %v2993
        %v2995 = vpop.f32.mrb[0].mxu0
        %v2996 = vadd.f32 %v1887, %v2995
        %v2997 = vpop.f32.mrb[0].mxu0
        %v2998 = vadd.f32 %v1892, %v2997
        %v2999 = vpop.f32.mrb[0].mxu0
        %v3000 = vadd.f32 %v1892, %v2999
        %3001 = vmatprep.mubr.bf16.mxu0 %v2240
        %3002 = vmatmul.mubr.bf16.gmra.mrb[0].mxu0 %v2150
        %v3003 = vpop.f32.mrb[0].mxu0
        %v3004 = vadd.f32 %v1897, %v3003
        %v3005 = vpop.f32.mrb[0].mxu0
        %v3006 = vadd.f32 %v1897, %v3005
        %v3007 = vpop.f32.mrb[0].mxu0
        %v3008 = vadd.f32 %v1902, %v3007
        %v3009 = vpop.f32.mrb[0].mxu0
        %v3010 = vadd.f32 %v1902, %v3009
        %3011 = vmatprep.mubr.bf16.mxu0 %v2243
        %3012 = vmatmul.mubr.bf16.gmra.mrb[0].mxu0 %v2152
        %v3013 = vpop.f32.mrb[0].mxu0
        %v3014 = vadd.f32 %v1907, %v3013
        %v3015 = vpop.f32.mrb[0].mxu0
        %v3016 = vadd.f32 %v1907, %v3015
        %v3017 = vpop.f32.mrb[0].mxu0
        %v3018 = vadd.f32 %v1912, %v3017
        %v3019 = vpop.f32.mrb[0].mxu0
        %v3020 = vadd.f32 %v1912, %v3019
        %3021 = vmatprep.mubr.bf16.mxu0 %v2246
        %3022 = vmatmul.mubr.bf16.gmra.mrb[0].mxu0 %v2154
        %v3023 = vpop.f32.mrb[0].mxu0
        %v3024 = vadd.f32 %v1917, %v3023
        %v3025 = vpop.f32.mrb[0].mxu0
        %v3026 = vadd.f32 %v1917, %v3025
        %v3027 = vpop.f32.mrb[0].mxu0
        %v3028 = vadd.f32 %v1922, %v3027
        %v3029 = vpop.f32.mrb[0].mxu0
        %v3030 = vadd.f32 %v1922, %v3029
        %3031 = vmatprep.mubr.bf16.mxu0 %v2249
        %3032 = vmatmul.mubr.bf16.gmra.mrb[0].mxu0 %v2156
        %v3033 = vpop.f32.mrb[0].mxu0
        %v3034 = vadd.f32 %v1927, %v3033
        %v3035 = vpop.f32.mrb[0].mxu0
        %v3036 = vadd.f32 %v1927, %v3035
        %v3037 = vpop.f32.mrb[0].mxu0
        %v3038 = vadd.f32 %v1932, %v3037
        %v3039 = vpop.f32.mrb[0].mxu0
        %v3040 = vadd.f32 %v1932, %v3039
        %3041 = vmatprep.mubr.bf16.mxu0 %v2252
        %3042 = vmatmul.mubr.bf16.gmra.mrb[0].mxu0 %v2158
        %v3043 = vpop.f32.mrb[0].mxu0
        %v3044 = vadd.f32 %v1937, %v3043
        %v3045 = vpop.f32.mrb[0].mxu0
        %v3046 = vadd.f32 %v1937, %v3045
        %v3047 = vpop.f32.mrb[0].mxu0
        %v3048 = vadd.f32 %v1942, %v3047
        %v3049 = vpop.f32.mrb[0].mxu0
        %v3050 = vadd.f32 %v1942, %v3049
        %3051 = vmatprep.mubr.bf16.mxu0 %v2255
        %3052 = vmatmul.mubr.bf16.gmra.mrb[0].mxu0 %v2160
        %v3053 = vpop.f32.mrb[0].mxu0
        %v3054 = vadd.f32 %v1947, %v3053
        %v3055 = vpop.f32.mrb[0].mxu0
        %v3056 = vadd.f32 %v1947, %v3055
        %v3057 = vpop.f32.mrb[0].mxu0
        %v3058 = vadd.f32 %v1952, %v3057
        %v3059 = vpop.f32.mrb[0].mxu0
        %v3060 = vadd.f32 %v1952, %v3059
        %3061 = vmatprep.mubr.bf16.mxu0 %v2258
        %3062 = vmatmul.mubr.bf16.gmra.mrb[0].mxu0 %v2162
        %v3063 = vpop.f32.mrb[0].mxu0
        %v3064 = vadd.f32 %v1957, %v3063
        %v3065 = vpop.f32.mrb[0].mxu0
        %v3066 = vadd.f32 %v1957, %v3065
        %v3067 = vpop.f32.mrb[0].mxu0
        %v3068 = vadd.f32 %v1962, %v3067
        %v3069 = vpop.f32.mrb[0].mxu0
        %v3070 = vadd.f32 %v1962, %v3069
        %3071 = vmatprep.mubr.bf16.mxu0 %v2261
        %3072 = vmatmul.mubr.bf16.gmra.mrb[0].mxu0 %v2164
        %v3073 = vpop.f32.mrb[0].mxu0
        %v3074 = vadd.f32 %v1967, %v3073
        %v3075 = vpop.f32.mrb[0].mxu0
        %v3076 = vadd.f32 %v1967, %v3075
        %v3077 = vpop.f32.mrb[0].mxu0
        %v3078 = vadd.f32 %v1972, %v3077
        %v3079 = vpop.f32.mrb[0].mxu0
        %v3080 = vadd.f32 %v1972, %v3079
        %3081 = vdwg.mxu0
        %3082 = vmatprep.subr.bf16.mxu0 %v1342
        %3083 = vmatpush1.bf16.msra.mxu0 %v1338
        %3084 = vmatprep.subr.bf16.mxu0 %v1384
        %3085 = vmatpush1.bf16.msra.mxu0 %v1381
        %3086 = vmatprep.subr.bf16.mxu0 %v1409
        %3087 = vmatpush1.bf16.msra.mxu0 %v1406
        %3088 = vmatprep.subr.bf16.mxu0 %v1451
        %3089 = vmatpush1.bf16.msra.mxu0 %v1448
        %3090 = vmatprep.subr.bf16.mxu0 %v1476
        %3091 = vmatpush1.bf16.msra.mxu0 %v1473
        %3092 = vmatprep.subr.bf16.mxu0 %v1508
        %3093 = vmatpush1.bf16.msra.mxu0 %v1504
        %3094 = vmatprep.subr.bf16.mxu0 %v1548
        %3095 = vmatpush1.bf16.msra.mxu0 %v1545
        %3096 = vmatprep.subr.bf16.mxu0 %v1572
        %3097 = vmatpush1.bf16.msra.mxu0 %v1569
        %3098 = vmatprep.subr.bf16.mxu0 %v1612
        %3099 = vmatpush1.bf16.msra.mxu0 %v1609
        %3100 = vmatprep.subr.bf16.mxu0 %v1636
        %3101 = vmatpush1.bf16.msra.mxu0 %v1633
        %3102 = vmatprep.subr.bf16.mxu0 0
        %3103 = vmatpush1.bf16.msra.mxu0 0
        %3104 = vmatprep.subr.bf16.mxu0 0
        %3105 = vmatpush1.bf16.msra.mxu0 0
        %3106 = vmatprep.subr.bf16.mxu0 0
        %3107 = vmatpush1.bf16.msra.mxu0 0
        %3108 = vmatprep.subr.bf16.mxu0 0
        %3109 = vmatpush1.bf16.msra.mxu0 0
        %3110 = vmatprep.subr.bf16.mxu0 0
        %3111 = vmatpush1.bf16.msra.mxu0 0
        %3112 = vmatprep.subr.bf16.mxu0 0
        %3113 = vmatpush1.bf16.msra.mxu0 0
        %3114 = vmatprep.mubr.bf16.mxu0 %v2192
        %3115 = vmatmul.mubr.bf16.gmra.mrb[0].mxu0 %v2118
        %v3116 = vpop.f32.mrb[0].mxu0
        %v3117 = vadd.f32 %v1737, %v3116
        %v3118 = vpop.f32.mrb[0].mxu0
        %v3119 = vadd.f32 %v1737, %v3118
        %v3120 = vpop.f32.mrb[0].mxu0
        %v3121 = vadd.f32 %v1742, %v3120
        %v3122 = vpop.f32.mrb[0].mxu0
        %v3123 = vadd.f32 %v1742, %v3122
        %3124 = vmatprep.mubr.bf16.mxu0 %v2195
        %3125 = vmatmul.mubr.bf16.gmra.mrb[0].mxu0 %v2120
        %v3126 = vpop.f32.mrb[0].mxu0
        %v3127 = vadd.f32 %v1747, %v3126
        %v3128 = vpop.f32.mrb[0].mxu0
        %v3129 = vadd.f32 %v1747, %v3128
        %v3130 = vpop.f32.mrb[0].mxu0
        %v3131 = vadd.f32 %v1752, %v3130
        %v3132 = vpop.f32.mrb[0].mxu0
        %v3133 = vadd.f32 %v1752, %v3132
        %3134 = vmatprep.mubr.bf16.mxu0 %v2198
        %3135 = vmatmul.mubr.bf16.gmra.mrb[0].mxu0 %v2122
        %v3136 = vpop.f32.mrb[0].mxu0
        %v3137 = vadd.f32 %v1757, %v3136
        %v3138 = vpop.f32.mrb[0].mxu0
        %v3139 = vadd.f32 %v1757, %v3138
        %v3140 = vpop.f32.mrb[0].mxu0
        %v3141 = vadd.f32 %v1762, %v3140
        %v3142 = vpop.f32.mrb[0].mxu0
        %v3143 = vadd.f32 %v1762, %v3142
        %3144 = vmatprep.mubr.bf16.mxu0 %v2201
        %3145 = vmatmul.mubr.bf16.gmra.mrb[0].mxu0 %v2124
        %v3146 = vpop.f32.mrb[0].mxu0
        %v3147 = vadd.f32 %v1767, %v3146
        %v3148 = vpop.f32.mrb[0].mxu0
        %v3149 = vadd.f32 %v1767, %v3148
        %v3150 = vpop.f32.mrb[0].mxu0
        %v3151 = vadd.f32 %v1772, %v3150
        %v3152 = vpop.f32.mrb[0].mxu0
        %v3153 = vadd.f32 %v1772, %v3152
        %3154 = vmatprep.mubr.bf16.mxu0 %v2204
        %3155 = vmatmul.mubr.bf16.gmra.mrb[0].mxu0 %v2126
        %v3156 = vpop.f32.mrb[0].mxu0
        %v3157 = vadd.f32 %v1777, %v3156
        %v3158 = vpop.f32.mrb[0].mxu0
        %v3159 = vadd.f32 %v1777, %v3158
        %v3160 = vpop.f32.mrb[0].mxu0
        %v3161 = vadd.f32 %v1782, %v3160
        %v3162 = vpop.f32.mrb[0].mxu0
        %v3163 = vadd.f32 %v1782, %v3162
        %3164 = vmatprep.mubr.bf16.mxu0 %v2207
        %3165 = vmatmul.mubr.bf16.gmra.mrb[0].mxu0 %v2128
        %v3166 = vpop.f32.mrb[0].mxu0
        %v3167 = vadd.f32 %v1787, %v3166
        %v3168 = vpop.f32.mrb[0].mxu0
        %v3169 = vadd.f32 %v1787, %v3168
        %v3170 = vpop.f32.mrb[0].mxu0
        %v3171 = vadd.f32 %v1792, %v3170
        %v3172 = vpop.f32.mrb[0].mxu0
        %v3173 = vadd.f32 %v1792, %v3172
        %3174 = vmatprep.mubr.bf16.mxu0 %v2210
        %3175 = vmatmul.mubr.bf16.gmra.mrb[0].mxu0 %v2130
        %v3176 = vpop.f32.mrb[0].mxu0
        %v3177 = vadd.f32 %v1797, %v3176
        %v3178 = vpop.f32.mrb[0].mxu0
        %v3179 = vadd.f32 %v1797, %v3178
        %v3180 = vpop.f32.mrb[0].mxu0
        %v3181 = vadd.f32 %v1802, %v3180
        %v3182 = vpop.f32.mrb[0].mxu0
        %v3183 = vadd.f32 %v1802, %v3182
        %3184 = vmatprep.mubr.bf16.mxu0 %v2213
        %3185 = vmatmul.mubr.bf16.gmra.mrb[0].mxu0 %v2132
        %v3186 = vpop.f32.mrb[0].mxu0
        %v3187 = vadd.f32 %v1807, %v3186
        %v3188 = vpop.f32.mrb[0].mxu0
        %v3189 = vadd.f32 %v1807, %v3188
        %v3190 = vpop.f32.mrb[0].mxu0
        %v3191 = vadd.f32 %v1812, %v3190
        %v3192 = vpop.f32.mrb[0].mxu0
        %v3193 = vadd.f32 %v1812, %v3192
        %3194 = vmatprep.mubr.bf16.mxu0 %v2216
        %3195 = vmatmul.mubr.bf16.gmra.mrb[0].mxu0 %v2134
        %v3196 = vpop.f32.mrb[0].mxu0
        %v3197 = vadd.f32 %v1817, %v3196
        %v3198 = vpop.f32.mrb[0].mxu0
        %v3199 = vadd.f32 %v1817, %v3198
        %v3200 = vpop.f32.mrb[0].mxu0
        %v3201 = vadd.f32 %v1822, %v3200
        %v3202 = vpop.f32.mrb[0].mxu0
        %v3203 = vadd.f32 %v1822, %v3202
        %3204 = vmatprep.mubr.bf16.mxu0 %v2219
        %3205 = vmatmul.mubr.bf16.gmra.mrb[0].mxu0 %v2136
        %v3206 = vpop.f32.mrb[0].mxu0
        %v3207 = vadd.f32 %v1827, %v3206
        %v3208 = vpop.f32.mrb[0].mxu0
        %v3209 = vadd.f32 %v1827, %v3208
        %v3210 = vpop.f32.mrb[0].mxu0
        %v3211 = vadd.f32 %v1832, %v3210
        %v3212 = vpop.f32.mrb[0].mxu0
        %v3213 = vadd.f32 %v1832, %v3212
        %3214 = vmatprep.mubr.bf16.mxu0 %v2222
        %3215 = vmatmul.mubr.bf16.gmra.mrb[0].mxu0 %v2138
        %v3216 = vpop.f32.mrb[0].mxu0
        %v3217 = vadd.f32 %v1837, %v3216
        %v3218 = vpop.f32.mrb[0].mxu0
        %v3219 = vadd.f32 %v1837, %v3218
        %v3220 = vpop.f32.mrb[0].mxu0
        %v3221 = vadd.f32 %v1842, %v3220
        %v3222 = vpop.f32.mrb[0].mxu0
        %v3223 = vadd.f32 %v1842, %v3222
        %3224 = vmatprep.mubr.bf16.mxu0 %v2225
        %3225 = vmatmul.mubr.bf16.gmra.mrb[0].mxu0 %v2140
        %v3226 = vpop.f32.mrb[0].mxu0
        %v3227 = vadd.f32 %v1847, %v3226
        %v3228 = vpop.f32.mrb[0].mxu0
        %v3229 = vadd.f32 %v1847, %v3228
        %v3230 = vpop.f32.mrb[0].mxu0
        %v3231 = vadd.f32 %v1852, %v3230
        %v3232 = vpop.f32.mrb[0].mxu0
        %v3233 = vadd.f32 %v1852, %v3232
        %3234 = vmatprep.mubr.bf16.mxu0 %v2228
        %3235 = vmatmul.mubr.bf16.gmra.mrb[0].mxu0 %v2142
        %v3236 = vpop.f32.mrb[0].mxu0
        %v3237 = vadd.f32 %v1857, %v3236
        %v3238 = vpop.f32.mrb[0].mxu0
        %v3239 = vadd.f32 %v1857, %v3238
        %v3240 = vpop.f32.mrb[0].mxu0
        %v3241 = vadd.f32 %v1862, %v3240
        %v3242 = vpop.f32.mrb[0].mxu0
        %v3243 = vadd.f32 %v1862, %v3242
        %3244 = vmatprep.mubr.bf16.mxu0 %v2231
        %3245 = vmatmul.mubr.bf16.gmra.mrb[0].mxu0 %v2144
        %v3246 = vpop.f32.mrb[0].mxu0
        %v3247 = vadd.f32 %v1867, %v3246
        %v3248 = vpop.f32.mrb[0].mxu0
        %v3249 = vadd.f32 %v1867, %v3248
        %v3250 = vpop.f32.mrb[0].mxu0
        %v3251 = vadd.f32 %v1872, %v3250
        %v3252 = vpop.f32.mrb[0].mxu0
        %v3253 = vadd.f32 %v1872, %v3252
        %3254 = vmatprep.mubr.bf16.mxu0 %v2234
        %3255 = vmatmul.mubr.bf16.gmra.mrb[0].mxu0 %v2146
        %v3256 = vpop.f32.mrb[0].mxu0
        %v3257 = vadd.f32 %v1877, %v3256
        %v3258 = vpop.f32.mrb[0].mxu0
        %v3259 = vadd.f32 %v1877, %v3258
        %v3260 = vpop.f32.mrb[0].mxu0
        %v3261 = vadd.f32 %v1882, %v3260
        %v3262 = vpop.f32.mrb[0].mxu0
        %v3263 = vadd.f32 %v1882, %v3262
        %3264 = vmatprep.mubr.bf16.mxu0 %v2237
        %3265 = vmatmul.mubr.bf16.gmra.mrb[0].mxu0 %v2148
        %v3266 = vpop.f32.mrb[0].mxu0
        %v3267 = vadd.f32 %v1887, %v3266
        %v3268 = vpop.f32.mrb[0].mxu0
        %v3269 = vadd.f32 %v1887, %v3268
        %v3270 = vpop.f32.mrb[0].mxu0
        %v3271 = vadd.f32 %v1892, %v3270
        %v3272 = vpop.f32.mrb[0].mxu0
        %v3273 = vadd.f32 %v1892, %v3272
        %3274 = vmatprep.mubr.bf16.mxu0 %v2240
        %3275 = vmatmul.mubr.bf16.gmra.mrb[0].mxu0 %v2150
        %v3276 = vpop.f32.mrb[0].mxu0
        %v3277 = vadd.f32 %v1897, %v3276
        %v3278 = vpop.f32.mrb[0].mxu0
        %v3279 = vadd.f32 %v1897, %v3278
        %v3280 = vpop.f32.mrb[0].mxu0
        %v3281 = vadd.f32 %v1902, %v3280
        %v3282 = vpop.f32.mrb[0].mxu0
        %v3283 = vadd.f32 %v1902, %v3282
        %3284 = vmatprep.mubr.bf16.mxu0 %v2243
        %3285 = vmatmul.mubr.bf16.gmra.mrb[0].mxu0 %v2152
        %v3286 = vpop.f32.mrb[0].mxu0
        %v3287 = vadd.f32 %v1907, %v3286
        %v3288 = vpop.f32.mrb[0].mxu0
        %v3289 = vadd.f32 %v1907, %v3288
        %v3290 = vpop.f32.mrb[0].mxu0
        %v3291 = vadd.f32 %v1912, %v3290
        %v3292 = vpop.f32.mrb[0].mxu0
        %v3293 = vadd.f32 %v1912, %v3292
        %3294 = vmatprep.mubr.bf16.mxu0 %v2246
        %3295 = vmatmul.mubr.bf16.gmra.mrb[0].mxu0 %v2154
        %v3296 = vpop.f32.mrb[0].mxu0
        %v3297 = vadd.f32 %v1917, %v3296
        %v3298 = vpop.f32.mrb[0].mxu0
        %v3299 = vadd.f32 %v1917, %v3298
        %v3300 = vpop.f32.mrb[0].mxu0
        %v3301 = vadd.f32 %v1922, %v3300
        %v3302 = vpop.f32.mrb[0].mxu0
        %v3303 = vadd.f32 %v1922, %v3302
        %3304 = vmatprep.mubr.bf16.mxu0 %v2249
        %3305 = vmatmul.mubr.bf16.gmra.mrb[0].mxu0 %v2156
        %v3306 = vpop.f32.mrb[0].mxu0
        %v3307 = vadd.f32 %v1927, %v3306
        %v3308 = vpop.f32.mrb[0].mxu0
        %v3309 = vadd.f32 %v1927, %v3308
        %v3310 = vpop.f32.mrb[0].mxu0
        %v3311 = vadd.f32 %v1932, %v3310
        %v3312 = vpop.f32.mrb[0].mxu0
        %v3313 = vadd.f32 %v1932, %v3312
        %3314 = vmatprep.mubr.bf16.mxu0 %v2252
        %3315 = vmatmul.mubr.bf16.gmra.mrb[0].mxu0 %v2158
        %v3316 = vpop.f32.mrb[0].mxu0
        %v3317 = vadd.f32 %v1937, %v3316
        %v3318 = vpop.f32.mrb[0].mxu0
        %v3319 = vadd.f32 %v1937, %v3318
        %v3320 = vpop.f32.mrb[0].mxu0
        %v3321 = vadd.f32 %v1942, %v3320
        %v3322 = vpop.f32.mrb[0].mxu0
        %v3323 = vadd.f32 %v1942, %v3322
        %3324 = vmatprep.mubr.bf16.mxu0 %v2255
        %3325 = vmatmul.mubr.bf16.gmra.mrb[0].mxu0 %v2160
        %v3326 = vpop.f32.mrb[0].mxu0
        %v3327 = vadd.f32 %v1947, %v3326
        %v3328 = vpop.f32.mrb[0].mxu0
        %v3329 = vadd.f32 %v1947, %v3328
        %v3330 = vpop.f32.mrb[0].mxu0
        %v3331 = vadd.f32 %v1952, %v3330
        %v3332 = vpop.f32.mrb[0].mxu0
        %v3333 = vadd.f32 %v1952, %v3332
        %3334 = vmatprep.mubr.bf16.mxu0 %v2258
        %3335 = vmatmul.mubr.bf16.gmra.mrb[0].mxu0 %v2162
        %v3336 = vpop.f32.mrb[0].mxu0
        %v3337 = vadd.f32 %v1957, %v3336
        %v3338 = vpop.f32.mrb[0].mxu0
        %v3339 = vadd.f32 %v1957, %v3338
        %v3340 = vpop.f32.mrb[0].mxu0
        %v3341 = vadd.f32 %v1962, %v3340
        %v3342 = vpop.f32.mrb[0].mxu0
        %v3343 = vadd.f32 %v1962, %v3342
        %3344 = vmatprep.mubr.bf16.mxu0 %v2261
        %3345 = vmatmul.mubr.bf16.gmra.mrb[0].mxu0 %v2164
        %v3346 = vpop.f32.mrb[0].mxu0
        %v3347 = vadd.f32 %v1967, %v3346
        %v3348 = vpop.f32.mrb[0].mxu0
        %v3349 = vadd.f32 %v1967, %v3348
        %v3350 = vpop.f32.mrb[0].mxu0
        %v3351 = vadd.f32 %v1972, %v3350
        %v3352 = vpop.f32.mrb[0].mxu0
        %v3353 = vadd.f32 %v1972, %v3352
        %3354 = vdwg.mxu0
        %v3355 = vmax.f32 %v2298, 0.0
        %v3356 = vmax.f32 %v2300, 0.0
        %v3357 = vmax.f32 %v2571, 0.0
        %v3358 = vmax.f32 %v2573, 0.0
        %v3359 = vmax.f32 %v2844, 0.0
        %v3360 = vmax.f32 %v2846, 0.0
        %v3361 = vmax.f32 %v3117, 0.0
        %v3362 = vmax.f32 %v3119, 0.0
        %v3363 = vmax.f32 %v2302, 0.0
        %v3364 = vmax.f32 %v2304, 0.0
        %v3365 = vmax.f32 %v2575, 0.0
        %v3366 = vmax.f32 %v2577, 0.0
        %v3367 = vmax.f32 %v2848, 0.0
        %v3368 = vmax.f32 %v2850, 0.0
        %v3369 = vmax.f32 %v3121, 0.0
        %v3370 = vmax.f32 %v3123, 0.0
        %v3371 = vmax.f32 %v2308, 0.0
        %v3372 = vmax.f32 %v2310, 0.0
        %v3373 = vmax.f32 %v2581, 0.0
        %v3374 = vmax.f32 %v2583, 0.0
        %v3375 = vmax.f32 %v2854, 0.0
        %v3376 = vmax.f32 %v2856, 0.0
        %v3377 = vmax.f32 %v3127, 0.0
        %v3378 = vmax.f32 %v3129, 0.0
        %v3379 = vmax.f32 %v2312, 0.0
        %v3380 = vmax.f32 %v2314, 0.0
        %v3381 = vmax.f32 %v2585, 0.0
        %v3382 = vmax.f32 %v2587, 0.0
        %v3383 = vmax.f32 %v2858, 0.0
        %v3384 = vmax.f32 %v2860, 0.0
        %v3385 = vmax.f32 %v3131, 0.0
        %v3386 = vmax.f32 %v3133, 0.0
        %v3387 = vmax.f32 %v2318, 0.0
        %v3388 = vmax.f32 %v2320, 0.0
        %v3389 = vmax.f32 %v2591, 0.0
        %v3390 = vmax.f32 %v2593, 0.0
        %v3391 = vmax.f32 %v2864, 0.0
        %v3392 = vmax.f32 %v2866, 0.0
        %v3393 = vmax.f32 %v3137, 0.0
        %v3394 = vmax.f32 %v3139, 0.0
        %v3395 = vmax.f32 %v2322, 0.0
        %v3396 = vmax.f32 %v2324, 0.0
        %v3397 = vmax.f32 %v2595, 0.0
        %v3398 = vmax.f32 %v2597, 0.0
        %v3399 = vmax.f32 %v2868, 0.0
        %v3400 = vmax.f32 %v2870, 0.0
        %v3401 = vmax.f32 %v3141, 0.0
        %v3402 = vmax.f32 %v3143, 0.0
        %v3403 = vmax.f32 %v2328, 0.0
        %v3404 = vmax.f32 %v2330, 0.0
        %v3405 = vmax.f32 %v2601, 0.0
        %v3406 = vmax.f32 %v2603, 0.0
        %v3407 = vmax.f32 %v2874, 0.0
        %v3408 = vmax.f32 %v2876, 0.0
        %v3409 = vmax.f32 %v3147, 0.0
        %v3410 = vmax.f32 %v3149, 0.0
        %v3411 = vmax.f32 %v2332, 0.0
        %v3412 = vmax.f32 %v2334, 0.0
        %v3413 = vmax.f32 %v2605, 0.0
        %v3414 = vmax.f32 %v2607, 0.0
        %v3415 = vmax.f32 %v2878, 0.0
        %v3416 = vmax.f32 %v2880, 0.0
        %v3417 = vmax.f32 %v3151, 0.0
        %v3418 = vmax.f32 %v3153, 0.0
        %v3419 = vmax.f32 %v2338, 0.0
        %v3420 = vmax.f32 %v2340, 0.0
        %v3421 = vmax.f32 %v2611, 0.0
        %v3422 = vmax.f32 %v2613, 0.0
        %v3423 = vmax.f32 %v2884, 0.0
        %v3424 = vmax.f32 %v2886, 0.0
        %v3425 = vmax.f32 %v3157, 0.0
        %v3426 = vmax.f32 %v3159, 0.0
        %v3427 = vmax.f32 %v2342, 0.0
        %v3428 = vmax.f32 %v2344, 0.0
        %v3429 = vmax.f32 %v2615, 0.0
        %v3430 = vmax.f32 %v2617, 0.0
        %v3431 = vmax.f32 %v2888, 0.0
        %v3432 = vmax.f32 %v2890, 0.0
        %v3433 = vmax.f32 %v3161, 0.0
        %v3434 = vmax.f32 %v3163, 0.0
        %v3435 = vmax.f32 %v2348, 0.0
        %v3436 = vmax.f32 %v2350, 0.0
        %v3437 = vmax.f32 %v2621, 0.0
        %v3438 = vmax.f32 %v2623, 0.0
        %v3439 = vmax.f32 %v2894, 0.0
        %v3440 = vmax.f32 %v2896, 0.0
        %v3441 = vmax.f32 %v3167, 0.0
        %v3442 = vmax.f32 %v3169, 0.0
        %v3443 = vmax.f32 %v2352, 0.0
        %v3444 = vmax.f32 %v2354, 0.0
        %v3445 = vmax.f32 %v2625, 0.0
        %v3446 = vmax.f32 %v2627, 0.0
        %v3447 = vmax.f32 %v2898, 0.0
        %v3448 = vmax.f32 %v2900, 0.0
        %v3449 = vmax.f32 %v3171, 0.0
        %v3450 = vmax.f32 %v3173, 0.0
        %v3451 = vmax.f32 %v2358, 0.0
        %v3452 = vmax.f32 %v2360, 0.0
        %v3453 = vmax.f32 %v2631, 0.0
        %v3454 = vmax.f32 %v2633, 0.0
        %v3455 = vmax.f32 %v2904, 0.0
        %v3456 = vmax.f32 %v2906, 0.0
        %v3457 = vmax.f32 %v3177, 0.0
        %v3458 = vmax.f32 %v3179, 0.0
        %v3459 = vmax.f32 %v2362, 0.0
        %v3460 = vmax.f32 %v2364, 0.0
        %v3461 = vmax.f32 %v2635, 0.0
        %v3462 = vmax.f32 %v2637, 0.0
        %v3463 = vmax.f32 %v2908, 0.0
        %v3464 = vmax.f32 %v2910, 0.0
        %v3465 = vmax.f32 %v3181, 0.0
        %v3466 = vmax.f32 %v3183, 0.0
        %v3467 = vmax.f32 %v2368, 0.0
        %v3468 = vmax.f32 %v2370, 0.0
        %v3469 = vmax.f32 %v2641, 0.0
        %v3470 = vmax.f32 %v2643, 0.0
        %v3471 = vmax.f32 %v2914, 0.0
        %v3472 = vmax.f32 %v2916, 0.0
        %v3473 = vmax.f32 %v3187, 0.0
        %v3474 = vmax.f32 %v3189, 0.0
        %v3475 = vmax.f32 %v2372, 0.0
        %v3476 = vmax.f32 %v2374, 0.0
        %v3477 = vmax.f32 %v2645, 0.0
        %v3478 = vmax.f32 %v2647, 0.0
        %v3479 = vmax.f32 %v2918, 0.0
        %v3480 = vmax.f32 %v2920, 0.0
        %v3481 = vmax.f32 %v3191, 0.0
        %v3482 = vmax.f32 %v3193, 0.0
        %v3483 = vmax.f32 %v2378, 0.0
        %v3484 = vmax.f32 %v2380, 0.0
        %v3485 = vmax.f32 %v2651, 0.0
        %v3486 = vmax.f32 %v2653, 0.0
        %v3487 = vmax.f32 %v2924, 0.0
        %v3488 = vmax.f32 %v2926, 0.0
        %v3489 = vmax.f32 %v3197, 0.0
        %v3490 = vmax.f32 %v3199, 0.0
        %v3491 = vmax.f32 %v2382, 0.0
        %v3492 = vmax.f32 %v2384, 0.0
        %v3493 = vmax.f32 %v2655, 0.0
        %v3494 = vmax.f32 %v2657, 0.0
        %v3495 = vmax.f32 %v2928, 0.0
        %v3496 = vmax.f32 %v2930, 0.0
        %v3497 = vmax.f32 %v3201, 0.0
        %v3498 = vmax.f32 %v3203, 0.0
        %v3499 = vmax.f32 %v2388, 0.0
        %v3500 = vmax.f32 %v2390, 0.0
        %v3501 = vmax.f32 %v2661, 0.0
        %v3502 = vmax.f32 %v2663, 0.0
        %v3503 = vmax.f32 %v2934, 0.0
        %v3504 = vmax.f32 %v2936, 0.0
        %v3505 = vmax.f32 %v3207, 0.0
        %v3506 = vmax.f32 %v3209, 0.0
        %v3507 = vmax.f32 %v2392, 0.0
        %v3508 = vmax.f32 %v2394, 0.0
        %v3509 = vmax.f32 %v2665, 0.0
        %v3510 = vmax.f32 %v2667, 0.0
        %v3511 = vmax.f32 %v2938, 0.0
        %v3512 = vmax.f32 %v2940, 0.0
        %v3513 = vmax.f32 %v3211, 0.0
        %v3514 = vmax.f32 %v3213, 0.0
        %v3515 = vmax.f32 %v2398, 0.0
        %v3516 = vmax.f32 %v2400, 0.0
        %v3517 = vmax.f32 %v2671, 0.0
        %v3518 = vmax.f32 %v2673, 0.0
        %v3519 = vmax.f32 %v2944, 0.0
        %v3520 = vmax.f32 %v2946, 0.0
        %v3521 = vmax.f32 %v3217, 0.0
        %v3522 = vmax.f32 %v3219, 0.0
        %v3523 = vmax.f32 %v2402, 0.0
        %v3524 = vmax.f32 %v2404, 0.0
        %v3525 = vmax.f32 %v2675, 0.0
        %v3526 = vmax.f32 %v2677, 0.0
        %v3527 = vmax.f32 %v2948, 0.0
        %v3528 = vmax.f32 %v2950, 0.0
        %v3529 = vmax.f32 %v3221, 0.0
        %v3530 = vmax.f32 %v3223, 0.0
        %v3531 = vmax.f32 %v2408, 0.0
        %v3532 = vmax.f32 %v2410, 0.0
        %v3533 = vmax.f32 %v2681, 0.0
        %v3534 = vmax.f32 %v2683, 0.0
        %v3535 = vmax.f32 %v2954, 0.0
        %v3536 = vmax.f32 %v2956, 0.0
        %v3537 = vmax.f32 %v3227, 0.0
        %v3538 = vmax.f32 %v3229, 0.0
        %v3539 = vmax.f32 %v2412, 0.0
        %v3540 = vmax.f32 %v2414, 0.0
        %v3541 = vmax.f32 %v2685, 0.0
        %v3542 = vmax.f32 %v2687, 0.0
        %v3543 = vmax.f32 %v2958, 0.0
        %v3544 = vmax.f32 %v2960, 0.0
        %v3545 = vmax.f32 %v3231, 0.0
        %v3546 = vmax.f32 %v3233, 0.0
        %v3547 = vmax.f32 %v2418, 0.0
        %v3548 = vmax.f32 %v2420, 0.0
        %v3549 = vmax.f32 %v2691, 0.0
        %v3550 = vmax.f32 %v2693, 0.0
        %v3551 = vmax.f32 %v2964, 0.0
        %v3552 = vmax.f32 %v2966, 0.0
        %v3553 = vmax.f32 %v3237, 0.0
        %v3554 = vmax.f32 %v3239, 0.0
        %v3555 = vmax.f32 %v2422, 0.0
        %v3556 = vmax.f32 %v2424, 0.0
        %v3557 = vmax.f32 %v2695, 0.0
        %v3558 = vmax.f32 %v2697, 0.0
        %v3559 = vmax.f32 %v2968, 0.0
        %v3560 = vmax.f32 %v2970, 0.0
        %v3561 = vmax.f32 %v3241, 0.0
        %v3562 = vmax.f32 %v3243, 0.0
        %v3563 = vmax.f32 %v2428, 0.0
        %v3564 = vmax.f32 %v2430, 0.0
        %v3565 = vmax.f32 %v2701, 0.0
        %v3566 = vmax.f32 %v2703, 0.0
        %v3567 = vmax.f32 %v2974, 0.0
        %v3568 = vmax.f32 %v2976, 0.0
        %v3569 = vmax.f32 %v3247, 0.0
        %v3570 = vmax.f32 %v3249, 0.0
        %v3571 = vmax.f32 %v2432, 0.0
        %v3572 = vmax.f32 %v2434, 0.0
        %v3573 = vmax.f32 %v2705, 0.0
        %v3574 = vmax.f32 %v2707, 0.0
        %v3575 = vmax.f32 %v2978, 0.0
        %v3576 = vmax.f32 %v2980, 0.0
        %v3577 = vmax.f32 %v3251, 0.0
        %v3578 = vmax.f32 %v3253, 0.0
        %v3579 = vmax.f32 %v2438, 0.0
        %v3580 = vmax.f32 %v2440, 0.0
        %v3581 = vmax.f32 %v2711, 0.0
        %v3582 = vmax.f32 %v2713, 0.0
        %v3583 = vmax.f32 %v2984, 0.0
        %v3584 = vmax.f32 %v2986, 0.0
        %v3585 = vmax.f32 %v3257, 0.0
        %v3586 = vmax.f32 %v3259, 0.0
        %v3587 = vmax.f32 %v2442, 0.0
        %v3588 = vmax.f32 %v2444, 0.0
        %v3589 = vmax.f32 %v2715, 0.0
        %v3590 = vmax.f32 %v2717, 0.0
        %v3591 = vmax.f32 %v2988, 0.0
        %v3592 = vmax.f32 %v2990, 0.0
        %v3593 = vmax.f32 %v3261, 0.0
        %v3594 = vmax.f32 %v3263, 0.0
        %v3595 = vmax.f32 %v2448, 0.0
        %v3596 = vmax.f32 %v2450, 0.0
        %v3597 = vmax.f32 %v2721, 0.0
        %v3598 = vmax.f32 %v2723, 0.0
        %v3599 = vmax.f32 %v2994, 0.0
        %v3600 = vmax.f32 %v2996, 0.0
        %v3601 = vmax.f32 %v3267, 0.0
        %v3602 = vmax.f32 %v3269, 0.0
        %v3603 = vmax.f32 %v2452, 0.0
        %v3604 = vmax.f32 %v2454, 0.0
        %v3605 = vmax.f32 %v2725, 0.0
        %v3606 = vmax.f32 %v2727, 0.0
        %v3607 = vmax.f32 %v2998, 0.0
        %v3608 = vmax.f32 %v3000, 0.0
        %v3609 = vmax.f32 %v3271, 0.0
        %v3610 = vmax.f32 %v3273, 0.0
        %v3611 = vmax.f32 %v2458, 0.0
        %v3612 = vmax.f32 %v2460, 0.0
        %v3613 = vmax.f32 %v2731, 0.0
        %v3614 = vmax.f32 %v2733, 0.0
        %v3615 = vmax.f32 %v3004, 0.0
        %v3616 = vmax.f32 %v3006, 0.0
        %v3617 = vmax.f32 %v3277, 0.0
        %v3618 = vmax.f32 %v3279, 0.0
        %v3619 = vmax.f32 %v2462, 0.0
        %v3620 = vmax.f32 %v2464, 0.0
        %v3621 = vmax.f32 %v2735, 0.0
        %v3622 = vmax.f32 %v2737, 0.0
        %v3623 = vmax.f32 %v3008, 0.0
        %v3624 = vmax.f32 %v3010, 0.0
        %v3625 = vmax.f32 %v3281, 0.0
        %v3626 = vmax.f32 %v3283, 0.0
        %v3627 = vmax.f32 %v2468, 0.0
        %v3628 = vmax.f32 %v2470, 0.0
        %v3629 = vmax.f32 %v2741, 0.0
        %v3630 = vmax.f32 %v2743, 0.0
        %v3631 = vmax.f32 %v3014, 0.0
        %v3632 = vmax.f32 %v3016, 0.0
        %v3633 = vmax.f32 %v3287, 0.0
        %v3634 = vmax.f32 %v3289, 0.0
        %v3635 = vmax.f32 %v2472, 0.0
        %v3636 = vmax.f32 %v2474, 0.0
        %v3637 = vmax.f32 %v2745, 0.0
        %v3638 = vmax.f32 %v2747, 0.0
        %v3639 = vmax.f32 %v3018, 0.0
        %v3640 = vmax.f32 %v3020, 0.0
        %v3641 = vmax.f32 %v3291, 0.0
        %v3642 = vmax.f32 %v3293, 0.0
        %v3643 = vmax.f32 %v2478, 0.0
        %v3644 = vmax.f32 %v2480, 0.0
        %v3645 = vmax.f32 %v2751, 0.0
        %v3646 = vmax.f32 %v2753, 0.0
        %v3647 = vmax.f32 %v3024, 0.0
        %v3648 = vmax.f32 %v3026, 0.0
        %v3649 = vmax.f32 %v3297, 0.0
        %v3650 = vmax.f32 %v3299, 0.0
        %v3651 = vmax.f32 %v2482, 0.0
        %v3652 = vmax.f32 %v2484, 0.0
        %v3653 = vmax.f32 %v2755, 0.0
        %v3654 = vmax.f32 %v2757, 0.0
        %v3655 = vmax.f32 %v3028, 0.0
        %v3656 = vmax.f32 %v3030, 0.0
        %v3657 = vmax.f32 %v3301, 0.0
        %v3658 = vmax.f32 %v3303, 0.0
        %v3659 = vmax.f32 %v2488, 0.0
        %v3660 = vmax.f32 %v2490, 0.0
        %v3661 = vmax.f32 %v2761, 0.0
        %v3662 = vmax.f32 %v2763, 0.0
        %v3663 = vmax.f32 %v3034, 0.0
        %v3664 = vmax.f32 %v3036, 0.0
        %v3665 = vmax.f32 %v3307, 0.0
        %v3666 = vmax.f32 %v3309, 0.0
        %v3667 = vmax.f32 %v2492, 0.0
        %v3668 = vmax.f32 %v2494, 0.0
        %v3669 = vmax.f32 %v2765, 0.0
        %v3670 = vmax.f32 %v2767, 0.0
        %v3671 = vmax.f32 %v3038, 0.0
        %v3672 = vmax.f32 %v3040, 0.0
        %v3673 = vmax.f32 %v3311, 0.0
        %v3674 = vmax.f32 %v3313, 0.0
        %v3675 = vmax.f32 %v2498, 0.0
        %v3676 = vmax.f32 %v2500, 0.0
        %v3677 = vmax.f32 %v2771, 0.0
        %v3678 = vmax.f32 %v2773, 0.0
        %v3679 = vmax.f32 %v3044, 0.0
        %v3680 = vmax.f32 %v3046, 0.0
        %v3681 = vmax.f32 %v3317, 0.0
        %v3682 = vmax.f32 %v3319, 0.0
        %v3683 = vmax.f32 %v2502, 0.0
        %v3684 = vmax.f32 %v2504, 0.0
        %v3685 = vmax.f32 %v2775, 0.0
        %v3686 = vmax.f32 %v2777, 0.0
        %v3687 = vmax.f32 %v3048, 0.0
        %v3688 = vmax.f32 %v3050, 0.0
        %v3689 = vmax.f32 %v3321, 0.0
        %v3690 = vmax.f32 %v3323, 0.0
        %v3691 = vmax.f32 %v2508, 0.0
        %v3692 = vmax.f32 %v2510, 0.0
        %v3693 = vmax.f32 %v2781, 0.0
        %v3694 = vmax.f32 %v2783, 0.0
        %v3695 = vmax.f32 %v3054, 0.0
        %v3696 = vmax.f32 %v3056, 0.0
        %v3697 = vmax.f32 %v3327, 0.0
        %v3698 = vmax.f32 %v3329, 0.0
        %v3699 = vmax.f32 %v2512, 0.0
        %v3700 = vmax.f32 %v2514, 0.0
        %v3701 = vmax.f32 %v2785, 0.0
        %v3702 = vmax.f32 %v2787, 0.0
        %v3703 = vmax.f32 %v3058, 0.0
        %v3704 = vmax.f32 %v3060, 0.0
        %v3705 = vmax.f32 %v3331, 0.0
        %v3706 = vmax.f32 %v3333, 0.0
        %v3707 = vmax.f32 %v2518, 0.0
        %v3708 = vmax.f32 %v2520, 0.0
        %v3709 = vmax.f32 %v2791, 0.0
        %v3710 = vmax.f32 %v2793, 0.0
        %v3711 = vmax.f32 %v3064, 0.0
        %v3712 = vmax.f32 %v3066, 0.0
        %v3713 = vmax.f32 %v3337, 0.0
        %v3714 = vmax.f32 %v3339, 0.0
        %v3715 = vmax.f32 %v2522, 0.0
        %v3716 = vmax.f32 %v2524, 0.0
        %v3717 = vmax.f32 %v2795, 0.0
        %v3718 = vmax.f32 %v2797, 0.0
        %v3719 = vmax.f32 %v3068, 0.0
        %v3720 = vmax.f32 %v3070, 0.0
        %v3721 = vmax.f32 %v3341, 0.0
        %v3722 = vmax.f32 %v3343, 0.0
        %v3723 = vmax.f32 %v2528, 0.0
        %v3724 = vmax.f32 %v2530, 0.0
        %v3725 = vmax.f32 %v2801, 0.0
        %v3726 = vmax.f32 %v2803, 0.0
        %v3727 = vmax.f32 %v3074, 0.0
        %v3728 = vmax.f32 %v3076, 0.0
        %v3729 = vmax.f32 %v3347, 0.0
        %v3730 = vmax.f32 %v3349, 0.0
        %v3731 = vmax.f32 %v2532, 0.0
        %v3732 = vmax.f32 %v2534, 0.0
        %v3733 = vmax.f32 %v2805, 0.0
        %v3734 = vmax.f32 %v2807, 0.0
        %v3735 = vmax.f32 %v3078, 0.0
        %v3736 = vmax.f32 %v3080, 0.0
        %v3737 = vmax.f32 %v3351, 0.0
        %v3738 = vmax.f32 %v3353, 0.0
        %3739 = vst [vmem:[%s760] sm:$0xff] %v3355
        %3740 = vst [vmem:[%s760 + $0x8] sm:$0xff] %v3356
        %3741 = vst [vmem:[%s760 + $0x10] sm:$0xff] %v3357
        %3742 = vst [vmem:[%s760 + $0x18] sm:$0xff] %v3358
        %3743 = vst [vmem:[%s760 + $0x20] sm:$0xff] %v3359
        %3744 = vst [vmem:[%s760 + $0x28] sm:$0xff] %v3360
        %3745 = vst [vmem:[%s760 + $0x30] sm:$0xff] %v3361
        %3746 = vst [vmem:[%s760 + $0x38] sm:$0xff] %v3362
        %3747 = vst [vmem:[%s760 + $0x40] sm:$0xff] %v3363
        %3748 = vst [vmem:[%s760 + $0x48] sm:$0xff] %v3364
        %3749 = vst [vmem:[%s760 + $0x50] sm:$0xff] %v3365
        %3750 = vst [vmem:[%s760 + $0x58] sm:$0xff] %v3366
        %3751 = vst [vmem:[%s760 + $0x60] sm:$0xff] %v3367
        %3752 = vst [vmem:[%s760 + $0x68] sm:$0xff] %v3368
        %3753 = vst [vmem:[%s760 + $0x70] sm:$0xff] %v3369
        %3754 = vst [vmem:[%s760 + $0x78] sm:$0xff] %v3370
        %3755 = vst [vmem:[%s760 + $0x80] sm:$0xff] %v3371
        %3756 = vst [vmem:[%s760 + $0x88] sm:$0xff] %v3372
        %3757 = vst [vmem:[%s760 + $0x90] sm:$0xff] %v3373
        %3758 = vst [vmem:[%s760 + $0x98] sm:$0xff] %v3374
        %3759 = vst [vmem:[%s760 + $0xa0] sm:$0xff] %v3375
        %3760 = vst [vmem:[%s760 + $0xa8] sm:$0xff] %v3376
        %3761 = vst [vmem:[%s760 + $0xb0] sm:$0xff] %v3377
        %3762 = vst [vmem:[%s760 + $0xb8] sm:$0xff] %v3378
        %3763 = vst [vmem:[%s760 + $0xc0] sm:$0xff] %v3379
        %3764 = vst [vmem:[%s760 + $0xc8] sm:$0xff] %v3380
        %3765 = vst [vmem:[%s760 + $0xd0] sm:$0xff] %v3381
        %3766 = vst [vmem:[%s760 + $0xd8] sm:$0xff] %v3382
        %3767 = vst [vmem:[%s760 + $0xe0] sm:$0xff] %v3383
        %3768 = vst [vmem:[%s760 + $0xe8] sm:$0xff] %v3384
        %3769 = vst [vmem:[%s760 + $0xf0] sm:$0xff] %v3385
        %3770 = vst [vmem:[%s760 + $0xf8] sm:$0xff] %v3386
        %3771 = vst [vmem:[%s760 + $0x100] sm:$0xff] %v3387
        %3772 = vst [vmem:[%s760 + $0x108] sm:$0xff] %v3388
        %3773 = vst [vmem:[%s760 + $0x110] sm:$0xff] %v3389
        %3774 = vst [vmem:[%s760 + $0x118] sm:$0xff] %v3390
        %3775 = vst [vmem:[%s760 + $0x120] sm:$0xff] %v3391
        %3776 = vst [vmem:[%s760 + $0x128] sm:$0xff] %v3392
        %3777 = vst [vmem:[%s760 + $0x130] sm:$0xff] %v3393
        %3778 = vst [vmem:[%s760 + $0x138] sm:$0xff] %v3394
        %3779 = vst [vmem:[%s760 + $0x140] sm:$0xff] %v3395
        %3780 = vst [vmem:[%s760 + $0x148] sm:$0xff] %v3396
        %3781 = vst [vmem:[%s760 + $0x150] sm:$0xff] %v3397
        %3782 = vst [vmem:[%s760 + $0x158] sm:$0xff] %v3398
        %3783 = vst [vmem:[%s760 + $0x160] sm:$0xff] %v3399
        %3784 = vst [vmem:[%s760 + $0x168] sm:$0xff] %v3400
        %3785 = vst [vmem:[%s760 + $0x170] sm:$0xff] %v3401
        %3786 = vst [vmem:[%s760 + $0x178] sm:$0xff] %v3402
        %3787 = vst [vmem:[%s760 + $0x180] sm:$0xff] %v3403
        %3788 = vst [vmem:[%s760 + $0x188] sm:$0xff] %v3404
        %3789 = vst [vmem:[%s760 + $0x190] sm:$0xff] %v3405
        %3790 = vst [vmem:[%s760 + $0x198] sm:$0xff] %v3406
        %3791 = vst [vmem:[%s760 + $0x1a0] sm:$0xff] %v3407
        %3792 = vst [vmem:[%s760 + $0x1a8] sm:$0xff] %v3408
        %3793 = vst [vmem:[%s760 + $0x1b0] sm:$0xff] %v3409
        %3794 = vst [vmem:[%s760 + $0x1b8] sm:$0xff] %v3410
        %3795 = vst [vmem:[%s760 + $0x1c0] sm:$0xff] %v3411
        %3796 = vst [vmem:[%s760 + $0x1c8] sm:$0xff] %v3412
        %3797 = vst [vmem:[%s760 + $0x1d0] sm:$0xff] %v3413
        %3798 = vst [vmem:[%s760 + $0x1d8] sm:$0xff] %v3414
        %3799 = vst [vmem:[%s760 + $0x1e0] sm:$0xff] %v3415
        %3800 = vst [vmem:[%s760 + $0x1e8] sm:$0xff] %v3416
        %3801 = vst [vmem:[%s760 + $0x1f0] sm:$0xff] %v3417
        %3802 = vst [vmem:[%s760 + $0x1f8] sm:$0xff] %v3418
        %3803 = vst [vmem:[%s760 + $0x200] sm:$0xff] %v3419
        %3804 = vst [vmem:[%s760 + $0x208] sm:$0xff] %v3420
        %3805 = vst [vmem:[%s760 + $0x210] sm:$0xff] %v3421
        %3806 = vst [vmem:[%s760 + $0x218] sm:$0xff] %v3422
        %3807 = vst [vmem:[%s760 + $0x220] sm:$0xff] %v3423
        %3808 = vst [vmem:[%s760 + $0x228] sm:$0xff] %v3424
        %3809 = vst [vmem:[%s760 + $0x230] sm:$0xff] %v3425
        %3810 = vst [vmem:[%s760 + $0x238] sm:$0xff] %v3426
        %3811 = vst [vmem:[%s760 + $0x240] sm:$0xff] %v3427
        %3812 = vst [vmem:[%s760 + $0x248] sm:$0xff] %v3428
        %3813 = vst [vmem:[%s760 + $0x250] sm:$0xff] %v3429
        %3814 = vst [vmem:[%s760 + $0x258] sm:$0xff] %v3430
        %3815 = vst [vmem:[%s760 + $0x260] sm:$0xff] %v3431
        %3816 = vst [vmem:[%s760 + $0x268] sm:$0xff] %v3432
        %3817 = vst [vmem:[%s760 + $0x270] sm:$0xff] %v3433
        %3818 = vst [vmem:[%s760 + $0x278] sm:$0xff] %v3434
        %3819 = vst [vmem:[%s760 + $0x280] sm:$0xff] %v3435
        %3820 = vst [vmem:[%s760 + $0x288] sm:$0xff] %v3436
        %3821 = vst [vmem:[%s760 + $0x290] sm:$0xff] %v3437
        %3822 = vst [vmem:[%s760 + $0x298] sm:$0xff] %v3438
        %3823 = vst [vmem:[%s760 + $0x2a0] sm:$0xff] %v3439
        %3824 = vst [vmem:[%s760 + $0x2a8] sm:$0xff] %v3440
        %3825 = vst [vmem:[%s760 + $0x2b0] sm:$0xff] %v3441
        %3826 = vst [vmem:[%s760 + $0x2b8] sm:$0xff] %v3442
        %3827 = vst [vmem:[%s760 + $0x2c0] sm:$0xff] %v3443
        %3828 = vst [vmem:[%s760 + $0x2c8] sm:$0xff] %v3444
        %3829 = vst [vmem:[%s760 + $0x2d0] sm:$0xff] %v3445
        %3830 = vst [vmem:[%s760 + $0x2d8] sm:$0xff] %v3446
        %3831 = vst [vmem:[%s760 + $0x2e0] sm:$0xff] %v3447
        %3832 = vst [vmem:[%s760 + $0x2e8] sm:$0xff] %v3448
        %3833 = vst [vmem:[%s760 + $0x2f0] sm:$0xff] %v3449
        %3834 = vst [vmem:[%s760 + $0x2f8] sm:$0xff] %v3450
        %3835 = vst [vmem:[%s760 + $0x300] sm:$0xff] %v3451
        %3836 = vst [vmem:[%s760 + $0x308] sm:$0xff] %v3452
        %3837 = vst [vmem:[%s760 + $0x310] sm:$0xff] %v3453
        %3838 = vst [vmem:[%s760 + $0x318] sm:$0xff] %v3454
        %3839 = vst [vmem:[%s760 + $0x320] sm:$0xff] %v3455
        %3840 = vst [vmem:[%s760 + $0x328] sm:$0xff] %v3456
        %3841 = vst [vmem:[%s760 + $0x330] sm:$0xff] %v3457
        %3842 = vst [vmem:[%s760 + $0x338] sm:$0xff] %v3458
        %3843 = vst [vmem:[%s760 + $0x340] sm:$0xff] %v3459
        %3844 = vst [vmem:[%s760 + $0x348] sm:$0xff] %v3460
        %3845 = vst [vmem:[%s760 + $0x350] sm:$0xff] %v3461
        %3846 = vst [vmem:[%s760 + $0x358] sm:$0xff] %v3462
        %3847 = vst [vmem:[%s760 + $0x360] sm:$0xff] %v3463
        %3848 = vst [vmem:[%s760 + $0x368] sm:$0xff] %v3464
        %3849 = vst [vmem:[%s760 + $0x370] sm:$0xff] %v3465
        %3850 = vst [vmem:[%s760 + $0x378] sm:$0xff] %v3466
        %3851 = vst [vmem:[%s760 + $0x380] sm:$0xff] %v3467
        %3852 = vst [vmem:[%s760 + $0x388] sm:$0xff] %v3468
        %3853 = vst [vmem:[%s760 + $0x390] sm:$0xff] %v3469
        %3854 = vst [vmem:[%s760 + $0x398] sm:$0xff] %v3470
        %3855 = vst [vmem:[%s760 + $0x3a0] sm:$0xff] %v3471
        %3856 = vst [vmem:[%s760 + $0x3a8] sm:$0xff] %v3472
        %3857 = vst [vmem:[%s760 + $0x3b0] sm:$0xff] %v3473
        %3858 = vst [vmem:[%s760 + $0x3b8] sm:$0xff] %v3474
        %3859 = vst [vmem:[%s760 + $0x3c0] sm:$0xff] %v3475
        %3860 = vst [vmem:[%s760 + $0x3c8] sm:$0xff] %v3476
        %3861 = vst [vmem:[%s760 + $0x3d0] sm:$0xff] %v3477
        %3862 = vst [vmem:[%s760 + $0x3d8] sm:$0xff] %v3478
        %3863 = vst [vmem:[%s760 + $0x3e0] sm:$0xff] %v3479
        %3864 = vst [vmem:[%s760 + $0x3e8] sm:$0xff] %v3480
        %3865 = vst [vmem:[%s760 + $0x3f0] sm:$0xff] %v3481
        %3866 = vst [vmem:[%s760 + $0x3f8] sm:$0xff] %v3482
        %3867 = vst [vmem:[%s766] sm:$0xff] %v3483
        %3868 = vst [vmem:[%s766 + $0x8] sm:$0xff] %v3484
        %3869 = vst [vmem:[%s766 + $0x10] sm:$0xff] %v3485
        %3870 = vst [vmem:[%s766 + $0x18] sm:$0xff] %v3486
        %3871 = vst [vmem:[%s766 + $0x20] sm:$0xff] %v3487
        %3872 = vst [vmem:[%s766 + $0x28] sm:$0xff] %v3488
        %3873 = vst [vmem:[%s766 + $0x30] sm:$0xff] %v3489
        %3874 = vst [vmem:[%s766 + $0x38] sm:$0xff] %v3490
        %3875 = vst [vmem:[%s766 + $0x40] sm:$0xff] %v3491
        %3876 = vst [vmem:[%s766 + $0x48] sm:$0xff] %v3492
        %3877 = vst [vmem:[%s766 + $0x50] sm:$0xff] %v3493
        %3878 = vst [vmem:[%s766 + $0x58] sm:$0xff] %v3494
        %3879 = vst [vmem:[%s766 + $0x60] sm:$0xff] %v3495
        %3880 = vst [vmem:[%s766 + $0x68] sm:$0xff] %v3496
        %3881 = vst [vmem:[%s766 + $0x70] sm:$0xff] %v3497
        %3882 = vst [vmem:[%s766 + $0x78] sm:$0xff] %v3498
        %3883 = vst [vmem:[%s766 + $0x80] sm:$0xff] %v3499
        %3884 = vst [vmem:[%s766 + $0x88] sm:$0xff] %v3500
        %3885 = vst [vmem:[%s766 + $0x90] sm:$0xff] %v3501
        %3886 = vst [vmem:[%s766 + $0x98] sm:$0xff] %v3502
        %3887 = vst [vmem:[%s766 + $0xa0] sm:$0xff] %v3503
        %3888 = vst [vmem:[%s766 + $0xa8] sm:$0xff] %v3504
        %3889 = vst [vmem:[%s766 + $0xb0] sm:$0xff] %v3505
        %3890 = vst [vmem:[%s766 + $0xb8] sm:$0xff] %v3506
        %3891 = vst [vmem:[%s766 + $0xc0] sm:$0xff] %v3507
        %3892 = vst [vmem:[%s766 + $0xc8] sm:$0xff] %v3508
        %3893 = vst [vmem:[%s766 + $0xd0] sm:$0xff] %v3509
        %3894 = vst [vmem:[%s766 + $0xd8] sm:$0xff] %v3510
        %3895 = vst [vmem:[%s766 + $0xe0] sm:$0xff] %v3511
        %3896 = vst [vmem:[%s766 + $0xe8] sm:$0xff] %v3512
        %3897 = vst [vmem:[%s766 + $0xf0] sm:$0xff] %v3513
        %3898 = vst [vmem:[%s766 + $0xf8] sm:$0xff] %v3514
        %3899 = vst [vmem:[%s766 + $0x100] sm:$0xff] %v3515
        %3900 = vst [vmem:[%s766 + $0x108] sm:$0xff] %v3516
        %3901 = vst [vmem:[%s766 + $0x110] sm:$0xff] %v3517
        %3902 = vst [vmem:[%s766 + $0x118] sm:$0xff] %v3518
        %3903 = vst [vmem:[%s766 + $0x120] sm:$0xff] %v3519
        %3904 = vst [vmem:[%s766 + $0x128] sm:$0xff] %v3520
        %3905 = vst [vmem:[%s766 + $0x130] sm:$0xff] %v3521
        %3906 = vst [vmem:[%s766 + $0x138] sm:$0xff] %v3522
        %3907 = vst [vmem:[%s766 + $0x140] sm:$0xff] %v3523
        %3908 = vst [vmem:[%s766 + $0x148] sm:$0xff] %v3524
        %3909 = vst [vmem:[%s766 + $0x150] sm:$0xff] %v3525
        %3910 = vst [vmem:[%s766 + $0x158] sm:$0xff] %v3526
        %3911 = vst [vmem:[%s766 + $0x160] sm:$0xff] %v3527
        %3912 = vst [vmem:[%s766 + $0x168] sm:$0xff] %v3528
        %3913 = vst [vmem:[%s766 + $0x170] sm:$0xff] %v3529
        %3914 = vst [vmem:[%s766 + $0x178] sm:$0xff] %v3530
        %3915 = vst [vmem:[%s766 + $0x180] sm:$0xff] %v3531
        %3916 = vst [vmem:[%s766 + $0x188] sm:$0xff] %v3532
        %3917 = vst [vmem:[%s766 + $0x190] sm:$0xff] %v3533
        %3918 = vst [vmem:[%s766 + $0x198] sm:$0xff] %v3534
        %3919 = vst [vmem:[%s766 + $0x1a0] sm:$0xff] %v3535
        %3920 = vst [vmem:[%s766 + $0x1a8] sm:$0xff] %v3536
        %3921 = vst [vmem:[%s766 + $0x1b0] sm:$0xff] %v3537
        %3922 = vst [vmem:[%s766 + $0x1b8] sm:$0xff] %v3538
        %3923 = vst [vmem:[%s766 + $0x1c0] sm:$0xff] %v3539
        %3924 = vst [vmem:[%s766 + $0x1c8] sm:$0xff] %v3540
        %3925 = vst [vmem:[%s766 + $0x1d0] sm:$0xff] %v3541
        %3926 = vst [vmem:[%s766 + $0x1d8] sm:$0xff] %v3542
        %3927 = vst [vmem:[%s766 + $0x1e0] sm:$0xff] %v3543
        %3928 = vst [vmem:[%s766 + $0x1e8] sm:$0xff] %v3544
        %3929 = vst [vmem:[%s766 + $0x1f0] sm:$0xff] %v3545
        %3930 = vst [vmem:[%s766 + $0x1f8] sm:$0xff] %v3546
        %3931 = vst [vmem:[%s766 + $0x200] sm:$0xff] %v3547
        %3932 = vst [vmem:[%s766 + $0x208] sm:$0xff] %v3548
        %3933 = vst [vmem:[%s766 + $0x210] sm:$0xff] %v3549
        %3934 = vst [vmem:[%s766 + $0x218] sm:$0xff] %v3550
        %3935 = vst [vmem:[%s766 + $0x220] sm:$0xff] %v3551
        %3936 = vst [vmem:[%s766 + $0x228] sm:$0xff] %v3552
        %3937 = vst [vmem:[%s766 + $0x230] sm:$0xff] %v3553
        %3938 = vst [vmem:[%s766 + $0x238] sm:$0xff] %v3554
        %3939 = vst [vmem:[%s766 + $0x240] sm:$0xff] %v3555
        %3940 = vst [vmem:[%s766 + $0x248] sm:$0xff] %v3556
        %3941 = vst [vmem:[%s766 + $0x250] sm:$0xff] %v3557
        %3942 = vst [vmem:[%s766 + $0x258] sm:$0xff] %v3558
        %3943 = vst [vmem:[%s766 + $0x260] sm:$0xff] %v3559
        %3944 = vst [vmem:[%s766 + $0x268] sm:$0xff] %v3560
        %3945 = vst [vmem:[%s766 + $0x270] sm:$0xff] %v3561
        %3946 = vst [vmem:[%s766 + $0x278] sm:$0xff] %v3562
        %3947 = vst [vmem:[%s766 + $0x280] sm:$0xff] %v3563
        %3948 = vst [vmem:[%s766 + $0x288] sm:$0xff] %v3564
        %3949 = vst [vmem:[%s766 + $0x290] sm:$0xff] %v3565
        %3950 = vst [vmem:[%s766 + $0x298] sm:$0xff] %v3566
        %3951 = vst [vmem:[%s766 + $0x2a0] sm:$0xff] %v3567
        %3952 = vst [vmem:[%s766 + $0x2a8] sm:$0xff] %v3568
        %3953 = vst [vmem:[%s766 + $0x2b0] sm:$0xff] %v3569
        %3954 = vst [vmem:[%s766 + $0x2b8] sm:$0xff] %v3570
        %3955 = vst [vmem:[%s766 + $0x2c0] sm:$0xff] %v3571
        %3956 = vst [vmem:[%s766 + $0x2c8] sm:$0xff] %v3572
        %3957 = vst [vmem:[%s766 + $0x2d0] sm:$0xff] %v3573
        %3958 = vst [vmem:[%s766 + $0x2d8] sm:$0xff] %v3574
        %3959 = vst [vmem:[%s766 + $0x2e0] sm:$0xff] %v3575
        %3960 = vst [vmem:[%s766 + $0x2e8] sm:$0xff] %v3576
        %3961 = vst [vmem:[%s766 + $0x2f0] sm:$0xff] %v3577
        %3962 = vst [vmem:[%s766 + $0x2f8] sm:$0xff] %v3578
        %3963 = vst [vmem:[%s766 + $0x300] sm:$0xff] %v3579
        %3964 = vst [vmem:[%s766 + $0x308] sm:$0xff] %v3580
        %3965 = vst [vmem:[%s766 + $0x310] sm:$0xff] %v3581
        %3966 = vst [vmem:[%s766 + $0x318] sm:$0xff] %v3582
        %3967 = vst [vmem:[%s766 + $0x320] sm:$0xff] %v3583
        %3968 = vst [vmem:[%s766 + $0x328] sm:$0xff] %v3584
        %3969 = vst [vmem:[%s766 + $0x330] sm:$0xff] %v3585
        %3970 = vst [vmem:[%s766 + $0x338] sm:$0xff] %v3586
        %3971 = vst [vmem:[%s766 + $0x340] sm:$0xff] %v3587
        %3972 = vst [vmem:[%s766 + $0x348] sm:$0xff] %v3588
        %3973 = vst [vmem:[%s766 + $0x350] sm:$0xff] %v3589
        %3974 = vst [vmem:[%s766 + $0x358] sm:$0xff] %v3590
        %3975 = vst [vmem:[%s766 + $0x360] sm:$0xff] %v3591
        %3976 = vst [vmem:[%s766 + $0x368] sm:$0xff] %v3592
        %3977 = vst [vmem:[%s766 + $0x370] sm:$0xff] %v3593
        %3978 = vst [vmem:[%s766 + $0x378] sm:$0xff] %v3594
        %3979 = vst [vmem:[%s766 + $0x380] sm:$0xff] %v3595
        %3980 = vst [vmem:[%s766 + $0x388] sm:$0xff] %v3596
        %3981 = vst [vmem:[%s766 + $0x390] sm:$0xff] %v3597
        %3982 = vst [vmem:[%s766 + $0x398] sm:$0xff] %v3598
        %3983 = vst [vmem:[%s766 + $0x3a0] sm:$0xff] %v3599
        %3984 = vst [vmem:[%s766 + $0x3a8] sm:$0xff] %v3600
        %3985 = vst [vmem:[%s766 + $0x3b0] sm:$0xff] %v3601
        %3986 = vst [vmem:[%s766 + $0x3b8] sm:$0xff] %v3602
        %3987 = vst [vmem:[%s766 + $0x3c0] sm:$0xff] %v3603
        %3988 = vst [vmem:[%s766 + $0x3c8] sm:$0xff] %v3604
        %3989 = vst [vmem:[%s766 + $0x3d0] sm:$0xff] %v3605
        %3990 = vst [vmem:[%s766 + $0x3d8] sm:$0xff] %v3606
        %3991 = vst [vmem:[%s766 + $0x3e0] sm:$0xff] %v3607
        %3992 = vst [vmem:[%s766 + $0x3e8] sm:$0xff] %v3608
        %3993 = vst [vmem:[%s766 + $0x3f0] sm:$0xff] %v3609
        %3994 = vst [vmem:[%s766 + $0x3f8] sm:$0xff] %v3610
        %3995 = vst [vmem:[%s772] sm:$0xff] %v3611
        %3996 = vst [vmem:[%s772 + $0x8] sm:$0xff] %v3612
        %3997 = vst [vmem:[%s772 + $0x10] sm:$0xff] %v3613
        %3998 = vst [vmem:[%s772 + $0x18] sm:$0xff] %v3614
        %3999 = vst [vmem:[%s772 + $0x20] sm:$0xff] %v3615
        %4000 = vst [vmem:[%s772 + $0x28] sm:$0xff] %v3616
        %4001 = vst [vmem:[%s772 + $0x30] sm:$0xff] %v3617
        %4002 = vst [vmem:[%s772 + $0x38] sm:$0xff] %v3618
        %4003 = vst [vmem:[%s772 + $0x40] sm:$0xff] %v3619
        %4004 = vst [vmem:[%s772 + $0x48] sm:$0xff] %v3620
        %4005 = vst [vmem:[%s772 + $0x50] sm:$0xff] %v3621
        %4006 = vst [vmem:[%s772 + $0x58] sm:$0xff] %v3622
        %4007 = vst [vmem:[%s772 + $0x60] sm:$0xff] %v3623
        %4008 = vst [vmem:[%s772 + $0x68] sm:$0xff] %v3624
        %4009 = vst [vmem:[%s772 + $0x70] sm:$0xff] %v3625
        %4010 = vst [vmem:[%s772 + $0x78] sm:$0xff] %v3626
        %4011 = vst [vmem:[%s772 + $0x80] sm:$0xff] %v3627
        %4012 = vst [vmem:[%s772 + $0x88] sm:$0xff] %v3628
        %4013 = vst [vmem:[%s772 + $0x90] sm:$0xff] %v3629
        %4014 = vst [vmem:[%s772 + $0x98] sm:$0xff] %v3630
        %4015 = vst [vmem:[%s772 + $0xa0] sm:$0xff] %v3631
        %4016 = vst [vmem:[%s772 + $0xa8] sm:$0xff] %v3632
        %4017 = vst [vmem:[%s772 + $0xb0] sm:$0xff] %v3633
        %4018 = vst [vmem:[%s772 + $0xb8] sm:$0xff] %v3634
        %4019 = vst [vmem:[%s772 + $0xc0] sm:$0xff] %v3635
        %4020 = vst [vmem:[%s772 + $0xc8] sm:$0xff] %v3636
        %4021 = vst [vmem:[%s772 + $0xd0] sm:$0xff] %v3637
        %4022 = vst [vmem:[%s772 + $0xd8] sm:$0xff] %v3638
        %4023 = vst [vmem:[%s772 + $0xe0] sm:$0xff] %v3639
        %4024 = vst [vmem:[%s772 + $0xe8] sm:$0xff] %v3640
        %4025 = vst [vmem:[%s772 + $0xf0] sm:$0xff] %v3641
        %4026 = vst [vmem:[%s772 + $0xf8] sm:$0xff] %v3642
        %4027 = vst [vmem:[%s772 + $0x100] sm:$0xff] %v3643
        %4028 = vst [vmem:[%s772 + $0x108] sm:$0xff] %v3644
        %4029 = vst [vmem:[%s772 + $0x110] sm:$0xff] %v3645
        %4030 = vst [vmem:[%s772 + $0x118] sm:$0xff] %v3646
        %4031 = vst [vmem:[%s772 + $0x120] sm:$0xff] %v3647
        %4032 = vst [vmem:[%s772 + $0x128] sm:$0xff] %v3648
        %4033 = vst [vmem:[%s772 + $0x130] sm:$0xff] %v3649
        %4034 = vst [vmem:[%s772 + $0x138] sm:$0xff] %v3650
        %4035 = vst [vmem:[%s772 + $0x140] sm:$0xff] %v3651
        %4036 = vst [vmem:[%s772 + $0x148] sm:$0xff] %v3652
        %4037 = vst [vmem:[%s772 + $0x150] sm:$0xff] %v3653
        %4038 = vst [vmem:[%s772 + $0x158] sm:$0xff] %v3654
        %4039 = vst [vmem:[%s772 + $0x160] sm:$0xff] %v3655
        %4040 = vst [vmem:[%s772 + $0x168] sm:$0xff] %v3656
        %4041 = vst [vmem:[%s772 + $0x170] sm:$0xff] %v3657
        %4042 = vst [vmem:[%s772 + $0x178] sm:$0xff] %v3658
        %4043 = vst [vmem:[%s772 + $0x180] sm:$0xff] %v3659
        %4044 = vst [vmem:[%s772 + $0x188] sm:$0xff] %v3660
        %4045 = vst [vmem:[%s772 + $0x190] sm:$0xff] %v3661
        %4046 = vst [vmem:[%s772 + $0x198] sm:$0xff] %v3662
        %4047 = vst [vmem:[%s772 + $0x1a0] sm:$0xff] %v3663
        %4048 = vst [vmem:[%s772 + $0x1a8] sm:$0xff] %v3664
        %4049 = vst [vmem:[%s772 + $0x1b0] sm:$0xff] %v3665
        %4050 = vst [vmem:[%s772 + $0x1b8] sm:$0xff] %v3666
        %4051 = vst [vmem:[%s772 + $0x1c0] sm:$0xff] %v3667
        %4052 = vst [vmem:[%s772 + $0x1c8] sm:$0xff] %v3668
        %4053 = vst [vmem:[%s772 + $0x1d0] sm:$0xff] %v3669
        %4054 = vst [vmem:[%s772 + $0x1d8] sm:$0xff] %v3670
        %4055 = vst [vmem:[%s772 + $0x1e0] sm:$0xff] %v3671
        %4056 = vst [vmem:[%s772 + $0x1e8] sm:$0xff] %v3672
        %4057 = vst [vmem:[%s772 + $0x1f0] sm:$0xff] %v3673
        %4058 = vst [vmem:[%s772 + $0x1f8] sm:$0xff] %v3674
        %4059 = vst [vmem:[%s772 + $0x200] sm:$0xff] %v3675
        %4060 = vst [vmem:[%s772 + $0x208] sm:$0xff] %v3676
        %4061 = vst [vmem:[%s772 + $0x210] sm:$0xff] %v3677
        %4062 = vst [vmem:[%s772 + $0x218] sm:$0xff] %v3678
        %4063 = vst [vmem:[%s772 + $0x220] sm:$0xff] %v3679
        %4064 = vst [vmem:[%s772 + $0x228] sm:$0xff] %v3680
        %4065 = vst [vmem:[%s772 + $0x230] sm:$0xff] %v3681
        %4066 = vst [vmem:[%s772 + $0x238] sm:$0xff] %v3682
        %4067 = vst [vmem:[%s772 + $0x240] sm:$0xff] %v3683
        %4068 = vst [vmem:[%s772 + $0x248] sm:$0xff] %v3684
        %4069 = vst [vmem:[%s772 + $0x250] sm:$0xff] %v3685
        %4070 = vst [vmem:[%s772 + $0x258] sm:$0xff] %v3686
        %4071 = vst [vmem:[%s772 + $0x260] sm:$0xff] %v3687
        %4072 = vst [vmem:[%s772 + $0x268] sm:$0xff] %v3688
        %4073 = vst [vmem:[%s772 + $0x270] sm:$0xff] %v3689
        %4074 = vst [vmem:[%s772 + $0x278] sm:$0xff] %v3690
        %4075 = vst [vmem:[%s772 + $0x280] sm:$0xff] %v3691
        %4076 = vst [vmem:[%s772 + $0x288] sm:$0xff] %v3692
        %4077 = vst [vmem:[%s772 + $0x290] sm:$0xff] %v3693
        %4078 = vst [vmem:[%s772 + $0x298] sm:$0xff] %v3694
        %4079 = vst [vmem:[%s772 + $0x2a0] sm:$0xff] %v3695
        %4080 = vst [vmem:[%s772 + $0x2a8] sm:$0xff] %v3696
        %4081 = vst [vmem:[%s772 + $0x2b0] sm:$0xff] %v3697
        %4082 = vst [vmem:[%s772 + $0x2b8] sm:$0xff] %v3698
        %4083 = vst [vmem:[%s772 + $0x2c0] sm:$0xff] %v3699
        %4084 = vst [vmem:[%s772 + $0x2c8] sm:$0xff] %v3700
        %4085 = vst [vmem:[%s772 + $0x2d0] sm:$0xff] %v3701
        %4086 = vst [vmem:[%s772 + $0x2d8] sm:$0xff] %v3702
        %4087 = vst [vmem:[%s772 + $0x2e0] sm:$0xff] %v3703
        %4088 = vst [vmem:[%s772 + $0x2e8] sm:$0xff] %v3704
        %4089 = vst [vmem:[%s772 + $0x2f0] sm:$0xff] %v3705
        %4090 = vst [vmem:[%s772 + $0x2f8] sm:$0xff] %v3706
        %4091 = vst [vmem:[%s772 + $0x300] sm:$0xff] %v3707
        %4092 = vst [vmem:[%s772 + $0x308] sm:$0xff] %v3708
        %4093 = vst [vmem:[%s772 + $0x310] sm:$0xff] %v3709
        %4094 = vst [vmem:[%s772 + $0x318] sm:$0xff] %v3710
        %4095 = vst [vmem:[%s772 + $0x320] sm:$0xff] %v3711
        %4096 = vst [vmem:[%s772 + $0x328] sm:$0xff] %v3712
        %4097 = vst [vmem:[%s772 + $0x330] sm:$0xff] %v3713
        %4098 = vst [vmem:[%s772 + $0x338] sm:$0xff] %v3714
        %4099 = vst [vmem:[%s772 + $0x340] sm:$0xff] %v3715
        %4100 = vst [vmem:[%s772 + $0x348] sm:$0xff] %v3716
        %4101 = vst [vmem:[%s772 + $0x350] sm:$0xff] %v3717
        %4102 = vst [vmem:[%s772 + $0x358] sm:$0xff] %v3718
        %4103 = vst [vmem:[%s772 + $0x360] sm:$0xff] %v3719
        %4104 = vst [vmem:[%s772 + $0x368] sm:$0xff] %v3720
        %4105 = vst [vmem:[%s772 + $0x370] sm:$0xff] %v3721
        %4106 = vst [vmem:[%s772 + $0x378] sm:$0xff] %v3722
        %4107 = vst [vmem:[%s772 + $0x380] sm:$0xff] %v3723
        %4108 = vst [vmem:[%s772 + $0x388] sm:$0xff] %v3724
        %4109 = vst [vmem:[%s772 + $0x390] sm:$0xff] %v3725
        %4110 = vst [vmem:[%s772 + $0x398] sm:$0xff] %v3726
        %4111 = vst [vmem:[%s772 + $0x3a0] sm:$0xff] %v3727
        %4112 = vst [vmem:[%s772 + $0x3a8] sm:$0xff] %v3728
        %4113 = vst [vmem:[%s772 + $0x3b0] sm:$0xff] %v3729
        %4114 = vst [vmem:[%s772 + $0x3b8] sm:$0xff] %v3730
        %4115 = vst [vmem:[%s772 + $0x3c0] sm:$0xff] %v3731
        %4116 = vst [vmem:[%s772 + $0x3c8] sm:$0xff] %v3732
        %4117 = vst [vmem:[%s772 + $0x3d0] sm:$0xff] %v3733
        %4118 = vst [vmem:[%s772 + $0x3d8] sm:$0xff] %v3734
        %4119 = vst [vmem:[%s772 + $0x3e0] sm:$0xff] %v3735
        %4120 = vst [vmem:[%s772 + $0x3e8] sm:$0xff] %v3736
        %4121 = vst [vmem:[%s772 + $0x3f0] sm:$0xff] %v3737
        %4122 = vst [vmem:[%s772 + $0x3f8] sm:$0xff] %v3738
        %s4123 = sand.u32 %s142, 1
        %s4124 = sand.u32 %s142, 1
        %s4125 = smul.addr %s4124, 1024
        %s4126 = scalar_lea.vmem [#allocation4], %s4125
        %s4127 = sand.u32 %s170, 1
        %s4128 = sand.u32 %s170, 1
        %s4129 = smul.addr %s4128, 1024
        %s4130 = scalar_lea.vmem [#allocation5], %s4129
        %s4131 = sand.u32 %s198, 1
        %s4132 = sand.u32 %s198, 1
        %s4133 = smul.addr %s4132, 1024
        %s4134 = scalar_lea.vmem [#allocation6], %s4133
        // Predicated region
        $region144: #{encoder_forward.1} parent=134 // pred_check
          %p4135 = pneg %p152
        $region145: #{encoder_forward.1} parent=134 // pred_check_branch
          %4137 = sbr.rel (%p4135) target = $region147
        $region146: #{encoder_forward.1} parent=134 // pred_region
          %s4138 = smul.u32 8, %s23
          %s4139 = ssub.s32 10, %s4138
          %p4140 = scmp.lt.s32.totalorder %s4139, 8
          %s4141 = scalar_select %p4140, %s4139, 8
          %s4142 = smul.u32 2048, %s4141
          %p4143 = scmp.ne.s32.totalorder 0, %s4142
          %s4144 = smul.addr %s22, 160
          %s4145 = sadd.s32 %s4138, %s4144
          %s4146 = smul.addr %s4145, 8
          %s4147 = scalar_lea.vmem %s4, %s4146
          %s4148 = smul.u32 %s4141, 8
          // Predicated region
          $region148: #{encoder_forward.1} parent=146 // pred_check
            %p4149 = pneg %p4143
          $region149: #{encoder_forward.1} parent=146 // pred_check_branch
            %4151 = sbr.rel (%p4149) target = $region151
          $region150: #{encoder_forward.1} parent=146 // pred_region
            %p4152 = scmp.lt.u32.totalorder %s4148, 8
            %p4153 = pneg %p4152
            // Predicated region
            $region152: #{encoder_forward.1} parent=150 // pred_check
              _
            $region153: #{encoder_forward.1} parent=150 // pred_check_branch
              %4155 = sbr.rel (%p4152) target = $region155
            $region154: #{encoder_forward.1} parent=150 // pred_region
              %s4200 = sand.u32 %s4148, 7
              %p4201 = scmp.eq.s32.totalorder %s4200, 0
              // Predicated region
              $region167: #{encoder_forward.1} parent=154 // pred_check
                %p4202 = pneg %p4201
              $region168: #{encoder_forward.1} parent=154 // pred_check_branch
                %4204 = sbr.rel (%p4202) target = $region170
              $region169: #{encoder_forward.1} parent=154 // pred_region
                %s4205 = sshrl.u32 %s4148, 3
                %s4206 = sshrl.u32 %s4205, 2
                // While loop
                $region171: #{encoder_forward.1} parent=169 // loop_pre_header
                  _
                $region172: #{encoder_forward.1} parent=169 // loop_header
                  %s4210 = sphi 0, %s4212
                  %p4211 = scmp.ge.s32.totalorder %s4210, %s4206
                  %s4215 = sphi 0, %s4348
                  %s4216 = sphi %s4126, %s4351
                  %s4217 = sphi %s4147, %s4352
                $region173: #{encoder_forward.1} parent=169 // loop_header_branch
                  %4214 = sbr.rel (%p4211) target = $region177
                $region174: #{encoder_forward.1} parent=169 // loop_body
                  %v4218 = vld [vmem:[%s4216] sm:$0xff]
                  %4219 = vst [vmem:[%s4217] sm:$0xff] %v4218
                  %v4220 = vld [vmem:[%s4216 + $0x8] sm:$0xff]
                  %4221 = vst [vmem:[%s4217 + $0x8] sm:$0xff] %v4220
                  %v4222 = vld [vmem:[%s4216 + $0x10] sm:$0xff]
                  %4223 = vst [vmem:[%s4217 + $0x10] sm:$0xff] %v4222
                  %v4224 = vld [vmem:[%s4216 + $0x18] sm:$0xff]
                  %4225 = vst [vmem:[%s4217 + $0x18] sm:$0xff] %v4224
                  %v4226 = vld [vmem:[%s4216 + $0x40] sm:$0xff]
                  %4227 = vst [vmem:[%s4217 + $0x50] sm:$0xff] %v4226
                  %v4228 = vld [vmem:[%s4216 + $0x48] sm:$0xff]
                  %4229 = vst [vmem:[%s4217 + $0x58] sm:$0xff] %v4228
                  %v4230 = vld [vmem:[%s4216 + $0x50] sm:$0xff]
                  %4231 = vst [vmem:[%s4217 + $0x60] sm:$0xff] %v4230
                  %v4232 = vld [vmem:[%s4216 + $0x58] sm:$0xff]
                  %4233 = vst [vmem:[%s4217 + $0x68] sm:$0xff] %v4232
                  %v4234 = vld [vmem:[%s4216 + $0x80] sm:$0xff]
                  %4235 = vst [vmem:[%s4217 + $0xa0] sm:$0xff] %v4234
                  %v4236 = vld [vmem:[%s4216 + $0x88] sm:$0xff]
                  %4237 = vst [vmem:[%s4217 + $0xa8] sm:$0xff] %v4236
                  %v4238 = vld [vmem:[%s4216 + $0x90] sm:$0xff]
                  %4239 = vst [vmem:[%s4217 + $0xb0] sm:$0xff] %v4238
                  %v4240 = vld [vmem:[%s4216 + $0x98] sm:$0xff]
                  %4241 = vst [vmem:[%s4217 + $0xb8] sm:$0xff] %v4240
                  %v4242 = vld [vmem:[%s4216 + $0xc0] sm:$0xff]
                  %4243 = vst [vmem:[%s4217 + $0xf0] sm:$0xff] %v4242
                  %v4244 = vld [vmem:[%s4216 + $0xc8] sm:$0xff]
                  %4245 = vst [vmem:[%s4217 + $0xf8] sm:$0xff] %v4244
                  %v4246 = vld [vmem:[%s4216 + $0xd0] sm:$0xff]
                  %4247 = vst [vmem:[%s4217 + $0x100] sm:$0xff] %v4246
                  %v4248 = vld [vmem:[%s4216 + $0xd8] sm:$0xff]
                  %4249 = vst [vmem:[%s4217 + $0x108] sm:$0xff] %v4248
                  %v4250 = vld [vmem:[%s4216 + $0x100] sm:$0xff]
                  %4251 = vst [vmem:[%s4217 + $0x140] sm:$0xff] %v4250
                  %v4252 = vld [vmem:[%s4216 + $0x108] sm:$0xff]
                  %4253 = vst [vmem:[%s4217 + $0x148] sm:$0xff] %v4252
                  %v4254 = vld [vmem:[%s4216 + $0x110] sm:$0xff]
                  %4255 = vst [vmem:[%s4217 + $0x150] sm:$0xff] %v4254
                  %v4256 = vld [vmem:[%s4216 + $0x118] sm:$0xff]
                  %4257 = vst [vmem:[%s4217 + $0x158] sm:$0xff] %v4256
                  %v4258 = vld [vmem:[%s4216 + $0x140] sm:$0xff]
                  %4259 = vst [vmem:[%s4217 + $0x190] sm:$0xff] %v4258
                  %v4260 = vld [vmem:[%s4216 + $0x148] sm:$0xff]
                  %4261 = vst [vmem:[%s4217 + $0x198] sm:$0xff] %v4260
                  %v4262 = vld [vmem:[%s4216 + $0x150] sm:$0xff]
                  %4263 = vst [vmem:[%s4217 + $0x1a0] sm:$0xff] %v4262
                  %v4264 = vld [vmem:[%s4216 + $0x158] sm:$0xff]
                  %4265 = vst [vmem:[%s4217 + $0x1a8] sm:$0xff] %v4264
                  %v4266 = vld [vmem:[%s4216 + $0x180] sm:$0xff]
                  %4267 = vst [vmem:[%s4217 + $0x1e0] sm:$0xff] %v4266
                  %v4268 = vld [vmem:[%s4216 + $0x188] sm:$0xff]
                  %4269 = vst [vmem:[%s4217 + $0x1e8] sm:$0xff] %v4268
                  %v4270 = vld [vmem:[%s4216 + $0x190] sm:$0xff]
                  %4271 = vst [vmem:[%s4217 + $0x1f0] sm:$0xff] %v4270
                  %v4272 = vld [vmem:[%s4216 + $0x198] sm:$0xff]
                  %4273 = vst [vmem:[%s4217 + $0x1f8] sm:$0xff] %v4272
                  %v4274 = vld [vmem:[%s4216 + $0x1c0] sm:$0xff]
                  %4275 = vst [vmem:[%s4217 + $0x230] sm:$0xff] %v4274
                  %v4276 = vld [vmem:[%s4216 + $0x1c8] sm:$0xff]
                  %4277 = vst [vmem:[%s4217 + $0x238] sm:$0xff] %v4276
                  %v4278 = vld [vmem:[%s4216 + $0x1d0] sm:$0xff]
                  %4279 = vst [vmem:[%s4217 + $0x240] sm:$0xff] %v4278
                  %v4280 = vld [vmem:[%s4216 + $0x1d8] sm:$0xff]
                  %4281 = vst [vmem:[%s4217 + $0x248] sm:$0xff] %v4280
                  %v4282 = vld [vmem:[%s4216 + $0x200] sm:$0xff]
                  %4283 = vst [vmem:[%s4217 + $0x280] sm:$0xff] %v4282
                  %v4284 = vld [vmem:[%s4216 + $0x208] sm:$0xff]
                  %4285 = vst [vmem:[%s4217 + $0x288] sm:$0xff] %v4284
                  %v4286 = vld [vmem:[%s4216 + $0x210] sm:$0xff]
                  %4287 = vst [vmem:[%s4217 + $0x290] sm:$0xff] %v4286
                  %v4288 = vld [vmem:[%s4216 + $0x218] sm:$0xff]
                  %4289 = vst [vmem:[%s4217 + $0x298] sm:$0xff] %v4288
                  %v4290 = vld [vmem:[%s4216 + $0x240] sm:$0xff]
                  %4291 = vst [vmem:[%s4217 + $0x2d0] sm:$0xff] %v4290
                  %v4292 = vld [vmem:[%s4216 + $0x248] sm:$0xff]
                  %4293 = vst [vmem:[%s4217 + $0x2d8] sm:$0xff] %v4292
                  %v4294 = vld [vmem:[%s4216 + $0x250] sm:$0xff]
                  %4295 = vst [vmem:[%s4217 + $0x2e0] sm:$0xff] %v4294
                  %v4296 = vld [vmem:[%s4216 + $0x258] sm:$0xff]
                  %4297 = vst [vmem:[%s4217 + $0x2e8] sm:$0xff] %v4296
                  %v4298 = vld [vmem:[%s4216 + $0x280] sm:$0xff]
                  %4299 = vst [vmem:[%s4217 + $0x320] sm:$0xff] %v4298
                  %v4300 = vld [vmem:[%s4216 + $0x288] sm:$0xff]
                  %4301 = vst [vmem:[%s4217 + $0x328] sm:$0xff] %v4300
                  %v4302 = vld [vmem:[%s4216 + $0x290] sm:$0xff]
                  %4303 = vst [vmem:[%s4217 + $0x330] sm:$0xff] %v4302
                  %v4304 = vld [vmem:[%s4216 + $0x298] sm:$0xff]
                  %4305 = vst [vmem:[%s4217 + $0x338] sm:$0xff] %v4304
                  %v4306 = vld [vmem:[%s4216 + $0x2c0] sm:$0xff]
                  %4307 = vst [vmem:[%s4217 + $0x370] sm:$0xff] %v4306
                  %v4308 = vld [vmem:[%s4216 + $0x2c8] sm:$0xff]
                  %4309 = vst [vmem:[%s4217 + $0x378] sm:$0xff] %v4308
                  %v4310 = vld [vmem:[%s4216 + $0x2d0] sm:$0xff]
                  %4311 = vst [vmem:[%s4217 + $0x380] sm:$0xff] %v4310
                  %v4312 = vld [vmem:[%s4216 + $0x2d8] sm:$0xff]
                  %4313 = vst [vmem:[%s4217 + $0x388] sm:$0xff] %v4312
                  %v4314 = vld [vmem:[%s4216 + $0x300] sm:$0xff]
                  %4315 = vst [vmem:[%s4217 + $0x3c0] sm:$0xff] %v4314
                  %v4316 = vld [vmem:[%s4216 + $0x308] sm:$0xff]
                  %4317 = vst [vmem:[%s4217 + $0x3c8] sm:$0xff] %v4316
                  %v4318 = vld [vmem:[%s4216 + $0x310] sm:$0xff]
                  %4319 = vst [vmem:[%s4217 + $0x3d0] sm:$0xff] %v4318
                  %v4320 = vld [vmem:[%s4216 + $0x318] sm:$0xff]
                  %4321 = vst [vmem:[%s4217 + $0x3d8] sm:$0xff] %v4320
                  %v4322 = vld [vmem:[%s4216 + $0x340] sm:$0xff]
                  %4323 = vst [vmem:[%s4217 + $0x410] sm:$0xff] %v4322
                  %v4324 = vld [vmem:[%s4216 + $0x348] sm:$0xff]
                  %4325 = vst [vmem:[%s4217 + $0x418] sm:$0xff] %v4324
                  %v4326 = vld [vmem:[%s4216 + $0x350] sm:$0xff]
                  %4327 = vst [vmem:[%s4217 + $0x420] sm:$0xff] %v4326
                  %v4328 = vld [vmem:[%s4216 + $0x358] sm:$0xff]
                  %4329 = vst [vmem:[%s4217 + $0x428] sm:$0xff] %v4328
                  %v4330 = vld [vmem:[%s4216 + $0x380] sm:$0xff]
                  %4331 = vst [vmem:[%s4217 + $0x460] sm:$0xff] %v4330
                  %v4332 = vld [vmem:[%s4216 + $0x388] sm:$0xff]
                  %4333 = vst [vmem:[%s4217 + $0x468] sm:$0xff] %v4332
                  %v4334 = vld [vmem:[%s4216 + $0x390] sm:$0xff]
                  %4335 = vst [vmem:[%s4217 + $0x470] sm:$0xff] %v4334
                  %v4336 = vld [vmem:[%s4216 + $0x398] sm:$0xff]
                  %4337 = vst [vmem:[%s4217 + $0x478] sm:$0xff] %v4336
                  %v4338 = vld [vmem:[%s4216 + $0x3c0] sm:$0xff]
                  %4339 = vst [vmem:[%s4217 + $0x4b0] sm:$0xff] %v4338
                  %v4340 = vld [vmem:[%s4216 + $0x3c8] sm:$0xff]
                  %4341 = vst [vmem:[%s4217 + $0x4b8] sm:$0xff] %v4340
                  %v4342 = vld [vmem:[%s4216 + $0x3d0] sm:$0xff]
                  %4343 = vst [vmem:[%s4217 + $0x4c0] sm:$0xff] %v4342
                  %v4344 = vld [vmem:[%s4216 + $0x3d8] sm:$0xff]
                  %4345 = vst [vmem:[%s4217 + $0x4c8] sm:$0xff] %v4344
                  %s4346 = sadd.s32 1, %s4215
                  %p4347 = scmp.ge.s32.totalorder %s4346, %s4206
                  %s4348 = scalar_select %p4347, 0, %s4346
                  %s4349 = smul.u32 %s4348, 32
                  %s4350 = smul.u32 %s4348, 32
                  %s4351 = scalar_lea.vmem %s4126, %s4349 [#allocation4]
                  %s4352 = scalar_lea.vmem %s4147, %s4350
                $region175: #{encoder_forward.1} parent=169 // loop_footer
                  %s4212 = sadd.s32 %s4210, 1
                $region176: #{encoder_forward.1} parent=169 // loop_footer_branch
                  %4209 = sbr.rel target = $region172
                $region177: #{encoder_forward.1} parent=169 // loop_exit
                  _
                %s4353 = sshrl.u32 %s4205, 2
                %s4354 = sand.u32 %s4205, 3
                %s4355 = smul.u32 %s4353, 4
                %s4356 = smul.u32 128, %s4355
                %s4357 = sshra.s32 %s4356, 4
                %s4358 = scalar_lea.vmem %s4126, %s4357 [#allocation4]
                %s4359 = smul.u32 128, %s4355
                %s4360 = sshra.s32 %s4359, 4
                %s4361 = scalar_lea.vmem %s4147, %s4360
                // While loop
                $region178: #{encoder_forward.1} parent=169 // loop_pre_header
                  _
                $region179: #{encoder_forward.1} parent=169 // loop_header
                  %s4365 = sphi 0, %s4367
                  %p4366 = scmp.ge.s32.totalorder %s4365, %s4354
                  %s4370 = sphi 0, %s4407
                  %s4371 = sphi %s4358, %s4410
                  %s4372 = sphi %s4361, %s4411
                $region180: #{encoder_forward.1} parent=169 // loop_header_branch
                  %4369 = sbr.rel (%p4366) target = $region184
                $region181: #{encoder_forward.1} parent=169 // loop_body
                  %v4373 = vld [vmem:[%s4371] sm:$0xff]
                  %4374 = vst [vmem:[%s4372] sm:$0xff] %v4373
                  %v4375 = vld [vmem:[%s4371 + $0x40] sm:$0xff]
                  %4376 = vst [vmem:[%s4372 + $0x50] sm:$0xff] %v4375
                  %v4377 = vld [vmem:[%s4371 + $0x80] sm:$0xff]
                  %4378 = vst [vmem:[%s4372 + $0xa0] sm:$0xff] %v4377
                  %v4379 = vld [vmem:[%s4371 + $0xc0] sm:$0xff]
                  %4380 = vst [vmem:[%s4372 + $0xf0] sm:$0xff] %v4379
                  %v4381 = vld [vmem:[%s4371 + $0x100] sm:$0xff]
                  %4382 = vst [vmem:[%s4372 + $0x140] sm:$0xff] %v4381
                  %v4383 = vld [vmem:[%s4371 + $0x140] sm:$0xff]
                  %4384 = vst [vmem:[%s4372 + $0x190] sm:$0xff] %v4383
                  %v4385 = vld [vmem:[%s4371 + $0x180] sm:$0xff]
                  %4386 = vst [vmem:[%s4372 + $0x1e0] sm:$0xff] %v4385
                  %v4387 = vld [vmem:[%s4371 + $0x1c0] sm:$0xff]
                  %4388 = vst [vmem:[%s4372 + $0x230] sm:$0xff] %v4387
                  %v4389 = vld [vmem:[%s4371 + $0x200] sm:$0xff]
                  %4390 = vst [vmem:[%s4372 + $0x280] sm:$0xff] %v4389
                  %v4391 = vld [vmem:[%s4371 + $0x240] sm:$0xff]
                  %4392 = vst [vmem:[%s4372 + $0x2d0] sm:$0xff] %v4391
                  %v4393 = vld [vmem:[%s4371 + $0x280] sm:$0xff]
                  %4394 = vst [vmem:[%s4372 + $0x320] sm:$0xff] %v4393
                  %v4395 = vld [vmem:[%s4371 + $0x2c0] sm:$0xff]
                  %4396 = vst [vmem:[%s4372 + $0x370] sm:$0xff] %v4395
                  %v4397 = vld [vmem:[%s4371 + $0x300] sm:$0xff]
                  %4398 = vst [vmem:[%s4372 + $0x3c0] sm:$0xff] %v4397
                  %v4399 = vld [vmem:[%s4371 + $0x340] sm:$0xff]
                  %4400 = vst [vmem:[%s4372 + $0x410] sm:$0xff] %v4399
                  %v4401 = vld [vmem:[%s4371 + $0x380] sm:$0xff]
                  %4402 = vst [vmem:[%s4372 + $0x460] sm:$0xff] %v4401
                  %v4403 = vld [vmem:[%s4371 + $0x3c0] sm:$0xff]
                  %4404 = vst [vmem:[%s4372 + $0x4b0] sm:$0xff] %v4403
                  %s4405 = sadd.s32 1, %s4370
                  %p4406 = scmp.ge.s32.totalorder %s4405, %s4354
                  %s4407 = scalar_select %p4406, 0, %s4405
                  %s4408 = smul.u32 %s4407, 8
                  %s4409 = smul.u32 %s4407, 8
                  %s4410 = scalar_lea.vmem %s4358, %s4408 [#allocation4]
                  %s4411 = scalar_lea.vmem %s4361, %s4409
                $region182: #{encoder_forward.1} parent=169 // loop_footer
                  %s4367 = sadd.s32 %s4365, 1
                $region183: #{encoder_forward.1} parent=169 // loop_footer_branch
                  %4364 = sbr.rel target = $region179
                $region184: #{encoder_forward.1} parent=169 // loop_exit
                  _
              $region170: #{encoder_forward.1} parent=154 // pred_fallthru
                _
              %p4412 = pneg %p4201
              // Predicated region
              $region185: #{encoder_forward.1} parent=154 // pred_check
                _
              $region186: #{encoder_forward.1} parent=154 // pred_check_branch
                %4414 = sbr.rel (%p4201) target = $region188
              $region187: #{encoder_forward.1} parent=154 // pred_region
                %s4415 = sand.u32 %s4148, 7
                %s4416 = ssub.s32 %s4148, %s4415
                %s4417 = scalar_lea.vmem %s4126, %s4416 [#allocation4]
                %s4418 = ssub.s32 %s4148, %s4415
                %s4419 = scalar_lea.vmem %s4147, %s4418
                %s4420 = sshrl.u32 %s4148, 3
                %s4421 = sshrl.u32 %s4420, 2
                // While loop
                $region189: #{encoder_forward.1} parent=187 // loop_pre_header
                  _
                $region190: #{encoder_forward.1} parent=187 // loop_header
                  %s4425 = sphi 0, %s4427
                  %p4426 = scmp.ge.s32.totalorder %s4425, %s4421
                  %s4430 = sphi 0, %s4563
                  %s4431 = sphi %s4126, %s4566
                  %s4432 = sphi %s4147, %s4567
                $region191: #{encoder_forward.1} parent=187 // loop_header_branch
                  %4429 = sbr.rel (%p4426) target = $region195
                $region192: #{encoder_forward.1} parent=187 // loop_body
                  %v4433 = vld [vmem:[%s4431] sm:$0xff]
                  %4434 = vst [vmem:[%s4432] sm:$0xff] %v4433
                  %v4435 = vld [vmem:[%s4431 + $0x8] sm:$0xff]
                  %4436 = vst [vmem:[%s4432 + $0x8] sm:$0xff] %v4435
                  %v4437 = vld [vmem:[%s4431 + $0x10] sm:$0xff]
                  %4438 = vst [vmem:[%s4432 + $0x10] sm:$0xff] %v4437
                  %v4439 = vld [vmem:[%s4431 + $0x18] sm:$0xff]
                  %4440 = vst [vmem:[%s4432 + $0x18] sm:$0xff] %v4439
                  %v4441 = vld [vmem:[%s4431 + $0x40] sm:$0xff]
                  %4442 = vst [vmem:[%s4432 + $0x50] sm:$0xff] %v4441
                  %v4443 = vld [vmem:[%s4431 + $0x48] sm:$0xff]
                  %4444 = vst [vmem:[%s4432 + $0x58] sm:$0xff] %v4443
                  %v4445 = vld [vmem:[%s4431 + $0x50] sm:$0xff]
                  %4446 = vst [vmem:[%s4432 + $0x60] sm:$0xff] %v4445
                  %v4447 = vld [vmem:[%s4431 + $0x58] sm:$0xff]
                  %4448 = vst [vmem:[%s4432 + $0x68] sm:$0xff] %v4447
                  %v4449 = vld [vmem:[%s4431 + $0x80] sm:$0xff]
                  %4450 = vst [vmem:[%s4432 + $0xa0] sm:$0xff] %v4449
                  %v4451 = vld [vmem:[%s4431 + $0x88] sm:$0xff]
                  %4452 = vst [vmem:[%s4432 + $0xa8] sm:$0xff] %v4451
                  %v4453 = vld [vmem:[%s4431 + $0x90] sm:$0xff]
                  %4454 = vst [vmem:[%s4432 + $0xb0] sm:$0xff] %v4453
                  %v4455 = vld [vmem:[%s4431 + $0x98] sm:$0xff]
                  %4456 = vst [vmem:[%s4432 + $0xb8] sm:$0xff] %v4455
                  %v4457 = vld [vmem:[%s4431 + $0xc0] sm:$0xff]
                  %4458 = vst [vmem:[%s4432 + $0xf0] sm:$0xff] %v4457
                  %v4459 = vld [vmem:[%s4431 + $0xc8] sm:$0xff]
                  %4460 = vst [vmem:[%s4432 + $0xf8] sm:$0xff] %v4459
                  %v4461 = vld [vmem:[%s4431 + $0xd0] sm:$0xff]
                  %4462 = vst [vmem:[%s4432 + $0x100] sm:$0xff] %v4461
                  %v4463 = vld [vmem:[%s4431 + $0xd8] sm:$0xff]
                  %4464 = vst [vmem:[%s4432 + $0x108] sm:$0xff] %v4463
                  %v4465 = vld [vmem:[%s4431 + $0x100] sm:$0xff]
                  %4466 = vst [vmem:[%s4432 + $0x140] sm:$0xff] %v4465
                  %v4467 = vld [vmem:[%s4431 + $0x108] sm:$0xff]
                  %4468 = vst [vmem:[%s4432 + $0x148] sm:$0xff] %v4467
                  %v4469 = vld [vmem:[%s4431 + $0x110] sm:$0xff]
                  %4470 = vst [vmem:[%s4432 + $0x150] sm:$0xff] %v4469
                  %v4471 = vld [vmem:[%s4431 + $0x118] sm:$0xff]
                  %4472 = vst [vmem:[%s4432 + $0x158] sm:$0xff] %v4471
                  %v4473 = vld [vmem:[%s4431 + $0x140] sm:$0xff]
                  %4474 = vst [vmem:[%s4432 + $0x190] sm:$0xff] %v4473
                  %v4475 = vld [vmem:[%s4431 + $0x148] sm:$0xff]
                  %4476 = vst [vmem:[%s4432 + $0x198] sm:$0xff] %v4475
                  %v4477 = vld [vmem:[%s4431 + $0x150] sm:$0xff]
                  %4478 = vst [vmem:[%s4432 + $0x1a0] sm:$0xff] %v4477
                  %v4479 = vld [vmem:[%s4431 + $0x158] sm:$0xff]
                  %4480 = vst [vmem:[%s4432 + $0x1a8] sm:$0xff] %v4479
                  %v4481 = vld [vmem:[%s4431 + $0x180] sm:$0xff]
                  %4482 = vst [vmem:[%s4432 + $0x1e0] sm:$0xff] %v4481
                  %v4483 = vld [vmem:[%s4431 + $0x188] sm:$0xff]
                  %4484 = vst [vmem:[%s4432 + $0x1e8] sm:$0xff] %v4483
                  %v4485 = vld [vmem:[%s4431 + $0x190] sm:$0xff]
                  %4486 = vst [vmem:[%s4432 + $0x1f0] sm:$0xff] %v4485
                  %v4487 = vld [vmem:[%s4431 + $0x198] sm:$0xff]
                  %4488 = vst [vmem:[%s4432 + $0x1f8] sm:$0xff] %v4487
                  %v4489 = vld [vmem:[%s4431 + $0x1c0] sm:$0xff]
                  %4490 = vst [vmem:[%s4432 + $0x230] sm:$0xff] %v4489
                  %v4491 = vld [vmem:[%s4431 + $0x1c8] sm:$0xff]
                  %4492 = vst [vmem:[%s4432 + $0x238] sm:$0xff] %v4491
                  %v4493 = vld [vmem:[%s4431 + $0x1d0] sm:$0xff]
                  %4494 = vst [vmem:[%s4432 + $0x240] sm:$0xff] %v4493
                  %v4495 = vld [vmem:[%s4431 + $0x1d8] sm:$0xff]
                  %4496 = vst [vmem:[%s4432 + $0x248] sm:$0xff] %v4495
                  %v4497 = vld [vmem:[%s4431 + $0x200] sm:$0xff]
                  %4498 = vst [vmem:[%s4432 + $0x280] sm:$0xff] %v4497
                  %v4499 = vld [vmem:[%s4431 + $0x208] sm:$0xff]
                  %4500 = vst [vmem:[%s4432 + $0x288] sm:$0xff] %v4499
                  %v4501 = vld [vmem:[%s4431 + $0x210] sm:$0xff]
                  %4502 = vst [vmem:[%s4432 + $0x290] sm:$0xff] %v4501
                  %v4503 = vld [vmem:[%s4431 + $0x218] sm:$0xff]
                  %4504 = vst [vmem:[%s4432 + $0x298] sm:$0xff] %v4503
                  %v4505 = vld [vmem:[%s4431 + $0x240] sm:$0xff]
                  %4506 = vst [vmem:[%s4432 + $0x2d0] sm:$0xff] %v4505
                  %v4507 = vld [vmem:[%s4431 + $0x248] sm:$0xff]
                  %4508 = vst [vmem:[%s4432 + $0x2d8] sm:$0xff] %v4507
                  %v4509 = vld [vmem:[%s4431 + $0x250] sm:$0xff]
                  %4510 = vst [vmem:[%s4432 + $0x2e0] sm:$0xff] %v4509
                  %v4511 = vld [vmem:[%s4431 + $0x258] sm:$0xff]
                  %4512 = vst [vmem:[%s4432 + $0x2e8] sm:$0xff] %v4511
                  %v4513 = vld [vmem:[%s4431 + $0x280] sm:$0xff]
                  %4514 = vst [vmem:[%s4432 + $0x320] sm:$0xff] %v4513
                  %v4515 = vld [vmem:[%s4431 + $0x288] sm:$0xff]
                  %4516 = vst [vmem:[%s4432 + $0x328] sm:$0xff] %v4515
                  %v4517 = vld [vmem:[%s4431 + $0x290] sm:$0xff]
                  %4518 = vst [vmem:[%s4432 + $0x330] sm:$0xff] %v4517
                  %v4519 = vld [vmem:[%s4431 + $0x298] sm:$0xff]
                  %4520 = vst [vmem:[%s4432 + $0x338] sm:$0xff] %v4519
                  %v4521 = vld [vmem:[%s4431 + $0x2c0] sm:$0xff]
                  %4522 = vst [vmem:[%s4432 + $0x370] sm:$0xff] %v4521
                  %v4523 = vld [vmem:[%s4431 + $0x2c8] sm:$0xff]
                  %4524 = vst [vmem:[%s4432 + $0x378] sm:$0xff] %v4523
                  %v4525 = vld [vmem:[%s4431 + $0x2d0] sm:$0xff]
                  %4526 = vst [vmem:[%s4432 + $0x380] sm:$0xff] %v4525
                  %v4527 = vld [vmem:[%s4431 + $0x2d8] sm:$0xff]
                  %4528 = vst [vmem:[%s4432 + $0x388] sm:$0xff] %v4527
                  %v4529 = vld [vmem:[%s4431 + $0x300] sm:$0xff]
                  %4530 = vst [vmem:[%s4432 + $0x3c0] sm:$0xff] %v4529
                  %v4531 = vld [vmem:[%s4431 + $0x308] sm:$0xff]
                  %4532 = vst [vmem:[%s4432 + $0x3c8] sm:$0xff] %v4531
                  %v4533 = vld [vmem:[%s4431 + $0x310] sm:$0xff]
                  %4534 = vst [vmem:[%s4432 + $0x3d0] sm:$0xff] %v4533
                  %v4535 = vld [vmem:[%s4431 + $0x318] sm:$0xff]
                  %4536 = vst [vmem:[%s4432 + $0x3d8] sm:$0xff] %v4535
                  %v4537 = vld [vmem:[%s4431 + $0x340] sm:$0xff]
                  %4538 = vst [vmem:[%s4432 + $0x410] sm:$0xff] %v4537
                  %v4539 = vld [vmem:[%s4431 + $0x348] sm:$0xff]
                  %4540 = vst [vmem:[%s4432 + $0x418] sm:$0xff] %v4539
                  %v4541 = vld [vmem:[%s4431 + $0x350] sm:$0xff]
                  %4542 = vst [vmem:[%s4432 + $0x420] sm:$0xff] %v4541
                  %v4543 = vld [vmem:[%s4431 + $0x358] sm:$0xff]
                  %4544 = vst [vmem:[%s4432 + $0x428] sm:$0xff] %v4543
                  %v4545 = vld [vmem:[%s4431 + $0x380] sm:$0xff]
                  %4546 = vst [vmem:[%s4432 + $0x460] sm:$0xff] %v4545
                  %v4547 = vld [vmem:[%s4431 + $0x388] sm:$0xff]
                  %4548 = vst [vmem:[%s4432 + $0x468] sm:$0xff] %v4547
                  %v4549 = vld [vmem:[%s4431 + $0x390] sm:$0xff]
                  %4550 = vst [vmem:[%s4432 + $0x470] sm:$0xff] %v4549
                  %v4551 = vld [vmem:[%s4431 + $0x398] sm:$0xff]
                  %4552 = vst [vmem:[%s4432 + $0x478] sm:$0xff] %v4551
                  %v4553 = vld [vmem:[%s4431 + $0x3c0] sm:$0xff]
                  %4554 = vst [vmem:[%s4432 + $0x4b0] sm:$0xff] %v4553
                  %v4555 = vld [vmem:[%s4431 + $0x3c8] sm:$0xff]
                  %4556 = vst [vmem:[%s4432 + $0x4b8] sm:$0xff] %v4555
                  %v4557 = vld [vmem:[%s4431 + $0x3d0] sm:$0xff]
                  %4558 = vst [vmem:[%s4432 + $0x4c0] sm:$0xff] %v4557
                  %v4559 = vld [vmem:[%s4431 + $0x3d8] sm:$0xff]
                  %4560 = vst [vmem:[%s4432 + $0x4c8] sm:$0xff] %v4559
                  %s4561 = sadd.s32 1, %s4430
                  %p4562 = scmp.ge.s32.totalorder %s4561, %s4421
                  %s4563 = scalar_select %p4562, 0, %s4561
                  %s4564 = smul.u32 %s4563, 32
                  %s4565 = smul.u32 %s4563, 32
                  %s4566 = scalar_lea.vmem %s4126, %s4564 [#allocation4]
                  %s4567 = scalar_lea.vmem %s4147, %s4565
                $region193: #{encoder_forward.1} parent=187 // loop_footer
                  %s4427 = sadd.s32 %s4425, 1
                $region194: #{encoder_forward.1} parent=187 // loop_footer_branch
                  %4424 = sbr.rel target = $region190
                $region195: #{encoder_forward.1} parent=187 // loop_exit
                  _
                %s4568 = sshrl.u32 %s4420, 2
                %s4569 = sand.u32 %s4420, 3
                %s4570 = smul.u32 %s4568, 4
                %s4571 = smul.u32 128, %s4570
                %s4572 = sshra.s32 %s4571, 4
                %s4573 = scalar_lea.vmem %s4126, %s4572 [#allocation4]
                %s4574 = smul.u32 128, %s4570
                %s4575 = sshra.s32 %s4574, 4
                %s4576 = scalar_lea.vmem %s4147, %s4575
                // While loop
                $region196: #{encoder_forward.1} parent=187 // loop_pre_header
                  _
                $region197: #{encoder_forward.1} parent=187 // loop_header
                  %s4580 = sphi 0, %s4582
                  %p4581 = scmp.ge.s32.totalorder %s4580, %s4569
                  %s4585 = sphi 0, %s4622
                  %s4586 = sphi %s4573, %s4625
                  %s4587 = sphi %s4576, %s4626
                $region198: #{encoder_forward.1} parent=187 // loop_header_branch
                  %4584 = sbr.rel (%p4581) target = $region202
                $region199: #{encoder_forward.1} parent=187 // loop_body
                  %v4588 = vld [vmem:[%s4586] sm:$0xff]
                  %4589 = vst [vmem:[%s4587] sm:$0xff] %v4588
                  %v4590 = vld [vmem:[%s4586 + $0x40] sm:$0xff]
                  %4591 = vst [vmem:[%s4587 + $0x50] sm:$0xff] %v4590
                  %v4592 = vld [vmem:[%s4586 + $0x80] sm:$0xff]
                  %4593 = vst [vmem:[%s4587 + $0xa0] sm:$0xff] %v4592
                  %v4594 = vld [vmem:[%s4586 + $0xc0] sm:$0xff]
                  %4595 = vst [vmem:[%s4587 + $0xf0] sm:$0xff] %v4594
                  %v4596 = vld [vmem:[%s4586 + $0x100] sm:$0xff]
                  %4597 = vst [vmem:[%s4587 + $0x140] sm:$0xff] %v4596
                  %v4598 = vld [vmem:[%s4586 + $0x140] sm:$0xff]
                  %4599 = vst [vmem:[%s4587 + $0x190] sm:$0xff] %v4598
                  %v4600 = vld [vmem:[%s4586 + $0x180] sm:$0xff]
                  %4601 = vst [vmem:[%s4587 + $0x1e0] sm:$0xff] %v4600
                  %v4602 = vld [vmem:[%s4586 + $0x1c0] sm:$0xff]
                  %4603 = vst [vmem:[%s4587 + $0x230] sm:$0xff] %v4602
                  %v4604 = vld [vmem:[%s4586 + $0x200] sm:$0xff]
                  %4605 = vst [vmem:[%s4587 + $0x280] sm:$0xff] %v4604
                  %v4606 = vld [vmem:[%s4586 + $0x240] sm:$0xff]
                  %4607 = vst [vmem:[%s4587 + $0x2d0] sm:$0xff] %v4606
                  %v4608 = vld [vmem:[%s4586 + $0x280] sm:$0xff]
                  %4609 = vst [vmem:[%s4587 + $0x320] sm:$0xff] %v4608
                  %v4610 = vld [vmem:[%s4586 + $0x2c0] sm:$0xff]
                  %4611 = vst [vmem:[%s4587 + $0x370] sm:$0xff] %v4610
                  %v4612 = vld [vmem:[%s4586 + $0x300] sm:$0xff]
                  %4613 = vst [vmem:[%s4587 + $0x3c0] sm:$0xff] %v4612
                  %v4614 = vld [vmem:[%s4586 + $0x340] sm:$0xff]
                  %4615 = vst [vmem:[%s4587 + $0x410] sm:$0xff] %v4614
                  %v4616 = vld [vmem:[%s4586 + $0x380] sm:$0xff]
                  %4617 = vst [vmem:[%s4587 + $0x460] sm:$0xff] %v4616
                  %v4618 = vld [vmem:[%s4586 + $0x3c0] sm:$0xff]
                  %4619 = vst [vmem:[%s4587 + $0x4b0] sm:$0xff] %v4618
                  %s4620 = sadd.s32 1, %s4585
                  %p4621 = scmp.ge.s32.totalorder %s4620, %s4569
                  %s4622 = scalar_select %p4621, 0, %s4620
                  %s4623 = smul.u32 %s4622, 8
                  %s4624 = smul.u32 %s4622, 8
                  %s4625 = scalar_lea.vmem %s4573, %s4623 [#allocation4]
                  %s4626 = scalar_lea.vmem %s4576, %s4624
                $region200: #{encoder_forward.1} parent=187 // loop_footer
                  %s4582 = sadd.s32 %s4580, 1
                $region201: #{encoder_forward.1} parent=187 // loop_footer_branch
                  %4579 = sbr.rel target = $region197
                $region202: #{encoder_forward.1} parent=187 // loop_exit
                  _
                %s4627 = sshllo.u32 0, %s4415
                loop: start=0, step=1, limit=1
                $region203: #{encoder_forward.1} parent=187 // loop_pre_header
                  _
                $region204: #{encoder_forward.1} parent=187 // loop_header
                  %s4629 = sphi 0, %s4633
                  %p4630 = scmp.ge.s32.totalorder %s4629, 1
                  %s4634 = sphi %s4417, %s4417
                  %s4635 = sphi %s4419, %s4419
                $region205: #{encoder_forward.1} parent=187 // loop_header_branch
                  %4632 = sbr.rel (%p4630) target = $region209
                $region206: #{encoder_forward.1} parent=187 // loop_body
                  %v4636 = vld [vmem:[%s4634] sm:%s4627]
                  %4637 = vst [vmem:[%s4635] sm:%s4627] %v4636
                  %v4638 = vld [vmem:[%s4634 + $0x40] sm:%s4627]
                  %4639 = vst [vmem:[%s4635 + $0x50] sm:%s4627] %v4638
                  %v4640 = vld [vmem:[%s4634 + $0x80] sm:%s4627]
                  %4641 = vst [vmem:[%s4635 + $0xa0] sm:%s4627] %v4640
                  %v4642 = vld [vmem:[%s4634 + $0xc0] sm:%s4627]
                  %4643 = vst [vmem:[%s4635 + $0xf0] sm:%s4627] %v4642
                  %v4644 = vld [vmem:[%s4634 + $0x100] sm:%s4627]
                  %4645 = vst [vmem:[%s4635 + $0x140] sm:%s4627] %v4644
                  %v4646 = vld [vmem:[%s4634 + $0x140] sm:%s4627]
                  %4647 = vst [vmem:[%s4635 + $0x190] sm:%s4627] %v4646
                  %v4648 = vld [vmem:[%s4634 + $0x180] sm:%s4627]
                  %4649 = vst [vmem:[%s4635 + $0x1e0] sm:%s4627] %v4648
                  %v4650 = vld [vmem:[%s4634 + $0x1c0] sm:%s4627]
                  %4651 = vst [vmem:[%s4635 + $0x230] sm:%s4627] %v4650
                  %v4652 = vld [vmem:[%s4634 + $0x200] sm:%s4627]
                  %4653 = vst [vmem:[%s4635 + $0x280] sm:%s4627] %v4652
                  %v4654 = vld [vmem:[%s4634 + $0x240] sm:%s4627]
                  %4655 = vst [vmem:[%s4635 + $0x2d0] sm:%s4627] %v4654
                  %v4656 = vld [vmem:[%s4634 + $0x280] sm:%s4627]
                  %4657 = vst [vmem:[%s4635 + $0x320] sm:%s4627] %v4656
                  %v4658 = vld [vmem:[%s4634 + $0x2c0] sm:%s4627]
                  %4659 = vst [vmem:[%s4635 + $0x370] sm:%s4627] %v4658
                  %v4660 = vld [vmem:[%s4634 + $0x300] sm:%s4627]
                  %4661 = vst [vmem:[%s4635 + $0x3c0] sm:%s4627] %v4660
                  %v4662 = vld [vmem:[%s4634 + $0x340] sm:%s4627]
                  %4663 = vst [vmem:[%s4635 + $0x410] sm:%s4627] %v4662
                  %v4664 = vld [vmem:[%s4634 + $0x380] sm:%s4627]
                  %4665 = vst [vmem:[%s4635 + $0x460] sm:%s4627] %v4664
                  %v4666 = vld [vmem:[%s4634 + $0x3c0] sm:%s4627]
                  %4667 = vst [vmem:[%s4635 + $0x4b0] sm:%s4627] %v4666
                $region207: #{encoder_forward.1} parent=187 // loop_footer
                  %s4633 = sadd.s32 1, %s4629
                $region208: #{encoder_forward.1} parent=187 // loop_footer_branch
                  %4628 = sbr.rel target = $region204
                $region209: #{encoder_forward.1} parent=187 // loop_exit
                  _
              $region188: #{encoder_forward.1} parent=154 // pred_fallthru
                _
            $region155: #{encoder_forward.1} parent=150 // pred_fallthru
              _
            // Predicated region
            $region156: #{encoder_forward.1} parent=150 // pred_check
              %p4156 = pneg %p4152
            $region157: #{encoder_forward.1} parent=150 // pred_check_branch
              %4158 = sbr.rel (%p4156) target = $region159
            $region158: #{encoder_forward.1} parent=150 // pred_region
              %s4159 = sshllo.u32 0, %s4148
              loop: start=0, step=1, limit=1
              $region160: #{encoder_forward.1} parent=158 // loop_pre_header
                _
              $region161: #{encoder_forward.1} parent=158 // loop_header
                %s4161 = sphi 0, %s4165
                %p4162 = scmp.ge.s32.totalorder %s4161, 1
                %s4166 = sphi %s4126, %s4126
                %s4167 = sphi %s4147, %s4147
              $region162: #{encoder_forward.1} parent=158 // loop_header_branch
                %4164 = sbr.rel (%p4162) target = $region166
              $region163: #{encoder_forward.1} parent=158 // loop_body
                %v4168 = vld [vmem:[%s4166] sm:%s4159]
                %4169 = vst [vmem:[%s4167] sm:%s4159] %v4168
                %v4170 = vld [vmem:[%s4166 + $0x40] sm:%s4159]
                %4171 = vst [vmem:[%s4167 + $0x50] sm:%s4159] %v4170
                %v4172 = vld [vmem:[%s4166 + $0x80] sm:%s4159]
                %4173 = vst [vmem:[%s4167 + $0xa0] sm:%s4159] %v4172
                %v4174 = vld [vmem:[%s4166 + $0xc0] sm:%s4159]
                %4175 = vst [vmem:[%s4167 + $0xf0] sm:%s4159] %v4174
                %v4176 = vld [vmem:[%s4166 + $0x100] sm:%s4159]
                %4177 = vst [vmem:[%s4167 + $0x140] sm:%s4159] %v4176
                %v4178 = vld [vmem:[%s4166 + $0x140] sm:%s4159]
                %4179 = vst [vmem:[%s4167 + $0x190] sm:%s4159] %v4178
                %v4180 = vld [vmem:[%s4166 + $0x180] sm:%s4159]
                %4181 = vst [vmem:[%s4167 + $0x1e0] sm:%s4159] %v4180
                %v4182 = vld [vmem:[%s4166 + $0x1c0] sm:%s4159]
                %4183 = vst [vmem:[%s4167 + $0x230] sm:%s4159] %v4182
                %v4184 = vld [vmem:[%s4166 + $0x200] sm:%s4159]
                %4185 = vst [vmem:[%s4167 + $0x280] sm:%s4159] %v4184
                %v4186 = vld [vmem:[%s4166 + $0x240] sm:%s4159]
                %4187 = vst [vmem:[%s4167 + $0x2d0] sm:%s4159] %v4186
                %v4188 = vld [vmem:[%s4166 + $0x280] sm:%s4159]
                %4189 = vst [vmem:[%s4167 + $0x320] sm:%s4159] %v4188
                %v4190 = vld [vmem:[%s4166 + $0x2c0] sm:%s4159]
                %4191 = vst [vmem:[%s4167 + $0x370] sm:%s4159] %v4190
                %v4192 = vld [vmem:[%s4166 + $0x300] sm:%s4159]
                %4193 = vst [vmem:[%s4167 + $0x3c0] sm:%s4159] %v4192
                %v4194 = vld [vmem:[%s4166 + $0x340] sm:%s4159]
                %4195 = vst [vmem:[%s4167 + $0x410] sm:%s4159] %v4194
                %v4196 = vld [vmem:[%s4166 + $0x380] sm:%s4159]
                %4197 = vst [vmem:[%s4167 + $0x460] sm:%s4159] %v4196
                %v4198 = vld [vmem:[%s4166 + $0x3c0] sm:%s4159]
                %4199 = vst [vmem:[%s4167 + $0x4b0] sm:%s4159] %v4198
              $region164: #{encoder_forward.1} parent=158 // loop_footer
                %s4165 = sadd.s32 1, %s4161
              $region165: #{encoder_forward.1} parent=158 // loop_footer_branch
                %4160 = sbr.rel target = $region161
              $region166: #{encoder_forward.1} parent=158 // loop_exit
                _
            $region159: #{encoder_forward.1} parent=150 // pred_fallthru
              _
          $region151: #{encoder_forward.1} parent=146 // pred_fallthru
            _
          %4668 = vnop
        $region147: #{encoder_forward.1} parent=134 // pred_fallthru
          _
        // Predicated region
        $region210: #{encoder_forward.1} parent=134 // pred_check
          %p4669 = pneg %p180
        $region211: #{encoder_forward.1} parent=134 // pred_check_branch
          %4671 = sbr.rel (%p4669) target = $region213
        $region212: #{encoder_forward.1} parent=134 // pred_region
          %s4672 = smul.u32 8, %s23
          %s4673 = ssub.s32 10, %s4672
          %p4674 = scmp.lt.s32.totalorder %s4673, 8
          %s4675 = scalar_select %p4674, %s4673, 8
          %s4676 = smul.u32 2048, %s4675
          %p4677 = scmp.ne.s32.totalorder 0, %s4676
          %s4678 = smul.addr %s22, 160
          %s4679 = sadd.s32 %s4672, %s4678
          %s4680 = smul.addr %s4679, 8
          %s4681 = scalar_lea.vmem %s5, %s4680
          %s4682 = smul.u32 %s4675, 8
          // Predicated region
          $region214: #{encoder_forward.1} parent=212 // pred_check
            %p4683 = pneg %p4677
          $region215: #{encoder_forward.1} parent=212 // pred_check_branch
            %4685 = sbr.rel (%p4683) target = $region217
          $region216: #{encoder_forward.1} parent=212 // pred_region
            %p4686 = scmp.lt.u32.totalorder %s4682, 8
            %p4687 = pneg %p4686
            // Predicated region
            $region218: #{encoder_forward.1} parent=216 // pred_check
              _
            $region219: #{encoder_forward.1} parent=216 // pred_check_branch
              %4689 = sbr.rel (%p4686) target = $region221
            $region220: #{encoder_forward.1} parent=216 // pred_region
              %s4734 = sand.u32 %s4682, 7
              %p4735 = scmp.eq.s32.totalorder %s4734, 0
              // Predicated region
              $region233: #{encoder_forward.1} parent=220 // pred_check
                %p4736 = pneg %p4735
              $region234: #{encoder_forward.1} parent=220 // pred_check_branch
                %4738 = sbr.rel (%p4736) target = $region236
              $region235: #{encoder_forward.1} parent=220 // pred_region
                %s4739 = sshrl.u32 %s4682, 3
                %s4740 = sshrl.u32 %s4739, 2
                // While loop
                $region237: #{encoder_forward.1} parent=235 // loop_pre_header
                  _
                $region238: #{encoder_forward.1} parent=235 // loop_header
                  %s4744 = sphi 0, %s4746
                  %p4745 = scmp.ge.s32.totalorder %s4744, %s4740
                  %s4749 = sphi 0, %s4882
                  %s4750 = sphi %s4130, %s4885
                  %s4751 = sphi %s4681, %s4886
                $region239: #{encoder_forward.1} parent=235 // loop_header_branch
                  %4748 = sbr.rel (%p4745) target = $region243
                $region240: #{encoder_forward.1} parent=235 // loop_body
                  %v4752 = vld [vmem:[%s4750] sm:$0xff]
                  %4753 = vst [vmem:[%s4751] sm:$0xff] %v4752
                  %v4754 = vld [vmem:[%s4750 + $0x8] sm:$0xff]
                  %4755 = vst [vmem:[%s4751 + $0x8] sm:$0xff] %v4754
                  %v4756 = vld [vmem:[%s4750 + $0x10] sm:$0xff]
                  %4757 = vst [vmem:[%s4751 + $0x10] sm:$0xff] %v4756
                  %v4758 = vld [vmem:[%s4750 + $0x18] sm:$0xff]
                  %4759 = vst [vmem:[%s4751 + $0x18] sm:$0xff] %v4758
                  %v4760 = vld [vmem:[%s4750 + $0x40] sm:$0xff]
                  %4761 = vst [vmem:[%s4751 + $0x50] sm:$0xff] %v4760
                  %v4762 = vld [vmem:[%s4750 + $0x48] sm:$0xff]
                  %4763 = vst [vmem:[%s4751 + $0x58] sm:$0xff] %v4762
                  %v4764 = vld [vmem:[%s4750 + $0x50] sm:$0xff]
                  %4765 = vst [vmem:[%s4751 + $0x60] sm:$0xff] %v4764
                  %v4766 = vld [vmem:[%s4750 + $0x58] sm:$0xff]
                  %4767 = vst [vmem:[%s4751 + $0x68] sm:$0xff] %v4766
                  %v4768 = vld [vmem:[%s4750 + $0x80] sm:$0xff]
                  %4769 = vst [vmem:[%s4751 + $0xa0] sm:$0xff] %v4768
                  %v4770 = vld [vmem:[%s4750 + $0x88] sm:$0xff]
                  %4771 = vst [vmem:[%s4751 + $0xa8] sm:$0xff] %v4770
                  %v4772 = vld [vmem:[%s4750 + $0x90] sm:$0xff]
                  %4773 = vst [vmem:[%s4751 + $0xb0] sm:$0xff] %v4772
                  %v4774 = vld [vmem:[%s4750 + $0x98] sm:$0xff]
                  %4775 = vst [vmem:[%s4751 + $0xb8] sm:$0xff] %v4774
                  %v4776 = vld [vmem:[%s4750 + $0xc0] sm:$0xff]
                  %4777 = vst [vmem:[%s4751 + $0xf0] sm:$0xff] %v4776
                  %v4778 = vld [vmem:[%s4750 + $0xc8] sm:$0xff]
                  %4779 = vst [vmem:[%s4751 + $0xf8] sm:$0xff] %v4778
                  %v4780 = vld [vmem:[%s4750 + $0xd0] sm:$0xff]
                  %4781 = vst [vmem:[%s4751 + $0x100] sm:$0xff] %v4780
                  %v4782 = vld [vmem:[%s4750 + $0xd8] sm:$0xff]
                  %4783 = vst [vmem:[%s4751 + $0x108] sm:$0xff] %v4782
                  %v4784 = vld [vmem:[%s4750 + $0x100] sm:$0xff]
                  %4785 = vst [vmem:[%s4751 + $0x140] sm:$0xff] %v4784
                  %v4786 = vld [vmem:[%s4750 + $0x108] sm:$0xff]
                  %4787 = vst [vmem:[%s4751 + $0x148] sm:$0xff] %v4786
                  %v4788 = vld [vmem:[%s4750 + $0x110] sm:$0xff]
                  %4789 = vst [vmem:[%s4751 + $0x150] sm:$0xff] %v4788
                  %v4790 = vld [vmem:[%s4750 + $0x118] sm:$0xff]
                  %4791 = vst [vmem:[%s4751 + $0x158] sm:$0xff] %v4790
                  %v4792 = vld [vmem:[%s4750 + $0x140] sm:$0xff]
                  %4793 = vst [vmem:[%s4751 + $0x190] sm:$0xff] %v4792
                  %v4794 = vld [vmem:[%s4750 + $0x148] sm:$0xff]
                  %4795 = vst [vmem:[%s4751 + $0x198] sm:$0xff] %v4794
                  %v4796 = vld [vmem:[%s4750 + $0x150] sm:$0xff]
                  %4797 = vst [vmem:[%s4751 + $0x1a0] sm:$0xff] %v4796
                  %v4798 = vld [vmem:[%s4750 + $0x158] sm:$0xff]
                  %4799 = vst [vmem:[%s4751 + $0x1a8] sm:$0xff] %v4798
                  %v4800 = vld [vmem:[%s4750 + $0x180] sm:$0xff]
                  %4801 = vst [vmem:[%s4751 + $0x1e0] sm:$0xff] %v4800
                  %v4802 = vld [vmem:[%s4750 + $0x188] sm:$0xff]
                  %4803 = vst [vmem:[%s4751 + $0x1e8] sm:$0xff] %v4802
                  %v4804 = vld [vmem:[%s4750 + $0x190] sm:$0xff]
                  %4805 = vst [vmem:[%s4751 + $0x1f0] sm:$0xff] %v4804
                  %v4806 = vld [vmem:[%s4750 + $0x198] sm:$0xff]
                  %4807 = vst [vmem:[%s4751 + $0x1f8] sm:$0xff] %v4806
                  %v4808 = vld [vmem:[%s4750 + $0x1c0] sm:$0xff]
                  %4809 = vst [vmem:[%s4751 + $0x230] sm:$0xff] %v4808
                  %v4810 = vld [vmem:[%s4750 + $0x1c8] sm:$0xff]
                  %4811 = vst [vmem:[%s4751 + $0x238] sm:$0xff] %v4810
                  %v4812 = vld [vmem:[%s4750 + $0x1d0] sm:$0xff]
                  %4813 = vst [vmem:[%s4751 + $0x240] sm:$0xff] %v4812
                  %v4814 = vld [vmem:[%s4750 + $0x1d8] sm:$0xff]
                  %4815 = vst [vmem:[%s4751 + $0x248] sm:$0xff] %v4814
                  %v4816 = vld [vmem:[%s4750 + $0x200] sm:$0xff]
                  %4817 = vst [vmem:[%s4751 + $0x280] sm:$0xff] %v4816
                  %v4818 = vld [vmem:[%s4750 + $0x208] sm:$0xff]
                  %4819 = vst [vmem:[%s4751 + $0x288] sm:$0xff] %v4818
                  %v4820 = vld [vmem:[%s4750 + $0x210] sm:$0xff]
                  %4821 = vst [vmem:[%s4751 + $0x290] sm:$0xff] %v4820
                  %v4822 = vld [vmem:[%s4750 + $0x218] sm:$0xff]
                  %4823 = vst [vmem:[%s4751 + $0x298] sm:$0xff] %v4822
                  %v4824 = vld [vmem:[%s4750 + $0x240] sm:$0xff]
                  %4825 = vst [vmem:[%s4751 + $0x2d0] sm:$0xff] %v4824
                  %v4826 = vld [vmem:[%s4750 + $0x248] sm:$0xff]
                  %4827 = vst [vmem:[%s4751 + $0x2d8] sm:$0xff] %v4826
                  %v4828 = vld [vmem:[%s4750 + $0x250] sm:$0xff]
                  %4829 = vst [vmem:[%s4751 + $0x2e0] sm:$0xff] %v4828
                  %v4830 = vld [vmem:[%s4750 + $0x258] sm:$0xff]
                  %4831 = vst [vmem:[%s4751 + $0x2e8] sm:$0xff] %v4830
                  %v4832 = vld [vmem:[%s4750 + $0x280] sm:$0xff]
                  %4833 = vst [vmem:[%s4751 + $0x320] sm:$0xff] %v4832
                  %v4834 = vld [vmem:[%s4750 + $0x288] sm:$0xff]
                  %4835 = vst [vmem:[%s4751 + $0x328] sm:$0xff] %v4834
                  %v4836 = vld [vmem:[%s4750 + $0x290] sm:$0xff]
                  %4837 = vst [vmem:[%s4751 + $0x330] sm:$0xff] %v4836
                  %v4838 = vld [vmem:[%s4750 + $0x298] sm:$0xff]
                  %4839 = vst [vmem:[%s4751 + $0x338] sm:$0xff] %v4838
                  %v4840 = vld [vmem:[%s4750 + $0x2c0] sm:$0xff]
                  %4841 = vst [vmem:[%s4751 + $0x370] sm:$0xff] %v4840
                  %v4842 = vld [vmem:[%s4750 + $0x2c8] sm:$0xff]
                  %4843 = vst [vmem:[%s4751 + $0x378] sm:$0xff] %v4842
                  %v4844 = vld [vmem:[%s4750 + $0x2d0] sm:$0xff]
                  %4845 = vst [vmem:[%s4751 + $0x380] sm:$0xff] %v4844
                  %v4846 = vld [vmem:[%s4750 + $0x2d8] sm:$0xff]
                  %4847 = vst [vmem:[%s4751 + $0x388] sm:$0xff] %v4846
                  %v4848 = vld [vmem:[%s4750 + $0x300] sm:$0xff]
                  %4849 = vst [vmem:[%s4751 + $0x3c0] sm:$0xff] %v4848
                  %v4850 = vld [vmem:[%s4750 + $0x308] sm:$0xff]
                  %4851 = vst [vmem:[%s4751 + $0x3c8] sm:$0xff] %v4850
                  %v4852 = vld [vmem:[%s4750 + $0x310] sm:$0xff]
                  %4853 = vst [vmem:[%s4751 + $0x3d0] sm:$0xff] %v4852
                  %v4854 = vld [vmem:[%s4750 + $0x318] sm:$0xff]
                  %4855 = vst [vmem:[%s4751 + $0x3d8] sm:$0xff] %v4854
                  %v4856 = vld [vmem:[%s4750 + $0x340] sm:$0xff]
                  %4857 = vst [vmem:[%s4751 + $0x410] sm:$0xff] %v4856
                  %v4858 = vld [vmem:[%s4750 + $0x348] sm:$0xff]
                  %4859 = vst [vmem:[%s4751 + $0x418] sm:$0xff] %v4858
                  %v4860 = vld [vmem:[%s4750 + $0x350] sm:$0xff]
                  %4861 = vst [vmem:[%s4751 + $0x420] sm:$0xff] %v4860
                  %v4862 = vld [vmem:[%s4750 + $0x358] sm:$0xff]
                  %4863 = vst [vmem:[%s4751 + $0x428] sm:$0xff] %v4862
                  %v4864 = vld [vmem:[%s4750 + $0x380] sm:$0xff]
                  %4865 = vst [vmem:[%s4751 + $0x460] sm:$0xff] %v4864
                  %v4866 = vld [vmem:[%s4750 + $0x388] sm:$0xff]
                  %4867 = vst [vmem:[%s4751 + $0x468] sm:$0xff] %v4866
                  %v4868 = vld [vmem:[%s4750 + $0x390] sm:$0xff]
                  %4869 = vst [vmem:[%s4751 + $0x470] sm:$0xff] %v4868
                  %v4870 = vld [vmem:[%s4750 + $0x398] sm:$0xff]
                  %4871 = vst [vmem:[%s4751 + $0x478] sm:$0xff] %v4870
                  %v4872 = vld [vmem:[%s4750 + $0x3c0] sm:$0xff]
                  %4873 = vst [vmem:[%s4751 + $0x4b0] sm:$0xff] %v4872
                  %v4874 = vld [vmem:[%s4750 + $0x3c8] sm:$0xff]
                  %4875 = vst [vmem:[%s4751 + $0x4b8] sm:$0xff] %v4874
                  %v4876 = vld [vmem:[%s4750 + $0x3d0] sm:$0xff]
                  %4877 = vst [vmem:[%s4751 + $0x4c0] sm:$0xff] %v4876
                  %v4878 = vld [vmem:[%s4750 + $0x3d8] sm:$0xff]
                  %4879 = vst [vmem:[%s4751 + $0x4c8] sm:$0xff] %v4878
                  %s4880 = sadd.s32 1, %s4749
                  %p4881 = scmp.ge.s32.totalorder %s4880, %s4740
                  %s4882 = scalar_select %p4881, 0, %s4880
                  %s4883 = smul.u32 %s4882, 32
                  %s4884 = smul.u32 %s4882, 32
                  %s4885 = scalar_lea.vmem %s4130, %s4883 [#allocation5]
                  %s4886 = scalar_lea.vmem %s4681, %s4884
                $region241: #{encoder_forward.1} parent=235 // loop_footer
                  %s4746 = sadd.s32 %s4744, 1
                $region242: #{encoder_forward.1} parent=235 // loop_footer_branch
                  %4743 = sbr.rel target = $region238
                $region243: #{encoder_forward.1} parent=235 // loop_exit
                  _
                %s4887 = sshrl.u32 %s4739, 2
                %s4888 = sand.u32 %s4739, 3
                %s4889 = smul.u32 %s4887, 4
                %s4890 = smul.u32 128, %s4889
                %s4891 = sshra.s32 %s4890, 4
                %s4892 = scalar_lea.vmem %s4130, %s4891 [#allocation5]
                %s4893 = smul.u32 128, %s4889
                %s4894 = sshra.s32 %s4893, 4
                %s4895 = scalar_lea.vmem %s4681, %s4894
                // While loop
                $region244: #{encoder_forward.1} parent=235 // loop_pre_header
                  _
                $region245: #{encoder_forward.1} parent=235 // loop_header
                  %s4899 = sphi 0, %s4901
                  %p4900 = scmp.ge.s32.totalorder %s4899, %s4888
                  %s4904 = sphi 0, %s4941
                  %s4905 = sphi %s4892, %s4944
                  %s4906 = sphi %s4895, %s4945
                $region246: #{encoder_forward.1} parent=235 // loop_header_branch
                  %4903 = sbr.rel (%p4900) target = $region250
                $region247: #{encoder_forward.1} parent=235 // loop_body
                  %v4907 = vld [vmem:[%s4905] sm:$0xff]
                  %4908 = vst [vmem:[%s4906] sm:$0xff] %v4907
                  %v4909 = vld [vmem:[%s4905 + $0x40] sm:$0xff]
                  %4910 = vst [vmem:[%s4906 + $0x50] sm:$0xff] %v4909
                  %v4911 = vld [vmem:[%s4905 + $0x80] sm:$0xff]
                  %4912 = vst [vmem:[%s4906 + $0xa0] sm:$0xff] %v4911
                  %v4913 = vld [vmem:[%s4905 + $0xc0] sm:$0xff]
                  %4914 = vst [vmem:[%s4906 + $0xf0] sm:$0xff] %v4913
                  %v4915 = vld [vmem:[%s4905 + $0x100] sm:$0xff]
                  %4916 = vst [vmem:[%s4906 + $0x140] sm:$0xff] %v4915
                  %v4917 = vld [vmem:[%s4905 + $0x140] sm:$0xff]
                  %4918 = vst [vmem:[%s4906 + $0x190] sm:$0xff] %v4917
                  %v4919 = vld [vmem:[%s4905 + $0x180] sm:$0xff]
                  %4920 = vst [vmem:[%s4906 + $0x1e0] sm:$0xff] %v4919
                  %v4921 = vld [vmem:[%s4905 + $0x1c0] sm:$0xff]
                  %4922 = vst [vmem:[%s4906 + $0x230] sm:$0xff] %v4921
                  %v4923 = vld [vmem:[%s4905 + $0x200] sm:$0xff]
                  %4924 = vst [vmem:[%s4906 + $0x280] sm:$0xff] %v4923
                  %v4925 = vld [vmem:[%s4905 + $0x240] sm:$0xff]
                  %4926 = vst [vmem:[%s4906 + $0x2d0] sm:$0xff] %v4925
                  %v4927 = vld [vmem:[%s4905 + $0x280] sm:$0xff]
                  %4928 = vst [vmem:[%s4906 + $0x320] sm:$0xff] %v4927
                  %v4929 = vld [vmem:[%s4905 + $0x2c0] sm:$0xff]
                  %4930 = vst [vmem:[%s4906 + $0x370] sm:$0xff] %v4929
                  %v4931 = vld [vmem:[%s4905 + $0x300] sm:$0xff]
                  %4932 = vst [vmem:[%s4906 + $0x3c0] sm:$0xff] %v4931
                  %v4933 = vld [vmem:[%s4905 + $0x340] sm:$0xff]
                  %4934 = vst [vmem:[%s4906 + $0x410] sm:$0xff] %v4933
                  %v4935 = vld [vmem:[%s4905 + $0x380] sm:$0xff]
                  %4936 = vst [vmem:[%s4906 + $0x460] sm:$0xff] %v4935
                  %v4937 = vld [vmem:[%s4905 + $0x3c0] sm:$0xff]
                  %4938 = vst [vmem:[%s4906 + $0x4b0] sm:$0xff] %v4937
                  %s4939 = sadd.s32 1, %s4904
                  %p4940 = scmp.ge.s32.totalorder %s4939, %s4888
                  %s4941 = scalar_select %p4940, 0, %s4939
                  %s4942 = smul.u32 %s4941, 8
                  %s4943 = smul.u32 %s4941, 8
                  %s4944 = scalar_lea.vmem %s4892, %s4942 [#allocation5]
                  %s4945 = scalar_lea.vmem %s4895, %s4943
                $region248: #{encoder_forward.1} parent=235 // loop_footer
                  %s4901 = sadd.s32 %s4899, 1
                $region249: #{encoder_forward.1} parent=235 // loop_footer_branch
                  %4898 = sbr.rel target = $region245
                $region250: #{encoder_forward.1} parent=235 // loop_exit
                  _
              $region236: #{encoder_forward.1} parent=220 // pred_fallthru
                _
              %p4946 = pneg %p4735
              // Predicated region
              $region251: #{encoder_forward.1} parent=220 // pred_check
                _
              $region252: #{encoder_forward.1} parent=220 // pred_check_branch
                %4948 = sbr.rel (%p4735) target = $region254
              $region253: #{encoder_forward.1} parent=220 // pred_region
                %s4949 = sand.u32 %s4682, 7
                %s4950 = ssub.s32 %s4682, %s4949
                %s4951 = scalar_lea.vmem %s4130, %s4950 [#allocation5]
                %s4952 = ssub.s32 %s4682, %s4949
                %s4953 = scalar_lea.vmem %s4681, %s4952
                %s4954 = sshrl.u32 %s4682, 3
                %s4955 = sshrl.u32 %s4954, 2
                // While loop
                $region255: #{encoder_forward.1} parent=253 // loop_pre_header
                  _
                $region256: #{encoder_forward.1} parent=253 // loop_header
                  %s4959 = sphi 0, %s4961
                  %p4960 = scmp.ge.s32.totalorder %s4959, %s4955
                  %s4964 = sphi 0, %s5097
                  %s4965 = sphi %s4130, %s5100
                  %s4966 = sphi %s4681, %s5101
                $region257: #{encoder_forward.1} parent=253 // loop_header_branch
                  %4963 = sbr.rel (%p4960) target = $region261
                $region258: #{encoder_forward.1} parent=253 // loop_body
                  %v4967 = vld [vmem:[%s4965] sm:$0xff]
                  %4968 = vst [vmem:[%s4966] sm:$0xff] %v4967
                  %v4969 = vld [vmem:[%s4965 + $0x8] sm:$0xff]
                  %4970 = vst [vmem:[%s4966 + $0x8] sm:$0xff] %v4969
                  %v4971 = vld [vmem:[%s4965 + $0x10] sm:$0xff]
                  %4972 = vst [vmem:[%s4966 + $0x10] sm:$0xff] %v4971
                  %v4973 = vld [vmem:[%s4965 + $0x18] sm:$0xff]
                  %4974 = vst [vmem:[%s4966 + $0x18] sm:$0xff] %v4973
                  %v4975 = vld [vmem:[%s4965 + $0x40] sm:$0xff]
                  %4976 = vst [vmem:[%s4966 + $0x50] sm:$0xff] %v4975
                  %v4977 = vld [vmem:[%s4965 + $0x48] sm:$0xff]
                  %4978 = vst [vmem:[%s4966 + $0x58] sm:$0xff] %v4977
                  %v4979 = vld [vmem:[%s4965 + $0x50] sm:$0xff]
                  %4980 = vst [vmem:[%s4966 + $0x60] sm:$0xff] %v4979
                  %v4981 = vld [vmem:[%s4965 + $0x58] sm:$0xff]
                  %4982 = vst [vmem:[%s4966 + $0x68] sm:$0xff] %v4981
                  %v4983 = vld [vmem:[%s4965 + $0x80] sm:$0xff]
                  %4984 = vst [vmem:[%s4966 + $0xa0] sm:$0xff] %v4983
                  %v4985 = vld [vmem:[%s4965 + $0x88] sm:$0xff]
                  %4986 = vst [vmem:[%s4966 + $0xa8] sm:$0xff] %v4985
                  %v4987 = vld [vmem:[%s4965 + $0x90] sm:$0xff]
                  %4988 = vst [vmem:[%s4966 + $0xb0] sm:$0xff] %v4987
                  %v4989 = vld [vmem:[%s4965 + $0x98] sm:$0xff]
                  %4990 = vst [vmem:[%s4966 + $0xb8] sm:$0xff] %v4989
                  %v4991 = vld [vmem:[%s4965 + $0xc0] sm:$0xff]
                  %4992 = vst [vmem:[%s4966 + $0xf0] sm:$0xff] %v4991
                  %v4993 = vld [vmem:[%s4965 + $0xc8] sm:$0xff]
                  %4994 = vst [vmem:[%s4966 + $0xf8] sm:$0xff] %v4993
                  %v4995 = vld [vmem:[%s4965 + $0xd0] sm:$0xff]
                  %4996 = vst [vmem:[%s4966 + $0x100] sm:$0xff] %v4995
                  %v4997 = vld [vmem:[%s4965 + $0xd8] sm:$0xff]
                  %4998 = vst [vmem:[%s4966 + $0x108] sm:$0xff] %v4997
                  %v4999 = vld [vmem:[%s4965 + $0x100] sm:$0xff]
                  %5000 = vst [vmem:[%s4966 + $0x140] sm:$0xff] %v4999
                  %v5001 = vld [vmem:[%s4965 + $0x108] sm:$0xff]
                  %5002 = vst [vmem:[%s4966 + $0x148] sm:$0xff] %v5001
                  %v5003 = vld [vmem:[%s4965 + $0x110] sm:$0xff]
                  %5004 = vst [vmem:[%s4966 + $0x150] sm:$0xff] %v5003
                  %v5005 = vld [vmem:[%s4965 + $0x118] sm:$0xff]
                  %5006 = vst [vmem:[%s4966 + $0x158] sm:$0xff] %v5005
                  %v5007 = vld [vmem:[%s4965 + $0x140] sm:$0xff]
                  %5008 = vst [vmem:[%s4966 + $0x190] sm:$0xff] %v5007
                  %v5009 = vld [vmem:[%s4965 + $0x148] sm:$0xff]
                  %5010 = vst [vmem:[%s4966 + $0x198] sm:$0xff] %v5009
                  %v5011 = vld [vmem:[%s4965 + $0x150] sm:$0xff]
                  %5012 = vst [vmem:[%s4966 + $0x1a0] sm:$0xff] %v5011
                  %v5013 = vld [vmem:[%s4965 + $0x158] sm:$0xff]
                  %5014 = vst [vmem:[%s4966 + $0x1a8] sm:$0xff] %v5013
                  %v5015 = vld [vmem:[%s4965 + $0x180] sm:$0xff]
                  %5016 = vst [vmem:[%s4966 + $0x1e0] sm:$0xff] %v5015
                  %v5017 = vld [vmem:[%s4965 + $0x188] sm:$0xff]
                  %5018 = vst [vmem:[%s4966 + $0x1e8] sm:$0xff] %v5017
                  %v5019 = vld [vmem:[%s4965 + $0x190] sm:$0xff]
                  %5020 = vst [vmem:[%s4966 + $0x1f0] sm:$0xff] %v5019
                  %v5021 = vld [vmem:[%s4965 + $0x198] sm:$0xff]
                  %5022 = vst [vmem:[%s4966 + $0x1f8] sm:$0xff] %v5021
                  %v5023 = vld [vmem:[%s4965 + $0x1c0] sm:$0xff]
                  %5024 = vst [vmem:[%s4966 + $0x230] sm:$0xff] %v5023
                  %v5025 = vld [vmem:[%s4965 + $0x1c8] sm:$0xff]
                  %5026 = vst [vmem:[%s4966 + $0x238] sm:$0xff] %v5025
                  %v5027 = vld [vmem:[%s4965 + $0x1d0] sm:$0xff]
                  %5028 = vst [vmem:[%s4966 + $0x240] sm:$0xff] %v5027
                  %v5029 = vld [vmem:[%s4965 + $0x1d8] sm:$0xff]
                  %5030 = vst [vmem:[%s4966 + $0x248] sm:$0xff] %v5029
                  %v5031 = vld [vmem:[%s4965 + $0x200] sm:$0xff]
                  %5032 = vst [vmem:[%s4966 + $0x280] sm:$0xff] %v5031
                  %v5033 = vld [vmem:[%s4965 + $0x208] sm:$0xff]
                  %5034 = vst [vmem:[%s4966 + $0x288] sm:$0xff] %v5033
                  %v5035 = vld [vmem:[%s4965 + $0x210] sm:$0xff]
                  %5036 = vst [vmem:[%s4966 + $0x290] sm:$0xff] %v5035
                  %v5037 = vld [vmem:[%s4965 + $0x218] sm:$0xff]
                  %5038 = vst [vmem:[%s4966 + $0x298] sm:$0xff] %v5037
                  %v5039 = vld [vmem:[%s4965 + $0x240] sm:$0xff]
                  %5040 = vst [vmem:[%s4966 + $0x2d0] sm:$0xff] %v5039
                  %v5041 = vld [vmem:[%s4965 + $0x248] sm:$0xff]
                  %5042 = vst [vmem:[%s4966 + $0x2d8] sm:$0xff] %v5041
                  %v5043 = vld [vmem:[%s4965 + $0x250] sm:$0xff]
                  %5044 = vst [vmem:[%s4966 + $0x2e0] sm:$0xff] %v5043
                  %v5045 = vld [vmem:[%s4965 + $0x258] sm:$0xff]
                  %5046 = vst [vmem:[%s4966 + $0x2e8] sm:$0xff] %v5045
                  %v5047 = vld [vmem:[%s4965 + $0x280] sm:$0xff]
                  %5048 = vst [vmem:[%s4966 + $0x320] sm:$0xff] %v5047
                  %v5049 = vld [vmem:[%s4965 + $0x288] sm:$0xff]
                  %5050 = vst [vmem:[%s4966 + $0x328] sm:$0xff] %v5049
                  %v5051 = vld [vmem:[%s4965 + $0x290] sm:$0xff]
                  %5052 = vst [vmem:[%s4966 + $0x330] sm:$0xff] %v5051
                  %v5053 = vld [vmem:[%s4965 + $0x298] sm:$0xff]
                  %5054 = vst [vmem:[%s4966 + $0x338] sm:$0xff] %v5053
                  %v5055 = vld [vmem:[%s4965 + $0x2c0] sm:$0xff]
                  %5056 = vst [vmem:[%s4966 + $0x370] sm:$0xff] %v5055
                  %v5057 = vld [vmem:[%s4965 + $0x2c8] sm:$0xff]
                  %5058 = vst [vmem:[%s4966 + $0x378] sm:$0xff] %v5057
                  %v5059 = vld [vmem:[%s4965 + $0x2d0] sm:$0xff]
                  %5060 = vst [vmem:[%s4966 + $0x380] sm:$0xff] %v5059
                  %v5061 = vld [vmem:[%s4965 + $0x2d8] sm:$0xff]
                  %5062 = vst [vmem:[%s4966 + $0x388] sm:$0xff] %v5061
                  %v5063 = vld [vmem:[%s4965 + $0x300] sm:$0xff]
                  %5064 = vst [vmem:[%s4966 + $0x3c0] sm:$0xff] %v5063
                  %v5065 = vld [vmem:[%s4965 + $0x308] sm:$0xff]
                  %5066 = vst [vmem:[%s4966 + $0x3c8] sm:$0xff] %v5065
                  %v5067 = vld [vmem:[%s4965 + $0x310] sm:$0xff]
                  %5068 = vst [vmem:[%s4966 + $0x3d0] sm:$0xff] %v5067
                  %v5069 = vld [vmem:[%s4965 + $0x318] sm:$0xff]
                  %5070 = vst [vmem:[%s4966 + $0x3d8] sm:$0xff] %v5069
                  %v5071 = vld [vmem:[%s4965 + $0x340] sm:$0xff]
                  %5072 = vst [vmem:[%s4966 + $0x410] sm:$0xff] %v5071
                  %v5073 = vld [vmem:[%s4965 + $0x348] sm:$0xff]
                  %5074 = vst [vmem:[%s4966 + $0x418] sm:$0xff] %v5073
                  %v5075 = vld [vmem:[%s4965 + $0x350] sm:$0xff]
                  %5076 = vst [vmem:[%s4966 + $0x420] sm:$0xff] %v5075
                  %v5077 = vld [vmem:[%s4965 + $0x358] sm:$0xff]
                  %5078 = vst [vmem:[%s4966 + $0x428] sm:$0xff] %v5077
                  %v5079 = vld [vmem:[%s4965 + $0x380] sm:$0xff]
                  %5080 = vst [vmem:[%s4966 + $0x460] sm:$0xff] %v5079
                  %v5081 = vld [vmem:[%s4965 + $0x388] sm:$0xff]
                  %5082 = vst [vmem:[%s4966 + $0x468] sm:$0xff] %v5081
                  %v5083 = vld [vmem:[%s4965 + $0x390] sm:$0xff]
                  %5084 = vst [vmem:[%s4966 + $0x470] sm:$0xff] %v5083
                  %v5085 = vld [vmem:[%s4965 + $0x398] sm:$0xff]
                  %5086 = vst [vmem:[%s4966 + $0x478] sm:$0xff] %v5085
                  %v5087 = vld [vmem:[%s4965 + $0x3c0] sm:$0xff]
                  %5088 = vst [vmem:[%s4966 + $0x4b0] sm:$0xff] %v5087
                  %v5089 = vld [vmem:[%s4965 + $0x3c8] sm:$0xff]
                  %5090 = vst [vmem:[%s4966 + $0x4b8] sm:$0xff] %v5089
                  %v5091 = vld [vmem:[%s4965 + $0x3d0] sm:$0xff]
                  %5092 = vst [vmem:[%s4966 + $0x4c0] sm:$0xff] %v5091
                  %v5093 = vld [vmem:[%s4965 + $0x3d8] sm:$0xff]
                  %5094 = vst [vmem:[%s4966 + $0x4c8] sm:$0xff] %v5093
                  %s5095 = sadd.s32 1, %s4964
                  %p5096 = scmp.ge.s32.totalorder %s5095, %s4955
                  %s5097 = scalar_select %p5096, 0, %s5095
                  %s5098 = smul.u32 %s5097, 32
                  %s5099 = smul.u32 %s5097, 32
                  %s5100 = scalar_lea.vmem %s4130, %s5098 [#allocation5]
                  %s5101 = scalar_lea.vmem %s4681, %s5099
                $region259: #{encoder_forward.1} parent=253 // loop_footer
                  %s4961 = sadd.s32 %s4959, 1
                $region260: #{encoder_forward.1} parent=253 // loop_footer_branch
                  %4958 = sbr.rel target = $region256
                $region261: #{encoder_forward.1} parent=253 // loop_exit
                  _
                %s5102 = sshrl.u32 %s4954, 2
                %s5103 = sand.u32 %s4954, 3
                %s5104 = smul.u32 %s5102, 4
                %s5105 = smul.u32 128, %s5104
                %s5106 = sshra.s32 %s5105, 4
                %s5107 = scalar_lea.vmem %s4130, %s5106 [#allocation5]
                %s5108 = smul.u32 128, %s5104
                %s5109 = sshra.s32 %s5108, 4
                %s5110 = scalar_lea.vmem %s4681, %s5109
                // While loop
                $region262: #{encoder_forward.1} parent=253 // loop_pre_header
                  _
                $region263: #{encoder_forward.1} parent=253 // loop_header
                  %s5114 = sphi 0, %s5116
                  %p5115 = scmp.ge.s32.totalorder %s5114, %s5103
                  %s5119 = sphi 0, %s5156
                  %s5120 = sphi %s5107, %s5159
                  %s5121 = sphi %s5110, %s5160
                $region264: #{encoder_forward.1} parent=253 // loop_header_branch
                  %5118 = sbr.rel (%p5115) target = $region268
                $region265: #{encoder_forward.1} parent=253 // loop_body
                  %v5122 = vld [vmem:[%s5120] sm:$0xff]
                  %5123 = vst [vmem:[%s5121] sm:$0xff] %v5122
                  %v5124 = vld [vmem:[%s5120 + $0x40] sm:$0xff]
                  %5125 = vst [vmem:[%s5121 + $0x50] sm:$0xff] %v5124
                  %v5126 = vld [vmem:[%s5120 + $0x80] sm:$0xff]
                  %5127 = vst [vmem:[%s5121 + $0xa0] sm:$0xff] %v5126
                  %v5128 = vld [vmem:[%s5120 + $0xc0] sm:$0xff]
                  %5129 = vst [vmem:[%s5121 + $0xf0] sm:$0xff] %v5128
                  %v5130 = vld [vmem:[%s5120 + $0x100] sm:$0xff]
                  %5131 = vst [vmem:[%s5121 + $0x140] sm:$0xff] %v5130
                  %v5132 = vld [vmem:[%s5120 + $0x140] sm:$0xff]
                  %5133 = vst [vmem:[%s5121 + $0x190] sm:$0xff] %v5132
                  %v5134 = vld [vmem:[%s5120 + $0x180] sm:$0xff]
                  %5135 = vst [vmem:[%s5121 + $0x1e0] sm:$0xff] %v5134
                  %v5136 = vld [vmem:[%s5120 + $0x1c0] sm:$0xff]
                  %5137 = vst [vmem:[%s5121 + $0x230] sm:$0xff] %v5136
                  %v5138 = vld [vmem:[%s5120 + $0x200] sm:$0xff]
                  %5139 = vst [vmem:[%s5121 + $0x280] sm:$0xff] %v5138
                  %v5140 = vld [vmem:[%s5120 + $0x240] sm:$0xff]
                  %5141 = vst [vmem:[%s5121 + $0x2d0] sm:$0xff] %v5140
                  %v5142 = vld [vmem:[%s5120 + $0x280] sm:$0xff]
                  %5143 = vst [vmem:[%s5121 + $0x320] sm:$0xff] %v5142
                  %v5144 = vld [vmem:[%s5120 + $0x2c0] sm:$0xff]
                  %5145 = vst [vmem:[%s5121 + $0x370] sm:$0xff] %v5144
                  %v5146 = vld [vmem:[%s5120 + $0x300] sm:$0xff]
                  %5147 = vst [vmem:[%s5121 + $0x3c0] sm:$0xff] %v5146
                  %v5148 = vld [vmem:[%s5120 + $0x340] sm:$0xff]
                  %5149 = vst [vmem:[%s5121 + $0x410] sm:$0xff] %v5148
                  %v5150 = vld [vmem:[%s5120 + $0x380] sm:$0xff]
                  %5151 = vst [vmem:[%s5121 + $0x460] sm:$0xff] %v5150
                  %v5152 = vld [vmem:[%s5120 + $0x3c0] sm:$0xff]
                  %5153 = vst [vmem:[%s5121 + $0x4b0] sm:$0xff] %v5152
                  %s5154 = sadd.s32 1, %s5119
                  %p5155 = scmp.ge.s32.totalorder %s5154, %s5103
                  %s5156 = scalar_select %p5155, 0, %s5154
                  %s5157 = smul.u32 %s5156, 8
                  %s5158 = smul.u32 %s5156, 8
                  %s5159 = scalar_lea.vmem %s5107, %s5157 [#allocation5]
                  %s5160 = scalar_lea.vmem %s5110, %s5158
                $region266: #{encoder_forward.1} parent=253 // loop_footer
                  %s5116 = sadd.s32 %s5114, 1
                $region267: #{encoder_forward.1} parent=253 // loop_footer_branch
                  %5113 = sbr.rel target = $region263
                $region268: #{encoder_forward.1} parent=253 // loop_exit
                  _
                %s5161 = sshllo.u32 0, %s4949
                loop: start=0, step=1, limit=1
                $region269: #{encoder_forward.1} parent=253 // loop_pre_header
                  _
                $region270: #{encoder_forward.1} parent=253 // loop_header
                  %s5163 = sphi 0, %s5167
                  %p5164 = scmp.ge.s32.totalorder %s5163, 1
                  %s5168 = sphi %s4951, %s4951
                  %s5169 = sphi %s4953, %s4953
                $region271: #{encoder_forward.1} parent=253 // loop_header_branch
                  %5166 = sbr.rel (%p5164) target = $region275
                $region272: #{encoder_forward.1} parent=253 // loop_body
                  %v5170 = vld [vmem:[%s5168] sm:%s5161]
                  %5171 = vst [vmem:[%s5169] sm:%s5161] %v5170
                  %v5172 = vld [vmem:[%s5168 + $0x40] sm:%s5161]
                  %5173 = vst [vmem:[%s5169 + $0x50] sm:%s5161] %v5172
                  %v5174 = vld [vmem:[%s5168 + $0x80] sm:%s5161]
                  %5175 = vst [vmem:[%s5169 + $0xa0] sm:%s5161] %v5174
                  %v5176 = vld [vmem:[%s5168 + $0xc0] sm:%s5161]
                  %5177 = vst [vmem:[%s5169 + $0xf0] sm:%s5161] %v5176
                  %v5178 = vld [vmem:[%s5168 + $0x100] sm:%s5161]
                  %5179 = vst [vmem:[%s5169 + $0x140] sm:%s5161] %v5178
                  %v5180 = vld [vmem:[%s5168 + $0x140] sm:%s5161]
                  %5181 = vst [vmem:[%s5169 + $0x190] sm:%s5161] %v5180
                  %v5182 = vld [vmem:[%s5168 + $0x180] sm:%s5161]
                  %5183 = vst [vmem:[%s5169 + $0x1e0] sm:%s5161] %v5182
                  %v5184 = vld [vmem:[%s5168 + $0x1c0] sm:%s5161]
                  %5185 = vst [vmem:[%s5169 + $0x230] sm:%s5161] %v5184
                  %v5186 = vld [vmem:[%s5168 + $0x200] sm:%s5161]
                  %5187 = vst [vmem:[%s5169 + $0x280] sm:%s5161] %v5186
                  %v5188 = vld [vmem:[%s5168 + $0x240] sm:%s5161]
                  %5189 = vst [vmem:[%s5169 + $0x2d0] sm:%s5161] %v5188
                  %v5190 = vld [vmem:[%s5168 + $0x280] sm:%s5161]
                  %5191 = vst [vmem:[%s5169 + $0x320] sm:%s5161] %v5190
                  %v5192 = vld [vmem:[%s5168 + $0x2c0] sm:%s5161]
                  %5193 = vst [vmem:[%s5169 + $0x370] sm:%s5161] %v5192
                  %v5194 = vld [vmem:[%s5168 + $0x300] sm:%s5161]
                  %5195 = vst [vmem:[%s5169 + $0x3c0] sm:%s5161] %v5194
                  %v5196 = vld [vmem:[%s5168 + $0x340] sm:%s5161]
                  %5197 = vst [vmem:[%s5169 + $0x410] sm:%s5161] %v5196
                  %v5198 = vld [vmem:[%s5168 + $0x380] sm:%s5161]
                  %5199 = vst [vmem:[%s5169 + $0x460] sm:%s5161] %v5198
                  %v5200 = vld [vmem:[%s5168 + $0x3c0] sm:%s5161]
                  %5201 = vst [vmem:[%s5169 + $0x4b0] sm:%s5161] %v5200
                $region273: #{encoder_forward.1} parent=253 // loop_footer
                  %s5167 = sadd.s32 1, %s5163
                $region274: #{encoder_forward.1} parent=253 // loop_footer_branch
                  %5162 = sbr.rel target = $region270
                $region275: #{encoder_forward.1} parent=253 // loop_exit
                  _
              $region254: #{encoder_forward.1} parent=220 // pred_fallthru
                _
            $region221: #{encoder_forward.1} parent=216 // pred_fallthru
              _
            // Predicated region
            $region222: #{encoder_forward.1} parent=216 // pred_check
              %p4690 = pneg %p4686
            $region223: #{encoder_forward.1} parent=216 // pred_check_branch
              %4692 = sbr.rel (%p4690) target = $region225
            $region224: #{encoder_forward.1} parent=216 // pred_region
              %s4693 = sshllo.u32 0, %s4682
              loop: start=0, step=1, limit=1
              $region226: #{encoder_forward.1} parent=224 // loop_pre_header
                _
              $region227: #{encoder_forward.1} parent=224 // loop_header
                %s4695 = sphi 0, %s4699
                %p4696 = scmp.ge.s32.totalorder %s4695, 1
                %s4700 = sphi %s4130, %s4130
                %s4701 = sphi %s4681, %s4681
              $region228: #{encoder_forward.1} parent=224 // loop_header_branch
                %4698 = sbr.rel (%p4696) target = $region232
              $region229: #{encoder_forward.1} parent=224 // loop_body
                %v4702 = vld [vmem:[%s4700] sm:%s4693]
                %4703 = vst [vmem:[%s4701] sm:%s4693] %v4702
                %v4704 = vld [vmem:[%s4700 + $0x40] sm:%s4693]
                %4705 = vst [vmem:[%s4701 + $0x50] sm:%s4693] %v4704
                %v4706 = vld [vmem:[%s4700 + $0x80] sm:%s4693]
                %4707 = vst [vmem:[%s4701 + $0xa0] sm:%s4693] %v4706
                %v4708 = vld [vmem:[%s4700 + $0xc0] sm:%s4693]
                %4709 = vst [vmem:[%s4701 + $0xf0] sm:%s4693] %v4708
                %v4710 = vld [vmem:[%s4700 + $0x100] sm:%s4693]
                %4711 = vst [vmem:[%s4701 + $0x140] sm:%s4693] %v4710
                %v4712 = vld [vmem:[%s4700 + $0x140] sm:%s4693]
                %4713 = vst [vmem:[%s4701 + $0x190] sm:%s4693] %v4712
                %v4714 = vld [vmem:[%s4700 + $0x180] sm:%s4693]
                %4715 = vst [vmem:[%s4701 + $0x1e0] sm:%s4693] %v4714
                %v4716 = vld [vmem:[%s4700 + $0x1c0] sm:%s4693]
                %4717 = vst [vmem:[%s4701 + $0x230] sm:%s4693] %v4716
                %v4718 = vld [vmem:[%s4700 + $0x200] sm:%s4693]
                %4719 = vst [vmem:[%s4701 + $0x280] sm:%s4693] %v4718
                %v4720 = vld [vmem:[%s4700 + $0x240] sm:%s4693]
                %4721 = vst [vmem:[%s4701 + $0x2d0] sm:%s4693] %v4720
                %v4722 = vld [vmem:[%s4700 + $0x280] sm:%s4693]
                %4723 = vst [vmem:[%s4701 + $0x320] sm:%s4693] %v4722
                %v4724 = vld [vmem:[%s4700 + $0x2c0] sm:%s4693]
                %4725 = vst [vmem:[%s4701 + $0x370] sm:%s4693] %v4724
                %v4726 = vld [vmem:[%s4700 + $0x300] sm:%s4693]
                %4727 = vst [vmem:[%s4701 + $0x3c0] sm:%s4693] %v4726
                %v4728 = vld [vmem:[%s4700 + $0x340] sm:%s4693]
                %4729 = vst [vmem:[%s4701 + $0x410] sm:%s4693] %v4728
                %v4730 = vld [vmem:[%s4700 + $0x380] sm:%s4693]
                %4731 = vst [vmem:[%s4701 + $0x460] sm:%s4693] %v4730
                %v4732 = vld [vmem:[%s4700 + $0x3c0] sm:%s4693]
                %4733 = vst [vmem:[%s4701 + $0x4b0] sm:%s4693] %v4732
              $region230: #{encoder_forward.1} parent=224 // loop_footer
                %s4699 = sadd.s32 1, %s4695
              $region231: #{encoder_forward.1} parent=224 // loop_footer_branch
                %4694 = sbr.rel target = $region227
              $region232: #{encoder_forward.1} parent=224 // loop_exit
                _
            $region225: #{encoder_forward.1} parent=216 // pred_fallthru
              _
          $region217: #{encoder_forward.1} parent=212 // pred_fallthru
            _
          %5202 = vnop
        $region213: #{encoder_forward.1} parent=134 // pred_fallthru
          _
        // Predicated region
        $region276: #{encoder_forward.1} parent=134 // pred_check
          %p5203 = pneg %p208
        $region277: #{encoder_forward.1} parent=134 // pred_check_branch
          %5205 = sbr.rel (%p5203) target = $region279
        $region278: #{encoder_forward.1} parent=134 // pred_region
          %s5206 = smul.u32 8, %s23
          %s5207 = ssub.s32 10, %s5206
          %p5208 = scmp.lt.s32.totalorder %s5207, 8
          %s5209 = scalar_select %p5208, %s5207, 8
          %s5210 = smul.u32 2048, %s5209
          %p5211 = scmp.ne.s32.totalorder 0, %s5210
          %s5212 = smul.addr %s22, 160
          %s5213 = sadd.s32 %s5206, %s5212
          %s5214 = smul.addr %s5213, 8
          %s5215 = scalar_lea.vmem %s6, %s5214
          %s5216 = smul.u32 %s5209, 8
          // Predicated region
          $region280: #{encoder_forward.1} parent=278 // pred_check
            %p5217 = pneg %p5211
          $region281: #{encoder_forward.1} parent=278 // pred_check_branch
            %5219 = sbr.rel (%p5217) target = $region283
          $region282: #{encoder_forward.1} parent=278 // pred_region
            %p5220 = scmp.lt.u32.totalorder %s5216, 8
            %p5221 = pneg %p5220
            // Predicated region
            $region284: #{encoder_forward.1} parent=282 // pred_check
              _
            $region285: #{encoder_forward.1} parent=282 // pred_check_branch
              %5223 = sbr.rel (%p5220) target = $region287
            $region286: #{encoder_forward.1} parent=282 // pred_region
              %s5268 = sand.u32 %s5216, 7
              %p5269 = scmp.eq.s32.totalorder %s5268, 0
              // Predicated region
              $region299: #{encoder_forward.1} parent=286 // pred_check
                %p5270 = pneg %p5269
              $region300: #{encoder_forward.1} parent=286 // pred_check_branch
                %5272 = sbr.rel (%p5270) target = $region302
              $region301: #{encoder_forward.1} parent=286 // pred_region
                %s5273 = sshrl.u32 %s5216, 3
                %s5274 = sshrl.u32 %s5273, 2
                // While loop
                $region303: #{encoder_forward.1} parent=301 // loop_pre_header
                  _
                $region304: #{encoder_forward.1} parent=301 // loop_header
                  %s5278 = sphi 0, %s5280
                  %p5279 = scmp.ge.s32.totalorder %s5278, %s5274
                  %s5283 = sphi 0, %s5416
                  %s5284 = sphi %s4134, %s5419
                  %s5285 = sphi %s5215, %s5420
                $region305: #{encoder_forward.1} parent=301 // loop_header_branch
                  %5282 = sbr.rel (%p5279) target = $region309
                $region306: #{encoder_forward.1} parent=301 // loop_body
                  %v5286 = vld [vmem:[%s5284] sm:$0xff]
                  %5287 = vst [vmem:[%s5285] sm:$0xff] %v5286
                  %v5288 = vld [vmem:[%s5284 + $0x8] sm:$0xff]
                  %5289 = vst [vmem:[%s5285 + $0x8] sm:$0xff] %v5288
                  %v5290 = vld [vmem:[%s5284 + $0x10] sm:$0xff]
                  %5291 = vst [vmem:[%s5285 + $0x10] sm:$0xff] %v5290
                  %v5292 = vld [vmem:[%s5284 + $0x18] sm:$0xff]
                  %5293 = vst [vmem:[%s5285 + $0x18] sm:$0xff] %v5292
                  %v5294 = vld [vmem:[%s5284 + $0x40] sm:$0xff]
                  %5295 = vst [vmem:[%s5285 + $0x50] sm:$0xff] %v5294
                  %v5296 = vld [vmem:[%s5284 + $0x48] sm:$0xff]
                  %5297 = vst [vmem:[%s5285 + $0x58] sm:$0xff] %v5296
                  %v5298 = vld [vmem:[%s5284 + $0x50] sm:$0xff]
                  %5299 = vst [vmem:[%s5285 + $0x60] sm:$0xff] %v5298
                  %v5300 = vld [vmem:[%s5284 + $0x58] sm:$0xff]
                  %5301 = vst [vmem:[%s5285 + $0x68] sm:$0xff] %v5300
                  %v5302 = vld [vmem:[%s5284 + $0x80] sm:$0xff]
                  %5303 = vst [vmem:[%s5285 + $0xa0] sm:$0xff] %v5302
                  %v5304 = vld [vmem:[%s5284 + $0x88] sm:$0xff]
                  %5305 = vst [vmem:[%s5285 + $0xa8] sm:$0xff] %v5304
                  %v5306 = vld [vmem:[%s5284 + $0x90] sm:$0xff]
                  %5307 = vst [vmem:[%s5285 + $0xb0] sm:$0xff] %v5306
                  %v5308 = vld [vmem:[%s5284 + $0x98] sm:$0xff]
                  %5309 = vst [vmem:[%s5285 + $0xb8] sm:$0xff] %v5308
                  %v5310 = vld [vmem:[%s5284 + $0xc0] sm:$0xff]
                  %5311 = vst [vmem:[%s5285 + $0xf0] sm:$0xff] %v5310
                  %v5312 = vld [vmem:[%s5284 + $0xc8] sm:$0xff]
                  %5313 = vst [vmem:[%s5285 + $0xf8] sm:$0xff] %v5312
                  %v5314 = vld [vmem:[%s5284 + $0xd0] sm:$0xff]
                  %5315 = vst [vmem:[%s5285 + $0x100] sm:$0xff] %v5314
                  %v5316 = vld [vmem:[%s5284 + $0xd8] sm:$0xff]
                  %5317 = vst [vmem:[%s5285 + $0x108] sm:$0xff] %v5316
                  %v5318 = vld [vmem:[%s5284 + $0x100] sm:$0xff]
                  %5319 = vst [vmem:[%s5285 + $0x140] sm:$0xff] %v5318
                  %v5320 = vld [vmem:[%s5284 + $0x108] sm:$0xff]
                  %5321 = vst [vmem:[%s5285 + $0x148] sm:$0xff] %v5320
                  %v5322 = vld [vmem:[%s5284 + $0x110] sm:$0xff]
                  %5323 = vst [vmem:[%s5285 + $0x150] sm:$0xff] %v5322
                  %v5324 = vld [vmem:[%s5284 + $0x118] sm:$0xff]
                  %5325 = vst [vmem:[%s5285 + $0x158] sm:$0xff] %v5324
                  %v5326 = vld [vmem:[%s5284 + $0x140] sm:$0xff]
                  %5327 = vst [vmem:[%s5285 + $0x190] sm:$0xff] %v5326
                  %v5328 = vld [vmem:[%s5284 + $0x148] sm:$0xff]
                  %5329 = vst [vmem:[%s5285 + $0x198] sm:$0xff] %v5328
                  %v5330 = vld [vmem:[%s5284 + $0x150] sm:$0xff]
                  %5331 = vst [vmem:[%s5285 + $0x1a0] sm:$0xff] %v5330
                  %v5332 = vld [vmem:[%s5284 + $0x158] sm:$0xff]
                  %5333 = vst [vmem:[%s5285 + $0x1a8] sm:$0xff] %v5332
                  %v5334 = vld [vmem:[%s5284 + $0x180] sm:$0xff]
                  %5335 = vst [vmem:[%s5285 + $0x1e0] sm:$0xff] %v5334
                  %v5336 = vld [vmem:[%s5284 + $0x188] sm:$0xff]
                  %5337 = vst [vmem:[%s5285 + $0x1e8] sm:$0xff] %v5336
                  %v5338 = vld [vmem:[%s5284 + $0x190] sm:$0xff]
                  %5339 = vst [vmem:[%s5285 + $0x1f0] sm:$0xff] %v5338
                  %v5340 = vld [vmem:[%s5284 + $0x198] sm:$0xff]
                  %5341 = vst [vmem:[%s5285 + $0x1f8] sm:$0xff] %v5340
                  %v5342 = vld [vmem:[%s5284 + $0x1c0] sm:$0xff]
                  %5343 = vst [vmem:[%s5285 + $0x230] sm:$0xff] %v5342
                  %v5344 = vld [vmem:[%s5284 + $0x1c8] sm:$0xff]
                  %5345 = vst [vmem:[%s5285 + $0x238] sm:$0xff] %v5344
                  %v5346 = vld [vmem:[%s5284 + $0x1d0] sm:$0xff]
                  %5347 = vst [vmem:[%s5285 + $0x240] sm:$0xff] %v5346
                  %v5348 = vld [vmem:[%s5284 + $0x1d8] sm:$0xff]
                  %5349 = vst [vmem:[%s5285 + $0x248] sm:$0xff] %v5348
                  %v5350 = vld [vmem:[%s5284 + $0x200] sm:$0xff]
                  %5351 = vst [vmem:[%s5285 + $0x280] sm:$0xff] %v5350
                  %v5352 = vld [vmem:[%s5284 + $0x208] sm:$0xff]
                  %5353 = vst [vmem:[%s5285 + $0x288] sm:$0xff] %v5352
                  %v5354 = vld [vmem:[%s5284 + $0x210] sm:$0xff]
                  %5355 = vst [vmem:[%s5285 + $0x290] sm:$0xff] %v5354
                  %v5356 = vld [vmem:[%s5284 + $0x218] sm:$0xff]
                  %5357 = vst [vmem:[%s5285 + $0x298] sm:$0xff] %v5356
                  %v5358 = vld [vmem:[%s5284 + $0x240] sm:$0xff]
                  %5359 = vst [vmem:[%s5285 + $0x2d0] sm:$0xff] %v5358
                  %v5360 = vld [vmem:[%s5284 + $0x248] sm:$0xff]
                  %5361 = vst [vmem:[%s5285 + $0x2d8] sm:$0xff] %v5360
                  %v5362 = vld [vmem:[%s5284 + $0x250] sm:$0xff]
                  %5363 = vst [vmem:[%s5285 + $0x2e0] sm:$0xff] %v5362
                  %v5364 = vld [vmem:[%s5284 + $0x258] sm:$0xff]
                  %5365 = vst [vmem:[%s5285 + $0x2e8] sm:$0xff] %v5364
                  %v5366 = vld [vmem:[%s5284 + $0x280] sm:$0xff]
                  %5367 = vst [vmem:[%s5285 + $0x320] sm:$0xff] %v5366
                  %v5368 = vld [vmem:[%s5284 + $0x288] sm:$0xff]
                  %5369 = vst [vmem:[%s5285 + $0x328] sm:$0xff] %v5368
                  %v5370 = vld [vmem:[%s5284 + $0x290] sm:$0xff]
                  %5371 = vst [vmem:[%s5285 + $0x330] sm:$0xff] %v5370
                  %v5372 = vld [vmem:[%s5284 + $0x298] sm:$0xff]
                  %5373 = vst [vmem:[%s5285 + $0x338] sm:$0xff] %v5372
                  %v5374 = vld [vmem:[%s5284 + $0x2c0] sm:$0xff]
                  %5375 = vst [vmem:[%s5285 + $0x370] sm:$0xff] %v5374
                  %v5376 = vld [vmem:[%s5284 + $0x2c8] sm:$0xff]
                  %5377 = vst [vmem:[%s5285 + $0x378] sm:$0xff] %v5376
                  %v5378 = vld [vmem:[%s5284 + $0x2d0] sm:$0xff]
                  %5379 = vst [vmem:[%s5285 + $0x380] sm:$0xff] %v5378
                  %v5380 = vld [vmem:[%s5284 + $0x2d8] sm:$0xff]
                  %5381 = vst [vmem:[%s5285 + $0x388] sm:$0xff] %v5380
                  %v5382 = vld [vmem:[%s5284 + $0x300] sm:$0xff]
                  %5383 = vst [vmem:[%s5285 + $0x3c0] sm:$0xff] %v5382
                  %v5384 = vld [vmem:[%s5284 + $0x308] sm:$0xff]
                  %5385 = vst [vmem:[%s5285 + $0x3c8] sm:$0xff] %v5384
                  %v5386 = vld [vmem:[%s5284 + $0x310] sm:$0xff]
                  %5387 = vst [vmem:[%s5285 + $0x3d0] sm:$0xff] %v5386
                  %v5388 = vld [vmem:[%s5284 + $0x318] sm:$0xff]
                  %5389 = vst [vmem:[%s5285 + $0x3d8] sm:$0xff] %v5388
                  %v5390 = vld [vmem:[%s5284 + $0x340] sm:$0xff]
                  %5391 = vst [vmem:[%s5285 + $0x410] sm:$0xff] %v5390
                  %v5392 = vld [vmem:[%s5284 + $0x348] sm:$0xff]
                  %5393 = vst [vmem:[%s5285 + $0x418] sm:$0xff] %v5392
                  %v5394 = vld [vmem:[%s5284 + $0x350] sm:$0xff]
                  %5395 = vst [vmem:[%s5285 + $0x420] sm:$0xff] %v5394
                  %v5396 = vld [vmem:[%s5284 + $0x358] sm:$0xff]
                  %5397 = vst [vmem:[%s5285 + $0x428] sm:$0xff] %v5396
                  %v5398 = vld [vmem:[%s5284 + $0x380] sm:$0xff]
                  %5399 = vst [vmem:[%s5285 + $0x460] sm:$0xff] %v5398
                  %v5400 = vld [vmem:[%s5284 + $0x388] sm:$0xff]
                  %5401 = vst [vmem:[%s5285 + $0x468] sm:$0xff] %v5400
                  %v5402 = vld [vmem:[%s5284 + $0x390] sm:$0xff]
                  %5403 = vst [vmem:[%s5285 + $0x470] sm:$0xff] %v5402
                  %v5404 = vld [vmem:[%s5284 + $0x398] sm:$0xff]
                  %5405 = vst [vmem:[%s5285 + $0x478] sm:$0xff] %v5404
                  %v5406 = vld [vmem:[%s5284 + $0x3c0] sm:$0xff]
                  %5407 = vst [vmem:[%s5285 + $0x4b0] sm:$0xff] %v5406
                  %v5408 = vld [vmem:[%s5284 + $0x3c8] sm:$0xff]
                  %5409 = vst [vmem:[%s5285 + $0x4b8] sm:$0xff] %v5408
                  %v5410 = vld [vmem:[%s5284 + $0x3d0] sm:$0xff]
                  %5411 = vst [vmem:[%s5285 + $0x4c0] sm:$0xff] %v5410
                  %v5412 = vld [vmem:[%s5284 + $0x3d8] sm:$0xff]
                  %5413 = vst [vmem:[%s5285 + $0x4c8] sm:$0xff] %v5412
                  %s5414 = sadd.s32 1, %s5283
                  %p5415 = scmp.ge.s32.totalorder %s5414, %s5274
                  %s5416 = scalar_select %p5415, 0, %s5414
                  %s5417 = smul.u32 %s5416, 32
                  %s5418 = smul.u32 %s5416, 32
                  %s5419 = scalar_lea.vmem %s4134, %s5417 [#allocation6]
                  %s5420 = scalar_lea.vmem %s5215, %s5418
                $region307: #{encoder_forward.1} parent=301 // loop_footer
                  %s5280 = sadd.s32 %s5278, 1
                $region308: #{encoder_forward.1} parent=301 // loop_footer_branch
                  %5277 = sbr.rel target = $region304
                $region309: #{encoder_forward.1} parent=301 // loop_exit
                  _
                %s5421 = sshrl.u32 %s5273, 2
                %s5422 = sand.u32 %s5273, 3
                %s5423 = smul.u32 %s5421, 4
                %s5424 = smul.u32 128, %s5423
                %s5425 = sshra.s32 %s5424, 4
                %s5426 = scalar_lea.vmem %s4134, %s5425 [#allocation6]
                %s5427 = smul.u32 128, %s5423
                %s5428 = sshra.s32 %s5427, 4
                %s5429 = scalar_lea.vmem %s5215, %s5428
                // While loop
                $region310: #{encoder_forward.1} parent=301 // loop_pre_header
                  _
                $region311: #{encoder_forward.1} parent=301 // loop_header
                  %s5433 = sphi 0, %s5435
                  %p5434 = scmp.ge.s32.totalorder %s5433, %s5422
                  %s5438 = sphi 0, %s5475
                  %s5439 = sphi %s5426, %s5478
                  %s5440 = sphi %s5429, %s5479
                $region312: #{encoder_forward.1} parent=301 // loop_header_branch
                  %5437 = sbr.rel (%p5434) target = $region316
                $region313: #{encoder_forward.1} parent=301 // loop_body
                  %v5441 = vld [vmem:[%s5439] sm:$0xff]
                  %5442 = vst [vmem:[%s5440] sm:$0xff] %v5441
                  %v5443 = vld [vmem:[%s5439 + $0x40] sm:$0xff]
                  %5444 = vst [vmem:[%s5440 + $0x50] sm:$0xff] %v5443
                  %v5445 = vld [vmem:[%s5439 + $0x80] sm:$0xff]
                  %5446 = vst [vmem:[%s5440 + $0xa0] sm:$0xff] %v5445
                  %v5447 = vld [vmem:[%s5439 + $0xc0] sm:$0xff]
                  %5448 = vst [vmem:[%s5440 + $0xf0] sm:$0xff] %v5447
                  %v5449 = vld [vmem:[%s5439 + $0x100] sm:$0xff]
                  %5450 = vst [vmem:[%s5440 + $0x140] sm:$0xff] %v5449
                  %v5451 = vld [vmem:[%s5439 + $0x140] sm:$0xff]
                  %5452 = vst [vmem:[%s5440 + $0x190] sm:$0xff] %v5451
                  %v5453 = vld [vmem:[%s5439 + $0x180] sm:$0xff]
                  %5454 = vst [vmem:[%s5440 + $0x1e0] sm:$0xff] %v5453
                  %v5455 = vld [vmem:[%s5439 + $0x1c0] sm:$0xff]
                  %5456 = vst [vmem:[%s5440 + $0x230] sm:$0xff] %v5455
                  %v5457 = vld [vmem:[%s5439 + $0x200] sm:$0xff]
                  %5458 = vst [vmem:[%s5440 + $0x280] sm:$0xff] %v5457
                  %v5459 = vld [vmem:[%s5439 + $0x240] sm:$0xff]
                  %5460 = vst [vmem:[%s5440 + $0x2d0] sm:$0xff] %v5459
                  %v5461 = vld [vmem:[%s5439 + $0x280] sm:$0xff]
                  %5462 = vst [vmem:[%s5440 + $0x320] sm:$0xff] %v5461
                  %v5463 = vld [vmem:[%s5439 + $0x2c0] sm:$0xff]
                  %5464 = vst [vmem:[%s5440 + $0x370] sm:$0xff] %v5463
                  %v5465 = vld [vmem:[%s5439 + $0x300] sm:$0xff]
                  %5466 = vst [vmem:[%s5440 + $0x3c0] sm:$0xff] %v5465
                  %v5467 = vld [vmem:[%s5439 + $0x340] sm:$0xff]
                  %5468 = vst [vmem:[%s5440 + $0x410] sm:$0xff] %v5467
                  %v5469 = vld [vmem:[%s5439 + $0x380] sm:$0xff]
                  %5470 = vst [vmem:[%s5440 + $0x460] sm:$0xff] %v5469
                  %v5471 = vld [vmem:[%s5439 + $0x3c0] sm:$0xff]
                  %5472 = vst [vmem:[%s5440 + $0x4b0] sm:$0xff] %v5471
                  %s5473 = sadd.s32 1, %s5438
                  %p5474 = scmp.ge.s32.totalorder %s5473, %s5422
                  %s5475 = scalar_select %p5474, 0, %s5473
                  %s5476 = smul.u32 %s5475, 8
                  %s5477 = smul.u32 %s5475, 8
                  %s5478 = scalar_lea.vmem %s5426, %s5476 [#allocation6]
                  %s5479 = scalar_lea.vmem %s5429, %s5477
                $region314: #{encoder_forward.1} parent=301 // loop_footer
                  %s5435 = sadd.s32 %s5433, 1
                $region315: #{encoder_forward.1} parent=301 // loop_footer_branch
                  %5432 = sbr.rel target = $region311
                $region316: #{encoder_forward.1} parent=301 // loop_exit
                  _
              $region302: #{encoder_forward.1} parent=286 // pred_fallthru
                _
              %p5480 = pneg %p5269
              // Predicated region
              $region317: #{encoder_forward.1} parent=286 // pred_check
                _
              $region318: #{encoder_forward.1} parent=286 // pred_check_branch
                %5482 = sbr.rel (%p5269) target = $region320
              $region319: #{encoder_forward.1} parent=286 // pred_region
                %s5483 = sand.u32 %s5216, 7
                %s5484 = ssub.s32 %s5216, %s5483
                %s5485 = scalar_lea.vmem %s4134, %s5484 [#allocation6]
                %s5486 = ssub.s32 %s5216, %s5483
                %s5487 = scalar_lea.vmem %s5215, %s5486
                %s5488 = sshrl.u32 %s5216, 3
                %s5489 = sshrl.u32 %s5488, 2
                // While loop
                $region321: #{encoder_forward.1} parent=319 // loop_pre_header
                  _
                $region322: #{encoder_forward.1} parent=319 // loop_header
                  %s5493 = sphi 0, %s5495
                  %p5494 = scmp.ge.s32.totalorder %s5493, %s5489
                  %s5498 = sphi 0, %s5631
                  %s5499 = sphi %s4134, %s5634
                  %s5500 = sphi %s5215, %s5635
                $region323: #{encoder_forward.1} parent=319 // loop_header_branch
                  %5497 = sbr.rel (%p5494) target = $region327
                $region324: #{encoder_forward.1} parent=319 // loop_body
                  %v5501 = vld [vmem:[%s5499] sm:$0xff]
                  %5502 = vst [vmem:[%s5500] sm:$0xff] %v5501
                  %v5503 = vld [vmem:[%s5499 + $0x8] sm:$0xff]
                  %5504 = vst [vmem:[%s5500 + $0x8] sm:$0xff] %v5503
                  %v5505 = vld [vmem:[%s5499 + $0x10] sm:$0xff]
                  %5506 = vst [vmem:[%s5500 + $0x10] sm:$0xff] %v5505
                  %v5507 = vld [vmem:[%s5499 + $0x18] sm:$0xff]
                  %5508 = vst [vmem:[%s5500 + $0x18] sm:$0xff] %v5507
                  %v5509 = vld [vmem:[%s5499 + $0x40] sm:$0xff]
                  %5510 = vst [vmem:[%s5500 + $0x50] sm:$0xff] %v5509
                  %v5511 = vld [vmem:[%s5499 + $0x48] sm:$0xff]
                  %5512 = vst [vmem:[%s5500 + $0x58] sm:$0xff] %v5511
                  %v5513 = vld [vmem:[%s5499 + $0x50] sm:$0xff]
                  %5514 = vst [vmem:[%s5500 + $0x60] sm:$0xff] %v5513
                  %v5515 = vld [vmem:[%s5499 + $0x58] sm:$0xff]
                  %5516 = vst [vmem:[%s5500 + $0x68] sm:$0xff] %v5515
                  %v5517 = vld [vmem:[%s5499 + $0x80] sm:$0xff]
                  %5518 = vst [vmem:[%s5500 + $0xa0] sm:$0xff] %v5517
                  %v5519 = vld [vmem:[%s5499 + $0x88] sm:$0xff]
                  %5520 = vst [vmem:[%s5500 + $0xa8] sm:$0xff] %v5519
                  %v5521 = vld [vmem:[%s5499 + $0x90] sm:$0xff]
                  %5522 = vst [vmem:[%s5500 + $0xb0] sm:$0xff] %v5521
                  %v5523 = vld [vmem:[%s5499 + $0x98] sm:$0xff]
                  %5524 = vst [vmem:[%s5500 + $0xb8] sm:$0xff] %v5523
                  %v5525 = vld [vmem:[%s5499 + $0xc0] sm:$0xff]
                  %5526 = vst [vmem:[%s5500 + $0xf0] sm:$0xff] %v5525
                  %v5527 = vld [vmem:[%s5499 + $0xc8] sm:$0xff]
                  %5528 = vst [vmem:[%s5500 + $0xf8] sm:$0xff] %v5527
                  %v5529 = vld [vmem:[%s5499 + $0xd0] sm:$0xff]
                  %5530 = vst [vmem:[%s5500 + $0x100] sm:$0xff] %v5529
                  %v5531 = vld [vmem:[%s5499 + $0xd8] sm:$0xff]
                  %5532 = vst [vmem:[%s5500 + $0x108] sm:$0xff] %v5531
                  %v5533 = vld [vmem:[%s5499 + $0x100] sm:$0xff]
                  %5534 = vst [vmem:[%s5500 + $0x140] sm:$0xff] %v5533
                  %v5535 = vld [vmem:[%s5499 + $0x108] sm:$0xff]
                  %5536 = vst [vmem:[%s5500 + $0x148] sm:$0xff] %v5535
                  %v5537 = vld [vmem:[%s5499 + $0x110] sm:$0xff]
                  %5538 = vst [vmem:[%s5500 + $0x150] sm:$0xff] %v5537
                  %v5539 = vld [vmem:[%s5499 + $0x118] sm:$0xff]
                  %5540 = vst [vmem:[%s5500 + $0x158] sm:$0xff] %v5539
                  %v5541 = vld [vmem:[%s5499 + $0x140] sm:$0xff]
                  %5542 = vst [vmem:[%s5500 + $0x190] sm:$0xff] %v5541
                  %v5543 = vld [vmem:[%s5499 + $0x148] sm:$0xff]
                  %5544 = vst [vmem:[%s5500 + $0x198] sm:$0xff] %v5543
                  %v5545 = vld [vmem:[%s5499 + $0x150] sm:$0xff]
                  %5546 = vst [vmem:[%s5500 + $0x1a0] sm:$0xff] %v5545
                  %v5547 = vld [vmem:[%s5499 + $0x158] sm:$0xff]
                  %5548 = vst [vmem:[%s5500 + $0x1a8] sm:$0xff] %v5547
                  %v5549 = vld [vmem:[%s5499 + $0x180] sm:$0xff]
                  %5550 = vst [vmem:[%s5500 + $0x1e0] sm:$0xff] %v5549
                  %v5551 = vld [vmem:[%s5499 + $0x188] sm:$0xff]
                  %5552 = vst [vmem:[%s5500 + $0x1e8] sm:$0xff] %v5551
                  %v5553 = vld [vmem:[%s5499 + $0x190] sm:$0xff]
                  %5554 = vst [vmem:[%s5500 + $0x1f0] sm:$0xff] %v5553
                  %v5555 = vld [vmem:[%s5499 + $0x198] sm:$0xff]
                  %5556 = vst [vmem:[%s5500 + $0x1f8] sm:$0xff] %v5555
                  %v5557 = vld [vmem:[%s5499 + $0x1c0] sm:$0xff]
                  %5558 = vst [vmem:[%s5500 + $0x230] sm:$0xff] %v5557
                  %v5559 = vld [vmem:[%s5499 + $0x1c8] sm:$0xff]
                  %5560 = vst [vmem:[%s5500 + $0x238] sm:$0xff] %v5559
                  %v5561 = vld [vmem:[%s5499 + $0x1d0] sm:$0xff]
                  %5562 = vst [vmem:[%s5500 + $0x240] sm:$0xff] %v5561
                  %v5563 = vld [vmem:[%s5499 + $0x1d8] sm:$0xff]
                  %5564 = vst [vmem:[%s5500 + $0x248] sm:$0xff] %v5563
                  %v5565 = vld [vmem:[%s5499 + $0x200] sm:$0xff]
                  %5566 = vst [vmem:[%s5500 + $0x280] sm:$0xff] %v5565
                  %v5567 = vld [vmem:[%s5499 + $0x208] sm:$0xff]
                  %5568 = vst [vmem:[%s5500 + $0x288] sm:$0xff] %v5567
                  %v5569 = vld [vmem:[%s5499 + $0x210] sm:$0xff]
                  %5570 = vst [vmem:[%s5500 + $0x290] sm:$0xff] %v5569
                  %v5571 = vld [vmem:[%s5499 + $0x218] sm:$0xff]
                  %5572 = vst [vmem:[%s5500 + $0x298] sm:$0xff] %v5571
                  %v5573 = vld [vmem:[%s5499 + $0x240] sm:$0xff]
                  %5574 = vst [vmem:[%s5500 + $0x2d0] sm:$0xff] %v5573
                  %v5575 = vld [vmem:[%s5499 + $0x248] sm:$0xff]
                  %5576 = vst [vmem:[%s5500 + $0x2d8] sm:$0xff] %v5575
                  %v5577 = vld [vmem:[%s5499 + $0x250] sm:$0xff]
                  %5578 = vst [vmem:[%s5500 + $0x2e0] sm:$0xff] %v5577
                  %v5579 = vld [vmem:[%s5499 + $0x258] sm:$0xff]
                  %5580 = vst [vmem:[%s5500 + $0x2e8] sm:$0xff] %v5579
                  %v5581 = vld [vmem:[%s5499 + $0x280] sm:$0xff]
                  %5582 = vst [vmem:[%s5500 + $0x320] sm:$0xff] %v5581
                  %v5583 = vld [vmem:[%s5499 + $0x288] sm:$0xff]
                  %5584 = vst [vmem:[%s5500 + $0x328] sm:$0xff] %v5583
                  %v5585 = vld [vmem:[%s5499 + $0x290] sm:$0xff]
                  %5586 = vst [vmem:[%s5500 + $0x330] sm:$0xff] %v5585
                  %v5587 = vld [vmem:[%s5499 + $0x298] sm:$0xff]
                  %5588 = vst [vmem:[%s5500 + $0x338] sm:$0xff] %v5587
                  %v5589 = vld [vmem:[%s5499 + $0x2c0] sm:$0xff]
                  %5590 = vst [vmem:[%s5500 + $0x370] sm:$0xff] %v5589
                  %v5591 = vld [vmem:[%s5499 + $0x2c8] sm:$0xff]
                  %5592 = vst [vmem:[%s5500 + $0x378] sm:$0xff] %v5591
                  %v5593 = vld [vmem:[%s5499 + $0x2d0] sm:$0xff]
                  %5594 = vst [vmem:[%s5500 + $0x380] sm:$0xff] %v5593
                  %v5595 = vld [vmem:[%s5499 + $0x2d8] sm:$0xff]
                  %5596 = vst [vmem:[%s5500 + $0x388] sm:$0xff] %v5595
                  %v5597 = vld [vmem:[%s5499 + $0x300] sm:$0xff]
                  %5598 = vst [vmem:[%s5500 + $0x3c0] sm:$0xff] %v5597
                  %v5599 = vld [vmem:[%s5499 + $0x308] sm:$0xff]
                  %5600 = vst [vmem:[%s5500 + $0x3c8] sm:$0xff] %v5599
                  %v5601 = vld [vmem:[%s5499 + $0x310] sm:$0xff]
                  %5602 = vst [vmem:[%s5500 + $0x3d0] sm:$0xff] %v5601
                  %v5603 = vld [vmem:[%s5499 + $0x318] sm:$0xff]
                  %5604 = vst [vmem:[%s5500 + $0x3d8] sm:$0xff] %v5603
                  %v5605 = vld [vmem:[%s5499 + $0x340] sm:$0xff]
                  %5606 = vst [vmem:[%s5500 + $0x410] sm:$0xff] %v5605
                  %v5607 = vld [vmem:[%s5499 + $0x348] sm:$0xff]
                  %5608 = vst [vmem:[%s5500 + $0x418] sm:$0xff] %v5607
                  %v5609 = vld [vmem:[%s5499 + $0x350] sm:$0xff]
                  %5610 = vst [vmem:[%s5500 + $0x420] sm:$0xff] %v5609
                  %v5611 = vld [vmem:[%s5499 + $0x358] sm:$0xff]
                  %5612 = vst [vmem:[%s5500 + $0x428] sm:$0xff] %v5611
                  %v5613 = vld [vmem:[%s5499 + $0x380] sm:$0xff]
                  %5614 = vst [vmem:[%s5500 + $0x460] sm:$0xff] %v5613
                  %v5615 = vld [vmem:[%s5499 + $0x388] sm:$0xff]
                  %5616 = vst [vmem:[%s5500 + $0x468] sm:$0xff] %v5615
                  %v5617 = vld [vmem:[%s5499 + $0x390] sm:$0xff]
                  %5618 = vst [vmem:[%s5500 + $0x470] sm:$0xff] %v5617
                  %v5619 = vld [vmem:[%s5499 + $0x398] sm:$0xff]
                  %5620 = vst [vmem:[%s5500 + $0x478] sm:$0xff] %v5619
                  %v5621 = vld [vmem:[%s5499 + $0x3c0] sm:$0xff]
                  %5622 = vst [vmem:[%s5500 + $0x4b0] sm:$0xff] %v5621
                  %v5623 = vld [vmem:[%s5499 + $0x3c8] sm:$0xff]
                  %5624 = vst [vmem:[%s5500 + $0x4b8] sm:$0xff] %v5623
                  %v5625 = vld [vmem:[%s5499 + $0x3d0] sm:$0xff]
                  %5626 = vst [vmem:[%s5500 + $0x4c0] sm:$0xff] %v5625
                  %v5627 = vld [vmem:[%s5499 + $0x3d8] sm:$0xff]
                  %5628 = vst [vmem:[%s5500 + $0x4c8] sm:$0xff] %v5627
                  %s5629 = sadd.s32 1, %s5498
                  %p5630 = scmp.ge.s32.totalorder %s5629, %s5489
                  %s5631 = scalar_select %p5630, 0, %s5629
                  %s5632 = smul.u32 %s5631, 32
                  %s5633 = smul.u32 %s5631, 32
                  %s5634 = scalar_lea.vmem %s4134, %s5632 [#allocation6]
                  %s5635 = scalar_lea.vmem %s5215, %s5633
                $region325: #{encoder_forward.1} parent=319 // loop_footer
                  %s5495 = sadd.s32 %s5493, 1
                $region326: #{encoder_forward.1} parent=319 // loop_footer_branch
                  %5492 = sbr.rel target = $region322
                $region327: #{encoder_forward.1} parent=319 // loop_exit
                  _
                %s5636 = sshrl.u32 %s5488, 2
                %s5637 = sand.u32 %s5488, 3
                %s5638 = smul.u32 %s5636, 4
                %s5639 = smul.u32 128, %s5638
                %s5640 = sshra.s32 %s5639, 4
                %s5641 = scalar_lea.vmem %s4134, %s5640 [#allocation6]
                %s5642 = smul.u32 128, %s5638
                %s5643 = sshra.s32 %s5642, 4
                %s5644 = scalar_lea.vmem %s5215, %s5643
                // While loop
                $region328: #{encoder_forward.1} parent=319 // loop_pre_header
                  _
                $region329: #{encoder_forward.1} parent=319 // loop_header
                  %s5648 = sphi 0, %s5650
                  %p5649 = scmp.ge.s32.totalorder %s5648, %s5637
                  %s5653 = sphi 0, %s5690
                  %s5654 = sphi %s5641, %s5693
                  %s5655 = sphi %s5644, %s5694
                $region330: #{encoder_forward.1} parent=319 // loop_header_branch
                  %5652 = sbr.rel (%p5649) target = $region334
                $region331: #{encoder_forward.1} parent=319 // loop_body
                  %v5656 = vld [vmem:[%s5654] sm:$0xff]
                  %5657 = vst [vmem:[%s5655] sm:$0xff] %v5656
                  %v5658 = vld [vmem:[%s5654 + $0x40] sm:$0xff]
                  %5659 = vst [vmem:[%s5655 + $0x50] sm:$0xff] %v5658
                  %v5660 = vld [vmem:[%s5654 + $0x80] sm:$0xff]
                  %5661 = vst [vmem:[%s5655 + $0xa0] sm:$0xff] %v5660
                  %v5662 = vld [vmem:[%s5654 + $0xc0] sm:$0xff]
                  %5663 = vst [vmem:[%s5655 + $0xf0] sm:$0xff] %v5662
                  %v5664 = vld [vmem:[%s5654 + $0x100] sm:$0xff]
                  %5665 = vst [vmem:[%s5655 + $0x140] sm:$0xff] %v5664
                  %v5666 = vld [vmem:[%s5654 + $0x140] sm:$0xff]
                  %5667 = vst [vmem:[%s5655 + $0x190] sm:$0xff] %v5666
                  %v5668 = vld [vmem:[%s5654 + $0x180] sm:$0xff]
                  %5669 = vst [vmem:[%s5655 + $0x1e0] sm:$0xff] %v5668
                  %v5670 = vld [vmem:[%s5654 + $0x1c0] sm:$0xff]
                  %5671 = vst [vmem:[%s5655 + $0x230] sm:$0xff] %v5670
                  %v5672 = vld [vmem:[%s5654 + $0x200] sm:$0xff]
                  %5673 = vst [vmem:[%s5655 + $0x280] sm:$0xff] %v5672
                  %v5674 = vld [vmem:[%s5654 + $0x240] sm:$0xff]
                  %5675 = vst [vmem:[%s5655 + $0x2d0] sm:$0xff] %v5674
                  %v5676 = vld [vmem:[%s5654 + $0x280] sm:$0xff]
                  %5677 = vst [vmem:[%s5655 + $0x320] sm:$0xff] %v5676
                  %v5678 = vld [vmem:[%s5654 + $0x2c0] sm:$0xff]
                  %5679 = vst [vmem:[%s5655 + $0x370] sm:$0xff] %v5678
                  %v5680 = vld [vmem:[%s5654 + $0x300] sm:$0xff]
                  %5681 = vst [vmem:[%s5655 + $0x3c0] sm:$0xff] %v5680
                  %v5682 = vld [vmem:[%s5654 + $0x340] sm:$0xff]
                  %5683 = vst [vmem:[%s5655 + $0x410] sm:$0xff] %v5682
                  %v5684 = vld [vmem:[%s5654 + $0x380] sm:$0xff]
                  %5685 = vst [vmem:[%s5655 + $0x460] sm:$0xff] %v5684
                  %v5686 = vld [vmem:[%s5654 + $0x3c0] sm:$0xff]
                  %5687 = vst [vmem:[%s5655 + $0x4b0] sm:$0xff] %v5686
                  %s5688 = sadd.s32 1, %s5653
                  %p5689 = scmp.ge.s32.totalorder %s5688, %s5637
                  %s5690 = scalar_select %p5689, 0, %s5688
                  %s5691 = smul.u32 %s5690, 8
                  %s5692 = smul.u32 %s5690, 8
                  %s5693 = scalar_lea.vmem %s5641, %s5691 [#allocation6]
                  %s5694 = scalar_lea.vmem %s5644, %s5692
                $region332: #{encoder_forward.1} parent=319 // loop_footer
                  %s5650 = sadd.s32 %s5648, 1
                $region333: #{encoder_forward.1} parent=319 // loop_footer_branch
                  %5647 = sbr.rel target = $region329
                $region334: #{encoder_forward.1} parent=319 // loop_exit
                  _
                %s5695 = sshllo.u32 0, %s5483
                loop: start=0, step=1, limit=1
                $region335: #{encoder_forward.1} parent=319 // loop_pre_header
                  _
                $region336: #{encoder_forward.1} parent=319 // loop_header
                  %s5697 = sphi 0, %s5701
                  %p5698 = scmp.ge.s32.totalorder %s5697, 1
                  %s5702 = sphi %s5485, %s5485
                  %s5703 = sphi %s5487, %s5487
                $region337: #{encoder_forward.1} parent=319 // loop_header_branch
                  %5700 = sbr.rel (%p5698) target = $region341
                $region338: #{encoder_forward.1} parent=319 // loop_body
                  %v5704 = vld [vmem:[%s5702] sm:%s5695]
                  %5705 = vst [vmem:[%s5703] sm:%s5695] %v5704
                  %v5706 = vld [vmem:[%s5702 + $0x40] sm:%s5695]
                  %5707 = vst [vmem:[%s5703 + $0x50] sm:%s5695] %v5706
                  %v5708 = vld [vmem:[%s5702 + $0x80] sm:%s5695]
                  %5709 = vst [vmem:[%s5703 + $0xa0] sm:%s5695] %v5708
                  %v5710 = vld [vmem:[%s5702 + $0xc0] sm:%s5695]
                  %5711 = vst [vmem:[%s5703 + $0xf0] sm:%s5695] %v5710
                  %v5712 = vld [vmem:[%s5702 + $0x100] sm:%s5695]
                  %5713 = vst [vmem:[%s5703 + $0x140] sm:%s5695] %v5712
                  %v5714 = vld [vmem:[%s5702 + $0x140] sm:%s5695]
                  %5715 = vst [vmem:[%s5703 + $0x190] sm:%s5695] %v5714
                  %v5716 = vld [vmem:[%s5702 + $0x180] sm:%s5695]
                  %5717 = vst [vmem:[%s5703 + $0x1e0] sm:%s5695] %v5716
                  %v5718 = vld [vmem:[%s5702 + $0x1c0] sm:%s5695]
                  %5719 = vst [vmem:[%s5703 + $0x230] sm:%s5695] %v5718
                  %v5720 = vld [vmem:[%s5702 + $0x200] sm:%s5695]
                  %5721 = vst [vmem:[%s5703 + $0x280] sm:%s5695] %v5720
                  %v5722 = vld [vmem:[%s5702 + $0x240] sm:%s5695]
                  %5723 = vst [vmem:[%s5703 + $0x2d0] sm:%s5695] %v5722
                  %v5724 = vld [vmem:[%s5702 + $0x280] sm:%s5695]
                  %5725 = vst [vmem:[%s5703 + $0x320] sm:%s5695] %v5724
                  %v5726 = vld [vmem:[%s5702 + $0x2c0] sm:%s5695]
                  %5727 = vst [vmem:[%s5703 + $0x370] sm:%s5695] %v5726
                  %v5728 = vld [vmem:[%s5702 + $0x300] sm:%s5695]
                  %5729 = vst [vmem:[%s5703 + $0x3c0] sm:%s5695] %v5728
                  %v5730 = vld [vmem:[%s5702 + $0x340] sm:%s5695]
                  %5731 = vst [vmem:[%s5703 + $0x410] sm:%s5695] %v5730
                  %v5732 = vld [vmem:[%s5702 + $0x380] sm:%s5695]
                  %5733 = vst [vmem:[%s5703 + $0x460] sm:%s5695] %v5732
                  %v5734 = vld [vmem:[%s5702 + $0x3c0] sm:%s5695]
                  %5735 = vst [vmem:[%s5703 + $0x4b0] sm:%s5695] %v5734
                $region339: #{encoder_forward.1} parent=319 // loop_footer
                  %s5701 = sadd.s32 1, %s5697
                $region340: #{encoder_forward.1} parent=319 // loop_footer_branch
                  %5696 = sbr.rel target = $region336
                $region341: #{encoder_forward.1} parent=319 // loop_exit
                  _
              $region320: #{encoder_forward.1} parent=286 // pred_fallthru
                _
            $region287: #{encoder_forward.1} parent=282 // pred_fallthru
              _
            // Predicated region
            $region288: #{encoder_forward.1} parent=282 // pred_check
              %p5224 = pneg %p5220
            $region289: #{encoder_forward.1} parent=282 // pred_check_branch
              %5226 = sbr.rel (%p5224) target = $region291
            $region290: #{encoder_forward.1} parent=282 // pred_region
              %s5227 = sshllo.u32 0, %s5216
              loop: start=0, step=1, limit=1
              $region292: #{encoder_forward.1} parent=290 // loop_pre_header
                _
              $region293: #{encoder_forward.1} parent=290 // loop_header
                %s5229 = sphi 0, %s5233
                %p5230 = scmp.ge.s32.totalorder %s5229, 1
                %s5234 = sphi %s4134, %s4134
                %s5235 = sphi %s5215, %s5215
              $region294: #{encoder_forward.1} parent=290 // loop_header_branch
                %5232 = sbr.rel (%p5230) target = $region298
              $region295: #{encoder_forward.1} parent=290 // loop_body
                %v5236 = vld [vmem:[%s5234] sm:%s5227]
                %5237 = vst [vmem:[%s5235] sm:%s5227] %v5236
                %v5238 = vld [vmem:[%s5234 + $0x40] sm:%s5227]
                %5239 = vst [vmem:[%s5235 + $0x50] sm:%s5227] %v5238
                %v5240 = vld [vmem:[%s5234 + $0x80] sm:%s5227]
                %5241 = vst [vmem:[%s5235 + $0xa0] sm:%s5227] %v5240
                %v5242 = vld [vmem:[%s5234 + $0xc0] sm:%s5227]
                %5243 = vst [vmem:[%s5235 + $0xf0] sm:%s5227] %v5242
                %v5244 = vld [vmem:[%s5234 + $0x100] sm:%s5227]
                %5245 = vst [vmem:[%s5235 + $0x140] sm:%s5227] %v5244
                %v5246 = vld [vmem:[%s5234 + $0x140] sm:%s5227]
                %5247 = vst [vmem:[%s5235 + $0x190] sm:%s5227] %v5246
                %v5248 = vld [vmem:[%s5234 + $0x180] sm:%s5227]
                %5249 = vst [vmem:[%s5235 + $0x1e0] sm:%s5227] %v5248
                %v5250 = vld [vmem:[%s5234 + $0x1c0] sm:%s5227]
                %5251 = vst [vmem:[%s5235 + $0x230] sm:%s5227] %v5250
                %v5252 = vld [vmem:[%s5234 + $0x200] sm:%s5227]
                %5253 = vst [vmem:[%s5235 + $0x280] sm:%s5227] %v5252
                %v5254 = vld [vmem:[%s5234 + $0x240] sm:%s5227]
                %5255 = vst [vmem:[%s5235 + $0x2d0] sm:%s5227] %v5254
                %v5256 = vld [vmem:[%s5234 + $0x280] sm:%s5227]
                %5257 = vst [vmem:[%s5235 + $0x320] sm:%s5227] %v5256
                %v5258 = vld [vmem:[%s5234 + $0x2c0] sm:%s5227]
                %5259 = vst [vmem:[%s5235 + $0x370] sm:%s5227] %v5258
                %v5260 = vld [vmem:[%s5234 + $0x300] sm:%s5227]
                %5261 = vst [vmem:[%s5235 + $0x3c0] sm:%s5227] %v5260
                %v5262 = vld [vmem:[%s5234 + $0x340] sm:%s5227]
                %5263 = vst [vmem:[%s5235 + $0x410] sm:%s5227] %v5262
                %v5264 = vld [vmem:[%s5234 + $0x380] sm:%s5227]
                %5265 = vst [vmem:[%s5235 + $0x460] sm:%s5227] %v5264
                %v5266 = vld [vmem:[%s5234 + $0x3c0] sm:%s5227]
                %5267 = vst [vmem:[%s5235 + $0x4b0] sm:%s5227] %v5266
              $region296: #{encoder_forward.1} parent=290 // loop_footer
                %s5233 = sadd.s32 1, %s5229
              $region297: #{encoder_forward.1} parent=290 // loop_footer_branch
                %5228 = sbr.rel target = $region293
              $region298: #{encoder_forward.1} parent=290 // loop_exit
                _
            $region291: #{encoder_forward.1} parent=282 // pred_fallthru
              _
          $region283: #{encoder_forward.1} parent=278 // pred_fallthru
            _
          %5736 = vnop
        $region279: #{encoder_forward.1} parent=134 // pred_fallthru
          _
      $region135: #{encoder_forward.1} parent=5 // pred_fallthru
        _
      %p5737 = scmp.le.s32.totalorder 2, %s13
      // Predicated region
      $region342: #{encoder_forward.1} parent=5 // pred_check
        %p5738 = pneg %p5737
      $region343: #{encoder_forward.1} parent=5 // pred_check_branch
        %5740 = sbr.rel (%p5738) target = $region345
      $region344: #{encoder_forward.1} parent=5 // pred_region
        %s5741 = ssub.s32 %s13, 2
        // Predicated region
        $region346: #{encoder_forward.1} parent=344 // pred_check
          %p5742 = pneg %p158
        $region347: #{encoder_forward.1} parent=344 // pred_check_branch
          %5744 = sbr.rel (%p5742) target = $region349
        $region348: #{encoder_forward.1} parent=344 // pred_region
          %s5745 = sand.u32 %s143, 1
          %s5746 = sand.u32 %s143, 1
          %s5747 = smul.addr %s5746, 1024
          %s5748 = scalar_lea.vmem [#allocation4], %s5747
        $region349: #{encoder_forward.1} parent=344 // pred_fallthru
          _
        // Predicated region
        $region350: #{encoder_forward.1} parent=344 // pred_check
          %p5749 = pneg %p186
        $region351: #{encoder_forward.1} parent=344 // pred_check_branch
          %5751 = sbr.rel (%p5749) target = $region353
        $region352: #{encoder_forward.1} parent=344 // pred_region
          %s5752 = sand.u32 %s171, 1
          %s5753 = sand.u32 %s171, 1
          %s5754 = smul.addr %s5753, 1024
          %s5755 = scalar_lea.vmem [#allocation5], %s5754
        $region353: #{encoder_forward.1} parent=344 // pred_fallthru
          _
        // Predicated region
        $region354: #{encoder_forward.1} parent=344 // pred_check
          %p5756 = pneg %p214
        $region355: #{encoder_forward.1} parent=344 // pred_check_branch
          %5758 = sbr.rel (%p5756) target = $region357
        $region356: #{encoder_forward.1} parent=344 // pred_region
          %s5759 = sand.u32 %s199, 1
          %s5760 = sand.u32 %s199, 1
          %s5761 = smul.addr %s5760, 1024
          %s5762 = scalar_lea.vmem [#allocation6], %s5761
        $region357: #{encoder_forward.1} parent=344 // pred_fallthru
          _
      $region345: #{encoder_forward.1} parent=5 // pred_fallthru
        _
    $region6: #{encoder_forward.1} parent=1 // loop_footer
      %s17 = sadd.s32 1, %s13
    $region7: #{encoder_forward.1} parent=1 // loop_footer_branch
      %12 = sbr.rel target = $region3
    $region8: #{encoder_forward.1} parent=1 // loop_exit
      _

</llo_original>
